<compile_context>
chip_gen: v5e
topology: v5e:2x2
jax: 0.10.0
libtpu: 0.0.40
codegen_flags: <defaults>
</compile_context>

<pallas_src>
from functools import lru_cache

import jax
import jax.numpy as jnp
from jax.experimental import pallas as pl
from jax.experimental.pallas import tpu as pltpu

NEG_SLOPE = 0.01  # F.leaky_relu default
_NUM_LAYERS = 8


def _leaky_relu(y):
    # max(y, 0.01*y) == leaky_relu(y) for all y; 2 VALU ops.
    return jnp.maximum(y, NEG_SLOPE * y)


def _ae_fused_kernel(x_ref, *refs):
    """Whole 8-layer MLP for one batch tile.

    refs = (w0, b0, ..., w7, b7, rec_ref, code_ref)
      wX: (K, N) bf16 (transposed vs torch, so y = x @ W + b)
      bX: (1, N) f32
    """
    wb = refs[: 2 * _NUM_LAYERS]
    rec_ref = refs[2 * _NUM_LAYERS]
    code_ref = refs[2 * _NUM_LAYERS + 1]

    a = x_ref[...]  # (bm, IN) bf16 — activations carried in bf16 between layers
    for layer in range(_NUM_LAYERS):
        w_ref = wb[2 * layer]
        b_ref = wb[2 * layer + 1]
        y = jnp.dot(
            a,                                   # bf16 MXU inputs
            w_ref[...],
            preferred_element_type=jnp.float32,  # f32 accumulation
        )
        y = y + b_ref[...]                       # bias broadcast over rows (f32)
        act = _leaky_relu(y)                     # f32 activation
        if layer == 3:                           # encoder_output_layer -> code
            code_ref[...] = act.astype(code_ref.dtype)
        if layer == _NUM_LAYERS - 1:
            rec_ref[...] = act.astype(rec_ref.dtype)
        else:
            a = act.astype(jnp.bfloat16)         # single cast; halves spill traffic


def _round_up(x, m):
    return ((x + m - 1) // m) * m


@lru_cache(maxsize=1)
def _tpu_config():
    """Generation-aware (bm_cap, num_tensorcores, vmem_limit_bytes)."""
    kind = ""
    try:
        kind = jax.devices()[0].device_kind.lower()
    except Exception:
        pass
    try:
        vmem_cap = int(getattr(pltpu.get_tpu_info(), "vmem_capacity_bytes",
                               64 * 1024 * 1024))
    except Exception:
        vmem_cap = 64 * 1024 * 1024  # conservative default (v7x per-TC VMEM)

    is_v5 = "v5" in kind
    is_v7 = ("v7" in kind) or ("tpu7" in kind) or ("7x" in kind)

    bm_cap = 128 if is_v5 else 256          # MXU M-width: 128 on v5e, 256 on v6e/v7x
    num_cores = 2 if is_v7 else 1           # v7x has 2 TensorCores per chip
    vmem_limit = max(48 * 1024 * 1024,
                     min(vmem_cap - 16 * 1024 * 1024, 96 * 1024 * 1024))
    return bm_cap, num_cores, vmem_limit


def _choose_bm(B, bm_cap, num_cores):
    """Batch-tile rows per grid step."""
    if B <= 128:
        bm = _round_up(B, 8)
        # On v7x, split medium batches so both TensorCores get a grid step.
        if num_cores > 1 and B > 8 * num_cores:
            bm = min(bm, _round_up(pl.cdiv(B, num_cores), 8))
        return bm
    bm = 128
    # Raise to 256 (fills the 256-wide MXU on v6e/v7x) only if that still
    # yields >= num_cores grid steps (e.g. on v7x: only when B >= 512).
    if bm_cap > 128 and B >= bm_cap * num_cores:
        bm = bm_cap
    return bm


@jax.jit
def ae_cifar_forward(params, features):
    """Mirrors AE_CIFAR.forward. params = list of 8 (w bf16 (K,N), b f32 (1,N))."""
    B, in_shape = features.shape
    assert params[0][0].shape[0] == in_shape
    code_dim = params[3][0].shape[1]

    bm_cap, num_cores, vmem_limit = _tpu_config()
    bm = _choose_bm(B, bm_cap, num_cores)
    Bp = _round_up(B, bm)

    # Feed x in bf16: the MXU consumes bf16 anyway; halves the per-tile x DMA.
    x = features.astype(jnp.bfloat16)
    if Bp != B:
        x = jnp.pad(x, ((0, Bp - B), (0, 0)))

    flat = []
    for w, b in params:
        flat += [w, b]

    flops = 2 * Bp * sum(int(w.shape[0]) * int(w.shape[1]) for w, _ in params)
    bytes_accessed = (
        x.size * x.dtype.itemsize
        + sum(int(t.size) * t.dtype.itemsize for t in flat)
        + Bp * (in_shape + code_dim) * 4
    )

    grid = (Bp // bm,)

    # Weights/biases have a constant index_map -> double-buffering buys nothing
    # and doubles their VMEM footprint; request a single buffer.
    try:
        resident_mode = pl.Buffered(1)
    except Exception:  # pragma: no cover - fall back to default pipelining
        resident_mode = None

    in_specs = (
        [pl.BlockSpec((bm, in_shape), lambda i: (i, 0))]           # x: batch-tiled
        + [pl.BlockSpec(t.shape, lambda i: (0, 0), pipeline_mode=resident_mode)
           for t in flat]                                          # weights/biases resident
    )
    out_specs = (
        pl.BlockSpec((bm, in_shape), lambda i: (i, 0)),
        pl.BlockSpec((bm, code_dim), lambda i: (i, 0)),
    )

    rec, code = pl.pallas_call(
        _ae_fused_kernel,
        out_shape=(
            jax.ShapeDtypeStruct((Bp, in_shape), jnp.float32),
            jax.ShapeDtypeStruct((Bp, code_dim), jnp.float32),
        ),
        grid_spec=pl.GridSpec(grid=grid, in_specs=in_specs, out_specs=out_specs),
        compiler_params=pltpu.CompilerParams(
            dimension_semantics=("parallel",),
            vmem_limit_bytes=vmem_limit,
        ),
        cost_estimate=pl.CostEstimate(
            flops=flops, transcendentals=0, bytes_accessed=bytes_accessed
        ),
    )(x, *flat)

    if Bp != B:
        rec = rec[:B]
        code = code[:B]
    return rec, code


def init_linear(key, in_features, out_features):
    """Deterministic PyTorch-style init: U(-1/sqrt(in), 1/sqrt(in)), f32."""
    kw, kb = jax.random.split(key)
    bound = 1.0 / jnp.sqrt(jnp.float32(in_features))
    # Stored as (in, out): transpose of torch's (out, in) weight.
    w = jax.random.uniform(kw, (in_features, out_features), jnp.float32, -bound, bound)
    b = jax.random.uniform(kb, (out_features,), jnp.float32, -bound, bound)
    return w, b


def ae_cifar_init(key, input_shape):
    dims = [
        (input_shape, 1024),  # encoder_hidden_layer
        (1024, 512),          # encoder_middle_1
        (512, 256),           # encoder_middle
        (256, 256),           # encoder_output_layer
        (256, 256),           # decoder_hidden_layer
        (256, 512),           # decoder_middle1
        (512, 1024),          # decoder_middle
        (1024, input_shape),  # decoder_output_layer
    ]
    keys = jax.random.split(key, len(dims))
    return [init_linear(k, din, dout) for k, (din, dout) in zip(keys, dims)]


def prepare_params(params_f32):
    """One-time HBM-side prep: bf16 weights (halves DMA bytes), (1, N) f32 biases."""
    return [
        (w.astype(jnp.bfloat16), b.reshape(1, -1).astype(jnp.float32))
        for w, b in params_f32
    ]


def _reference_forward_bf16(params_prepared, features):
    """Pure-JAX reference with the kernel's exact arithmetic (bf16 in, f32 acc)."""
    x = features
    outs = []
    for w, b in params_prepared:
        y = jnp.dot(x.astype(jnp.bfloat16), w, preferred_element_type=jnp.float32) + b
        x = jnp.maximum(y, NEG_SLOPE * y)
        outs.append(x)
    return outs[-1], outs[3]


def _reference_forward_f32(params_f32, features):
    """Full-precision reference (loose sanity check for the bf16 weights)."""
    x = features
    outs = []
    for w, b in params_f32:
        y = x @ w + b
        x = jnp.maximum(y, NEG_SLOPE * y)
        outs.append(x)
    return outs[-1], outs[3]


if __name__ == "__main__":
    IN_SHAPE = 512   # kwargs['input_shape'] (real CIFAR would be 3072; kept small)
    BATCH = 8

    key = jax.random.PRNGKey(0)
    k_param, k_data = jax.random.split(key)

    params_f32 = ae_cifar_init(k_param, IN_SHAPE)
    params = prepare_params(params_f32)
    x = jax.random.normal(k_data, (BATCH, IN_SHAPE), jnp.float32)

    reconstructed, code = ae_cifar_forward(params, x)
    reconstructed = jax.block_until_ready(reconstructed)
    code = jax.block_until_ready(code)

    assert reconstructed.shape == (BATCH, IN_SHAPE)
    assert code.shape == (BATCH, 256)

    # Tight check vs a reference that uses the same arithmetic (bf16 MXU in, f32 acc).
    ref_rec, ref_code = _reference_forward_bf16(params, x)
    assert jnp.allclose(reconstructed, ref_rec, atol=2e-3, rtol=2e-3)
    assert jnp.allclose(code, ref_code, atol=2e-3, rtol=2e-3)

    # Loose sanity vs the full-f32 reference (bf16 weights introduce ~1% error).
    f32_rec, f32_code = _reference_forward_f32(params_f32, x)
    assert jnp.allclose(reconstructed, f32_rec, atol=3e-2, rtol=3e-1)
    assert jnp.allclose(code, f32_code, atol=3e-2, rtol=3e-1)

    print("KERNEL_OK")
</pallas_src>

<mosaic_0001>
module attributes {stable_mosaic.version = 11 : i64} {
  func.func @_ae_fused_kernel(%arg0: i32, %arg1: memref<8x512xbf16, #tpu.memory_space<vmem>>, %arg2: memref<512x1024xbf16, #tpu.memory_space<vmem>>, %arg3: memref<1x1024xf32, #tpu.memory_space<vmem>>, %arg4: memref<1024x512xbf16, #tpu.memory_space<vmem>>, %arg5: memref<1x512xf32, #tpu.memory_space<vmem>>, %arg6: memref<512x256xbf16, #tpu.memory_space<vmem>>, %arg7: memref<1x256xf32, #tpu.memory_space<vmem>>, %arg8: memref<256x256xbf16, #tpu.memory_space<vmem>>, %arg9: memref<1x256xf32, #tpu.memory_space<vmem>>, %arg10: memref<256x256xbf16, #tpu.memory_space<vmem>>, %arg11: memref<1x256xf32, #tpu.memory_space<vmem>>, %arg12: memref<256x512xbf16, #tpu.memory_space<vmem>>, %arg13: memref<1x512xf32, #tpu.memory_space<vmem>>, %arg14: memref<512x1024xbf16, #tpu.memory_space<vmem>>, %arg15: memref<1x1024xf32, #tpu.memory_space<vmem>>, %arg16: memref<1024x512xbf16, #tpu.memory_space<vmem>>, %arg17: memref<1x512xf32, #tpu.memory_space<vmem>>, %arg18: memref<8x512xf32, #tpu.memory_space<vmem>>, %arg19: memref<8x256xf32, #tpu.memory_space<vmem>>) attributes {dimension_semantics = [#tpu.dimension_semantics<parallel>], iteration_bounds = array<i64: 1>, scalar_prefetch = 0 : i64, scratch_operands = 0 : i64, tpu.core_type = #tpu.core_type<tc>, window_params = [{transform_indices = @transform_0, window_bounds = array<i64: 8, 512>}, {pipeline_mode = #tpu.pipeline_mode<synchronous>, transform_indices = @transform_1, window_bounds = array<i64: 512, 1024>}, {pipeline_mode = #tpu.pipeline_mode<synchronous>, transform_indices = @transform_2, window_bounds = array<i64: 1, 1024>}, {pipeline_mode = #tpu.pipeline_mode<synchronous>, transform_indices = @transform_3, window_bounds = array<i64: 1024, 512>}, {pipeline_mode = #tpu.pipeline_mode<synchronous>, transform_indices = @transform_4, window_bounds = array<i64: 1, 512>}, {pipeline_mode = #tpu.pipeline_mode<synchronous>, transform_indices = @transform_5, window_bounds = array<i64: 512, 256>}, {pipeline_mode = #tpu.pipeline_mode<synchronous>, transform_indices = @transform_6, window_bounds = array<i64: 1, 256>}, {pipeline_mode = #tpu.pipeline_mode<synchronous>, transform_indices = @transform_7, window_bounds = array<i64: 256, 256>}, {pipeline_mode = #tpu.pipeline_mode<synchronous>, transform_indices = @transform_8, window_bounds = array<i64: 1, 256>}, {pipeline_mode = #tpu.pipeline_mode<synchronous>, transform_indices = @transform_9, window_bounds = array<i64: 256, 256>}, {pipeline_mode = #tpu.pipeline_mode<synchronous>, transform_indices = @transform_10, window_bounds = array<i64: 1, 256>}, {pipeline_mode = #tpu.pipeline_mode<synchronous>, transform_indices = @transform_11, window_bounds = array<i64: 256, 512>}, {pipeline_mode = #tpu.pipeline_mode<synchronous>, transform_indices = @transform_12, window_bounds = array<i64: 1, 512>}, {pipeline_mode = #tpu.pipeline_mode<synchronous>, transform_indices = @transform_13, window_bounds = array<i64: 512, 1024>}, {pipeline_mode = #tpu.pipeline_mode<synchronous>, transform_indices = @transform_14, window_bounds = array<i64: 1, 1024>}, {pipeline_mode = #tpu.pipeline_mode<synchronous>, transform_indices = @transform_15, window_bounds = array<i64: 1024, 512>}, {pipeline_mode = #tpu.pipeline_mode<synchronous>, transform_indices = @transform_16, window_bounds = array<i64: 1, 512>}, {transform_indices = @transform_17, window_bounds = array<i64: 8, 512>}, {transform_indices = @transform_18, window_bounds = array<i64: 8, 256>}]} {
    %c0 = arith.constant 0 : index
    %c0_0 = arith.constant 0 : index
    %0 = vector.load %arg1[%c0, %c0_0] : memref<8x512xbf16, #tpu.memory_space<vmem>>, vector<8x512xbf16>
    %c0_1 = arith.constant 0 : index
    %c0_2 = arith.constant 0 : index
    %1 = vector.load %arg2[%c0_1, %c0_2] : memref<512x1024xbf16, #tpu.memory_space<vmem>>, vector<512x1024xbf16>
    %cst = arith.constant dense<0.000000e+00> : vector<8x1024xf32>
    %2 = tpu.matmul %0, %1, %cst {dimension_numbers = #tpu.dot_dimension_numbers<[1], [0], [0], [1], [0, 0, 1, 1], [], []>} : vector<8x512xbf16>, vector<512x1024xbf16>, vector<8x1024xf32> -> vector<8x1024xf32>
    %c0_3 = arith.constant 0 : index
    %c0_4 = arith.constant 0 : index
    %3 = vector.load %arg3[%c0_3, %c0_4] : memref<1x1024xf32, #tpu.memory_space<vmem>>, vector<1x1024xf32>
    %4 = vector.broadcast %3 : vector<1x1024xf32> to vector<8x1024xf32>
    %5 = arith.addf %2, %4 : vector<8x1024xf32>
    %cst_5 = arith.constant 0.00999999977 : f32
    %6 = vector.broadcast %cst_5 : f32 to vector<8x1024xf32>
    %7 = arith.mulf %6, %5 : vector<8x1024xf32>
    %8 = arith.maximumf %5, %7 : vector<8x1024xf32>
    %9 = arith.truncf %8 : vector<8x1024xf32> to vector<8x1024xbf16>
    %c0_6 = arith.constant 0 : index
    %c0_7 = arith.constant 0 : index
    %10 = vector.load %arg4[%c0_6, %c0_7] : memref<1024x512xbf16, #tpu.memory_space<vmem>>, vector<1024x512xbf16>
    %cst_8 = arith.constant dense<0.000000e+00> : vector<8x512xf32>
    %11 = tpu.matmul %9, %10, %cst_8 {dimension_numbers = #tpu.dot_dimension_numbers<[1], [0], [0], [1], [0, 0, 1, 1], [], []>} : vector<8x1024xbf16>, vector<1024x512xbf16>, vector<8x512xf32> -> vector<8x512xf32>
    %c0_9 = arith.constant 0 : index
    %c0_10 = arith.constant 0 : index
    %12 = vector.load %arg5[%c0_9, %c0_10] : memref<1x512xf32, #tpu.memory_space<vmem>>, vector<1x512xf32>
    %13 = vector.broadcast %12 : vector<1x512xf32> to vector<8x512xf32>
    %14 = arith.addf %11, %13 : vector<8x512xf32>
    %cst_11 = arith.constant 0.00999999977 : f32
    %15 = vector.broadcast %cst_11 : f32 to vector<8x512xf32>
    %16 = arith.mulf %15, %14 : vector<8x512xf32>
    %17 = arith.maximumf %14, %16 : vector<8x512xf32>
    %18 = arith.truncf %17 : vector<8x512xf32> to vector<8x512xbf16>
    %c0_12 = arith.constant 0 : index
    %c0_13 = arith.constant 0 : index
    %19 = vector.load %arg6[%c0_12, %c0_13] : memref<512x256xbf16, #tpu.memory_space<vmem>>, vector<512x256xbf16>
    %cst_14 = arith.constant dense<0.000000e+00> : vector<8x256xf32>
    %20 = tpu.matmul %18, %19, %cst_14 {dimension_numbers = #tpu.dot_dimension_numbers<[1], [0], [0], [1], [0, 0, 1, 1], [], []>} : vector<8x512xbf16>, vector<512x256xbf16>, vector<8x256xf32> -> vector<8x256xf32>
    %c0_15 = arith.constant 0 : index
    %c0_16 = arith.constant 0 : index
    %21 = vector.load %arg7[%c0_15, %c0_16] : memref<1x256xf32, #tpu.memory_space<vmem>>, vector<1x256xf32>
    %22 = vector.broadcast %21 : vector<1x256xf32> to vector<8x256xf32>
    %23 = arith.addf %20, %22 : vector<8x256xf32>
    %cst_17 = arith.constant 0.00999999977 : f32
    %24 = vector.broadcast %cst_17 : f32 to vector<8x256xf32>
    %25 = arith.mulf %24, %23 : vector<8x256xf32>
    %26 = arith.maximumf %23, %25 : vector<8x256xf32>
    %27 = arith.truncf %26 : vector<8x256xf32> to vector<8x256xbf16>
    %c0_18 = arith.constant 0 : index
    %c0_19 = arith.constant 0 : index
    %28 = vector.load %arg8[%c0_18, %c0_19] : memref<256x256xbf16, #tpu.memory_space<vmem>>, vector<256x256xbf16>
    %cst_20 = arith.constant dense<0.000000e+00> : vector<8x256xf32>
    %29 = tpu.matmul %27, %28, %cst_20 {dimension_numbers = #tpu.dot_dimension_numbers<[1], [0], [0], [1], [0, 0, 1, 1], [], []>} : vector<8x256xbf16>, vector<256x256xbf16>, vector<8x256xf32> -> vector<8x256xf32>
    %c0_21 = arith.constant 0 : index
    %c0_22 = arith.constant 0 : index
    %30 = vector.load %arg9[%c0_21, %c0_22] : memref<1x256xf32, #tpu.memory_space<vmem>>, vector<1x256xf32>
    %31 = vector.broadcast %30 : vector<1x256xf32> to vector<8x256xf32>
    %32 = arith.addf %29, %31 : vector<8x256xf32>
    %cst_23 = arith.constant 0.00999999977 : f32
    %33 = vector.broadcast %cst_23 : f32 to vector<8x256xf32>
    %34 = arith.mulf %33, %32 : vector<8x256xf32>
    %35 = arith.maximumf %32, %34 : vector<8x256xf32>
    %c0_24 = arith.constant 0 : index
    %c0_25 = arith.constant 0 : index
    %36 = vector.load %arg19[%c0_24, %c0_25] : memref<8x256xf32, #tpu.memory_space<vmem>>, vector<8x256xf32>
    tpu.vector_store %arg19[%c0_24, %c0_25], %35 {strides = array<i32>} : memref<8x256xf32, #tpu.memory_space<vmem>>, vector<8x256xf32>,
    %37 = arith.truncf %35 : vector<8x256xf32> to vector<8x256xbf16>
    %c0_26 = arith.constant 0 : index
    %c0_27 = arith.constant 0 : index
    %38 = vector.load %arg10[%c0_26, %c0_27] : memref<256x256xbf16, #tpu.memory_space<vmem>>, vector<256x256xbf16>
    %cst_28 = arith.constant dense<0.000000e+00> : vector<8x256xf32>
    %39 = tpu.matmul %37, %38, %cst_28 {dimension_numbers = #tpu.dot_dimension_numbers<[1], [0], [0], [1], [0, 0, 1, 1], [], []>} : vector<8x256xbf16>, vector<256x256xbf16>, vector<8x256xf32> -> vector<8x256xf32>
    %c0_29 = arith.constant 0 : index
    %c0_30 = arith.constant 0 : index
    %40 = vector.load %arg11[%c0_29, %c0_30] : memref<1x256xf32, #tpu.memory_space<vmem>>, vector<1x256xf32>
    %41 = vector.broadcast %40 : vector<1x256xf32> to vector<8x256xf32>
    %42 = arith.addf %39, %41 : vector<8x256xf32>
    %cst_31 = arith.constant 0.00999999977 : f32
    %43 = vector.broadcast %cst_31 : f32 to vector<8x256xf32>
    %44 = arith.mulf %43, %42 : vector<8x256xf32>
    %45 = arith.maximumf %42, %44 : vector<8x256xf32>
    %46 = arith.truncf %45 : vector<8x256xf32> to vector<8x256xbf16>
    %c0_32 = arith.constant 0 : index
    %c0_33 = arith.constant 0 : index
    %47 = vector.load %arg12[%c0_32, %c0_33] : memref<256x512xbf16, #tpu.memory_space<vmem>>, vector<256x512xbf16>
    %cst_34 = arith.constant dense<0.000000e+00> : vector<8x512xf32>
    %48 = tpu.matmul %46, %47, %cst_34 {dimension_numbers = #tpu.dot_dimension_numbers<[1], [0], [0], [1], [0, 0, 1, 1], [], []>} : vector<8x256xbf16>, vector<256x512xbf16>, vector<8x512xf32> -> vector<8x512xf32>
    %c0_35 = arith.constant 0 : index
    %c0_36 = arith.constant 0 : index
    %49 = vector.load %arg13[%c0_35, %c0_36] : memref<1x512xf32, #tpu.memory_space<vmem>>, vector<1x512xf32>
    %50 = vector.broadcast %49 : vector<1x512xf32> to vector<8x512xf32>
    %51 = arith.addf %48, %50 : vector<8x512xf32>
    %cst_37 = arith.constant 0.00999999977 : f32
    %52 = vector.broadcast %cst_37 : f32 to vector<8x512xf32>
    %53 = arith.mulf %52, %51 : vector<8x512xf32>
    %54 = arith.maximumf %51, %53 : vector<8x512xf32>
    %55 = arith.truncf %54 : vector<8x512xf32> to vector<8x512xbf16>
    %c0_38 = arith.constant 0 : index
    %c0_39 = arith.constant 0 : index
    %56 = vector.load %arg14[%c0_38, %c0_39] : memref<512x1024xbf16, #tpu.memory_space<vmem>>, vector<512x1024xbf16>
    %cst_40 = arith.constant dense<0.000000e+00> : vector<8x1024xf32>
    %57 = tpu.matmul %55, %56, %cst_40 {dimension_numbers = #tpu.dot_dimension_numbers<[1], [0], [0], [1], [0, 0, 1, 1], [], []>} : vector<8x512xbf16>, vector<512x1024xbf16>, vector<8x1024xf32> -> vector<8x1024xf32>
    %c0_41 = arith.constant 0 : index
    %c0_42 = arith.constant 0 : index
    %58 = vector.load %arg15[%c0_41, %c0_42] : memref<1x1024xf32, #tpu.memory_space<vmem>>, vector<1x1024xf32>
    %59 = vector.broadcast %58 : vector<1x1024xf32> to vector<8x1024xf32>
    %60 = arith.addf %57, %59 : vector<8x1024xf32>
    %cst_43 = arith.constant 0.00999999977 : f32
    %61 = vector.broadcast %cst_43 : f32 to vector<8x1024xf32>
    %62 = arith.mulf %61, %60 : vector<8x1024xf32>
    %63 = arith.maximumf %60, %62 : vector<8x1024xf32>
    %64 = arith.truncf %63 : vector<8x1024xf32> to vector<8x1024xbf16>
    %c0_44 = arith.constant 0 : index
    %c0_45 = arith.constant 0 : index
    %65 = vector.load %arg16[%c0_44, %c0_45] : memref<1024x512xbf16, #tpu.memory_space<vmem>>, vector<1024x512xbf16>
    %cst_46 = arith.constant dense<0.000000e+00> : vector<8x512xf32>
    %66 = tpu.matmul %64, %65, %cst_46 {dimension_numbers = #tpu.dot_dimension_numbers<[1], [0], [0], [1], [0, 0, 1, 1], [], []>} : vector<8x1024xbf16>, vector<1024x512xbf16>, vector<8x512xf32> -> vector<8x512xf32>
    %c0_47 = arith.constant 0 : index
    %c0_48 = arith.constant 0 : index
    %67 = vector.load %arg17[%c0_47, %c0_48] : memref<1x512xf32, #tpu.memory_space<vmem>>, vector<1x512xf32>
    %68 = vector.broadcast %67 : vector<1x512xf32> to vector<8x512xf32>
    %69 = arith.addf %66, %68 : vector<8x512xf32>
    %cst_49 = arith.constant 0.00999999977 : f32
    %70 = vector.broadcast %cst_49 : f32 to vector<8x512xf32>
    %71 = arith.mulf %70, %69 : vector<8x512xf32>
    %72 = arith.maximumf %69, %71 : vector<8x512xf32>
    %c0_50 = arith.constant 0 : index
    %c0_51 = arith.constant 0 : index
    %73 = vector.load %arg18[%c0_50, %c0_51] : memref<8x512xf32, #tpu.memory_space<vmem>>, vector<8x512xf32>
    tpu.vector_store %arg18[%c0_50, %c0_51], %72 {strides = array<i32>} : memref<8x512xf32, #tpu.memory_space<vmem>>, vector<8x512xf32>,
    return
  }
  func.func @transform_0(%arg0: i32) -> (i32, i32) {
    %c0_i32 = arith.constant 0 : i32
    %c0_i32_0 = arith.constant 0 : i32
    return %arg0, %c0_i32 : i32, i32
  }
  func.func @transform_1(%arg0: i32) -> (i32, i32) {
    %c0_i32 = arith.constant 0 : i32
    %c0_i32_0 = arith.constant 0 : i32
    %c0_i32_1 = arith.constant 0 : i32
    return %c0_i32, %c0_i32_0 : i32, i32
  }
  func.func @transform_2(%arg0: i32) -> (i32, i32) {
    %c0_i32 = arith.constant 0 : i32
    %c0_i32_0 = arith.constant 0 : i32
    %c0_i32_1 = arith.constant 0 : i32
    return %c0_i32, %c0_i32_0 : i32, i32
  }
  func.func @transform_3(%arg0: i32) -> (i32, i32) {
    %c0_i32 = arith.constant 0 : i32
    %c0_i32_0 = arith.constant 0 : i32
    %c0_i32_1 = arith.constant 0 : i32
    return %c0_i32, %c0_i32_0 : i32, i32
  }
  func.func @transform_4(%arg0: i32) -> (i32, i32) {
    %c0_i32 = arith.constant 0 : i32
    %c0_i32_0 = arith.constant 0 : i32
    %c0_i32_1 = arith.constant 0 : i32
    return %c0_i32, %c0_i32_0 : i32, i32
  }
  func.func @transform_5(%arg0: i32) -> (i32, i32) {
    %c0_i32 = arith.constant 0 : i32
    %c0_i32_0 = arith.constant 0 : i32
    %c0_i32_1 = arith.constant 0 : i32
    return %c0_i32, %c0_i32_0 : i32, i32
  }
  func.func @transform_6(%arg0: i32) -> (i32, i32) {
    %c0_i32 = arith.constant 0 : i32
    %c0_i32_0 = arith.constant 0 : i32
    %c0_i32_1 = arith.constant 0 : i32
    return %c0_i32, %c0_i32_0 : i32, i32
  }
  func.func @transform_7(%arg0: i32) -> (i32, i32) {
    %c0_i32 = arith.constant 0 : i32
    %c0_i32_0 = arith.constant 0 : i32
    %c0_i32_1 = arith.constant 0 : i32
    return %c0_i32, %c0_i32_0 : i32, i32
  }
  func.func @transform_8(%arg0: i32) -> (i32, i32) {
    %c0_i32 = arith.constant 0 : i32
    %c0_i32_0 = arith.constant 0 : i32
    %c0_i32_1 = arith.constant 0 : i32
    return %c0_i32, %c0_i32_0 : i32, i32
  }
  func.func @transform_9(%arg0: i32) -> (i32, i32) {
    %c0_i32 = arith.constant 0 : i32
    %c0_i32_0 = arith.constant 0 : i32
    %c0_i32_1 = arith.constant 0 : i32
    return %c0_i32, %c0_i32_0 : i32, i32
  }
  func.func @transform_10(%arg0: i32) -> (i32, i32) {
    %c0_i32 = arith.constant 0 : i32
    %c0_i32_0 = arith.constant 0 : i32
    %c0_i32_1 = arith.constant 0 : i32
    return %c0_i32, %c0_i32_0 : i32, i32
  }
  func.func @transform_11(%arg0: i32) -> (i32, i32) {
    %c0_i32 = arith.constant 0 : i32
    %c0_i32_0 = arith.constant 0 : i32
    %c0_i32_1 = arith.constant 0 : i32
    return %c0_i32, %c0_i32_0 : i32, i32
  }
  func.func @transform_12(%arg0: i32) -> (i32, i32) {
    %c0_i32 = arith.constant 0 : i32
    %c0_i32_0 = arith.constant 0 : i32
    %c0_i32_1 = arith.constant 0 : i32
    return %c0_i32, %c0_i32_0 : i32, i32
  }
  func.func @transform_13(%arg0: i32) -> (i32, i32) {
    %c0_i32 = arith.constant 0 : i32
    %c0_i32_0 = arith.constant 0 : i32
    %c0_i32_1 = arith.constant 0 : i32
    return %c0_i32, %c0_i32_0 : i32, i32
  }
  func.func @transform_14(%arg0: i32) -> (i32, i32) {
    %c0_i32 = arith.constant 0 : i32
    %c0_i32_0 = arith.constant 0 : i32
    %c0_i32_1 = arith.constant 0 : i32
    return %c0_i32, %c0_i32_0 : i32, i32
  }
  func.func @transform_15(%arg0: i32) -> (i32, i32) {
    %c0_i32 = arith.constant 0 : i32
    %c0_i32_0 = arith.constant 0 : i32
    %c0_i32_1 = arith.constant 0 : i32
    return %c0_i32, %c0_i32_0 : i32, i32
  }
  func.func @transform_16(%arg0: i32) -> (i32, i32) {
    %c0_i32 = arith.constant 0 : i32
    %c0_i32_0 = arith.constant 0 : i32
    %c0_i32_1 = arith.constant 0 : i32
    return %c0_i32, %c0_i32_0 : i32, i32
  }
  func.func @transform_17(%arg0: i32) -> (i32, i32) {
    %c0_i32 = arith.constant 0 : i32
    %c0_i32_0 = arith.constant 0 : i32
    return %arg0, %c0_i32 : i32, i32
  }
  func.func @transform_18(%arg0: i32) -> (i32, i32) {
    %c0_i32 = arith.constant 0 : i32
    %c0_i32_0 = arith.constant 0 : i32
    return %arg0, %c0_i32 : i32, i32
  }
}

</mosaic_0001>

<llo_original>
// kernel: ae_cifar_forward.1
$region0: #{ae_cifar_forward.1}
  #allocation0 [shape = 'u32[]', space=smem, size = 0x4, offset = 0x4, fixed_abs, tag = 'smem constant byte address 0x4 - core index']
  #allocation1 [shape = 'u32[72,128]{1,0:T(1,128)}', space=vmem, size = 0x9000, scoped, tag = 'internal scratch']
  %s0 = inlined_call_operand.vmem [shape: bf16[8,512], index: 0, kind: input, shape index: {}]
  %s1 = inlined_call_operand.hbm [shape: bf16[512,1024], index: 1, kind: input, shape index: {}]
  %s2 = inlined_call_operand.vmem [shape: f32[1,1024], index: 2, kind: input, shape index: {}]
  %s3 = inlined_call_operand.hbm [shape: bf16[1024,512], index: 3, kind: input, shape index: {}]
  %s4 = inlined_call_operand.vmem [shape: f32[1,512], index: 4, kind: input, shape index: {}]
  %s5 = inlined_call_operand.hbm [shape: bf16[512,256], index: 5, kind: input, shape index: {}]
  %s6 = inlined_call_operand.vmem [shape: f32[1,256], index: 6, kind: input, shape index: {}]
  %s7 = inlined_call_operand.hbm [shape: bf16[256,256], index: 7, kind: input, shape index: {}]
  %s8 = inlined_call_operand.vmem [shape: f32[1,256], index: 8, kind: input, shape index: {}]
  %s9 = inlined_call_operand.hbm [shape: bf16[256,256], index: 9, kind: input, shape index: {}]
  %s10 = inlined_call_operand.vmem [shape: f32[1,256], index: 10, kind: input, shape index: {}]
  %s11 = inlined_call_operand.hbm [shape: bf16[256,512], index: 11, kind: input, shape index: {}]
  %s12 = inlined_call_operand.vmem [shape: f32[1,512], index: 12, kind: input, shape index: {}]
  %s13 = inlined_call_operand.hbm [shape: bf16[512,1024], index: 13, kind: input, shape index: {}]
  %s14 = inlined_call_operand.vmem [shape: f32[1,1024], index: 14, kind: input, shape index: {}]
  %s15 = inlined_call_operand.hbm [shape: bf16[1024,512], index: 15, kind: input, shape index: {}]
  %s16 = inlined_call_operand.vmem [shape: f32[1,512], index: 16, kind: input, shape index: {}]
  %s17 = inlined_call_operand.hbm [shape: f32[8,512], index: 17, kind: output, shape index: {0}]
  %s18 = inlined_call_operand.hbm [shape: f32[8,256], index: 18, kind: output, shape index: {1}]
  %19 = xla_tuple %s17, %s18
  %s20 = sld [smem:[#allocation0]]
  $region118: #{ae_cifar_forward.1} parent=0
    _
  %s22 = ssub.s32 1, %s20
  %s23 = scalar_select 0, %s22, %s20
  $region1: #{ae_cifar_forward.1} parent=0
    #allocation2 [shape = 'u8[1048576]{0}', space=vmem, size = 0x100000, scoped, tag = 'input window, operand 1, single buffered']
    #allocation3 [shape = 's32[1]{0}', space=sflag, size = 0x4, scoped, tag = 'scoped memory for ae_cifar_forward.1']
    #allocation4 [shape = 's32[1]{0}', space=sflag, size = 0x4, scoped, tag = 'scoped memory for ae_cifar_forward.1']
    #allocation5 [shape = 'u8[1048576]{0}', space=vmem, size = 0x100000, scoped, tag = 'input window, operand 3, single buffered']
    #allocation6 [shape = 's32[1]{0}', space=sflag, size = 0x4, scoped, tag = 'scoped memory for ae_cifar_forward.1']
    #allocation7 [shape = 'u8[262144]{0}', space=vmem, size = 0x40000, scoped, tag = 'input window, operand 5, single buffered']
    #allocation8 [shape = 'u8[131072]{0}', space=vmem, size = 0x20000, scoped, tag = 'input window, operand 7, single buffered']
    #allocation9 [shape = 's32[1]{0}', space=sflag, size = 0x4, scoped, tag = 'scoped memory for ae_cifar_forward.1']
    #allocation10 [shape = 'u8[131072]{0}', space=vmem, size = 0x20000, scoped, tag = 'input window, operand 9, single buffered']
    #allocation11 [shape = 'u8[262144]{0}', space=vmem, size = 0x40000, scoped, tag = 'input window, operand 11, single buffered']
    #allocation12 [shape = 's32[1]{0}', space=sflag, size = 0x4, scoped, tag = 'scoped memory for ae_cifar_forward.1']
    #allocation13 [shape = 'u8[1048576]{0}', space=vmem, size = 0x100000, scoped, tag = 'input window, operand 13, single buffered']
    #allocation14 [shape = 'u8[1048576]{0}', space=vmem, size = 0x100000, scoped, tag = 'input window, operand 15, single buffered']
    #allocation15 [shape = 's32[1]{0}', space=sflag, size = 0x4, scoped, tag = 'scoped memory for ae_cifar_forward.1']
    #allocation16 [shape = 'u8[16384]{0}', space=vmem, size = 0x4000, scoped, tag = 'output window, operand 0, single buffered']
    #allocation17 [shape = 'u8[8192]{0}', space=vmem, size = 0x2000, scoped, tag = 'output window, operand 1, single buffered']
    #allocation18 [shape = 's32[1]{0}', space=sflag, size = 0x4, scoped, tag = 'scoped memory for ae_cifar_forward.1']
    %24 = vsyncpa [#allocation3], 0
    %25 = vsyncpa [#allocation6], 0
    %26 = vsyncpa [#allocation9], 0
    %27 = vsyncpa [#allocation12], 0
    %28 = vsyncpa [#allocation15], 0
    %29 = vsyncpa [#allocation4], 0
    %30 = vsyncpa [#allocation18], 0
    // Predicated region
    $region2: #{ae_cifar_forward.1} parent=1 // pred_check
      _
    $region3: #{ae_cifar_forward.1} parent=1 // pred_check_branch
      %32 = sbr.rel (0) target = $region5
    $region4: #{ae_cifar_forward.1} parent=1 // pred_region
      _
    $region5: #{ae_cifar_forward.1} parent=1 // pred_fallthru
      _
    // Predicated region
    $region6: #{ae_cifar_forward.1} parent=1 // pred_check
      _
    $region7: #{ae_cifar_forward.1} parent=1 // pred_check_branch
      %34 = sbr.rel (0) target = $region9
    $region8: #{ae_cifar_forward.1} parent=1 // pred_region
      %36 = vsyncadd [#allocation3], 0
      %s37 = sshll.u32 %s1, 4
      %s38 = int_to_ptr.hbm [resolvable:$true] %s37
      %s39 = sshll.u32 [#allocation2], 4
      %s40 = int_to_ptr.vmem [resolvable:$true] %s39
      %45 = dma.hbm_to_vmem [thread:$0]  %s38, 32768, %s40, [#allocation3], 512, 512, 32
    $region9: #{ae_cifar_forward.1} parent=1 // pred_fallthru
      _
    // Predicated region
    $region10: #{ae_cifar_forward.1} parent=1 // pred_check
      _
    $region11: #{ae_cifar_forward.1} parent=1 // pred_check_branch
      %47 = sbr.rel (0) target = $region13
    $region12: #{ae_cifar_forward.1} parent=1 // pred_region
      _
    $region13: #{ae_cifar_forward.1} parent=1 // pred_fallthru
      _
    // Predicated region
    $region14: #{ae_cifar_forward.1} parent=1 // pred_check
      _
    $region15: #{ae_cifar_forward.1} parent=1 // pred_check_branch
      %49 = sbr.rel (0) target = $region17
    $region16: #{ae_cifar_forward.1} parent=1 // pred_region
      %51 = vsyncadd [#allocation6], 0
      %s52 = sshll.u32 %s3, 4
      %s53 = int_to_ptr.hbm [resolvable:$true] %s52
      %s54 = sshll.u32 [#allocation5], 4
      %s55 = int_to_ptr.vmem [resolvable:$true] %s54
      %60 = dma.hbm_to_vmem [thread:$0]  %s53, 32768, %s55, [#allocation6], 256, 256, 16
    $region17: #{ae_cifar_forward.1} parent=1 // pred_fallthru
      _
    // Predicated region
    $region18: #{ae_cifar_forward.1} parent=1 // pred_check
      _
    $region19: #{ae_cifar_forward.1} parent=1 // pred_check_branch
      %62 = sbr.rel (0) target = $region21
    $region20: #{ae_cifar_forward.1} parent=1 // pred_region
      _
    $region21: #{ae_cifar_forward.1} parent=1 // pred_fallthru
      _
    // Predicated region
    $region22: #{ae_cifar_forward.1} parent=1 // pred_check
      _
    $region23: #{ae_cifar_forward.1} parent=1 // pred_check_branch
      %64 = sbr.rel (0) target = $region25
    $region24: #{ae_cifar_forward.1} parent=1 // pred_region
      %66 = vsyncadd [#allocation6], 0
      %s67 = sshll.u32 %s5, 4
      %s68 = int_to_ptr.hbm [resolvable:$true] %s67
      %s69 = sshll.u32 [#allocation7], 4
      %s70 = int_to_ptr.vmem [resolvable:$true] %s69
      %75 = dma.hbm_to_vmem [thread:$0]  %s68, 8192, %s70, [#allocation6], 128, 128, 8
    $region25: #{ae_cifar_forward.1} parent=1 // pred_fallthru
      _
    // Predicated region
    $region26: #{ae_cifar_forward.1} parent=1 // pred_check
      _
    $region27: #{ae_cifar_forward.1} parent=1 // pred_check_branch
      %77 = sbr.rel (0) target = $region29
    $region28: #{ae_cifar_forward.1} parent=1 // pred_region
      _
    $region29: #{ae_cifar_forward.1} parent=1 // pred_fallthru
      _
    // Predicated region
    $region30: #{ae_cifar_forward.1} parent=1 // pred_check
      _
    $region31: #{ae_cifar_forward.1} parent=1 // pred_check_branch
      %79 = sbr.rel (0) target = $region33
    $region32: #{ae_cifar_forward.1} parent=1 // pred_region
      %81 = vsyncadd [#allocation9], 0
      %s82 = sshll.u32 %s7, 4
      %s83 = int_to_ptr.hbm [resolvable:$true] %s82
      %s84 = sshll.u32 [#allocation8], 4
      %s85 = int_to_ptr.vmem [resolvable:$true] %s84
      %90 = dma.hbm_to_vmem [thread:$0]  %s83, 4096, %s85, [#allocation9], 128, 128, 8
    $region33: #{ae_cifar_forward.1} parent=1 // pred_fallthru
      _
    // Predicated region
    $region34: #{ae_cifar_forward.1} parent=1 // pred_check
      _
    $region35: #{ae_cifar_forward.1} parent=1 // pred_check_branch
      %92 = sbr.rel (0) target = $region37
    $region36: #{ae_cifar_forward.1} parent=1 // pred_region
      _
    $region37: #{ae_cifar_forward.1} parent=1 // pred_fallthru
      _
    // Predicated region
    $region38: #{ae_cifar_forward.1} parent=1 // pred_check
      _
    $region39: #{ae_cifar_forward.1} parent=1 // pred_check_branch
      %94 = sbr.rel (0) target = $region41
    $region40: #{ae_cifar_forward.1} parent=1 // pred_region
      %96 = vsyncadd [#allocation9], 0
      %s97 = sshll.u32 %s9, 4
      %s98 = int_to_ptr.hbm [resolvable:$true] %s97
      %s99 = sshll.u32 [#allocation10], 4
      %s100 = int_to_ptr.vmem [resolvable:$true] %s99
      %105 = dma.hbm_to_vmem [thread:$0]  %s98, 4096, %s100, [#allocation9], 128, 128, 8
    $region41: #{ae_cifar_forward.1} parent=1 // pred_fallthru
      _
    // Predicated region
    $region42: #{ae_cifar_forward.1} parent=1 // pred_check
      _
    $region43: #{ae_cifar_forward.1} parent=1 // pred_check_branch
      %107 = sbr.rel (0) target = $region45
    $region44: #{ae_cifar_forward.1} parent=1 // pred_region
      _
    $region45: #{ae_cifar_forward.1} parent=1 // pred_fallthru
      _
    // Predicated region
    $region46: #{ae_cifar_forward.1} parent=1 // pred_check
      _
    $region47: #{ae_cifar_forward.1} parent=1 // pred_check_branch
      %109 = sbr.rel (0) target = $region49
    $region48: #{ae_cifar_forward.1} parent=1 // pred_region
      %111 = vsyncadd [#allocation12], 0
      %s112 = sshll.u32 %s11, 4
      %s113 = int_to_ptr.hbm [resolvable:$true] %s112
      %s114 = sshll.u32 [#allocation11], 4
      %s115 = int_to_ptr.vmem [resolvable:$true] %s114
      %120 = dma.hbm_to_vmem [thread:$0]  %s113, 8192, %s115, [#allocation12], 256, 256, 16
    $region49: #{ae_cifar_forward.1} parent=1 // pred_fallthru
      _
    // Predicated region
    $region50: #{ae_cifar_forward.1} parent=1 // pred_check
      _
    $region51: #{ae_cifar_forward.1} parent=1 // pred_check_branch
      %122 = sbr.rel (0) target = $region53
    $region52: #{ae_cifar_forward.1} parent=1 // pred_region
      _
    $region53: #{ae_cifar_forward.1} parent=1 // pred_fallthru
      _
    // Predicated region
    $region54: #{ae_cifar_forward.1} parent=1 // pred_check
      _
    $region55: #{ae_cifar_forward.1} parent=1 // pred_check_branch
      %124 = sbr.rel (0) target = $region57
    $region56: #{ae_cifar_forward.1} parent=1 // pred_region
      %126 = vsyncadd [#allocation12], 0
      %s127 = sshll.u32 %s13, 4
      %s128 = int_to_ptr.hbm [resolvable:$true] %s127
      %s129 = sshll.u32 [#allocation13], 4
      %s130 = int_to_ptr.vmem [resolvable:$true] %s129
      %135 = dma.hbm_to_vmem [thread:$0]  %s128, 32768, %s130, [#allocation12], 512, 512, 32
    $region57: #{ae_cifar_forward.1} parent=1 // pred_fallthru
      _
    // Predicated region
    $region58: #{ae_cifar_forward.1} parent=1 // pred_check
      _
    $region59: #{ae_cifar_forward.1} parent=1 // pred_check_branch
      %137 = sbr.rel (0) target = $region61
    $region60: #{ae_cifar_forward.1} parent=1 // pred_region
      _
    $region61: #{ae_cifar_forward.1} parent=1 // pred_fallthru
      _
    // Predicated region
    $region62: #{ae_cifar_forward.1} parent=1 // pred_check
      _
    $region63: #{ae_cifar_forward.1} parent=1 // pred_check_branch
      %139 = sbr.rel (0) target = $region65
    $region64: #{ae_cifar_forward.1} parent=1 // pred_region
      %141 = vsyncadd [#allocation15], 0
      %s142 = sshll.u32 %s15, 4
      %s143 = int_to_ptr.hbm [resolvable:$true] %s142
      %s144 = sshll.u32 [#allocation14], 4
      %s145 = int_to_ptr.vmem [resolvable:$true] %s144
      %150 = dma.hbm_to_vmem [thread:$0]  %s143, 32768, %s145, [#allocation15], 256, 256, 16
    $region65: #{ae_cifar_forward.1} parent=1 // pred_fallthru
      _
    // Predicated region
    $region66: #{ae_cifar_forward.1} parent=1 // pred_check
      _
    $region67: #{ae_cifar_forward.1} parent=1 // pred_check_branch
      %152 = sbr.rel (0) target = $region69
    $region68: #{ae_cifar_forward.1} parent=1 // pred_region
      _
    $region69: #{ae_cifar_forward.1} parent=1 // pred_fallthru
      _
    // Predicated region
    $region70: #{ae_cifar_forward.1} parent=1 // pred_check
      _
    $region71: #{ae_cifar_forward.1} parent=1 // pred_check_branch
      %154 = sbr.rel (0) target = $region73
    $region72: #{ae_cifar_forward.1} parent=1 // pred_region
      %156 = dma.done [#allocation3], 32768
    $region73: #{ae_cifar_forward.1} parent=1 // pred_fallthru
      _
    // Predicated region
    $region74: #{ae_cifar_forward.1} parent=1 // pred_check
      _
    $region75: #{ae_cifar_forward.1} parent=1 // pred_check_branch
      %158 = sbr.rel (0) target = $region77
    $region76: #{ae_cifar_forward.1} parent=1 // pred_region
      %160 = dma.done [#allocation6], 32768
    $region77: #{ae_cifar_forward.1} parent=1 // pred_fallthru
      _
    // Predicated region
    $region78: #{ae_cifar_forward.1} parent=1 // pred_check
      _
    $region79: #{ae_cifar_forward.1} parent=1 // pred_check_branch
      %162 = sbr.rel (0) target = $region81
    $region80: #{ae_cifar_forward.1} parent=1 // pred_region
      %164 = dma.done [#allocation6], 8192
    $region81: #{ae_cifar_forward.1} parent=1 // pred_fallthru
      _
    // Predicated region
    $region82: #{ae_cifar_forward.1} parent=1 // pred_check
      _
    $region83: #{ae_cifar_forward.1} parent=1 // pred_check_branch
      %166 = sbr.rel (0) target = $region85
    $region84: #{ae_cifar_forward.1} parent=1 // pred_region
      %168 = dma.done [#allocation9], 4096
    $region85: #{ae_cifar_forward.1} parent=1 // pred_fallthru
      _
    // Predicated region
    $region86: #{ae_cifar_forward.1} parent=1 // pred_check
      _
    $region87: #{ae_cifar_forward.1} parent=1 // pred_check_branch
      %170 = sbr.rel (0) target = $region89
    $region88: #{ae_cifar_forward.1} parent=1 // pred_region
      %172 = dma.done [#allocation9], 4096
    $region89: #{ae_cifar_forward.1} parent=1 // pred_fallthru
      _
    // Predicated region
    $region90: #{ae_cifar_forward.1} parent=1 // pred_check
      _
    $region91: #{ae_cifar_forward.1} parent=1 // pred_check_branch
      %174 = sbr.rel (0) target = $region93
    $region92: #{ae_cifar_forward.1} parent=1 // pred_region
      %176 = dma.done [#allocation12], 8192
    $region93: #{ae_cifar_forward.1} parent=1 // pred_fallthru
      _
    // Predicated region
    $region94: #{ae_cifar_forward.1} parent=1 // pred_check
      _
    $region95: #{ae_cifar_forward.1} parent=1 // pred_check_branch
      %178 = sbr.rel (0) target = $region97
    $region96: #{ae_cifar_forward.1} parent=1 // pred_region
      %180 = dma.done [#allocation12], 32768
    $region97: #{ae_cifar_forward.1} parent=1 // pred_fallthru
      _
    // Predicated region
    $region98: #{ae_cifar_forward.1} parent=1 // pred_check
      _
    $region99: #{ae_cifar_forward.1} parent=1 // pred_check_branch
      %182 = sbr.rel (0) target = $region101
    $region100: #{ae_cifar_forward.1} parent=1 // pred_region
      %184 = dma.done [#allocation15], 32768
    $region101: #{ae_cifar_forward.1} parent=1 // pred_fallthru
      _
    %v185 = vld [vmem:[%s0] sm:$0xff]
    %v186 = vld [vmem:[%s0 + $0x8] sm:$0xff]
    %v187 = vld [vmem:[#allocation2] sm:$0xff]
    %v188 = vld [vmem:[#allocation2 + $0x8] sm:$0xff]
    %v189 = vld [vmem:[#allocation2 + $0x10] sm:$0xff]
    %v190 = vld [vmem:[#allocation2 + $0x18] sm:$0xff]
    %v191 = vld [vmem:[#allocation2 + $0x20] sm:$0xff]
    %v192 = vld [vmem:[#allocation2 + $0x28] sm:$0xff]
    %v193 = vld [vmem:[#allocation2 + $0x30] sm:$0xff]
    %v194 = vld [vmem:[#allocation2 + $0x38] sm:$0xff]
    %v195 = vld [vmem:[#allocation2 + $0x40] sm:$0xff]
    %v196 = vld [vmem:[#allocation2 + $0x48] sm:$0xff]
    %v197 = vld [vmem:[#allocation2 + $0x50] sm:$0xff]
    %v198 = vld [vmem:[#allocation2 + $0x58] sm:$0xff]
    %v199 = vld [vmem:[#allocation2 + $0x60] sm:$0xff]
    %v200 = vld [vmem:[#allocation2 + $0x68] sm:$0xff]
    %v201 = vld [vmem:[#allocation2 + $0x70] sm:$0xff]
    %v202 = vld [vmem:[#allocation2 + $0x78] sm:$0xff]
    %v203 = vld [vmem:[#allocation2 + $0x80] sm:$0xff]
    %v204 = vld [vmem:[#allocation2 + $0x88] sm:$0xff]
    %v205 = vld [vmem:[#allocation2 + $0x90] sm:$0xff]
    %v206 = vld [vmem:[#allocation2 + $0x98] sm:$0xff]
    %v207 = vld [vmem:[#allocation2 + $0xa0] sm:$0xff]
    %v208 = vld [vmem:[#allocation2 + $0xa8] sm:$0xff]
    %v209 = vld [vmem:[#allocation2 + $0xb0] sm:$0xff]
    %v210 = vld [vmem:[#allocation2 + $0xb8] sm:$0xff]
    %v211 = vld [vmem:[#allocation2 + $0xc0] sm:$0xff]
    %v212 = vld [vmem:[#allocation2 + $0xc8] sm:$0xff]
    %v213 = vld [vmem:[#allocation2 + $0xd0] sm:$0xff]
    %v214 = vld [vmem:[#allocation2 + $0xd8] sm:$0xff]
    %v215 = vld [vmem:[#allocation2 + $0xe0] sm:$0xff]
    %v216 = vld [vmem:[#allocation2 + $0xe8] sm:$0xff]
    %v217 = vld [vmem:[#allocation2 + $0xf0] sm:$0xff]
    %v218 = vld [vmem:[#allocation2 + $0xf8] sm:$0xff]
    %v219 = vld [vmem:[#allocation2 + $0x100] sm:$0xff]
    %v220 = vld [vmem:[#allocation2 + $0x108] sm:$0xff]
    %v221 = vld [vmem:[#allocation2 + $0x110] sm:$0xff]
    %v222 = vld [vmem:[#allocation2 + $0x118] sm:$0xff]
    %v223 = vld [vmem:[#allocation2 + $0x120] sm:$0xff]
    %v224 = vld [vmem:[#allocation2 + $0x128] sm:$0xff]
    %v225 = vld [vmem:[#allocation2 + $0x130] sm:$0xff]
    %v226 = vld [vmem:[#allocation2 + $0x138] sm:$0xff]
    %v227 = vld [vmem:[#allocation2 + $0x140] sm:$0xff]
    %v228 = vld [vmem:[#allocation2 + $0x148] sm:$0xff]
    %v229 = vld [vmem:[#allocation2 + $0x150] sm:$0xff]
    %v230 = vld [vmem:[#allocation2 + $0x158] sm:$0xff]
    %v231 = vld [vmem:[#allocation2 + $0x160] sm:$0xff]
    %v232 = vld [vmem:[#allocation2 + $0x168] sm:$0xff]
    %v233 = vld [vmem:[#allocation2 + $0x170] sm:$0xff]
    %v234 = vld [vmem:[#allocation2 + $0x178] sm:$0xff]
    %v235 = vld [vmem:[#allocation2 + $0x180] sm:$0xff]
    %v236 = vld [vmem:[#allocation2 + $0x188] sm:$0xff]
    %v237 = vld [vmem:[#allocation2 + $0x190] sm:$0xff]
    %v238 = vld [vmem:[#allocation2 + $0x198] sm:$0xff]
    %v239 = vld [vmem:[#allocation2 + $0x1a0] sm:$0xff]
    %v240 = vld [vmem:[#allocation2 + $0x1a8] sm:$0xff]
    %v241 = vld [vmem:[#allocation2 + $0x1b0] sm:$0xff]
    %v242 = vld [vmem:[#allocation2 + $0x1b8] sm:$0xff]
    %v243 = vld [vmem:[#allocation2 + $0x1c0] sm:$0xff]
    %v244 = vld [vmem:[#allocation2 + $0x1c8] sm:$0xff]
    %v245 = vld [vmem:[#allocation2 + $0x1d0] sm:$0xff]
    %v246 = vld [vmem:[#allocation2 + $0x1d8] sm:$0xff]
    %v247 = vld [vmem:[#allocation2 + $0x1e0] sm:$0xff]
    %v248 = vld [vmem:[#allocation2 + $0x1e8] sm:$0xff]
    %v249 = vld [vmem:[#allocation2 + $0x1f0] sm:$0xff]
    %v250 = vld [vmem:[#allocation2 + $0x1f8] sm:$0xff]
    %v251 = vld [vmem:[#allocation2 + $0x200] sm:$0xff]
    %v252 = vld [vmem:[#allocation2 + $0x208] sm:$0xff]
    %v253 = vld [vmem:[#allocation2 + $0x210] sm:$0xff]
    %v254 = vld [vmem:[#allocation2 + $0x218] sm:$0xff]
    %v255 = vld [vmem:[#allocation2 + $0x220] sm:$0xff]
    %v256 = vld [vmem:[#allocation2 + $0x228] sm:$0xff]
    %v257 = vld [vmem:[#allocation2 + $0x230] sm:$0xff]
    %v258 = vld [vmem:[#allocation2 + $0x238] sm:$0xff]
    %v259 = vld [vmem:[#allocation2 + $0x240] sm:$0xff]
    %v260 = vld [vmem:[#allocation2 + $0x248] sm:$0xff]
    %v261 = vld [vmem:[#allocation2 + $0x250] sm:$0xff]
    %v262 = vld [vmem:[#allocation2 + $0x258] sm:$0xff]
    %v263 = vld [vmem:[#allocation2 + $0x260] sm:$0xff]
    %v264 = vld [vmem:[#allocation2 + $0x268] sm:$0xff]
    %v265 = vld [vmem:[#allocation2 + $0x270] sm:$0xff]
    %v266 = vld [vmem:[#allocation2 + $0x278] sm:$0xff]
    %v267 = vld [vmem:[#allocation2 + $0x280] sm:$0xff]
    %v268 = vld [vmem:[#allocation2 + $0x288] sm:$0xff]
    %v269 = vld [vmem:[#allocation2 + $0x290] sm:$0xff]
    %v270 = vld [vmem:[#allocation2 + $0x298] sm:$0xff]
    %v271 = vld [vmem:[#allocation2 + $0x2a0] sm:$0xff]
    %v272 = vld [vmem:[#allocation2 + $0x2a8] sm:$0xff]
    %v273 = vld [vmem:[#allocation2 + $0x2b0] sm:$0xff]
    %v274 = vld [vmem:[#allocation2 + $0x2b8] sm:$0xff]
    %v275 = vld [vmem:[#allocation2 + $0x2c0] sm:$0xff]
    %v276 = vld [vmem:[#allocation2 + $0x2c8] sm:$0xff]
    %v277 = vld [vmem:[#allocation2 + $0x2d0] sm:$0xff]
    %v278 = vld [vmem:[#allocation2 + $0x2d8] sm:$0xff]
    %v279 = vld [vmem:[#allocation2 + $0x2e0] sm:$0xff]
    %v280 = vld [vmem:[#allocation2 + $0x2e8] sm:$0xff]
    %v281 = vld [vmem:[#allocation2 + $0x2f0] sm:$0xff]
    %v282 = vld [vmem:[#allocation2 + $0x2f8] sm:$0xff]
    %v283 = vld [vmem:[#allocation2 + $0x300] sm:$0xff]
    %v284 = vld [vmem:[#allocation2 + $0x308] sm:$0xff]
    %v285 = vld [vmem:[#allocation2 + $0x310] sm:$0xff]
    %v286 = vld [vmem:[#allocation2 + $0x318] sm:$0xff]
    %v287 = vld [vmem:[#allocation2 + $0x320] sm:$0xff]
    %v288 = vld [vmem:[#allocation2 + $0x328] sm:$0xff]
    %v289 = vld [vmem:[#allocation2 + $0x330] sm:$0xff]
    %v290 = vld [vmem:[#allocation2 + $0x338] sm:$0xff]
    %v291 = vld [vmem:[#allocation2 + $0x340] sm:$0xff]
    %v292 = vld [vmem:[#allocation2 + $0x348] sm:$0xff]
    %v293 = vld [vmem:[#allocation2 + $0x350] sm:$0xff]
    %v294 = vld [vmem:[#allocation2 + $0x358] sm:$0xff]
    %v295 = vld [vmem:[#allocation2 + $0x360] sm:$0xff]
    %v296 = vld [vmem:[#allocation2 + $0x368] sm:$0xff]
    %v297 = vld [vmem:[#allocation2 + $0x370] sm:$0xff]
    %v298 = vld [vmem:[#allocation2 + $0x378] sm:$0xff]
    %v299 = vld [vmem:[#allocation2 + $0x380] sm:$0xff]
    %v300 = vld [vmem:[#allocation2 + $0x388] sm:$0xff]
    %v301 = vld [vmem:[#allocation2 + $0x390] sm:$0xff]
    %v302 = vld [vmem:[#allocation2 + $0x398] sm:$0xff]
    %v303 = vld [vmem:[#allocation2 + $0x3a0] sm:$0xff]
    %v304 = vld [vmem:[#allocation2 + $0x3a8] sm:$0xff]
    %v305 = vld [vmem:[#allocation2 + $0x3b0] sm:$0xff]
    %v306 = vld [vmem:[#allocation2 + $0x3b8] sm:$0xff]
    %v307 = vld [vmem:[#allocation2 + $0x3c0] sm:$0xff]
    %v308 = vld [vmem:[#allocation2 + $0x3c8] sm:$0xff]
    %v309 = vld [vmem:[#allocation2 + $0x3d0] sm:$0xff]
    %v310 = vld [vmem:[#allocation2 + $0x3d8] sm:$0xff]
    %v311 = vld [vmem:[#allocation2 + $0x3e0] sm:$0xff]
    %v312 = vld [vmem:[#allocation2 + $0x3e8] sm:$0xff]
    %v313 = vld [vmem:[#allocation2 + $0x3f0] sm:$0xff]
    %v314 = vld [vmem:[#allocation2 + $0x3f8] sm:$0xff]
    %v315 = vld [vmem:[#allocation2 + $0x400] sm:$0xff]
    %v316 = vld [vmem:[#allocation2 + $0x408] sm:$0xff]
    %v317 = vld [vmem:[#allocation2 + $0x410] sm:$0xff]
    %v318 = vld [vmem:[#allocation2 + $0x418] sm:$0xff]
    %v319 = vld [vmem:[#allocation2 + $0x420] sm:$0xff]
    %v320 = vld [vmem:[#allocation2 + $0x428] sm:$0xff]
    %v321 = vld [vmem:[#allocation2 + $0x430] sm:$0xff]
    %v322 = vld [vmem:[#allocation2 + $0x438] sm:$0xff]
    %v323 = vld [vmem:[#allocation2 + $0x440] sm:$0xff]
    %v324 = vld [vmem:[#allocation2 + $0x448] sm:$0xff]
    %v325 = vld [vmem:[#allocation2 + $0x450] sm:$0xff]
    %v326 = vld [vmem:[#allocation2 + $0x458] sm:$0xff]
    %v327 = vld [vmem:[#allocation2 + $0x460] sm:$0xff]
    %v328 = vld [vmem:[#allocation2 + $0x468] sm:$0xff]
    %v329 = vld [vmem:[#allocation2 + $0x470] sm:$0xff]
    %v330 = vld [vmem:[#allocation2 + $0x478] sm:$0xff]
    %v331 = vld [vmem:[#allocation2 + $0x480] sm:$0xff]
    %v332 = vld [vmem:[#allocation2 + $0x488] sm:$0xff]
    %v333 = vld [vmem:[#allocation2 + $0x490] sm:$0xff]
    %v334 = vld [vmem:[#allocation2 + $0x498] sm:$0xff]
    %v335 = vld [vmem:[#allocation2 + $0x4a0] sm:$0xff]
    %v336 = vld [vmem:[#allocation2 + $0x4a8] sm:$0xff]
    %v337 = vld [vmem:[#allocation2 + $0x4b0] sm:$0xff]
    %v338 = vld [vmem:[#allocation2 + $0x4b8] sm:$0xff]
    %v339 = vld [vmem:[#allocation2 + $0x4c0] sm:$0xff]
    %v340 = vld [vmem:[#allocation2 + $0x4c8] sm:$0xff]
    %v341 = vld [vmem:[#allocation2 + $0x4d0] sm:$0xff]
    %v342 = vld [vmem:[#allocation2 + $0x4d8] sm:$0xff]
    %v343 = vld [vmem:[#allocation2 + $0x4e0] sm:$0xff]
    %v344 = vld [vmem:[#allocation2 + $0x4e8] sm:$0xff]
    %v345 = vld [vmem:[#allocation2 + $0x4f0] sm:$0xff]
    %v346 = vld [vmem:[#allocation2 + $0x4f8] sm:$0xff]
    %v347 = vld [vmem:[#allocation2 + $0x500] sm:$0xff]
    %v348 = vld [vmem:[#allocation2 + $0x508] sm:$0xff]
    %v349 = vld [vmem:[#allocation2 + $0x510] sm:$0xff]
    %v350 = vld [vmem:[#allocation2 + $0x518] sm:$0xff]
    %v351 = vld [vmem:[#allocation2 + $0x520] sm:$0xff]
    %v352 = vld [vmem:[#allocation2 + $0x528] sm:$0xff]
    %v353 = vld [vmem:[#allocation2 + $0x530] sm:$0xff]
    %v354 = vld [vmem:[#allocation2 + $0x538] sm:$0xff]
    %v355 = vld [vmem:[#allocation2 + $0x540] sm:$0xff]
    %v356 = vld [vmem:[#allocation2 + $0x548] sm:$0xff]
    %v357 = vld [vmem:[#allocation2 + $0x550] sm:$0xff]
    %v358 = vld [vmem:[#allocation2 + $0x558] sm:$0xff]
    %v359 = vld [vmem:[#allocation2 + $0x560] sm:$0xff]
    %v360 = vld [vmem:[#allocation2 + $0x568] sm:$0xff]
    %v361 = vld [vmem:[#allocation2 + $0x570] sm:$0xff]
    %v362 = vld [vmem:[#allocation2 + $0x578] sm:$0xff]
    %v363 = vld [vmem:[#allocation2 + $0x580] sm:$0xff]
    %v364 = vld [vmem:[#allocation2 + $0x588] sm:$0xff]
    %v365 = vld [vmem:[#allocation2 + $0x590] sm:$0xff]
    %v366 = vld [vmem:[#allocation2 + $0x598] sm:$0xff]
    %v367 = vld [vmem:[#allocation2 + $0x5a0] sm:$0xff]
    %v368 = vld [vmem:[#allocation2 + $0x5a8] sm:$0xff]
    %v369 = vld [vmem:[#allocation2 + $0x5b0] sm:$0xff]
    %v370 = vld [vmem:[#allocation2 + $0x5b8] sm:$0xff]
    %v371 = vld [vmem:[#allocation2 + $0x5c0] sm:$0xff]
    %v372 = vld [vmem:[#allocation2 + $0x5c8] sm:$0xff]
    %v373 = vld [vmem:[#allocation2 + $0x5d0] sm:$0xff]
    %v374 = vld [vmem:[#allocation2 + $0x5d8] sm:$0xff]
    %v375 = vld [vmem:[#allocation2 + $0x5e0] sm:$0xff]
    %v376 = vld [vmem:[#allocation2 + $0x5e8] sm:$0xff]
    %v377 = vld [vmem:[#allocation2 + $0x5f0] sm:$0xff]
    %v378 = vld [vmem:[#allocation2 + $0x5f8] sm:$0xff]
    %v379 = vld [vmem:[#allocation2 + $0x600] sm:$0xff]
    %v380 = vld [vmem:[#allocation2 + $0x608] sm:$0xff]
    %v381 = vld [vmem:[#allocation2 + $0x610] sm:$0xff]
    %v382 = vld [vmem:[#allocation2 + $0x618] sm:$0xff]
    %v383 = vld [vmem:[#allocation2 + $0x620] sm:$0xff]
    %v384 = vld [vmem:[#allocation2 + $0x628] sm:$0xff]
    %v385 = vld [vmem:[#allocation2 + $0x630] sm:$0xff]
    %v386 = vld [vmem:[#allocation2 + $0x638] sm:$0xff]
    %v387 = vld [vmem:[#allocation2 + $0x640] sm:$0xff]
    %v388 = vld [vmem:[#allocation2 + $0x648] sm:$0xff]
    %v389 = vld [vmem:[#allocation2 + $0x650] sm:$0xff]
    %v390 = vld [vmem:[#allocation2 + $0x658] sm:$0xff]
    %v391 = vld [vmem:[#allocation2 + $0x660] sm:$0xff]
    %v392 = vld [vmem:[#allocation2 + $0x668] sm:$0xff]
    %v393 = vld [vmem:[#allocation2 + $0x670] sm:$0xff]
    %v394 = vld [vmem:[#allocation2 + $0x678] sm:$0xff]
    %v395 = vld [vmem:[#allocation2 + $0x680] sm:$0xff]
    %v396 = vld [vmem:[#allocation2 + $0x688] sm:$0xff]
    %v397 = vld [vmem:[#allocation2 + $0x690] sm:$0xff]
    %v398 = vld [vmem:[#allocation2 + $0x698] sm:$0xff]
    %v399 = vld [vmem:[#allocation2 + $0x6a0] sm:$0xff]
    %v400 = vld [vmem:[#allocation2 + $0x6a8] sm:$0xff]
    %v401 = vld [vmem:[#allocation2 + $0x6b0] sm:$0xff]
    %v402 = vld [vmem:[#allocation2 + $0x6b8] sm:$0xff]
    %v403 = vld [vmem:[#allocation2 + $0x6c0] sm:$0xff]
    %v404 = vld [vmem:[#allocation2 + $0x6c8] sm:$0xff]
    %v405 = vld [vmem:[#allocation2 + $0x6d0] sm:$0xff]
    %v406 = vld [vmem:[#allocation2 + $0x6d8] sm:$0xff]
    %v407 = vld [vmem:[#allocation2 + $0x6e0] sm:$0xff]
    %v408 = vld [vmem:[#allocation2 + $0x6e8] sm:$0xff]
    %v409 = vld [vmem:[#allocation2 + $0x6f0] sm:$0xff]
    %v410 = vld [vmem:[#allocation2 + $0x6f8] sm:$0xff]
    %v411 = vld [vmem:[#allocation2 + $0x700] sm:$0xff]
    %v412 = vld [vmem:[#allocation2 + $0x708] sm:$0xff]
    %v413 = vld [vmem:[#allocation2 + $0x710] sm:$0xff]
    %v414 = vld [vmem:[#allocation2 + $0x718] sm:$0xff]
    %v415 = vld [vmem:[#allocation2 + $0x720] sm:$0xff]
    %v416 = vld [vmem:[#allocation2 + $0x728] sm:$0xff]
    %v417 = vld [vmem:[#allocation2 + $0x730] sm:$0xff]
    %v418 = vld [vmem:[#allocation2 + $0x738] sm:$0xff]
    %v419 = vld [vmem:[#allocation2 + $0x740] sm:$0xff]
    %v420 = vld [vmem:[#allocation2 + $0x748] sm:$0xff]
    %v421 = vld [vmem:[#allocation2 + $0x750] sm:$0xff]
    %v422 = vld [vmem:[#allocation2 + $0x758] sm:$0xff]
    %v423 = vld [vmem:[#allocation2 + $0x760] sm:$0xff]
    %v424 = vld [vmem:[#allocation2 + $0x768] sm:$0xff]
    %v425 = vld [vmem:[#allocation2 + $0x770] sm:$0xff]
    %v426 = vld [vmem:[#allocation2 + $0x778] sm:$0xff]
    %v427 = vld [vmem:[#allocation2 + $0x780] sm:$0xff]
    %v428 = vld [vmem:[#allocation2 + $0x788] sm:$0xff]
    %v429 = vld [vmem:[#allocation2 + $0x790] sm:$0xff]
    %v430 = vld [vmem:[#allocation2 + $0x798] sm:$0xff]
    %v431 = vld [vmem:[#allocation2 + $0x7a0] sm:$0xff]
    %v432 = vld [vmem:[#allocation2 + $0x7a8] sm:$0xff]
    %v433 = vld [vmem:[#allocation2 + $0x7b0] sm:$0xff]
    %v434 = vld [vmem:[#allocation2 + $0x7b8] sm:$0xff]
    %v435 = vld [vmem:[#allocation2 + $0x7c0] sm:$0xff]
    %v436 = vld [vmem:[#allocation2 + $0x7c8] sm:$0xff]
    %v437 = vld [vmem:[#allocation2 + $0x7d0] sm:$0xff]
    %v438 = vld [vmem:[#allocation2 + $0x7d8] sm:$0xff]
    %v439 = vld [vmem:[#allocation2 + $0x7e0] sm:$0xff]
    %v440 = vld [vmem:[#allocation2 + $0x7e8] sm:$0xff]
    %v441 = vld [vmem:[#allocation2 + $0x7f0] sm:$0xff]
    %v442 = vld [vmem:[#allocation2 + $0x7f8] sm:$0xff]
    %v443 = vld [vmem:[%s2] sm:$0xff]
    %v445 = vperm.slane %v443, 0
    %v446 = vperm.slane %v443, 1
    %v447 = vperm.slane %v443, 2
    %v448 = vperm.slane %v443, 3
    %v449 = vperm.slane %v443, 4
    %v450 = vperm.slane %v443, 5
    %v451 = vperm.slane %v443, 6
    %v452 = vperm.slane %v443, 7
    %v463 = vunpack.c.l.b16 %v185
    %v464 = vunpack.c.h.b16 %v185
    %v465 = vunpack.c.l.b16 %v186
    %v466 = vunpack.c.h.b16 %v186
    %v467 = vpack.c.b16 %v463, %v463
    %v468 = vpack.c.b16 %v464, %v464
    %v469 = vpack.c.b16 %v465, %v465
    %v470 = vpack.c.b16 %v466, %v466
    %v731 = vunpack.c.l.b16 %v187
    %v732 = vunpack.c.h.b16 %v187
    %v733 = vunpack.c.l.b16 %v188
    %v734 = vunpack.c.h.b16 %v188
    %v735 = vunpack.c.l.b16 %v189
    %v736 = vunpack.c.h.b16 %v189
    %v737 = vunpack.c.l.b16 %v190
    %v738 = vunpack.c.h.b16 %v190
    %v739 = vunpack.c.l.b16 %v191
    %v740 = vunpack.c.h.b16 %v191
    %v741 = vunpack.c.l.b16 %v192
    %v742 = vunpack.c.h.b16 %v192
    %v743 = vunpack.c.l.b16 %v193
    %v744 = vunpack.c.h.b16 %v193
    %v745 = vunpack.c.l.b16 %v194
    %v746 = vunpack.c.h.b16 %v194
    %v747 = vunpack.c.l.b16 %v195
    %v748 = vunpack.c.h.b16 %v195
    %v749 = vunpack.c.l.b16 %v196
    %v750 = vunpack.c.h.b16 %v196
    %v751 = vunpack.c.l.b16 %v197
    %v752 = vunpack.c.h.b16 %v197
    %v753 = vunpack.c.l.b16 %v198
    %v754 = vunpack.c.h.b16 %v198
    %v755 = vunpack.c.l.b16 %v199
    %v756 = vunpack.c.h.b16 %v199
    %v757 = vunpack.c.l.b16 %v200
    %v758 = vunpack.c.h.b16 %v200
    %v759 = vunpack.c.l.b16 %v201
    %v760 = vunpack.c.h.b16 %v201
    %v761 = vunpack.c.l.b16 %v202
    %v762 = vunpack.c.h.b16 %v202
    %v763 = vunpack.c.l.b16 %v203
    %v764 = vunpack.c.h.b16 %v203
    %v765 = vunpack.c.l.b16 %v204
    %v766 = vunpack.c.h.b16 %v204
    %v767 = vunpack.c.l.b16 %v205
    %v768 = vunpack.c.h.b16 %v205
    %v769 = vunpack.c.l.b16 %v206
    %v770 = vunpack.c.h.b16 %v206
    %v771 = vunpack.c.l.b16 %v207
    %v772 = vunpack.c.h.b16 %v207
    %v773 = vunpack.c.l.b16 %v208
    %v774 = vunpack.c.h.b16 %v208
    %v775 = vunpack.c.l.b16 %v209
    %v776 = vunpack.c.h.b16 %v209
    %v777 = vunpack.c.l.b16 %v210
    %v778 = vunpack.c.h.b16 %v210
    %v779 = vunpack.c.l.b16 %v211
    %v780 = vunpack.c.h.b16 %v211
    %v781 = vunpack.c.l.b16 %v212
    %v782 = vunpack.c.h.b16 %v212
    %v783 = vunpack.c.l.b16 %v213
    %v784 = vunpack.c.h.b16 %v213
    %v785 = vunpack.c.l.b16 %v214
    %v786 = vunpack.c.h.b16 %v214
    %v787 = vunpack.c.l.b16 %v215
    %v788 = vunpack.c.h.b16 %v215
    %v789 = vunpack.c.l.b16 %v216
    %v790 = vunpack.c.h.b16 %v216
    %v791 = vunpack.c.l.b16 %v217
    %v792 = vunpack.c.h.b16 %v217
    %v793 = vunpack.c.l.b16 %v218
    %v794 = vunpack.c.h.b16 %v218
    %v795 = vunpack.c.l.b16 %v219
    %v796 = vunpack.c.h.b16 %v219
    %v797 = vunpack.c.l.b16 %v220
    %v798 = vunpack.c.h.b16 %v220
    %v799 = vunpack.c.l.b16 %v221
    %v800 = vunpack.c.h.b16 %v221
    %v801 = vunpack.c.l.b16 %v222
    %v802 = vunpack.c.h.b16 %v222
    %v803 = vunpack.c.l.b16 %v223
    %v804 = vunpack.c.h.b16 %v223
    %v805 = vunpack.c.l.b16 %v224
    %v806 = vunpack.c.h.b16 %v224
    %v807 = vunpack.c.l.b16 %v225
    %v808 = vunpack.c.h.b16 %v225
    %v809 = vunpack.c.l.b16 %v226
    %v810 = vunpack.c.h.b16 %v226
    %v811 = vunpack.c.l.b16 %v227
    %v812 = vunpack.c.h.b16 %v227
    %v813 = vunpack.c.l.b16 %v228
    %v814 = vunpack.c.h.b16 %v228
    %v815 = vunpack.c.l.b16 %v229
    %v816 = vunpack.c.h.b16 %v229
    %v817 = vunpack.c.l.b16 %v230
    %v818 = vunpack.c.h.b16 %v230
    %v819 = vunpack.c.l.b16 %v231
    %v820 = vunpack.c.h.b16 %v231
    %v821 = vunpack.c.l.b16 %v232
    %v822 = vunpack.c.h.b16 %v232
    %v823 = vunpack.c.l.b16 %v233
    %v824 = vunpack.c.h.b16 %v233
    %v825 = vunpack.c.l.b16 %v234
    %v826 = vunpack.c.h.b16 %v234
    %v827 = vunpack.c.l.b16 %v235
    %v828 = vunpack.c.h.b16 %v235
    %v829 = vunpack.c.l.b16 %v236
    %v830 = vunpack.c.h.b16 %v236
    %v831 = vunpack.c.l.b16 %v237
    %v832 = vunpack.c.h.b16 %v237
    %v833 = vunpack.c.l.b16 %v238
    %v834 = vunpack.c.h.b16 %v238
    %v835 = vunpack.c.l.b16 %v239
    %v836 = vunpack.c.h.b16 %v239
    %v837 = vunpack.c.l.b16 %v240
    %v838 = vunpack.c.h.b16 %v240
    %v839 = vunpack.c.l.b16 %v241
    %v840 = vunpack.c.h.b16 %v241
    %v841 = vunpack.c.l.b16 %v242
    %v842 = vunpack.c.h.b16 %v242
    %v843 = vunpack.c.l.b16 %v243
    %v844 = vunpack.c.h.b16 %v243
    %v845 = vunpack.c.l.b16 %v244
    %v846 = vunpack.c.h.b16 %v244
    %v847 = vunpack.c.l.b16 %v245
    %v848 = vunpack.c.h.b16 %v245
    %v849 = vunpack.c.l.b16 %v246
    %v850 = vunpack.c.h.b16 %v246
    %v851 = vunpack.c.l.b16 %v247
    %v852 = vunpack.c.h.b16 %v247
    %v853 = vunpack.c.l.b16 %v248
    %v854 = vunpack.c.h.b16 %v248
    %v855 = vunpack.c.l.b16 %v249
    %v856 = vunpack.c.h.b16 %v249
    %v857 = vunpack.c.l.b16 %v250
    %v858 = vunpack.c.h.b16 %v250
    %v859 = vunpack.c.l.b16 %v251
    %v860 = vunpack.c.h.b16 %v251
    %v861 = vunpack.c.l.b16 %v252
    %v862 = vunpack.c.h.b16 %v252
    %v863 = vunpack.c.l.b16 %v253
    %v864 = vunpack.c.h.b16 %v253
    %v865 = vunpack.c.l.b16 %v254
    %v866 = vunpack.c.h.b16 %v254
    %v867 = vunpack.c.l.b16 %v255
    %v868 = vunpack.c.h.b16 %v255
    %v869 = vunpack.c.l.b16 %v256
    %v870 = vunpack.c.h.b16 %v256
    %v871 = vunpack.c.l.b16 %v257
    %v872 = vunpack.c.h.b16 %v257
    %v873 = vunpack.c.l.b16 %v258
    %v874 = vunpack.c.h.b16 %v258
    %v875 = vunpack.c.l.b16 %v259
    %v876 = vunpack.c.h.b16 %v259
    %v877 = vunpack.c.l.b16 %v260
    %v878 = vunpack.c.h.b16 %v260
    %v879 = vunpack.c.l.b16 %v261
    %v880 = vunpack.c.h.b16 %v261
    %v881 = vunpack.c.l.b16 %v262
    %v882 = vunpack.c.h.b16 %v262
    %v883 = vunpack.c.l.b16 %v263
    %v884 = vunpack.c.h.b16 %v263
    %v885 = vunpack.c.l.b16 %v264
    %v886 = vunpack.c.h.b16 %v264
    %v887 = vunpack.c.l.b16 %v265
    %v888 = vunpack.c.h.b16 %v265
    %v889 = vunpack.c.l.b16 %v266
    %v890 = vunpack.c.h.b16 %v266
    %v891 = vunpack.c.l.b16 %v267
    %v892 = vunpack.c.h.b16 %v267
    %v893 = vunpack.c.l.b16 %v268
    %v894 = vunpack.c.h.b16 %v268
    %v895 = vunpack.c.l.b16 %v269
    %v896 = vunpack.c.h.b16 %v269
    %v897 = vunpack.c.l.b16 %v270
    %v898 = vunpack.c.h.b16 %v270
    %v899 = vunpack.c.l.b16 %v271
    %v900 = vunpack.c.h.b16 %v271
    %v901 = vunpack.c.l.b16 %v272
    %v902 = vunpack.c.h.b16 %v272
    %v903 = vunpack.c.l.b16 %v273
    %v904 = vunpack.c.h.b16 %v273
    %v905 = vunpack.c.l.b16 %v274
    %v906 = vunpack.c.h.b16 %v274
    %v907 = vunpack.c.l.b16 %v275
    %v908 = vunpack.c.h.b16 %v275
    %v909 = vunpack.c.l.b16 %v276
    %v910 = vunpack.c.h.b16 %v276
    %v911 = vunpack.c.l.b16 %v277
    %v912 = vunpack.c.h.b16 %v277
    %v913 = vunpack.c.l.b16 %v278
    %v914 = vunpack.c.h.b16 %v278
    %v915 = vunpack.c.l.b16 %v279
    %v916 = vunpack.c.h.b16 %v279
    %v917 = vunpack.c.l.b16 %v280
    %v918 = vunpack.c.h.b16 %v280
    %v919 = vunpack.c.l.b16 %v281
    %v920 = vunpack.c.h.b16 %v281
    %v921 = vunpack.c.l.b16 %v282
    %v922 = vunpack.c.h.b16 %v282
    %v923 = vunpack.c.l.b16 %v283
    %v924 = vunpack.c.h.b16 %v283
    %v925 = vunpack.c.l.b16 %v284
    %v926 = vunpack.c.h.b16 %v284
    %v927 = vunpack.c.l.b16 %v285
    %v928 = vunpack.c.h.b16 %v285
    %v929 = vunpack.c.l.b16 %v286
    %v930 = vunpack.c.h.b16 %v286
    %v931 = vunpack.c.l.b16 %v287
    %v932 = vunpack.c.h.b16 %v287
    %v933 = vunpack.c.l.b16 %v288
    %v934 = vunpack.c.h.b16 %v288
    %v935 = vunpack.c.l.b16 %v289
    %v936 = vunpack.c.h.b16 %v289
    %v937 = vunpack.c.l.b16 %v290
    %v938 = vunpack.c.h.b16 %v290
    %v939 = vunpack.c.l.b16 %v291
    %v940 = vunpack.c.h.b16 %v291
    %v941 = vunpack.c.l.b16 %v292
    %v942 = vunpack.c.h.b16 %v292
    %v943 = vunpack.c.l.b16 %v293
    %v944 = vunpack.c.h.b16 %v293
    %v945 = vunpack.c.l.b16 %v294
    %v946 = vunpack.c.h.b16 %v294
    %v947 = vunpack.c.l.b16 %v295
    %v948 = vunpack.c.h.b16 %v295
    %v949 = vunpack.c.l.b16 %v296
    %v950 = vunpack.c.h.b16 %v296
    %v951 = vunpack.c.l.b16 %v297
    %v952 = vunpack.c.h.b16 %v297
    %v953 = vunpack.c.l.b16 %v298
    %v954 = vunpack.c.h.b16 %v298
    %v955 = vunpack.c.l.b16 %v299
    %v956 = vunpack.c.h.b16 %v299
    %v957 = vunpack.c.l.b16 %v300
    %v958 = vunpack.c.h.b16 %v300
    %v959 = vunpack.c.l.b16 %v301
    %v960 = vunpack.c.h.b16 %v301
    %v961 = vunpack.c.l.b16 %v302
    %v962 = vunpack.c.h.b16 %v302
    %v963 = vunpack.c.l.b16 %v303
    %v964 = vunpack.c.h.b16 %v303
    %v965 = vunpack.c.l.b16 %v304
    %v966 = vunpack.c.h.b16 %v304
    %v967 = vunpack.c.l.b16 %v305
    %v968 = vunpack.c.h.b16 %v305
    %v969 = vunpack.c.l.b16 %v306
    %v970 = vunpack.c.h.b16 %v306
    %v971 = vunpack.c.l.b16 %v307
    %v972 = vunpack.c.h.b16 %v307
    %v973 = vunpack.c.l.b16 %v308
    %v974 = vunpack.c.h.b16 %v308
    %v975 = vunpack.c.l.b16 %v309
    %v976 = vunpack.c.h.b16 %v309
    %v977 = vunpack.c.l.b16 %v310
    %v978 = vunpack.c.h.b16 %v310
    %v979 = vunpack.c.l.b16 %v311
    %v980 = vunpack.c.h.b16 %v311
    %v981 = vunpack.c.l.b16 %v312
    %v982 = vunpack.c.h.b16 %v312
    %v983 = vunpack.c.l.b16 %v313
    %v984 = vunpack.c.h.b16 %v313
    %v985 = vunpack.c.l.b16 %v314
    %v986 = vunpack.c.h.b16 %v314
    %v987 = vunpack.c.l.b16 %v315
    %v988 = vunpack.c.h.b16 %v315
    %v989 = vunpack.c.l.b16 %v316
    %v990 = vunpack.c.h.b16 %v316
    %v991 = vunpack.c.l.b16 %v317
    %v992 = vunpack.c.h.b16 %v317
    %v993 = vunpack.c.l.b16 %v318
    %v994 = vunpack.c.h.b16 %v318
    %v995 = vunpack.c.l.b16 %v319
    %v996 = vunpack.c.h.b16 %v319
    %v997 = vunpack.c.l.b16 %v320
    %v998 = vunpack.c.h.b16 %v320
    %v999 = vunpack.c.l.b16 %v321
    %v1000 = vunpack.c.h.b16 %v321
    %v1001 = vunpack.c.l.b16 %v322
    %v1002 = vunpack.c.h.b16 %v322
    %v1003 = vunpack.c.l.b16 %v323
    %v1004 = vunpack.c.h.b16 %v323
    %v1005 = vunpack.c.l.b16 %v324
    %v1006 = vunpack.c.h.b16 %v324
    %v1007 = vunpack.c.l.b16 %v325
    %v1008 = vunpack.c.h.b16 %v325
    %v1009 = vunpack.c.l.b16 %v326
    %v1010 = vunpack.c.h.b16 %v326
    %v1011 = vunpack.c.l.b16 %v327
    %v1012 = vunpack.c.h.b16 %v327
    %v1013 = vunpack.c.l.b16 %v328
    %v1014 = vunpack.c.h.b16 %v328
    %v1015 = vunpack.c.l.b16 %v329
    %v1016 = vunpack.c.h.b16 %v329
    %v1017 = vunpack.c.l.b16 %v330
    %v1018 = vunpack.c.h.b16 %v330
    %v1019 = vunpack.c.l.b16 %v331
    %v1020 = vunpack.c.h.b16 %v331
    %v1021 = vunpack.c.l.b16 %v332
    %v1022 = vunpack.c.h.b16 %v332
    %v1023 = vunpack.c.l.b16 %v333
    %v1024 = vunpack.c.h.b16 %v333
    %v1025 = vunpack.c.l.b16 %v334
    %v1026 = vunpack.c.h.b16 %v334
    %v1027 = vunpack.c.l.b16 %v335
    %v1028 = vunpack.c.h.b16 %v335
    %v1029 = vunpack.c.l.b16 %v336
    %v1030 = vunpack.c.h.b16 %v336
    %v1031 = vunpack.c.l.b16 %v337
    %v1032 = vunpack.c.h.b16 %v337
    %v1033 = vunpack.c.l.b16 %v338
    %v1034 = vunpack.c.h.b16 %v338
    %v1035 = vunpack.c.l.b16 %v339
    %v1036 = vunpack.c.h.b16 %v339
    %v1037 = vunpack.c.l.b16 %v340
    %v1038 = vunpack.c.h.b16 %v340
    %v1039 = vunpack.c.l.b16 %v341
    %v1040 = vunpack.c.h.b16 %v341
    %v1041 = vunpack.c.l.b16 %v342
    %v1042 = vunpack.c.h.b16 %v342
    %v1043 = vunpack.c.l.b16 %v343
    %v1044 = vunpack.c.h.b16 %v343
    %v1045 = vunpack.c.l.b16 %v344
    %v1046 = vunpack.c.h.b16 %v344
    %v1047 = vunpack.c.l.b16 %v345
    %v1048 = vunpack.c.h.b16 %v345
    %v1049 = vunpack.c.l.b16 %v346
    %v1050 = vunpack.c.h.b16 %v346
    %v1051 = vunpack.c.l.b16 %v347
    %v1052 = vunpack.c.h.b16 %v347
    %v1053 = vunpack.c.l.b16 %v348
    %v1054 = vunpack.c.h.b16 %v348
    %v1055 = vunpack.c.l.b16 %v349
    %v1056 = vunpack.c.h.b16 %v349
    %v1057 = vunpack.c.l.b16 %v350
    %v1058 = vunpack.c.h.b16 %v350
    %v1059 = vunpack.c.l.b16 %v351
    %v1060 = vunpack.c.h.b16 %v351
    %v1061 = vunpack.c.l.b16 %v352
    %v1062 = vunpack.c.h.b16 %v352
    %v1063 = vunpack.c.l.b16 %v353
    %v1064 = vunpack.c.h.b16 %v353
    %v1065 = vunpack.c.l.b16 %v354
    %v1066 = vunpack.c.h.b16 %v354
    %v1067 = vunpack.c.l.b16 %v355
    %v1068 = vunpack.c.h.b16 %v355
    %v1069 = vunpack.c.l.b16 %v356
    %v1070 = vunpack.c.h.b16 %v356
    %v1071 = vunpack.c.l.b16 %v357
    %v1072 = vunpack.c.h.b16 %v357
    %v1073 = vunpack.c.l.b16 %v358
    %v1074 = vunpack.c.h.b16 %v358
    %v1075 = vunpack.c.l.b16 %v359
    %v1076 = vunpack.c.h.b16 %v359
    %v1077 = vunpack.c.l.b16 %v360
    %v1078 = vunpack.c.h.b16 %v360
    %v1079 = vunpack.c.l.b16 %v361
    %v1080 = vunpack.c.h.b16 %v361
    %v1081 = vunpack.c.l.b16 %v362
    %v1082 = vunpack.c.h.b16 %v362
    %v1083 = vunpack.c.l.b16 %v363
    %v1084 = vunpack.c.h.b16 %v363
    %v1085 = vunpack.c.l.b16 %v364
    %v1086 = vunpack.c.h.b16 %v364
    %v1087 = vunpack.c.l.b16 %v365
    %v1088 = vunpack.c.h.b16 %v365
    %v1089 = vunpack.c.l.b16 %v366
    %v1090 = vunpack.c.h.b16 %v366
    %v1091 = vunpack.c.l.b16 %v367
    %v1092 = vunpack.c.h.b16 %v367
    %v1093 = vunpack.c.l.b16 %v368
    %v1094 = vunpack.c.h.b16 %v368
    %v1095 = vunpack.c.l.b16 %v369
    %v1096 = vunpack.c.h.b16 %v369
    %v1097 = vunpack.c.l.b16 %v370
    %v1098 = vunpack.c.h.b16 %v370
    %v1099 = vunpack.c.l.b16 %v371
    %v1100 = vunpack.c.h.b16 %v371
    %v1101 = vunpack.c.l.b16 %v372
    %v1102 = vunpack.c.h.b16 %v372
    %v1103 = vunpack.c.l.b16 %v373
    %v1104 = vunpack.c.h.b16 %v373
    %v1105 = vunpack.c.l.b16 %v374
    %v1106 = vunpack.c.h.b16 %v374
    %v1107 = vunpack.c.l.b16 %v375
    %v1108 = vunpack.c.h.b16 %v375
    %v1109 = vunpack.c.l.b16 %v376
    %v1110 = vunpack.c.h.b16 %v376
    %v1111 = vunpack.c.l.b16 %v377
    %v1112 = vunpack.c.h.b16 %v377
    %v1113 = vunpack.c.l.b16 %v378
    %v1114 = vunpack.c.h.b16 %v378
    %v1115 = vunpack.c.l.b16 %v379
    %v1116 = vunpack.c.h.b16 %v379
    %v1117 = vunpack.c.l.b16 %v380
    %v1118 = vunpack.c.h.b16 %v380
    %v1119 = vunpack.c.l.b16 %v381
    %v1120 = vunpack.c.h.b16 %v381
    %v1121 = vunpack.c.l.b16 %v382
    %v1122 = vunpack.c.h.b16 %v382
    %v1123 = vunpack.c.l.b16 %v383
    %v1124 = vunpack.c.h.b16 %v383
    %v1125 = vunpack.c.l.b16 %v384
    %v1126 = vunpack.c.h.b16 %v384
    %v1127 = vunpack.c.l.b16 %v385
    %v1128 = vunpack.c.h.b16 %v385
    %v1129 = vunpack.c.l.b16 %v386
    %v1130 = vunpack.c.h.b16 %v386
    %v1131 = vunpack.c.l.b16 %v387
    %v1132 = vunpack.c.h.b16 %v387
    %v1133 = vunpack.c.l.b16 %v388
    %v1134 = vunpack.c.h.b16 %v388
    %v1135 = vunpack.c.l.b16 %v389
    %v1136 = vunpack.c.h.b16 %v389
    %v1137 = vunpack.c.l.b16 %v390
    %v1138 = vunpack.c.h.b16 %v390
    %v1139 = vunpack.c.l.b16 %v391
    %v1140 = vunpack.c.h.b16 %v391
    %v1141 = vunpack.c.l.b16 %v392
    %v1142 = vunpack.c.h.b16 %v392
    %v1143 = vunpack.c.l.b16 %v393
    %v1144 = vunpack.c.h.b16 %v393
    %v1145 = vunpack.c.l.b16 %v394
    %v1146 = vunpack.c.h.b16 %v394
    %v1147 = vunpack.c.l.b16 %v395
    %v1148 = vunpack.c.h.b16 %v395
    %v1149 = vunpack.c.l.b16 %v396
    %v1150 = vunpack.c.h.b16 %v396
    %v1151 = vunpack.c.l.b16 %v397
    %v1152 = vunpack.c.h.b16 %v397
    %v1153 = vunpack.c.l.b16 %v398
    %v1154 = vunpack.c.h.b16 %v398
    %v1155 = vunpack.c.l.b16 %v399
    %v1156 = vunpack.c.h.b16 %v399
    %v1157 = vunpack.c.l.b16 %v400
    %v1158 = vunpack.c.h.b16 %v400
    %v1159 = vunpack.c.l.b16 %v401
    %v1160 = vunpack.c.h.b16 %v401
    %v1161 = vunpack.c.l.b16 %v402
    %v1162 = vunpack.c.h.b16 %v402
    %v1163 = vunpack.c.l.b16 %v403
    %v1164 = vunpack.c.h.b16 %v403
    %v1165 = vunpack.c.l.b16 %v404
    %v1166 = vunpack.c.h.b16 %v404
    %v1167 = vunpack.c.l.b16 %v405
    %v1168 = vunpack.c.h.b16 %v405
    %v1169 = vunpack.c.l.b16 %v406
    %v1170 = vunpack.c.h.b16 %v406
    %v1171 = vunpack.c.l.b16 %v407
    %v1172 = vunpack.c.h.b16 %v407
    %v1173 = vunpack.c.l.b16 %v408
    %v1174 = vunpack.c.h.b16 %v408
    %v1175 = vunpack.c.l.b16 %v409
    %v1176 = vunpack.c.h.b16 %v409
    %v1177 = vunpack.c.l.b16 %v410
    %v1178 = vunpack.c.h.b16 %v410
    %v1179 = vunpack.c.l.b16 %v411
    %v1180 = vunpack.c.h.b16 %v411
    %v1181 = vunpack.c.l.b16 %v412
    %v1182 = vunpack.c.h.b16 %v412
    %v1183 = vunpack.c.l.b16 %v413
    %v1184 = vunpack.c.h.b16 %v413
    %v1185 = vunpack.c.l.b16 %v414
    %v1186 = vunpack.c.h.b16 %v414
    %v1187 = vunpack.c.l.b16 %v415
    %v1188 = vunpack.c.h.b16 %v415
    %v1189 = vunpack.c.l.b16 %v416
    %v1190 = vunpack.c.h.b16 %v416
    %v1191 = vunpack.c.l.b16 %v417
    %v1192 = vunpack.c.h.b16 %v417
    %v1193 = vunpack.c.l.b16 %v418
    %v1194 = vunpack.c.h.b16 %v418
    %v1195 = vunpack.c.l.b16 %v419
    %v1196 = vunpack.c.h.b16 %v419
    %v1197 = vunpack.c.l.b16 %v420
    %v1198 = vunpack.c.h.b16 %v420
    %v1199 = vunpack.c.l.b16 %v421
    %v1200 = vunpack.c.h.b16 %v421
    %v1201 = vunpack.c.l.b16 %v422
    %v1202 = vunpack.c.h.b16 %v422
    %v1203 = vunpack.c.l.b16 %v423
    %v1204 = vunpack.c.h.b16 %v423
    %v1205 = vunpack.c.l.b16 %v424
    %v1206 = vunpack.c.h.b16 %v424
    %v1207 = vunpack.c.l.b16 %v425
    %v1208 = vunpack.c.h.b16 %v425
    %v1209 = vunpack.c.l.b16 %v426
    %v1210 = vunpack.c.h.b16 %v426
    %v1211 = vunpack.c.l.b16 %v427
    %v1212 = vunpack.c.h.b16 %v427
    %v1213 = vunpack.c.l.b16 %v428
    %v1214 = vunpack.c.h.b16 %v428
    %v1215 = vunpack.c.l.b16 %v429
    %v1216 = vunpack.c.h.b16 %v429
    %v1217 = vunpack.c.l.b16 %v430
    %v1218 = vunpack.c.h.b16 %v430
    %v1219 = vunpack.c.l.b16 %v431
    %v1220 = vunpack.c.h.b16 %v431
    %v1221 = vunpack.c.l.b16 %v432
    %v1222 = vunpack.c.h.b16 %v432
    %v1223 = vunpack.c.l.b16 %v433
    %v1224 = vunpack.c.h.b16 %v433
    %v1225 = vunpack.c.l.b16 %v434
    %v1226 = vunpack.c.h.b16 %v434
    %v1227 = vunpack.c.l.b16 %v435
    %v1228 = vunpack.c.h.b16 %v435
    %v1229 = vunpack.c.l.b16 %v436
    %v1230 = vunpack.c.h.b16 %v436
    %v1231 = vunpack.c.l.b16 %v437
    %v1232 = vunpack.c.h.b16 %v437
    %v1233 = vunpack.c.l.b16 %v438
    %v1234 = vunpack.c.h.b16 %v438
    %v1235 = vunpack.c.l.b16 %v439
    %v1236 = vunpack.c.h.b16 %v439
    %v1237 = vunpack.c.l.b16 %v440
    %v1238 = vunpack.c.h.b16 %v440
    %v1239 = vunpack.c.l.b16 %v441
    %v1240 = vunpack.c.h.b16 %v441
    %v1241 = vunpack.c.l.b16 %v442
    %v1242 = vunpack.c.h.b16 %v442
    %v1243 = vpack.c.b16 %v739, %v731
    %v1244 = vpack.c.b16 %v740, %v732
    %v1245 = vpack.c.b16 %v741, %v733
    %v1246 = vpack.c.b16 %v742, %v734
    %v1247 = vpack.c.b16 %v743, %v735
    %v1248 = vpack.c.b16 %v744, %v736
    %v1249 = vpack.c.b16 %v745, %v737
    %v1250 = vpack.c.b16 %v746, %v738
    %v1251 = vpack.c.b16 %v755, %v747
    %v1252 = vpack.c.b16 %v756, %v748
    %v1253 = vpack.c.b16 %v757, %v749
    %v1254 = vpack.c.b16 %v758, %v750
    %v1255 = vpack.c.b16 %v759, %v751
    %v1256 = vpack.c.b16 %v760, %v752
    %v1257 = vpack.c.b16 %v761, %v753
    %v1258 = vpack.c.b16 %v762, %v754
    %v1259 = vpack.c.b16 %v771, %v763
    %v1260 = vpack.c.b16 %v772, %v764
    %v1261 = vpack.c.b16 %v773, %v765
    %v1262 = vpack.c.b16 %v774, %v766
    %v1263 = vpack.c.b16 %v775, %v767
    %v1264 = vpack.c.b16 %v776, %v768
    %v1265 = vpack.c.b16 %v777, %v769
    %v1266 = vpack.c.b16 %v778, %v770
    %v1267 = vpack.c.b16 %v787, %v779
    %v1268 = vpack.c.b16 %v788, %v780
    %v1269 = vpack.c.b16 %v789, %v781
    %v1270 = vpack.c.b16 %v790, %v782
    %v1271 = vpack.c.b16 %v791, %v783
    %v1272 = vpack.c.b16 %v792, %v784
    %v1273 = vpack.c.b16 %v793, %v785
    %v1274 = vpack.c.b16 %v794, %v786
    %v1275 = vpack.c.b16 %v803, %v795
    %v1276 = vpack.c.b16 %v804, %v796
    %v1277 = vpack.c.b16 %v805, %v797
    %v1278 = vpack.c.b16 %v806, %v798
    %v1279 = vpack.c.b16 %v807, %v799
    %v1280 = vpack.c.b16 %v808, %v800
    %v1281 = vpack.c.b16 %v809, %v801
    %v1282 = vpack.c.b16 %v810, %v802
    %v1283 = vpack.c.b16 %v819, %v811
    %v1284 = vpack.c.b16 %v820, %v812
    %v1285 = vpack.c.b16 %v821, %v813
    %v1286 = vpack.c.b16 %v822, %v814
    %v1287 = vpack.c.b16 %v823, %v815
    %v1288 = vpack.c.b16 %v824, %v816
    %v1289 = vpack.c.b16 %v825, %v817
    %v1290 = vpack.c.b16 %v826, %v818
    %v1291 = vpack.c.b16 %v835, %v827
    %v1292 = vpack.c.b16 %v836, %v828
    %v1293 = vpack.c.b16 %v837, %v829
    %v1294 = vpack.c.b16 %v838, %v830
    %v1295 = vpack.c.b16 %v839, %v831
    %v1296 = vpack.c.b16 %v840, %v832
    %v1297 = vpack.c.b16 %v841, %v833
    %v1298 = vpack.c.b16 %v842, %v834
    %v1299 = vpack.c.b16 %v851, %v843
    %v1300 = vpack.c.b16 %v852, %v844
    %v1301 = vpack.c.b16 %v853, %v845
    %v1302 = vpack.c.b16 %v854, %v846
    %v1303 = vpack.c.b16 %v855, %v847
    %v1304 = vpack.c.b16 %v856, %v848
    %v1305 = vpack.c.b16 %v857, %v849
    %v1306 = vpack.c.b16 %v858, %v850
    %v1307 = vpack.c.b16 %v867, %v859
    %v1308 = vpack.c.b16 %v868, %v860
    %v1309 = vpack.c.b16 %v869, %v861
    %v1310 = vpack.c.b16 %v870, %v862
    %v1311 = vpack.c.b16 %v871, %v863
    %v1312 = vpack.c.b16 %v872, %v864
    %v1313 = vpack.c.b16 %v873, %v865
    %v1314 = vpack.c.b16 %v874, %v866
    %v1315 = vpack.c.b16 %v883, %v875
    %v1316 = vpack.c.b16 %v884, %v876
    %v1317 = vpack.c.b16 %v885, %v877
    %v1318 = vpack.c.b16 %v886, %v878
    %v1319 = vpack.c.b16 %v887, %v879
    %v1320 = vpack.c.b16 %v888, %v880
    %v1321 = vpack.c.b16 %v889, %v881
    %v1322 = vpack.c.b16 %v890, %v882
    %v1323 = vpack.c.b16 %v899, %v891
    %v1324 = vpack.c.b16 %v900, %v892
    %v1325 = vpack.c.b16 %v901, %v893
    %v1326 = vpack.c.b16 %v902, %v894
    %v1327 = vpack.c.b16 %v903, %v895
    %v1328 = vpack.c.b16 %v904, %v896
    %v1329 = vpack.c.b16 %v905, %v897
    %v1330 = vpack.c.b16 %v906, %v898
    %v1331 = vpack.c.b16 %v915, %v907
    %v1332 = vpack.c.b16 %v916, %v908
    %v1333 = vpack.c.b16 %v917, %v909
    %v1334 = vpack.c.b16 %v918, %v910
    %v1335 = vpack.c.b16 %v919, %v911
    %v1336 = vpack.c.b16 %v920, %v912
    %v1337 = vpack.c.b16 %v921, %v913
    %v1338 = vpack.c.b16 %v922, %v914
    %v1339 = vpack.c.b16 %v931, %v923
    %v1340 = vpack.c.b16 %v932, %v924
    %v1341 = vpack.c.b16 %v933, %v925
    %v1342 = vpack.c.b16 %v934, %v926
    %v1343 = vpack.c.b16 %v935, %v927
    %v1344 = vpack.c.b16 %v936, %v928
    %v1345 = vpack.c.b16 %v937, %v929
    %v1346 = vpack.c.b16 %v938, %v930
    %v1347 = vpack.c.b16 %v947, %v939
    %v1348 = vpack.c.b16 %v948, %v940
    %v1349 = vpack.c.b16 %v949, %v941
    %v1350 = vpack.c.b16 %v950, %v942
    %v1351 = vpack.c.b16 %v951, %v943
    %v1352 = vpack.c.b16 %v952, %v944
    %v1353 = vpack.c.b16 %v953, %v945
    %v1354 = vpack.c.b16 %v954, %v946
    %v1355 = vpack.c.b16 %v963, %v955
    %v1356 = vpack.c.b16 %v964, %v956
    %v1357 = vpack.c.b16 %v965, %v957
    %v1358 = vpack.c.b16 %v966, %v958
    %v1359 = vpack.c.b16 %v967, %v959
    %v1360 = vpack.c.b16 %v968, %v960
    %v1361 = vpack.c.b16 %v969, %v961
    %v1362 = vpack.c.b16 %v970, %v962
    %v1363 = vpack.c.b16 %v979, %v971
    %v1364 = vpack.c.b16 %v980, %v972
    %v1365 = vpack.c.b16 %v981, %v973
    %v1366 = vpack.c.b16 %v982, %v974
    %v1367 = vpack.c.b16 %v983, %v975
    %v1368 = vpack.c.b16 %v984, %v976
    %v1369 = vpack.c.b16 %v985, %v977
    %v1370 = vpack.c.b16 %v986, %v978
    %v1371 = vpack.c.b16 %v995, %v987
    %v1372 = vpack.c.b16 %v996, %v988
    %v1373 = vpack.c.b16 %v997, %v989
    %v1374 = vpack.c.b16 %v998, %v990
    %v1375 = vpack.c.b16 %v999, %v991
    %v1376 = vpack.c.b16 %v1000, %v992
    %v1377 = vpack.c.b16 %v1001, %v993
    %v1378 = vpack.c.b16 %v1002, %v994
    %v1379 = vpack.c.b16 %v1011, %v1003
    %v1380 = vpack.c.b16 %v1012, %v1004
    %v1381 = vpack.c.b16 %v1013, %v1005
    %v1382 = vpack.c.b16 %v1014, %v1006
    %v1383 = vpack.c.b16 %v1015, %v1007
    %v1384 = vpack.c.b16 %v1016, %v1008
    %v1385 = vpack.c.b16 %v1017, %v1009
    %v1386 = vpack.c.b16 %v1018, %v1010
    %v1387 = vpack.c.b16 %v1027, %v1019
    %v1388 = vpack.c.b16 %v1028, %v1020
    %v1389 = vpack.c.b16 %v1029, %v1021
    %v1390 = vpack.c.b16 %v1030, %v1022
    %v1391 = vpack.c.b16 %v1031, %v1023
    %v1392 = vpack.c.b16 %v1032, %v1024
    %v1393 = vpack.c.b16 %v1033, %v1025
    %v1394 = vpack.c.b16 %v1034, %v1026
    %v1395 = vpack.c.b16 %v1043, %v1035
    %v1396 = vpack.c.b16 %v1044, %v1036
    %v1397 = vpack.c.b16 %v1045, %v1037
    %v1398 = vpack.c.b16 %v1046, %v1038
    %v1399 = vpack.c.b16 %v1047, %v1039
    %v1400 = vpack.c.b16 %v1048, %v1040
    %v1401 = vpack.c.b16 %v1049, %v1041
    %v1402 = vpack.c.b16 %v1050, %v1042
    %v1403 = vpack.c.b16 %v1059, %v1051
    %v1404 = vpack.c.b16 %v1060, %v1052
    %v1405 = vpack.c.b16 %v1061, %v1053
    %v1406 = vpack.c.b16 %v1062, %v1054
    %v1407 = vpack.c.b16 %v1063, %v1055
    %v1408 = vpack.c.b16 %v1064, %v1056
    %v1409 = vpack.c.b16 %v1065, %v1057
    %v1410 = vpack.c.b16 %v1066, %v1058
    %v1411 = vpack.c.b16 %v1075, %v1067
    %v1412 = vpack.c.b16 %v1076, %v1068
    %v1413 = vpack.c.b16 %v1077, %v1069
    %v1414 = vpack.c.b16 %v1078, %v1070
    %v1415 = vpack.c.b16 %v1079, %v1071
    %v1416 = vpack.c.b16 %v1080, %v1072
    %v1417 = vpack.c.b16 %v1081, %v1073
    %v1418 = vpack.c.b16 %v1082, %v1074
    %v1419 = vpack.c.b16 %v1091, %v1083
    %v1420 = vpack.c.b16 %v1092, %v1084
    %v1421 = vpack.c.b16 %v1093, %v1085
    %v1422 = vpack.c.b16 %v1094, %v1086
    %v1423 = vpack.c.b16 %v1095, %v1087
    %v1424 = vpack.c.b16 %v1096, %v1088
    %v1425 = vpack.c.b16 %v1097, %v1089
    %v1426 = vpack.c.b16 %v1098, %v1090
    %v1427 = vpack.c.b16 %v1107, %v1099
    %v1428 = vpack.c.b16 %v1108, %v1100
    %v1429 = vpack.c.b16 %v1109, %v1101
    %v1430 = vpack.c.b16 %v1110, %v1102
    %v1431 = vpack.c.b16 %v1111, %v1103
    %v1432 = vpack.c.b16 %v1112, %v1104
    %v1433 = vpack.c.b16 %v1113, %v1105
    %v1434 = vpack.c.b16 %v1114, %v1106
    %v1435 = vpack.c.b16 %v1123, %v1115
    %v1436 = vpack.c.b16 %v1124, %v1116
    %v1437 = vpack.c.b16 %v1125, %v1117
    %v1438 = vpack.c.b16 %v1126, %v1118
    %v1439 = vpack.c.b16 %v1127, %v1119
    %v1440 = vpack.c.b16 %v1128, %v1120
    %v1441 = vpack.c.b16 %v1129, %v1121
    %v1442 = vpack.c.b16 %v1130, %v1122
    %v1443 = vpack.c.b16 %v1139, %v1131
    %v1444 = vpack.c.b16 %v1140, %v1132
    %v1445 = vpack.c.b16 %v1141, %v1133
    %v1446 = vpack.c.b16 %v1142, %v1134
    %v1447 = vpack.c.b16 %v1143, %v1135
    %v1448 = vpack.c.b16 %v1144, %v1136
    %v1449 = vpack.c.b16 %v1145, %v1137
    %v1450 = vpack.c.b16 %v1146, %v1138
    %v1451 = vpack.c.b16 %v1155, %v1147
    %v1452 = vpack.c.b16 %v1156, %v1148
    %v1453 = vpack.c.b16 %v1157, %v1149
    %v1454 = vpack.c.b16 %v1158, %v1150
    %v1455 = vpack.c.b16 %v1159, %v1151
    %v1456 = vpack.c.b16 %v1160, %v1152
    %v1457 = vpack.c.b16 %v1161, %v1153
    %v1458 = vpack.c.b16 %v1162, %v1154
    %v1459 = vpack.c.b16 %v1171, %v1163
    %v1460 = vpack.c.b16 %v1172, %v1164
    %v1461 = vpack.c.b16 %v1173, %v1165
    %v1462 = vpack.c.b16 %v1174, %v1166
    %v1463 = vpack.c.b16 %v1175, %v1167
    %v1464 = vpack.c.b16 %v1176, %v1168
    %v1465 = vpack.c.b16 %v1177, %v1169
    %v1466 = vpack.c.b16 %v1178, %v1170
    %v1467 = vpack.c.b16 %v1187, %v1179
    %v1468 = vpack.c.b16 %v1188, %v1180
    %v1469 = vpack.c.b16 %v1189, %v1181
    %v1470 = vpack.c.b16 %v1190, %v1182
    %v1471 = vpack.c.b16 %v1191, %v1183
    %v1472 = vpack.c.b16 %v1192, %v1184
    %v1473 = vpack.c.b16 %v1193, %v1185
    %v1474 = vpack.c.b16 %v1194, %v1186
    %v1475 = vpack.c.b16 %v1203, %v1195
    %v1476 = vpack.c.b16 %v1204, %v1196
    %v1477 = vpack.c.b16 %v1205, %v1197
    %v1478 = vpack.c.b16 %v1206, %v1198
    %v1479 = vpack.c.b16 %v1207, %v1199
    %v1480 = vpack.c.b16 %v1208, %v1200
    %v1481 = vpack.c.b16 %v1209, %v1201
    %v1482 = vpack.c.b16 %v1210, %v1202
    %v1483 = vpack.c.b16 %v1219, %v1211
    %v1484 = vpack.c.b16 %v1220, %v1212
    %v1485 = vpack.c.b16 %v1221, %v1213
    %v1486 = vpack.c.b16 %v1222, %v1214
    %v1487 = vpack.c.b16 %v1223, %v1215
    %v1488 = vpack.c.b16 %v1224, %v1216
    %v1489 = vpack.c.b16 %v1225, %v1217
    %v1490 = vpack.c.b16 %v1226, %v1218
    %v1491 = vpack.c.b16 %v1235, %v1227
    %v1492 = vpack.c.b16 %v1236, %v1228
    %v1493 = vpack.c.b16 %v1237, %v1229
    %v1494 = vpack.c.b16 %v1238, %v1230
    %v1495 = vpack.c.b16 %v1239, %v1231
    %v1496 = vpack.c.b16 %v1240, %v1232
    %v1497 = vpack.c.b16 %v1241, %v1233
    %v1498 = vpack.c.b16 %v1242, %v1234
    %1755 = vmatpush.bf16.msra.mxu0 %v1299
    %1756 = vmatpush.bf16.msra.mxu0 %v1291
    %1757 = vmatpush.bf16.msra.mxu0 %v1283
    %1758 = vmatpush.bf16.msra.mxu0 %v1275
    %1759 = vmatpush.bf16.msra.mxu0 %v1267
    %1760 = vmatpush.bf16.msra.mxu0 %v1259
    %1761 = vmatpush.bf16.msra.mxu0 %v1251
    %1762 = vmatpush.bf16.msra.mxu0 %v1243
    %1763 = vmatmul.bf16.gmra.mxu0 %v467
    %v1764 = vpop.f32.mrf.mxu0
    %v1765 = vadd.f32 %v445, %v1764
    %v1766 = vpop.f32.mrf.mxu0
    %1767 = vdwg.mxu0
    %1768 = vmatpush.bf16.msra.mxu0 %v1363
    %1769 = vmatpush.bf16.msra.mxu0 %v1355
    %1770 = vmatpush.bf16.msra.mxu0 %v1347
    %1771 = vmatpush.bf16.msra.mxu0 %v1339
    %1772 = vmatpush.bf16.msra.mxu0 %v1331
    %1773 = vmatpush.bf16.msra.mxu0 %v1323
    %1774 = vmatpush.bf16.msra.mxu0 %v1315
    %1775 = vmatpush.bf16.msra.mxu0 %v1307
    %1776 = vmatmul.bf16.gmra.mxu0 %v468
    %v1777 = vpop.f32.mrf.mxu0
    %v1778 = vadd.f32 %v1765, %v1777
    %v1779 = vpop.f32.mrf.mxu0
    %1780 = vdwg.mxu0
    %1781 = vmatpush.bf16.msra.mxu0 %v1427
    %1782 = vmatpush.bf16.msra.mxu0 %v1419
    %1783 = vmatpush.bf16.msra.mxu0 %v1411
    %1784 = vmatpush.bf16.msra.mxu0 %v1403
    %1785 = vmatpush.bf16.msra.mxu0 %v1395
    %1786 = vmatpush.bf16.msra.mxu0 %v1387
    %1787 = vmatpush.bf16.msra.mxu0 %v1379
    %1788 = vmatpush.bf16.msra.mxu0 %v1371
    %1789 = vmatmul.bf16.gmra.mxu0 %v469
    %v1790 = vpop.f32.mrf.mxu0
    %v1791 = vadd.f32 %v1778, %v1790
    %v1792 = vpop.f32.mrf.mxu0
    %1793 = vdwg.mxu0
    %1794 = vmatpush.bf16.msra.mxu0 %v1491
    %1795 = vmatpush.bf16.msra.mxu0 %v1483
    %1796 = vmatpush.bf16.msra.mxu0 %v1475
    %1797 = vmatpush.bf16.msra.mxu0 %v1467
    %1798 = vmatpush.bf16.msra.mxu0 %v1459
    %1799 = vmatpush.bf16.msra.mxu0 %v1451
    %1800 = vmatpush.bf16.msra.mxu0 %v1443
    %1801 = vmatpush.bf16.msra.mxu0 %v1435
    %1802 = vmatmul.bf16.gmra.mxu0 %v470
    %v1803 = vpop.f32.mrf.mxu0
    %v1804 = vadd.f32 %v1791, %v1803
    %v1805 = vpop.f32.mrf.mxu0
    %1806 = vdwg.mxu0
    %1807 = vmatpush.bf16.msra.mxu0 %v1300
    %1808 = vmatpush.bf16.msra.mxu0 %v1292
    %1809 = vmatpush.bf16.msra.mxu0 %v1284
    %1810 = vmatpush.bf16.msra.mxu0 %v1276
    %1811 = vmatpush.bf16.msra.mxu0 %v1268
    %1812 = vmatpush.bf16.msra.mxu0 %v1260
    %1813 = vmatpush.bf16.msra.mxu0 %v1252
    %1814 = vmatpush.bf16.msra.mxu0 %v1244
    %1815 = vmatmul.bf16.gmra.mxu0 %v467
    %v1816 = vpop.f32.mrf.mxu0
    %v1817 = vadd.f32 %v446, %v1816
    %v1818 = vpop.f32.mrf.mxu0
    %1819 = vdwg.mxu0
    %1820 = vmatpush.bf16.msra.mxu0 %v1364
    %1821 = vmatpush.bf16.msra.mxu0 %v1356
    %1822 = vmatpush.bf16.msra.mxu0 %v1348
    %1823 = vmatpush.bf16.msra.mxu0 %v1340
    %1824 = vmatpush.bf16.msra.mxu0 %v1332
    %1825 = vmatpush.bf16.msra.mxu0 %v1324
    %1826 = vmatpush.bf16.msra.mxu0 %v1316
    %1827 = vmatpush.bf16.msra.mxu0 %v1308
    %1828 = vmatmul.bf16.gmra.mxu0 %v468
    %v1829 = vpop.f32.mrf.mxu0
    %v1830 = vadd.f32 %v1817, %v1829
    %v1831 = vpop.f32.mrf.mxu0
    %1832 = vdwg.mxu0
    %1833 = vmatpush.bf16.msra.mxu0 %v1428
    %1834 = vmatpush.bf16.msra.mxu0 %v1420
    %1835 = vmatpush.bf16.msra.mxu0 %v1412
    %1836 = vmatpush.bf16.msra.mxu0 %v1404
    %1837 = vmatpush.bf16.msra.mxu0 %v1396
    %1838 = vmatpush.bf16.msra.mxu0 %v1388
    %1839 = vmatpush.bf16.msra.mxu0 %v1380
    %1840 = vmatpush.bf16.msra.mxu0 %v1372
    %1841 = vmatmul.bf16.gmra.mxu0 %v469
    %v1842 = vpop.f32.mrf.mxu0
    %v1843 = vadd.f32 %v1830, %v1842
    %v1844 = vpop.f32.mrf.mxu0
    %1845 = vdwg.mxu0
    %1846 = vmatpush.bf16.msra.mxu0 %v1492
    %1847 = vmatpush.bf16.msra.mxu0 %v1484
    %1848 = vmatpush.bf16.msra.mxu0 %v1476
    %1849 = vmatpush.bf16.msra.mxu0 %v1468
    %1850 = vmatpush.bf16.msra.mxu0 %v1460
    %1851 = vmatpush.bf16.msra.mxu0 %v1452
    %1852 = vmatpush.bf16.msra.mxu0 %v1444
    %1853 = vmatpush.bf16.msra.mxu0 %v1436
    %1854 = vmatmul.bf16.gmra.mxu0 %v470
    %v1855 = vpop.f32.mrf.mxu0
    %v1856 = vadd.f32 %v1843, %v1855
    %v1857 = vpop.f32.mrf.mxu0
    %1858 = vdwg.mxu0
    %1859 = vmatpush.bf16.msra.mxu0 %v1301
    %1860 = vmatpush.bf16.msra.mxu0 %v1293
    %1861 = vmatpush.bf16.msra.mxu0 %v1285
    %1862 = vmatpush.bf16.msra.mxu0 %v1277
    %1863 = vmatpush.bf16.msra.mxu0 %v1269
    %1864 = vmatpush.bf16.msra.mxu0 %v1261
    %1865 = vmatpush.bf16.msra.mxu0 %v1253
    %1866 = vmatpush.bf16.msra.mxu0 %v1245
    %1867 = vmatmul.bf16.gmra.mxu0 %v467
    %v1868 = vpop.f32.mrf.mxu0
    %v1869 = vadd.f32 %v447, %v1868
    %v1870 = vpop.f32.mrf.mxu0
    %1871 = vdwg.mxu0
    %1872 = vmatpush.bf16.msra.mxu0 %v1365
    %1873 = vmatpush.bf16.msra.mxu0 %v1357
    %1874 = vmatpush.bf16.msra.mxu0 %v1349
    %1875 = vmatpush.bf16.msra.mxu0 %v1341
    %1876 = vmatpush.bf16.msra.mxu0 %v1333
    %1877 = vmatpush.bf16.msra.mxu0 %v1325
    %1878 = vmatpush.bf16.msra.mxu0 %v1317
    %1879 = vmatpush.bf16.msra.mxu0 %v1309
    %1880 = vmatmul.bf16.gmra.mxu0 %v468
    %v1881 = vpop.f32.mrf.mxu0
    %v1882 = vadd.f32 %v1869, %v1881
    %v1883 = vpop.f32.mrf.mxu0
    %1884 = vdwg.mxu0
    %1885 = vmatpush.bf16.msra.mxu0 %v1429
    %1886 = vmatpush.bf16.msra.mxu0 %v1421
    %1887 = vmatpush.bf16.msra.mxu0 %v1413
    %1888 = vmatpush.bf16.msra.mxu0 %v1405
    %1889 = vmatpush.bf16.msra.mxu0 %v1397
    %1890 = vmatpush.bf16.msra.mxu0 %v1389
    %1891 = vmatpush.bf16.msra.mxu0 %v1381
    %1892 = vmatpush.bf16.msra.mxu0 %v1373
    %1893 = vmatmul.bf16.gmra.mxu0 %v469
    %v1894 = vpop.f32.mrf.mxu0
    %v1895 = vadd.f32 %v1882, %v1894
    %v1896 = vpop.f32.mrf.mxu0
    %1897 = vdwg.mxu0
    %1898 = vmatpush.bf16.msra.mxu0 %v1493
    %1899 = vmatpush.bf16.msra.mxu0 %v1485
    %1900 = vmatpush.bf16.msra.mxu0 %v1477
    %1901 = vmatpush.bf16.msra.mxu0 %v1469
    %1902 = vmatpush.bf16.msra.mxu0 %v1461
    %1903 = vmatpush.bf16.msra.mxu0 %v1453
    %1904 = vmatpush.bf16.msra.mxu0 %v1445
    %1905 = vmatpush.bf16.msra.mxu0 %v1437
    %1906 = vmatmul.bf16.gmra.mxu0 %v470
    %v1907 = vpop.f32.mrf.mxu0
    %v1908 = vadd.f32 %v1895, %v1907
    %v1909 = vpop.f32.mrf.mxu0
    %1910 = vdwg.mxu0
    %1911 = vmatpush.bf16.msra.mxu0 %v1302
    %1912 = vmatpush.bf16.msra.mxu0 %v1294
    %1913 = vmatpush.bf16.msra.mxu0 %v1286
    %1914 = vmatpush.bf16.msra.mxu0 %v1278
    %1915 = vmatpush.bf16.msra.mxu0 %v1270
    %1916 = vmatpush.bf16.msra.mxu0 %v1262
    %1917 = vmatpush.bf16.msra.mxu0 %v1254
    %1918 = vmatpush.bf16.msra.mxu0 %v1246
    %1919 = vmatmul.bf16.gmra.mxu0 %v467
    %v1920 = vpop.f32.mrf.mxu0
    %v1921 = vadd.f32 %v448, %v1920
    %v1922 = vpop.f32.mrf.mxu0
    %1923 = vdwg.mxu0
    %1924 = vmatpush.bf16.msra.mxu0 %v1366
    %1925 = vmatpush.bf16.msra.mxu0 %v1358
    %1926 = vmatpush.bf16.msra.mxu0 %v1350
    %1927 = vmatpush.bf16.msra.mxu0 %v1342
    %1928 = vmatpush.bf16.msra.mxu0 %v1334
    %1929 = vmatpush.bf16.msra.mxu0 %v1326
    %1930 = vmatpush.bf16.msra.mxu0 %v1318
    %1931 = vmatpush.bf16.msra.mxu0 %v1310
    %1932 = vmatmul.bf16.gmra.mxu0 %v468
    %v1933 = vpop.f32.mrf.mxu0
    %v1934 = vadd.f32 %v1921, %v1933
    %v1935 = vpop.f32.mrf.mxu0
    %1936 = vdwg.mxu0
    %1937 = vmatpush.bf16.msra.mxu0 %v1430
    %1938 = vmatpush.bf16.msra.mxu0 %v1422
    %1939 = vmatpush.bf16.msra.mxu0 %v1414
    %1940 = vmatpush.bf16.msra.mxu0 %v1406
    %1941 = vmatpush.bf16.msra.mxu0 %v1398
    %1942 = vmatpush.bf16.msra.mxu0 %v1390
    %1943 = vmatpush.bf16.msra.mxu0 %v1382
    %1944 = vmatpush.bf16.msra.mxu0 %v1374
    %1945 = vmatmul.bf16.gmra.mxu0 %v469
    %v1946 = vpop.f32.mrf.mxu0
    %v1947 = vadd.f32 %v1934, %v1946
    %v1948 = vpop.f32.mrf.mxu0
    %1949 = vdwg.mxu0
    %1950 = vmatpush.bf16.msra.mxu0 %v1494
    %1951 = vmatpush.bf16.msra.mxu0 %v1486
    %1952 = vmatpush.bf16.msra.mxu0 %v1478
    %1953 = vmatpush.bf16.msra.mxu0 %v1470
    %1954 = vmatpush.bf16.msra.mxu0 %v1462
    %1955 = vmatpush.bf16.msra.mxu0 %v1454
    %1956 = vmatpush.bf16.msra.mxu0 %v1446
    %1957 = vmatpush.bf16.msra.mxu0 %v1438
    %1958 = vmatmul.bf16.gmra.mxu0 %v470
    %v1959 = vpop.f32.mrf.mxu0
    %v1960 = vadd.f32 %v1947, %v1959
    %v1961 = vpop.f32.mrf.mxu0
    %1962 = vdwg.mxu0
    %1963 = vmatpush.bf16.msra.mxu0 %v1303
    %1964 = vmatpush.bf16.msra.mxu0 %v1295
    %1965 = vmatpush.bf16.msra.mxu0 %v1287
    %1966 = vmatpush.bf16.msra.mxu0 %v1279
    %1967 = vmatpush.bf16.msra.mxu0 %v1271
    %1968 = vmatpush.bf16.msra.mxu0 %v1263
    %1969 = vmatpush.bf16.msra.mxu0 %v1255
    %1970 = vmatpush.bf16.msra.mxu0 %v1247
    %1971 = vmatmul.bf16.gmra.mxu0 %v467
    %v1972 = vpop.f32.mrf.mxu0
    %v1973 = vadd.f32 %v449, %v1972
    %v1974 = vpop.f32.mrf.mxu0
    %1975 = vdwg.mxu0
    %1976 = vmatpush.bf16.msra.mxu0 %v1367
    %1977 = vmatpush.bf16.msra.mxu0 %v1359
    %1978 = vmatpush.bf16.msra.mxu0 %v1351
    %1979 = vmatpush.bf16.msra.mxu0 %v1343
    %1980 = vmatpush.bf16.msra.mxu0 %v1335
    %1981 = vmatpush.bf16.msra.mxu0 %v1327
    %1982 = vmatpush.bf16.msra.mxu0 %v1319
    %1983 = vmatpush.bf16.msra.mxu0 %v1311
    %1984 = vmatmul.bf16.gmra.mxu0 %v468
    %v1985 = vpop.f32.mrf.mxu0
    %v1986 = vadd.f32 %v1973, %v1985
    %v1987 = vpop.f32.mrf.mxu0
    %1988 = vdwg.mxu0
    %1989 = vmatpush.bf16.msra.mxu0 %v1431
    %1990 = vmatpush.bf16.msra.mxu0 %v1423
    %1991 = vmatpush.bf16.msra.mxu0 %v1415
    %1992 = vmatpush.bf16.msra.mxu0 %v1407
    %1993 = vmatpush.bf16.msra.mxu0 %v1399
    %1994 = vmatpush.bf16.msra.mxu0 %v1391
    %1995 = vmatpush.bf16.msra.mxu0 %v1383
    %1996 = vmatpush.bf16.msra.mxu0 %v1375
    %1997 = vmatmul.bf16.gmra.mxu0 %v469
    %v1998 = vpop.f32.mrf.mxu0
    %v1999 = vadd.f32 %v1986, %v1998
    %v2000 = vpop.f32.mrf.mxu0
    %2001 = vdwg.mxu0
    %2002 = vmatpush.bf16.msra.mxu0 %v1495
    %2003 = vmatpush.bf16.msra.mxu0 %v1487
    %2004 = vmatpush.bf16.msra.mxu0 %v1479
    %2005 = vmatpush.bf16.msra.mxu0 %v1471
    %2006 = vmatpush.bf16.msra.mxu0 %v1463
    %2007 = vmatpush.bf16.msra.mxu0 %v1455
    %2008 = vmatpush.bf16.msra.mxu0 %v1447
    %2009 = vmatpush.bf16.msra.mxu0 %v1439
    %2010 = vmatmul.bf16.gmra.mxu0 %v470
    %v2011 = vpop.f32.mrf.mxu0
    %v2012 = vadd.f32 %v1999, %v2011
    %v2013 = vpop.f32.mrf.mxu0
    %2014 = vdwg.mxu0
    %2015 = vmatpush.bf16.msra.mxu0 %v1304
    %2016 = vmatpush.bf16.msra.mxu0 %v1296
    %2017 = vmatpush.bf16.msra.mxu0 %v1288
    %2018 = vmatpush.bf16.msra.mxu0 %v1280
    %2019 = vmatpush.bf16.msra.mxu0 %v1272
    %2020 = vmatpush.bf16.msra.mxu0 %v1264
    %2021 = vmatpush.bf16.msra.mxu0 %v1256
    %2022 = vmatpush.bf16.msra.mxu0 %v1248
    %2023 = vmatmul.bf16.gmra.mxu0 %v467
    %v2024 = vpop.f32.mrf.mxu0
    %v2025 = vadd.f32 %v450, %v2024
    %v2026 = vpop.f32.mrf.mxu0
    %2027 = vdwg.mxu0
    %2028 = vmatpush.bf16.msra.mxu0 %v1368
    %2029 = vmatpush.bf16.msra.mxu0 %v1360
    %2030 = vmatpush.bf16.msra.mxu0 %v1352
    %2031 = vmatpush.bf16.msra.mxu0 %v1344
    %2032 = vmatpush.bf16.msra.mxu0 %v1336
    %2033 = vmatpush.bf16.msra.mxu0 %v1328
    %2034 = vmatpush.bf16.msra.mxu0 %v1320
    %2035 = vmatpush.bf16.msra.mxu0 %v1312
    %2036 = vmatmul.bf16.gmra.mxu0 %v468
    %v2037 = vpop.f32.mrf.mxu0
    %v2038 = vadd.f32 %v2025, %v2037
    %v2039 = vpop.f32.mrf.mxu0
    %2040 = vdwg.mxu0
    %2041 = vmatpush.bf16.msra.mxu0 %v1432
    %2042 = vmatpush.bf16.msra.mxu0 %v1424
    %2043 = vmatpush.bf16.msra.mxu0 %v1416
    %2044 = vmatpush.bf16.msra.mxu0 %v1408
    %2045 = vmatpush.bf16.msra.mxu0 %v1400
    %2046 = vmatpush.bf16.msra.mxu0 %v1392
    %2047 = vmatpush.bf16.msra.mxu0 %v1384
    %2048 = vmatpush.bf16.msra.mxu0 %v1376
    %2049 = vmatmul.bf16.gmra.mxu0 %v469
    %v2050 = vpop.f32.mrf.mxu0
    %v2051 = vadd.f32 %v2038, %v2050
    %v2052 = vpop.f32.mrf.mxu0
    %2053 = vdwg.mxu0
    %2054 = vmatpush.bf16.msra.mxu0 %v1496
    %2055 = vmatpush.bf16.msra.mxu0 %v1488
    %2056 = vmatpush.bf16.msra.mxu0 %v1480
    %2057 = vmatpush.bf16.msra.mxu0 %v1472
    %2058 = vmatpush.bf16.msra.mxu0 %v1464
    %2059 = vmatpush.bf16.msra.mxu0 %v1456
    %2060 = vmatpush.bf16.msra.mxu0 %v1448
    %2061 = vmatpush.bf16.msra.mxu0 %v1440
    %2062 = vmatmul.bf16.gmra.mxu0 %v470
    %v2063 = vpop.f32.mrf.mxu0
    %v2064 = vadd.f32 %v2051, %v2063
    %v2065 = vpop.f32.mrf.mxu0
    %2066 = vdwg.mxu0
    %2067 = vmatpush.bf16.msra.mxu0 %v1305
    %2068 = vmatpush.bf16.msra.mxu0 %v1297
    %2069 = vmatpush.bf16.msra.mxu0 %v1289
    %2070 = vmatpush.bf16.msra.mxu0 %v1281
    %2071 = vmatpush.bf16.msra.mxu0 %v1273
    %2072 = vmatpush.bf16.msra.mxu0 %v1265
    %2073 = vmatpush.bf16.msra.mxu0 %v1257
    %2074 = vmatpush.bf16.msra.mxu0 %v1249
    %2075 = vmatmul.bf16.gmra.mxu0 %v467
    %v2076 = vpop.f32.mrf.mxu0
    %v2077 = vadd.f32 %v451, %v2076
    %v2078 = vpop.f32.mrf.mxu0
    %2079 = vdwg.mxu0
    %2080 = vmatpush.bf16.msra.mxu0 %v1369
    %2081 = vmatpush.bf16.msra.mxu0 %v1361
    %2082 = vmatpush.bf16.msra.mxu0 %v1353
    %2083 = vmatpush.bf16.msra.mxu0 %v1345
    %2084 = vmatpush.bf16.msra.mxu0 %v1337
    %2085 = vmatpush.bf16.msra.mxu0 %v1329
    %2086 = vmatpush.bf16.msra.mxu0 %v1321
    %2087 = vmatpush.bf16.msra.mxu0 %v1313
    %2088 = vmatmul.bf16.gmra.mxu0 %v468
    %v2089 = vpop.f32.mrf.mxu0
    %v2090 = vadd.f32 %v2077, %v2089
    %v2091 = vpop.f32.mrf.mxu0
    %2092 = vdwg.mxu0
    %2093 = vmatpush.bf16.msra.mxu0 %v1433
    %2094 = vmatpush.bf16.msra.mxu0 %v1425
    %2095 = vmatpush.bf16.msra.mxu0 %v1417
    %2096 = vmatpush.bf16.msra.mxu0 %v1409
    %2097 = vmatpush.bf16.msra.mxu0 %v1401
    %2098 = vmatpush.bf16.msra.mxu0 %v1393
    %2099 = vmatpush.bf16.msra.mxu0 %v1385
    %2100 = vmatpush.bf16.msra.mxu0 %v1377
    %2101 = vmatmul.bf16.gmra.mxu0 %v469
    %v2102 = vpop.f32.mrf.mxu0
    %v2103 = vadd.f32 %v2090, %v2102
    %v2104 = vpop.f32.mrf.mxu0
    %2105 = vdwg.mxu0
    %2106 = vmatpush.bf16.msra.mxu0 %v1497
    %2107 = vmatpush.bf16.msra.mxu0 %v1489
    %2108 = vmatpush.bf16.msra.mxu0 %v1481
    %2109 = vmatpush.bf16.msra.mxu0 %v1473
    %2110 = vmatpush.bf16.msra.mxu0 %v1465
    %2111 = vmatpush.bf16.msra.mxu0 %v1457
    %2112 = vmatpush.bf16.msra.mxu0 %v1449
    %2113 = vmatpush.bf16.msra.mxu0 %v1441
    %2114 = vmatmul.bf16.gmra.mxu0 %v470
    %v2115 = vpop.f32.mrf.mxu0
    %v2116 = vadd.f32 %v2103, %v2115
    %v2117 = vpop.f32.mrf.mxu0
    %2118 = vdwg.mxu0
    %2119 = vmatpush.bf16.msra.mxu0 %v1306
    %2120 = vmatpush.bf16.msra.mxu0 %v1298
    %2121 = vmatpush.bf16.msra.mxu0 %v1290
    %2122 = vmatpush.bf16.msra.mxu0 %v1282
    %2123 = vmatpush.bf16.msra.mxu0 %v1274
    %2124 = vmatpush.bf16.msra.mxu0 %v1266
    %2125 = vmatpush.bf16.msra.mxu0 %v1258
    %2126 = vmatpush.bf16.msra.mxu0 %v1250
    %2127 = vmatmul.bf16.gmra.mxu0 %v467
    %v2128 = vpop.f32.mrf.mxu0
    %v2129 = vadd.f32 %v452, %v2128
    %v2130 = vpop.f32.mrf.mxu0
    %2131 = vdwg.mxu0
    %2132 = vmatpush.bf16.msra.mxu0 %v1370
    %2133 = vmatpush.bf16.msra.mxu0 %v1362
    %2134 = vmatpush.bf16.msra.mxu0 %v1354
    %2135 = vmatpush.bf16.msra.mxu0 %v1346
    %2136 = vmatpush.bf16.msra.mxu0 %v1338
    %2137 = vmatpush.bf16.msra.mxu0 %v1330
    %2138 = vmatpush.bf16.msra.mxu0 %v1322
    %2139 = vmatpush.bf16.msra.mxu0 %v1314
    %2140 = vmatmul.bf16.gmra.mxu0 %v468
    %v2141 = vpop.f32.mrf.mxu0
    %v2142 = vadd.f32 %v2129, %v2141
    %v2143 = vpop.f32.mrf.mxu0
    %2144 = vdwg.mxu0
    %2145 = vmatpush.bf16.msra.mxu0 %v1434
    %2146 = vmatpush.bf16.msra.mxu0 %v1426
    %2147 = vmatpush.bf16.msra.mxu0 %v1418
    %2148 = vmatpush.bf16.msra.mxu0 %v1410
    %2149 = vmatpush.bf16.msra.mxu0 %v1402
    %2150 = vmatpush.bf16.msra.mxu0 %v1394
    %2151 = vmatpush.bf16.msra.mxu0 %v1386
    %2152 = vmatpush.bf16.msra.mxu0 %v1378
    %2153 = vmatmul.bf16.gmra.mxu0 %v469
    %v2154 = vpop.f32.mrf.mxu0
    %v2155 = vadd.f32 %v2142, %v2154
    %v2156 = vpop.f32.mrf.mxu0
    %2157 = vdwg.mxu0
    %2158 = vmatpush.bf16.msra.mxu0 %v1498
    %2159 = vmatpush.bf16.msra.mxu0 %v1490
    %2160 = vmatpush.bf16.msra.mxu0 %v1482
    %2161 = vmatpush.bf16.msra.mxu0 %v1474
    %2162 = vmatpush.bf16.msra.mxu0 %v1466
    %2163 = vmatpush.bf16.msra.mxu0 %v1458
    %2164 = vmatpush.bf16.msra.mxu0 %v1450
    %2165 = vmatpush.bf16.msra.mxu0 %v1442
    %2166 = vmatmul.bf16.gmra.mxu0 %v470
    %v2167 = vpop.f32.mrf.mxu0
    %v2168 = vadd.f32 %v2155, %v2167
    %v2169 = vpop.f32.mrf.mxu0
    %2170 = vdwg.mxu0
    %v2171 = vmul.f32 %v1804, 0.01
    %v2172 = vmul.f32 %v1856, 0.01
    %v2173 = vmul.f32 %v1908, 0.01
    %v2174 = vmul.f32 %v1960, 0.01
    %v2175 = vmul.f32 %v2012, 0.01
    %v2176 = vmul.f32 %v2064, 0.01
    %v2177 = vmul.f32 %v2116, 0.01
    %v2178 = vmul.f32 %v2168, 0.01
    %v2179 = vmax.f32 %v1804, %v2171
    %v2180 = vmax.f32 %v1856, %v2172
    %v2181 = vmax.f32 %v1908, %v2173
    %v2182 = vmax.f32 %v1960, %v2174
    %v2183 = vmax.f32 %v2012, %v2175
    %v2184 = vmax.f32 %v2064, %v2176
    %v2185 = vmax.f32 %v2116, %v2177
    %v2186 = vmax.f32 %v2168, %v2178
    %v2187 = vpack.c.bf16 %v2179, %v2179
    %v2188 = vpack.c.bf16 %v2180, %v2180
    %v2189 = vpack.c.bf16 %v2181, %v2181
    %v2190 = vpack.c.bf16 %v2182, %v2182
    %v2191 = vpack.c.bf16 %v2183, %v2183
    %v2192 = vpack.c.bf16 %v2184, %v2184
    %v2193 = vpack.c.bf16 %v2185, %v2185
    %v2194 = vpack.c.bf16 %v2186, %v2186
    %v2195 = vld [vmem:[#allocation5] sm:$0xff]
    %v2196 = vld [vmem:[#allocation5 + $0x8] sm:$0xff]
    %v2197 = vld [vmem:[#allocation5 + $0x10] sm:$0xff]
    %v2198 = vld [vmem:[#allocation5 + $0x18] sm:$0xff]
    %v2199 = vld [vmem:[#allocation5 + $0x20] sm:$0xff]
    %v2200 = vld [vmem:[#allocation5 + $0x28] sm:$0xff]
    %v2201 = vld [vmem:[#allocation5 + $0x30] sm:$0xff]
    %v2202 = vld [vmem:[#allocation5 + $0x38] sm:$0xff]
    %v2203 = vld [vmem:[#allocation5 + $0x40] sm:$0xff]
    %v2204 = vld [vmem:[#allocation5 + $0x48] sm:$0xff]
    %v2205 = vld [vmem:[#allocation5 + $0x50] sm:$0xff]
    %v2206 = vld [vmem:[#allocation5 + $0x58] sm:$0xff]
    %v2207 = vld [vmem:[#allocation5 + $0x60] sm:$0xff]
    %v2208 = vld [vmem:[#allocation5 + $0x68] sm:$0xff]
    %v2209 = vld [vmem:[#allocation5 + $0x70] sm:$0xff]
    %v2210 = vld [vmem:[#allocation5 + $0x78] sm:$0xff]
    %v2211 = vld [vmem:[#allocation5 + $0x80] sm:$0xff]
    %v2212 = vld [vmem:[#allocation5 + $0x88] sm:$0xff]
    %v2213 = vld [vmem:[#allocation5 + $0x90] sm:$0xff]
    %v2214 = vld [vmem:[#allocation5 + $0x98] sm:$0xff]
    %v2215 = vld [vmem:[#allocation5 + $0xa0] sm:$0xff]
    %v2216 = vld [vmem:[#allocation5 + $0xa8] sm:$0xff]
    %v2217 = vld [vmem:[#allocation5 + $0xb0] sm:$0xff]
    %v2218 = vld [vmem:[#allocation5 + $0xb8] sm:$0xff]
    %v2219 = vld [vmem:[#allocation5 + $0xc0] sm:$0xff]
    %v2220 = vld [vmem:[#allocation5 + $0xc8] sm:$0xff]
    %v2221 = vld [vmem:[#allocation5 + $0xd0] sm:$0xff]
    %v2222 = vld [vmem:[#allocation5 + $0xd8] sm:$0xff]
    %v2223 = vld [vmem:[#allocation5 + $0xe0] sm:$0xff]
    %v2224 = vld [vmem:[#allocation5 + $0xe8] sm:$0xff]
    %v2225 = vld [vmem:[#allocation5 + $0xf0] sm:$0xff]
    %v2226 = vld [vmem:[#allocation5 + $0xf8] sm:$0xff]
    %v2227 = vld [vmem:[#allocation5 + $0x100] sm:$0xff]
    %v2228 = vld [vmem:[#allocation5 + $0x108] sm:$0xff]
    %v2229 = vld [vmem:[#allocation5 + $0x110] sm:$0xff]
    %v2230 = vld [vmem:[#allocation5 + $0x118] sm:$0xff]
    %v2231 = vld [vmem:[#allocation5 + $0x120] sm:$0xff]
    %v2232 = vld [vmem:[#allocation5 + $0x128] sm:$0xff]
    %v2233 = vld [vmem:[#allocation5 + $0x130] sm:$0xff]
    %v2234 = vld [vmem:[#allocation5 + $0x138] sm:$0xff]
    %v2235 = vld [vmem:[#allocation5 + $0x140] sm:$0xff]
    %v2236 = vld [vmem:[#allocation5 + $0x148] sm:$0xff]
    %v2237 = vld [vmem:[#allocation5 + $0x150] sm:$0xff]
    %v2238 = vld [vmem:[#allocation5 + $0x158] sm:$0xff]
    %v2239 = vld [vmem:[#allocation5 + $0x160] sm:$0xff]
    %v2240 = vld [vmem:[#allocation5 + $0x168] sm:$0xff]
    %v2241 = vld [vmem:[#allocation5 + $0x170] sm:$0xff]
    %v2242 = vld [vmem:[#allocation5 + $0x178] sm:$0xff]
    %v2243 = vld [vmem:[#allocation5 + $0x180] sm:$0xff]
    %v2244 = vld [vmem:[#allocation5 + $0x188] sm:$0xff]
    %v2245 = vld [vmem:[#allocation5 + $0x190] sm:$0xff]
    %v2246 = vld [vmem:[#allocation5 + $0x198] sm:$0xff]
    %v2247 = vld [vmem:[#allocation5 + $0x1a0] sm:$0xff]
    %v2248 = vld [vmem:[#allocation5 + $0x1a8] sm:$0xff]
    %v2249 = vld [vmem:[#allocation5 + $0x1b0] sm:$0xff]
    %v2250 = vld [vmem:[#allocation5 + $0x1b8] sm:$0xff]
    %v2251 = vld [vmem:[#allocation5 + $0x1c0] sm:$0xff]
    %v2252 = vld [vmem:[#allocation5 + $0x1c8] sm:$0xff]
    %v2253 = vld [vmem:[#allocation5 + $0x1d0] sm:$0xff]
    %v2254 = vld [vmem:[#allocation5 + $0x1d8] sm:$0xff]
    %v2255 = vld [vmem:[#allocation5 + $0x1e0] sm:$0xff]
    %v2256 = vld [vmem:[#allocation5 + $0x1e8] sm:$0xff]
    %v2257 = vld [vmem:[#allocation5 + $0x1f0] sm:$0xff]
    %v2258 = vld [vmem:[#allocation5 + $0x1f8] sm:$0xff]
    %v2259 = vld [vmem:[#allocation5 + $0x200] sm:$0xff]
    %v2260 = vld [vmem:[#allocation5 + $0x208] sm:$0xff]
    %v2261 = vld [vmem:[#allocation5 + $0x210] sm:$0xff]
    %v2262 = vld [vmem:[#allocation5 + $0x218] sm:$0xff]
    %v2263 = vld [vmem:[#allocation5 + $0x220] sm:$0xff]
    %v2264 = vld [vmem:[#allocation5 + $0x228] sm:$0xff]
    %v2265 = vld [vmem:[#allocation5 + $0x230] sm:$0xff]
    %v2266 = vld [vmem:[#allocation5 + $0x238] sm:$0xff]
    %v2267 = vld [vmem:[#allocation5 + $0x240] sm:$0xff]
    %v2268 = vld [vmem:[#allocation5 + $0x248] sm:$0xff]
    %v2269 = vld [vmem:[#allocation5 + $0x250] sm:$0xff]
    %v2270 = vld [vmem:[#allocation5 + $0x258] sm:$0xff]
    %v2271 = vld [vmem:[#allocation5 + $0x260] sm:$0xff]
    %v2272 = vld [vmem:[#allocation5 + $0x268] sm:$0xff]
    %v2273 = vld [vmem:[#allocation5 + $0x270] sm:$0xff]
    %v2274 = vld [vmem:[#allocation5 + $0x278] sm:$0xff]
    %v2275 = vld [vmem:[#allocation5 + $0x280] sm:$0xff]
    %v2276 = vld [vmem:[#allocation5 + $0x288] sm:$0xff]
    %v2277 = vld [vmem:[#allocation5 + $0x290] sm:$0xff]
    %v2278 = vld [vmem:[#allocation5 + $0x298] sm:$0xff]
    %v2279 = vld [vmem:[#allocation5 + $0x2a0] sm:$0xff]
    %v2280 = vld [vmem:[#allocation5 + $0x2a8] sm:$0xff]
    %v2281 = vld [vmem:[#allocation5 + $0x2b0] sm:$0xff]
    %v2282 = vld [vmem:[#allocation5 + $0x2b8] sm:$0xff]
    %v2283 = vld [vmem:[#allocation5 + $0x2c0] sm:$0xff]
    %v2284 = vld [vmem:[#allocation5 + $0x2c8] sm:$0xff]
    %v2285 = vld [vmem:[#allocation5 + $0x2d0] sm:$0xff]
    %v2286 = vld [vmem:[#allocation5 + $0x2d8] sm:$0xff]
    %v2287 = vld [vmem:[#allocation5 + $0x2e0] sm:$0xff]
    %v2288 = vld [vmem:[#allocation5 + $0x2e8] sm:$0xff]
    %v2289 = vld [vmem:[#allocation5 + $0x2f0] sm:$0xff]
    %v2290 = vld [vmem:[#allocation5 + $0x2f8] sm:$0xff]
    %v2291 = vld [vmem:[#allocation5 + $0x300] sm:$0xff]
    %v2292 = vld [vmem:[#allocation5 + $0x308] sm:$0xff]
    %v2293 = vld [vmem:[#allocation5 + $0x310] sm:$0xff]
    %v2294 = vld [vmem:[#allocation5 + $0x318] sm:$0xff]
    %v2295 = vld [vmem:[#allocation5 + $0x320] sm:$0xff]
    %v2296 = vld [vmem:[#allocation5 + $0x328] sm:$0xff]
    %v2297 = vld [vmem:[#allocation5 + $0x330] sm:$0xff]
    %v2298 = vld [vmem:[#allocation5 + $0x338] sm:$0xff]
    %v2299 = vld [vmem:[#allocation5 + $0x340] sm:$0xff]
    %v2300 = vld [vmem:[#allocation5 + $0x348] sm:$0xff]
    %v2301 = vld [vmem:[#allocation5 + $0x350] sm:$0xff]
    %v2302 = vld [vmem:[#allocation5 + $0x358] sm:$0xff]
    %v2303 = vld [vmem:[#allocation5 + $0x360] sm:$0xff]
    %v2304 = vld [vmem:[#allocation5 + $0x368] sm:$0xff]
    %v2305 = vld [vmem:[#allocation5 + $0x370] sm:$0xff]
    %v2306 = vld [vmem:[#allocation5 + $0x378] sm:$0xff]
    %v2307 = vld [vmem:[#allocation5 + $0x380] sm:$0xff]
    %v2308 = vld [vmem:[#allocation5 + $0x388] sm:$0xff]
    %v2309 = vld [vmem:[#allocation5 + $0x390] sm:$0xff]
    %v2310 = vld [vmem:[#allocation5 + $0x398] sm:$0xff]
    %v2311 = vld [vmem:[#allocation5 + $0x3a0] sm:$0xff]
    %v2312 = vld [vmem:[#allocation5 + $0x3a8] sm:$0xff]
    %v2313 = vld [vmem:[#allocation5 + $0x3b0] sm:$0xff]
    %v2314 = vld [vmem:[#allocation5 + $0x3b8] sm:$0xff]
    %v2315 = vld [vmem:[#allocation5 + $0x3c0] sm:$0xff]
    %v2316 = vld [vmem:[#allocation5 + $0x3c8] sm:$0xff]
    %v2317 = vld [vmem:[#allocation5 + $0x3d0] sm:$0xff]
    %v2318 = vld [vmem:[#allocation5 + $0x3d8] sm:$0xff]
    %v2319 = vld [vmem:[#allocation5 + $0x3e0] sm:$0xff]
    %v2320 = vld [vmem:[#allocation5 + $0x3e8] sm:$0xff]
    %v2321 = vld [vmem:[#allocation5 + $0x3f0] sm:$0xff]
    %v2322 = vld [vmem:[#allocation5 + $0x3f8] sm:$0xff]
    %v2323 = vld [vmem:[#allocation5 + $0x400] sm:$0xff]
    %v2324 = vld [vmem:[#allocation5 + $0x408] sm:$0xff]
    %v2325 = vld [vmem:[#allocation5 + $0x410] sm:$0xff]
    %v2326 = vld [vmem:[#allocation5 + $0x418] sm:$0xff]
    %v2327 = vld [vmem:[#allocation5 + $0x420] sm:$0xff]
    %v2328 = vld [vmem:[#allocation5 + $0x428] sm:$0xff]
    %v2329 = vld [vmem:[#allocation5 + $0x430] sm:$0xff]
    %v2330 = vld [vmem:[#allocation5 + $0x438] sm:$0xff]
    %v2331 = vld [vmem:[#allocation5 + $0x440] sm:$0xff]
    %v2332 = vld [vmem:[#allocation5 + $0x448] sm:$0xff]
    %v2333 = vld [vmem:[#allocation5 + $0x450] sm:$0xff]
    %v2334 = vld [vmem:[#allocation5 + $0x458] sm:$0xff]
    %v2335 = vld [vmem:[#allocation5 + $0x460] sm:$0xff]
    %v2336 = vld [vmem:[#allocation5 + $0x468] sm:$0xff]
    %v2337 = vld [vmem:[#allocation5 + $0x470] sm:$0xff]
    %v2338 = vld [vmem:[#allocation5 + $0x478] sm:$0xff]
    %v2339 = vld [vmem:[#allocation5 + $0x480] sm:$0xff]
    %v2340 = vld [vmem:[#allocation5 + $0x488] sm:$0xff]
    %v2341 = vld [vmem:[#allocation5 + $0x490] sm:$0xff]
    %v2342 = vld [vmem:[#allocation5 + $0x498] sm:$0xff]
    %v2343 = vld [vmem:[#allocation5 + $0x4a0] sm:$0xff]
    %v2344 = vld [vmem:[#allocation5 + $0x4a8] sm:$0xff]
    %v2345 = vld [vmem:[#allocation5 + $0x4b0] sm:$0xff]
    %v2346 = vld [vmem:[#allocation5 + $0x4b8] sm:$0xff]
    %v2347 = vld [vmem:[#allocation5 + $0x4c0] sm:$0xff]
    %v2348 = vld [vmem:[#allocation5 + $0x4c8] sm:$0xff]
    %v2349 = vld [vmem:[#allocation5 + $0x4d0] sm:$0xff]
    %v2350 = vld [vmem:[#allocation5 + $0x4d8] sm:$0xff]
    %v2351 = vld [vmem:[#allocation5 + $0x4e0] sm:$0xff]
    %v2352 = vld [vmem:[#allocation5 + $0x4e8] sm:$0xff]
    %v2353 = vld [vmem:[#allocation5 + $0x4f0] sm:$0xff]
    %v2354 = vld [vmem:[#allocation5 + $0x4f8] sm:$0xff]
    %v2355 = vld [vmem:[#allocation5 + $0x500] sm:$0xff]
    %v2356 = vld [vmem:[#allocation5 + $0x508] sm:$0xff]
    %v2357 = vld [vmem:[#allocation5 + $0x510] sm:$0xff]
    %v2358 = vld [vmem:[#allocation5 + $0x518] sm:$0xff]
    %v2359 = vld [vmem:[#allocation5 + $0x520] sm:$0xff]
    %v2360 = vld [vmem:[#allocation5 + $0x528] sm:$0xff]
    %v2361 = vld [vmem:[#allocation5 + $0x530] sm:$0xff]
    %v2362 = vld [vmem:[#allocation5 + $0x538] sm:$0xff]
    %v2363 = vld [vmem:[#allocation5 + $0x540] sm:$0xff]
    %v2364 = vld [vmem:[#allocation5 + $0x548] sm:$0xff]
    %v2365 = vld [vmem:[#allocation5 + $0x550] sm:$0xff]
    %v2366 = vld [vmem:[#allocation5 + $0x558] sm:$0xff]
    %v2367 = vld [vmem:[#allocation5 + $0x560] sm:$0xff]
    %v2368 = vld [vmem:[#allocation5 + $0x568] sm:$0xff]
    %v2369 = vld [vmem:[#allocation5 + $0x570] sm:$0xff]
    %v2370 = vld [vmem:[#allocation5 + $0x578] sm:$0xff]
    %v2371 = vld [vmem:[#allocation5 + $0x580] sm:$0xff]
    %v2372 = vld [vmem:[#allocation5 + $0x588] sm:$0xff]
    %v2373 = vld [vmem:[#allocation5 + $0x590] sm:$0xff]
    %v2374 = vld [vmem:[#allocation5 + $0x598] sm:$0xff]
    %v2375 = vld [vmem:[#allocation5 + $0x5a0] sm:$0xff]
    %v2376 = vld [vmem:[#allocation5 + $0x5a8] sm:$0xff]
    %v2377 = vld [vmem:[#allocation5 + $0x5b0] sm:$0xff]
    %v2378 = vld [vmem:[#allocation5 + $0x5b8] sm:$0xff]
    %v2379 = vld [vmem:[#allocation5 + $0x5c0] sm:$0xff]
    %v2380 = vld [vmem:[#allocation5 + $0x5c8] sm:$0xff]
    %v2381 = vld [vmem:[#allocation5 + $0x5d0] sm:$0xff]
    %v2382 = vld [vmem:[#allocation5 + $0x5d8] sm:$0xff]
    %v2383 = vld [vmem:[#allocation5 + $0x5e0] sm:$0xff]
    %v2384 = vld [vmem:[#allocation5 + $0x5e8] sm:$0xff]
    %v2385 = vld [vmem:[#allocation5 + $0x5f0] sm:$0xff]
    %v2386 = vld [vmem:[#allocation5 + $0x5f8] sm:$0xff]
    %v2387 = vld [vmem:[#allocation5 + $0x600] sm:$0xff]
    %v2388 = vld [vmem:[#allocation5 + $0x608] sm:$0xff]
    %v2389 = vld [vmem:[#allocation5 + $0x610] sm:$0xff]
    %v2390 = vld [vmem:[#allocation5 + $0x618] sm:$0xff]
    %v2391 = vld [vmem:[#allocation5 + $0x620] sm:$0xff]
    %v2392 = vld [vmem:[#allocation5 + $0x628] sm:$0xff]
    %v2393 = vld [vmem:[#allocation5 + $0x630] sm:$0xff]
    %v2394 = vld [vmem:[#allocation5 + $0x638] sm:$0xff]
    %v2395 = vld [vmem:[#allocation5 + $0x640] sm:$0xff]
    %v2396 = vld [vmem:[#allocation5 + $0x648] sm:$0xff]
    %v2397 = vld [vmem:[#allocation5 + $0x650] sm:$0xff]
    %v2398 = vld [vmem:[#allocation5 + $0x658] sm:$0xff]
    %v2399 = vld [vmem:[#allocation5 + $0x660] sm:$0xff]
    %v2400 = vld [vmem:[#allocation5 + $0x668] sm:$0xff]
    %v2401 = vld [vmem:[#allocation5 + $0x670] sm:$0xff]
    %v2402 = vld [vmem:[#allocation5 + $0x678] sm:$0xff]
    %v2403 = vld [vmem:[#allocation5 + $0x680] sm:$0xff]
    %v2404 = vld [vmem:[#allocation5 + $0x688] sm:$0xff]
    %v2405 = vld [vmem:[#allocation5 + $0x690] sm:$0xff]
    %v2406 = vld [vmem:[#allocation5 + $0x698] sm:$0xff]
    %v2407 = vld [vmem:[#allocation5 + $0x6a0] sm:$0xff]
    %v2408 = vld [vmem:[#allocation5 + $0x6a8] sm:$0xff]
    %v2409 = vld [vmem:[#allocation5 + $0x6b0] sm:$0xff]
    %v2410 = vld [vmem:[#allocation5 + $0x6b8] sm:$0xff]
    %v2411 = vld [vmem:[#allocation5 + $0x6c0] sm:$0xff]
    %v2412 = vld [vmem:[#allocation5 + $0x6c8] sm:$0xff]
    %v2413 = vld [vmem:[#allocation5 + $0x6d0] sm:$0xff]
    %v2414 = vld [vmem:[#allocation5 + $0x6d8] sm:$0xff]
    %v2415 = vld [vmem:[#allocation5 + $0x6e0] sm:$0xff]
    %v2416 = vld [vmem:[#allocation5 + $0x6e8] sm:$0xff]
    %v2417 = vld [vmem:[#allocation5 + $0x6f0] sm:$0xff]
    %v2418 = vld [vmem:[#allocation5 + $0x6f8] sm:$0xff]
    %v2419 = vld [vmem:[#allocation5 + $0x700] sm:$0xff]
    %v2420 = vld [vmem:[#allocation5 + $0x708] sm:$0xff]
    %v2421 = vld [vmem:[#allocation5 + $0x710] sm:$0xff]
    %v2422 = vld [vmem:[#allocation5 + $0x718] sm:$0xff]
    %v2423 = vld [vmem:[#allocation5 + $0x720] sm:$0xff]
    %v2424 = vld [vmem:[#allocation5 + $0x728] sm:$0xff]
    %v2425 = vld [vmem:[#allocation5 + $0x730] sm:$0xff]
    %v2426 = vld [vmem:[#allocation5 + $0x738] sm:$0xff]
    %v2427 = vld [vmem:[#allocation5 + $0x740] sm:$0xff]
    %v2428 = vld [vmem:[#allocation5 + $0x748] sm:$0xff]
    %v2429 = vld [vmem:[#allocation5 + $0x750] sm:$0xff]
    %v2430 = vld [vmem:[#allocation5 + $0x758] sm:$0xff]
    %v2431 = vld [vmem:[#allocation5 + $0x760] sm:$0xff]
    %v2432 = vld [vmem:[#allocation5 + $0x768] sm:$0xff]
    %v2433 = vld [vmem:[#allocation5 + $0x770] sm:$0xff]
    %v2434 = vld [vmem:[#allocation5 + $0x778] sm:$0xff]
    %v2435 = vld [vmem:[#allocation5 + $0x780] sm:$0xff]
    %v2436 = vld [vmem:[#allocation5 + $0x788] sm:$0xff]
    %v2437 = vld [vmem:[#allocation5 + $0x790] sm:$0xff]
    %v2438 = vld [vmem:[#allocation5 + $0x798] sm:$0xff]
    %v2439 = vld [vmem:[#allocation5 + $0x7a0] sm:$0xff]
    %v2440 = vld [vmem:[#allocation5 + $0x7a8] sm:$0xff]
    %v2441 = vld [vmem:[#allocation5 + $0x7b0] sm:$0xff]
    %v2442 = vld [vmem:[#allocation5 + $0x7b8] sm:$0xff]
    %v2443 = vld [vmem:[#allocation5 + $0x7c0] sm:$0xff]
    %v2444 = vld [vmem:[#allocation5 + $0x7c8] sm:$0xff]
    %v2445 = vld [vmem:[#allocation5 + $0x7d0] sm:$0xff]
    %v2446 = vld [vmem:[#allocation5 + $0x7d8] sm:$0xff]
    %v2447 = vld [vmem:[#allocation5 + $0x7e0] sm:$0xff]
    %v2448 = vld [vmem:[#allocation5 + $0x7e8] sm:$0xff]
    %v2449 = vld [vmem:[#allocation5 + $0x7f0] sm:$0xff]
    %v2450 = vld [vmem:[#allocation5 + $0x7f8] sm:$0xff]
    %v2451 = vld [vmem:[%s4] sm:$0xf]
    %v2453 = vperm.slane %v2451, 0
    %v2454 = vperm.slane %v2451, 1
    %v2455 = vperm.slane %v2451, 2
    %v2456 = vperm.slane %v2451, 3
    %v2717 = vunpack.c.l.b16 %v2195
    %v2718 = vunpack.c.h.b16 %v2195
    %v2719 = vunpack.c.l.b16 %v2196
    %v2720 = vunpack.c.h.b16 %v2196
    %v2721 = vunpack.c.l.b16 %v2197
    %v2722 = vunpack.c.h.b16 %v2197
    %v2723 = vunpack.c.l.b16 %v2198
    %v2724 = vunpack.c.h.b16 %v2198
    %v2725 = vunpack.c.l.b16 %v2199
    %v2726 = vunpack.c.h.b16 %v2199
    %v2727 = vunpack.c.l.b16 %v2200
    %v2728 = vunpack.c.h.b16 %v2200
    %v2729 = vunpack.c.l.b16 %v2201
    %v2730 = vunpack.c.h.b16 %v2201
    %v2731 = vunpack.c.l.b16 %v2202
    %v2732 = vunpack.c.h.b16 %v2202
    %v2733 = vunpack.c.l.b16 %v2203
    %v2734 = vunpack.c.h.b16 %v2203
    %v2735 = vunpack.c.l.b16 %v2204
    %v2736 = vunpack.c.h.b16 %v2204
    %v2737 = vunpack.c.l.b16 %v2205
    %v2738 = vunpack.c.h.b16 %v2205
    %v2739 = vunpack.c.l.b16 %v2206
    %v2740 = vunpack.c.h.b16 %v2206
    %v2741 = vunpack.c.l.b16 %v2207
    %v2742 = vunpack.c.h.b16 %v2207
    %v2743 = vunpack.c.l.b16 %v2208
    %v2744 = vunpack.c.h.b16 %v2208
    %v2745 = vunpack.c.l.b16 %v2209
    %v2746 = vunpack.c.h.b16 %v2209
    %v2747 = vunpack.c.l.b16 %v2210
    %v2748 = vunpack.c.h.b16 %v2210
    %v2749 = vunpack.c.l.b16 %v2211
    %v2750 = vunpack.c.h.b16 %v2211
    %v2751 = vunpack.c.l.b16 %v2212
    %v2752 = vunpack.c.h.b16 %v2212
    %v2753 = vunpack.c.l.b16 %v2213
    %v2754 = vunpack.c.h.b16 %v2213
    %v2755 = vunpack.c.l.b16 %v2214
    %v2756 = vunpack.c.h.b16 %v2214
    %v2757 = vunpack.c.l.b16 %v2215
    %v2758 = vunpack.c.h.b16 %v2215
    %v2759 = vunpack.c.l.b16 %v2216
    %v2760 = vunpack.c.h.b16 %v2216
    %v2761 = vunpack.c.l.b16 %v2217
    %v2762 = vunpack.c.h.b16 %v2217
    %v2763 = vunpack.c.l.b16 %v2218
    %v2764 = vunpack.c.h.b16 %v2218
    %v2765 = vunpack.c.l.b16 %v2219
    %v2766 = vunpack.c.h.b16 %v2219
    %v2767 = vunpack.c.l.b16 %v2220
    %v2768 = vunpack.c.h.b16 %v2220
    %v2769 = vunpack.c.l.b16 %v2221
    %v2770 = vunpack.c.h.b16 %v2221
    %v2771 = vunpack.c.l.b16 %v2222
    %v2772 = vunpack.c.h.b16 %v2222
    %v2773 = vunpack.c.l.b16 %v2223
    %v2774 = vunpack.c.h.b16 %v2223
    %v2775 = vunpack.c.l.b16 %v2224
    %v2776 = vunpack.c.h.b16 %v2224
    %v2777 = vunpack.c.l.b16 %v2225
    %v2778 = vunpack.c.h.b16 %v2225
    %v2779 = vunpack.c.l.b16 %v2226
    %v2780 = vunpack.c.h.b16 %v2226
    %v2781 = vunpack.c.l.b16 %v2227
    %v2782 = vunpack.c.h.b16 %v2227
    %v2783 = vunpack.c.l.b16 %v2228
    %v2784 = vunpack.c.h.b16 %v2228
    %v2785 = vunpack.c.l.b16 %v2229
    %v2786 = vunpack.c.h.b16 %v2229
    %v2787 = vunpack.c.l.b16 %v2230
    %v2788 = vunpack.c.h.b16 %v2230
    %v2789 = vunpack.c.l.b16 %v2231
    %v2790 = vunpack.c.h.b16 %v2231
    %v2791 = vunpack.c.l.b16 %v2232
    %v2792 = vunpack.c.h.b16 %v2232
    %v2793 = vunpack.c.l.b16 %v2233
    %v2794 = vunpack.c.h.b16 %v2233
    %v2795 = vunpack.c.l.b16 %v2234
    %v2796 = vunpack.c.h.b16 %v2234
    %v2797 = vunpack.c.l.b16 %v2235
    %v2798 = vunpack.c.h.b16 %v2235
    %v2799 = vunpack.c.l.b16 %v2236
    %v2800 = vunpack.c.h.b16 %v2236
    %v2801 = vunpack.c.l.b16 %v2237
    %v2802 = vunpack.c.h.b16 %v2237
    %v2803 = vunpack.c.l.b16 %v2238
    %v2804 = vunpack.c.h.b16 %v2238
    %v2805 = vunpack.c.l.b16 %v2239
    %v2806 = vunpack.c.h.b16 %v2239
    %v2807 = vunpack.c.l.b16 %v2240
    %v2808 = vunpack.c.h.b16 %v2240
    %v2809 = vunpack.c.l.b16 %v2241
    %v2810 = vunpack.c.h.b16 %v2241
    %v2811 = vunpack.c.l.b16 %v2242
    %v2812 = vunpack.c.h.b16 %v2242
    %v2813 = vunpack.c.l.b16 %v2243
    %v2814 = vunpack.c.h.b16 %v2243
    %v2815 = vunpack.c.l.b16 %v2244
    %v2816 = vunpack.c.h.b16 %v2244
    %v2817 = vunpack.c.l.b16 %v2245
    %v2818 = vunpack.c.h.b16 %v2245
    %v2819 = vunpack.c.l.b16 %v2246
    %v2820 = vunpack.c.h.b16 %v2246
    %v2821 = vunpack.c.l.b16 %v2247
    %v2822 = vunpack.c.h.b16 %v2247
    %v2823 = vunpack.c.l.b16 %v2248
    %v2824 = vunpack.c.h.b16 %v2248
    %v2825 = vunpack.c.l.b16 %v2249
    %v2826 = vunpack.c.h.b16 %v2249
    %v2827 = vunpack.c.l.b16 %v2250
    %v2828 = vunpack.c.h.b16 %v2250
    %v2829 = vunpack.c.l.b16 %v2251
    %v2830 = vunpack.c.h.b16 %v2251
    %v2831 = vunpack.c.l.b16 %v2252
    %v2832 = vunpack.c.h.b16 %v2252
    %v2833 = vunpack.c.l.b16 %v2253
    %v2834 = vunpack.c.h.b16 %v2253
    %v2835 = vunpack.c.l.b16 %v2254
    %v2836 = vunpack.c.h.b16 %v2254
    %v2837 = vunpack.c.l.b16 %v2255
    %v2838 = vunpack.c.h.b16 %v2255
    %v2839 = vunpack.c.l.b16 %v2256
    %v2840 = vunpack.c.h.b16 %v2256
    %v2841 = vunpack.c.l.b16 %v2257
    %v2842 = vunpack.c.h.b16 %v2257
    %v2843 = vunpack.c.l.b16 %v2258
    %v2844 = vunpack.c.h.b16 %v2258
    %v2845 = vunpack.c.l.b16 %v2259
    %v2846 = vunpack.c.h.b16 %v2259
    %v2847 = vunpack.c.l.b16 %v2260
    %v2848 = vunpack.c.h.b16 %v2260
    %v2849 = vunpack.c.l.b16 %v2261
    %v2850 = vunpack.c.h.b16 %v2261
    %v2851 = vunpack.c.l.b16 %v2262
    %v2852 = vunpack.c.h.b16 %v2262
    %v2853 = vunpack.c.l.b16 %v2263
    %v2854 = vunpack.c.h.b16 %v2263
    %v2855 = vunpack.c.l.b16 %v2264
    %v2856 = vunpack.c.h.b16 %v2264
    %v2857 = vunpack.c.l.b16 %v2265
    %v2858 = vunpack.c.h.b16 %v2265
    %v2859 = vunpack.c.l.b16 %v2266
    %v2860 = vunpack.c.h.b16 %v2266
    %v2861 = vunpack.c.l.b16 %v2267
    %v2862 = vunpack.c.h.b16 %v2267
    %v2863 = vunpack.c.l.b16 %v2268
    %v2864 = vunpack.c.h.b16 %v2268
    %v2865 = vunpack.c.l.b16 %v2269
    %v2866 = vunpack.c.h.b16 %v2269
    %v2867 = vunpack.c.l.b16 %v2270
    %v2868 = vunpack.c.h.b16 %v2270
    %v2869 = vunpack.c.l.b16 %v2271
    %v2870 = vunpack.c.h.b16 %v2271
    %v2871 = vunpack.c.l.b16 %v2272
    %v2872 = vunpack.c.h.b16 %v2272
    %v2873 = vunpack.c.l.b16 %v2273
    %v2874 = vunpack.c.h.b16 %v2273
    %v2875 = vunpack.c.l.b16 %v2274
    %v2876 = vunpack.c.h.b16 %v2274
    %v2877 = vunpack.c.l.b16 %v2275
    %v2878 = vunpack.c.h.b16 %v2275
    %v2879 = vunpack.c.l.b16 %v2276
    %v2880 = vunpack.c.h.b16 %v2276
    %v2881 = vunpack.c.l.b16 %v2277
    %v2882 = vunpack.c.h.b16 %v2277
    %v2883 = vunpack.c.l.b16 %v2278
    %v2884 = vunpack.c.h.b16 %v2278
    %v2885 = vunpack.c.l.b16 %v2279
    %v2886 = vunpack.c.h.b16 %v2279
    %v2887 = vunpack.c.l.b16 %v2280
    %v2888 = vunpack.c.h.b16 %v2280
    %v2889 = vunpack.c.l.b16 %v2281
    %v2890 = vunpack.c.h.b16 %v2281
    %v2891 = vunpack.c.l.b16 %v2282
    %v2892 = vunpack.c.h.b16 %v2282
    %v2893 = vunpack.c.l.b16 %v2283
    %v2894 = vunpack.c.h.b16 %v2283
    %v2895 = vunpack.c.l.b16 %v2284
    %v2896 = vunpack.c.h.b16 %v2284
    %v2897 = vunpack.c.l.b16 %v2285
    %v2898 = vunpack.c.h.b16 %v2285
    %v2899 = vunpack.c.l.b16 %v2286
    %v2900 = vunpack.c.h.b16 %v2286
    %v2901 = vunpack.c.l.b16 %v2287
    %v2902 = vunpack.c.h.b16 %v2287
    %v2903 = vunpack.c.l.b16 %v2288
    %v2904 = vunpack.c.h.b16 %v2288
    %v2905 = vunpack.c.l.b16 %v2289
    %v2906 = vunpack.c.h.b16 %v2289
    %v2907 = vunpack.c.l.b16 %v2290
    %v2908 = vunpack.c.h.b16 %v2290
    %v2909 = vunpack.c.l.b16 %v2291
    %v2910 = vunpack.c.h.b16 %v2291
    %v2911 = vunpack.c.l.b16 %v2292
    %v2912 = vunpack.c.h.b16 %v2292
    %v2913 = vunpack.c.l.b16 %v2293
    %v2914 = vunpack.c.h.b16 %v2293
    %v2915 = vunpack.c.l.b16 %v2294
    %v2916 = vunpack.c.h.b16 %v2294
    %v2917 = vunpack.c.l.b16 %v2295
    %v2918 = vunpack.c.h.b16 %v2295
    %v2919 = vunpack.c.l.b16 %v2296
    %v2920 = vunpack.c.h.b16 %v2296
    %v2921 = vunpack.c.l.b16 %v2297
    %v2922 = vunpack.c.h.b16 %v2297
    %v2923 = vunpack.c.l.b16 %v2298
    %v2924 = vunpack.c.h.b16 %v2298
    %v2925 = vunpack.c.l.b16 %v2299
    %v2926 = vunpack.c.h.b16 %v2299
    %v2927 = vunpack.c.l.b16 %v2300
    %v2928 = vunpack.c.h.b16 %v2300
    %v2929 = vunpack.c.l.b16 %v2301
    %v2930 = vunpack.c.h.b16 %v2301
    %v2931 = vunpack.c.l.b16 %v2302
    %v2932 = vunpack.c.h.b16 %v2302
    %v2933 = vunpack.c.l.b16 %v2303
    %v2934 = vunpack.c.h.b16 %v2303
    %v2935 = vunpack.c.l.b16 %v2304
    %v2936 = vunpack.c.h.b16 %v2304
    %v2937 = vunpack.c.l.b16 %v2305
    %v2938 = vunpack.c.h.b16 %v2305
    %v2939 = vunpack.c.l.b16 %v2306
    %v2940 = vunpack.c.h.b16 %v2306
    %v2941 = vunpack.c.l.b16 %v2307
    %v2942 = vunpack.c.h.b16 %v2307
    %v2943 = vunpack.c.l.b16 %v2308
    %v2944 = vunpack.c.h.b16 %v2308
    %v2945 = vunpack.c.l.b16 %v2309
    %v2946 = vunpack.c.h.b16 %v2309
    %v2947 = vunpack.c.l.b16 %v2310
    %v2948 = vunpack.c.h.b16 %v2310
    %v2949 = vunpack.c.l.b16 %v2311
    %v2950 = vunpack.c.h.b16 %v2311
    %v2951 = vunpack.c.l.b16 %v2312
    %v2952 = vunpack.c.h.b16 %v2312
    %v2953 = vunpack.c.l.b16 %v2313
    %v2954 = vunpack.c.h.b16 %v2313
    %v2955 = vunpack.c.l.b16 %v2314
    %v2956 = vunpack.c.h.b16 %v2314
    %v2957 = vunpack.c.l.b16 %v2315
    %v2958 = vunpack.c.h.b16 %v2315
    %v2959 = vunpack.c.l.b16 %v2316
    %v2960 = vunpack.c.h.b16 %v2316
    %v2961 = vunpack.c.l.b16 %v2317
    %v2962 = vunpack.c.h.b16 %v2317
    %v2963 = vunpack.c.l.b16 %v2318
    %v2964 = vunpack.c.h.b16 %v2318
    %v2965 = vunpack.c.l.b16 %v2319
    %v2966 = vunpack.c.h.b16 %v2319
    %v2967 = vunpack.c.l.b16 %v2320
    %v2968 = vunpack.c.h.b16 %v2320
    %v2969 = vunpack.c.l.b16 %v2321
    %v2970 = vunpack.c.h.b16 %v2321
    %v2971 = vunpack.c.l.b16 %v2322
    %v2972 = vunpack.c.h.b16 %v2322
    %v2973 = vunpack.c.l.b16 %v2323
    %v2974 = vunpack.c.h.b16 %v2323
    %v2975 = vunpack.c.l.b16 %v2324
    %v2976 = vunpack.c.h.b16 %v2324
    %v2977 = vunpack.c.l.b16 %v2325
    %v2978 = vunpack.c.h.b16 %v2325
    %v2979 = vunpack.c.l.b16 %v2326
    %v2980 = vunpack.c.h.b16 %v2326
    %v2981 = vunpack.c.l.b16 %v2327
    %v2982 = vunpack.c.h.b16 %v2327
    %v2983 = vunpack.c.l.b16 %v2328
    %v2984 = vunpack.c.h.b16 %v2328
    %v2985 = vunpack.c.l.b16 %v2329
    %v2986 = vunpack.c.h.b16 %v2329
    %v2987 = vunpack.c.l.b16 %v2330
    %v2988 = vunpack.c.h.b16 %v2330
    %v2989 = vunpack.c.l.b16 %v2331
    %v2990 = vunpack.c.h.b16 %v2331
    %v2991 = vunpack.c.l.b16 %v2332
    %v2992 = vunpack.c.h.b16 %v2332
    %v2993 = vunpack.c.l.b16 %v2333
    %v2994 = vunpack.c.h.b16 %v2333
    %v2995 = vunpack.c.l.b16 %v2334
    %v2996 = vunpack.c.h.b16 %v2334
    %v2997 = vunpack.c.l.b16 %v2335
    %v2998 = vunpack.c.h.b16 %v2335
    %v2999 = vunpack.c.l.b16 %v2336
    %v3000 = vunpack.c.h.b16 %v2336
    %v3001 = vunpack.c.l.b16 %v2337
    %v3002 = vunpack.c.h.b16 %v2337
    %v3003 = vunpack.c.l.b16 %v2338
    %v3004 = vunpack.c.h.b16 %v2338
    %v3005 = vunpack.c.l.b16 %v2339
    %v3006 = vunpack.c.h.b16 %v2339
    %v3007 = vunpack.c.l.b16 %v2340
    %v3008 = vunpack.c.h.b16 %v2340
    %v3009 = vunpack.c.l.b16 %v2341
    %v3010 = vunpack.c.h.b16 %v2341
    %v3011 = vunpack.c.l.b16 %v2342
    %v3012 = vunpack.c.h.b16 %v2342
    %v3013 = vunpack.c.l.b16 %v2343
    %v3014 = vunpack.c.h.b16 %v2343
    %v3015 = vunpack.c.l.b16 %v2344
    %v3016 = vunpack.c.h.b16 %v2344
    %v3017 = vunpack.c.l.b16 %v2345
    %v3018 = vunpack.c.h.b16 %v2345
    %v3019 = vunpack.c.l.b16 %v2346
    %v3020 = vunpack.c.h.b16 %v2346
    %v3021 = vunpack.c.l.b16 %v2347
    %v3022 = vunpack.c.h.b16 %v2347
    %v3023 = vunpack.c.l.b16 %v2348
    %v3024 = vunpack.c.h.b16 %v2348
    %v3025 = vunpack.c.l.b16 %v2349
    %v3026 = vunpack.c.h.b16 %v2349
    %v3027 = vunpack.c.l.b16 %v2350
    %v3028 = vunpack.c.h.b16 %v2350
    %v3029 = vunpack.c.l.b16 %v2351
    %v3030 = vunpack.c.h.b16 %v2351
    %v3031 = vunpack.c.l.b16 %v2352
    %v3032 = vunpack.c.h.b16 %v2352
    %v3033 = vunpack.c.l.b16 %v2353
    %v3034 = vunpack.c.h.b16 %v2353
    %v3035 = vunpack.c.l.b16 %v2354
    %v3036 = vunpack.c.h.b16 %v2354
    %v3037 = vunpack.c.l.b16 %v2355
    %v3038 = vunpack.c.h.b16 %v2355
    %v3039 = vunpack.c.l.b16 %v2356
    %v3040 = vunpack.c.h.b16 %v2356
    %v3041 = vunpack.c.l.b16 %v2357
    %v3042 = vunpack.c.h.b16 %v2357
    %v3043 = vunpack.c.l.b16 %v2358
    %v3044 = vunpack.c.h.b16 %v2358
    %v3045 = vunpack.c.l.b16 %v2359
    %v3046 = vunpack.c.h.b16 %v2359
    %v3047 = vunpack.c.l.b16 %v2360
    %v3048 = vunpack.c.h.b16 %v2360
    %v3049 = vunpack.c.l.b16 %v2361
    %v3050 = vunpack.c.h.b16 %v2361
    %v3051 = vunpack.c.l.b16 %v2362
    %v3052 = vunpack.c.h.b16 %v2362
    %v3053 = vunpack.c.l.b16 %v2363
    %v3054 = vunpack.c.h.b16 %v2363
    %v3055 = vunpack.c.l.b16 %v2364
    %v3056 = vunpack.c.h.b16 %v2364
    %v3057 = vunpack.c.l.b16 %v2365
    %v3058 = vunpack.c.h.b16 %v2365
    %v3059 = vunpack.c.l.b16 %v2366
    %v3060 = vunpack.c.h.b16 %v2366
    %v3061 = vunpack.c.l.b16 %v2367
    %v3062 = vunpack.c.h.b16 %v2367
    %v3063 = vunpack.c.l.b16 %v2368
    %v3064 = vunpack.c.h.b16 %v2368
    %v3065 = vunpack.c.l.b16 %v2369
    %v3066 = vunpack.c.h.b16 %v2369
    %v3067 = vunpack.c.l.b16 %v2370
    %v3068 = vunpack.c.h.b16 %v2370
    %v3069 = vunpack.c.l.b16 %v2371
    %v3070 = vunpack.c.h.b16 %v2371
    %v3071 = vunpack.c.l.b16 %v2372
    %v3072 = vunpack.c.h.b16 %v2372
    %v3073 = vunpack.c.l.b16 %v2373
    %v3074 = vunpack.c.h.b16 %v2373
    %v3075 = vunpack.c.l.b16 %v2374
    %v3076 = vunpack.c.h.b16 %v2374
    %v3077 = vunpack.c.l.b16 %v2375
    %v3078 = vunpack.c.h.b16 %v2375
    %v3079 = vunpack.c.l.b16 %v2376
    %v3080 = vunpack.c.h.b16 %v2376
    %v3081 = vunpack.c.l.b16 %v2377
    %v3082 = vunpack.c.h.b16 %v2377
    %v3083 = vunpack.c.l.b16 %v2378
    %v3084 = vunpack.c.h.b16 %v2378
    %v3085 = vunpack.c.l.b16 %v2379
    %v3086 = vunpack.c.h.b16 %v2379
    %v3087 = vunpack.c.l.b16 %v2380
    %v3088 = vunpack.c.h.b16 %v2380
    %v3089 = vunpack.c.l.b16 %v2381
    %v3090 = vunpack.c.h.b16 %v2381
    %v3091 = vunpack.c.l.b16 %v2382
    %v3092 = vunpack.c.h.b16 %v2382
    %v3093 = vunpack.c.l.b16 %v2383
    %v3094 = vunpack.c.h.b16 %v2383
    %v3095 = vunpack.c.l.b16 %v2384
    %v3096 = vunpack.c.h.b16 %v2384
    %v3097 = vunpack.c.l.b16 %v2385
    %v3098 = vunpack.c.h.b16 %v2385
    %v3099 = vunpack.c.l.b16 %v2386
    %v3100 = vunpack.c.h.b16 %v2386
    %v3101 = vunpack.c.l.b16 %v2387
    %v3102 = vunpack.c.h.b16 %v2387
    %v3103 = vunpack.c.l.b16 %v2388
    %v3104 = vunpack.c.h.b16 %v2388
    %v3105 = vunpack.c.l.b16 %v2389
    %v3106 = vunpack.c.h.b16 %v2389
    %v3107 = vunpack.c.l.b16 %v2390
    %v3108 = vunpack.c.h.b16 %v2390
    %v3109 = vunpack.c.l.b16 %v2391
    %v3110 = vunpack.c.h.b16 %v2391
    %v3111 = vunpack.c.l.b16 %v2392
    %v3112 = vunpack.c.h.b16 %v2392
    %v3113 = vunpack.c.l.b16 %v2393
    %v3114 = vunpack.c.h.b16 %v2393
    %v3115 = vunpack.c.l.b16 %v2394
    %v3116 = vunpack.c.h.b16 %v2394
    %v3117 = vunpack.c.l.b16 %v2395
    %v3118 = vunpack.c.h.b16 %v2395
    %v3119 = vunpack.c.l.b16 %v2396
    %v3120 = vunpack.c.h.b16 %v2396
    %v3121 = vunpack.c.l.b16 %v2397
    %v3122 = vunpack.c.h.b16 %v2397
    %v3123 = vunpack.c.l.b16 %v2398
    %v3124 = vunpack.c.h.b16 %v2398
    %v3125 = vunpack.c.l.b16 %v2399
    %v3126 = vunpack.c.h.b16 %v2399
    %v3127 = vunpack.c.l.b16 %v2400
    %v3128 = vunpack.c.h.b16 %v2400
    %v3129 = vunpack.c.l.b16 %v2401
    %v3130 = vunpack.c.h.b16 %v2401
    %v3131 = vunpack.c.l.b16 %v2402
    %v3132 = vunpack.c.h.b16 %v2402
    %v3133 = vunpack.c.l.b16 %v2403
    %v3134 = vunpack.c.h.b16 %v2403
    %v3135 = vunpack.c.l.b16 %v2404
    %v3136 = vunpack.c.h.b16 %v2404
    %v3137 = vunpack.c.l.b16 %v2405
    %v3138 = vunpack.c.h.b16 %v2405
    %v3139 = vunpack.c.l.b16 %v2406
    %v3140 = vunpack.c.h.b16 %v2406
    %v3141 = vunpack.c.l.b16 %v2407
    %v3142 = vunpack.c.h.b16 %v2407
    %v3143 = vunpack.c.l.b16 %v2408
    %v3144 = vunpack.c.h.b16 %v2408
    %v3145 = vunpack.c.l.b16 %v2409
    %v3146 = vunpack.c.h.b16 %v2409
    %v3147 = vunpack.c.l.b16 %v2410
    %v3148 = vunpack.c.h.b16 %v2410
    %v3149 = vunpack.c.l.b16 %v2411
    %v3150 = vunpack.c.h.b16 %v2411
    %v3151 = vunpack.c.l.b16 %v2412
    %v3152 = vunpack.c.h.b16 %v2412
    %v3153 = vunpack.c.l.b16 %v2413
    %v3154 = vunpack.c.h.b16 %v2413
    %v3155 = vunpack.c.l.b16 %v2414
    %v3156 = vunpack.c.h.b16 %v2414
    %v3157 = vunpack.c.l.b16 %v2415
    %v3158 = vunpack.c.h.b16 %v2415
    %v3159 = vunpack.c.l.b16 %v2416
    %v3160 = vunpack.c.h.b16 %v2416
    %v3161 = vunpack.c.l.b16 %v2417
    %v3162 = vunpack.c.h.b16 %v2417
    %v3163 = vunpack.c.l.b16 %v2418
    %v3164 = vunpack.c.h.b16 %v2418
    %v3165 = vunpack.c.l.b16 %v2419
    %v3166 = vunpack.c.h.b16 %v2419
    %v3167 = vunpack.c.l.b16 %v2420
    %v3168 = vunpack.c.h.b16 %v2420
    %v3169 = vunpack.c.l.b16 %v2421
    %v3170 = vunpack.c.h.b16 %v2421
    %v3171 = vunpack.c.l.b16 %v2422
    %v3172 = vunpack.c.h.b16 %v2422
    %v3173 = vunpack.c.l.b16 %v2423
    %v3174 = vunpack.c.h.b16 %v2423
    %v3175 = vunpack.c.l.b16 %v2424
    %v3176 = vunpack.c.h.b16 %v2424
    %v3177 = vunpack.c.l.b16 %v2425
    %v3178 = vunpack.c.h.b16 %v2425
    %v3179 = vunpack.c.l.b16 %v2426
    %v3180 = vunpack.c.h.b16 %v2426
    %v3181 = vunpack.c.l.b16 %v2427
    %v3182 = vunpack.c.h.b16 %v2427
    %v3183 = vunpack.c.l.b16 %v2428
    %v3184 = vunpack.c.h.b16 %v2428
    %v3185 = vunpack.c.l.b16 %v2429
    %v3186 = vunpack.c.h.b16 %v2429
    %v3187 = vunpack.c.l.b16 %v2430
    %v3188 = vunpack.c.h.b16 %v2430
    %v3189 = vunpack.c.l.b16 %v2431
    %v3190 = vunpack.c.h.b16 %v2431
    %v3191 = vunpack.c.l.b16 %v2432
    %v3192 = vunpack.c.h.b16 %v2432
    %v3193 = vunpack.c.l.b16 %v2433
    %v3194 = vunpack.c.h.b16 %v2433
    %v3195 = vunpack.c.l.b16 %v2434
    %v3196 = vunpack.c.h.b16 %v2434
    %v3197 = vunpack.c.l.b16 %v2435
    %v3198 = vunpack.c.h.b16 %v2435
    %v3199 = vunpack.c.l.b16 %v2436
    %v3200 = vunpack.c.h.b16 %v2436
    %v3201 = vunpack.c.l.b16 %v2437
    %v3202 = vunpack.c.h.b16 %v2437
    %v3203 = vunpack.c.l.b16 %v2438
    %v3204 = vunpack.c.h.b16 %v2438
    %v3205 = vunpack.c.l.b16 %v2439
    %v3206 = vunpack.c.h.b16 %v2439
    %v3207 = vunpack.c.l.b16 %v2440
    %v3208 = vunpack.c.h.b16 %v2440
    %v3209 = vunpack.c.l.b16 %v2441
    %v3210 = vunpack.c.h.b16 %v2441
    %v3211 = vunpack.c.l.b16 %v2442
    %v3212 = vunpack.c.h.b16 %v2442
    %v3213 = vunpack.c.l.b16 %v2443
    %v3214 = vunpack.c.h.b16 %v2443
    %v3215 = vunpack.c.l.b16 %v2444
    %v3216 = vunpack.c.h.b16 %v2444
    %v3217 = vunpack.c.l.b16 %v2445
    %v3218 = vunpack.c.h.b16 %v2445
    %v3219 = vunpack.c.l.b16 %v2446
    %v3220 = vunpack.c.h.b16 %v2446
    %v3221 = vunpack.c.l.b16 %v2447
    %v3222 = vunpack.c.h.b16 %v2447
    %v3223 = vunpack.c.l.b16 %v2448
    %v3224 = vunpack.c.h.b16 %v2448
    %v3225 = vunpack.c.l.b16 %v2449
    %v3226 = vunpack.c.h.b16 %v2449
    %v3227 = vunpack.c.l.b16 %v2450
    %v3228 = vunpack.c.h.b16 %v2450
    %v3229 = vpack.c.b16 %v2721, %v2717
    %v3230 = vpack.c.b16 %v2722, %v2718
    %v3231 = vpack.c.b16 %v2723, %v2719
    %v3232 = vpack.c.b16 %v2724, %v2720
    %v3233 = vpack.c.b16 %v2729, %v2725
    %v3234 = vpack.c.b16 %v2730, %v2726
    %v3235 = vpack.c.b16 %v2731, %v2727
    %v3236 = vpack.c.b16 %v2732, %v2728
    %v3237 = vpack.c.b16 %v2737, %v2733
    %v3238 = vpack.c.b16 %v2738, %v2734
    %v3239 = vpack.c.b16 %v2739, %v2735
    %v3240 = vpack.c.b16 %v2740, %v2736
    %v3241 = vpack.c.b16 %v2745, %v2741
    %v3242 = vpack.c.b16 %v2746, %v2742
    %v3243 = vpack.c.b16 %v2747, %v2743
    %v3244 = vpack.c.b16 %v2748, %v2744
    %v3245 = vpack.c.b16 %v2753, %v2749
    %v3246 = vpack.c.b16 %v2754, %v2750
    %v3247 = vpack.c.b16 %v2755, %v2751
    %v3248 = vpack.c.b16 %v2756, %v2752
    %v3249 = vpack.c.b16 %v2761, %v2757
    %v3250 = vpack.c.b16 %v2762, %v2758
    %v3251 = vpack.c.b16 %v2763, %v2759
    %v3252 = vpack.c.b16 %v2764, %v2760
    %v3253 = vpack.c.b16 %v2769, %v2765
    %v3254 = vpack.c.b16 %v2770, %v2766
    %v3255 = vpack.c.b16 %v2771, %v2767
    %v3256 = vpack.c.b16 %v2772, %v2768
    %v3257 = vpack.c.b16 %v2777, %v2773
    %v3258 = vpack.c.b16 %v2778, %v2774
    %v3259 = vpack.c.b16 %v2779, %v2775
    %v3260 = vpack.c.b16 %v2780, %v2776
    %v3261 = vpack.c.b16 %v2785, %v2781
    %v3262 = vpack.c.b16 %v2786, %v2782
    %v3263 = vpack.c.b16 %v2787, %v2783
    %v3264 = vpack.c.b16 %v2788, %v2784
    %v3265 = vpack.c.b16 %v2793, %v2789
    %v3266 = vpack.c.b16 %v2794, %v2790
    %v3267 = vpack.c.b16 %v2795, %v2791
    %v3268 = vpack.c.b16 %v2796, %v2792
    %v3269 = vpack.c.b16 %v2801, %v2797
    %v3270 = vpack.c.b16 %v2802, %v2798
    %v3271 = vpack.c.b16 %v2803, %v2799
    %v3272 = vpack.c.b16 %v2804, %v2800
    %v3273 = vpack.c.b16 %v2809, %v2805
    %v3274 = vpack.c.b16 %v2810, %v2806
    %v3275 = vpack.c.b16 %v2811, %v2807
    %v3276 = vpack.c.b16 %v2812, %v2808
    %v3277 = vpack.c.b16 %v2817, %v2813
    %v3278 = vpack.c.b16 %v2818, %v2814
    %v3279 = vpack.c.b16 %v2819, %v2815
    %v3280 = vpack.c.b16 %v2820, %v2816
    %v3281 = vpack.c.b16 %v2825, %v2821
    %v3282 = vpack.c.b16 %v2826, %v2822
    %v3283 = vpack.c.b16 %v2827, %v2823
    %v3284 = vpack.c.b16 %v2828, %v2824
    %v3285 = vpack.c.b16 %v2833, %v2829
    %v3286 = vpack.c.b16 %v2834, %v2830
    %v3287 = vpack.c.b16 %v2835, %v2831
    %v3288 = vpack.c.b16 %v2836, %v2832
    %v3289 = vpack.c.b16 %v2841, %v2837
    %v3290 = vpack.c.b16 %v2842, %v2838
    %v3291 = vpack.c.b16 %v2843, %v2839
    %v3292 = vpack.c.b16 %v2844, %v2840
    %v3293 = vpack.c.b16 %v2849, %v2845
    %v3294 = vpack.c.b16 %v2850, %v2846
    %v3295 = vpack.c.b16 %v2851, %v2847
    %v3296 = vpack.c.b16 %v2852, %v2848
    %v3297 = vpack.c.b16 %v2857, %v2853
    %v3298 = vpack.c.b16 %v2858, %v2854
    %v3299 = vpack.c.b16 %v2859, %v2855
    %v3300 = vpack.c.b16 %v2860, %v2856
    %v3301 = vpack.c.b16 %v2865, %v2861
    %v3302 = vpack.c.b16 %v2866, %v2862
    %v3303 = vpack.c.b16 %v2867, %v2863
    %v3304 = vpack.c.b16 %v2868, %v2864
    %v3305 = vpack.c.b16 %v2873, %v2869
    %v3306 = vpack.c.b16 %v2874, %v2870
    %v3307 = vpack.c.b16 %v2875, %v2871
    %v3308 = vpack.c.b16 %v2876, %v2872
    %v3309 = vpack.c.b16 %v2881, %v2877
    %v3310 = vpack.c.b16 %v2882, %v2878
    %v3311 = vpack.c.b16 %v2883, %v2879
    %v3312 = vpack.c.b16 %v2884, %v2880
    %v3313 = vpack.c.b16 %v2889, %v2885
    %v3314 = vpack.c.b16 %v2890, %v2886
    %v3315 = vpack.c.b16 %v2891, %v2887
    %v3316 = vpack.c.b16 %v2892, %v2888
    %v3317 = vpack.c.b16 %v2897, %v2893
    %v3318 = vpack.c.b16 %v2898, %v2894
    %v3319 = vpack.c.b16 %v2899, %v2895
    %v3320 = vpack.c.b16 %v2900, %v2896
    %v3321 = vpack.c.b16 %v2905, %v2901
    %v3322 = vpack.c.b16 %v2906, %v2902
    %v3323 = vpack.c.b16 %v2907, %v2903
    %v3324 = vpack.c.b16 %v2908, %v2904
    %v3325 = vpack.c.b16 %v2913, %v2909
    %v3326 = vpack.c.b16 %v2914, %v2910
    %v3327 = vpack.c.b16 %v2915, %v2911
    %v3328 = vpack.c.b16 %v2916, %v2912
    %v3329 = vpack.c.b16 %v2921, %v2917
    %v3330 = vpack.c.b16 %v2922, %v2918
    %v3331 = vpack.c.b16 %v2923, %v2919
    %v3332 = vpack.c.b16 %v2924, %v2920
    %v3333 = vpack.c.b16 %v2929, %v2925
    %v3334 = vpack.c.b16 %v2930, %v2926
    %v3335 = vpack.c.b16 %v2931, %v2927
    %v3336 = vpack.c.b16 %v2932, %v2928
    %v3337 = vpack.c.b16 %v2937, %v2933
    %v3338 = vpack.c.b16 %v2938, %v2934
    %v3339 = vpack.c.b16 %v2939, %v2935
    %v3340 = vpack.c.b16 %v2940, %v2936
    %v3341 = vpack.c.b16 %v2945, %v2941
    %v3342 = vpack.c.b16 %v2946, %v2942
    %v3343 = vpack.c.b16 %v2947, %v2943
    %v3344 = vpack.c.b16 %v2948, %v2944
    %v3345 = vpack.c.b16 %v2953, %v2949
    %v3346 = vpack.c.b16 %v2954, %v2950
    %v3347 = vpack.c.b16 %v2955, %v2951
    %v3348 = vpack.c.b16 %v2956, %v2952
    %v3349 = vpack.c.b16 %v2961, %v2957
    %v3350 = vpack.c.b16 %v2962, %v2958
    %v3351 = vpack.c.b16 %v2963, %v2959
    %v3352 = vpack.c.b16 %v2964, %v2960
    %v3353 = vpack.c.b16 %v2969, %v2965
    %v3354 = vpack.c.b16 %v2970, %v2966
    %v3355 = vpack.c.b16 %v2971, %v2967
    %v3356 = vpack.c.b16 %v2972, %v2968
    %v3357 = vpack.c.b16 %v2977, %v2973
    %v3358 = vpack.c.b16 %v2978, %v2974
    %v3359 = vpack.c.b16 %v2979, %v2975
    %v3360 = vpack.c.b16 %v2980, %v2976
    %v3361 = vpack.c.b16 %v2985, %v2981
    %v3362 = vpack.c.b16 %v2986, %v2982
    %v3363 = vpack.c.b16 %v2987, %v2983
    %v3364 = vpack.c.b16 %v2988, %v2984
    %v3365 = vpack.c.b16 %v2993, %v2989
    %v3366 = vpack.c.b16 %v2994, %v2990
    %v3367 = vpack.c.b16 %v2995, %v2991
    %v3368 = vpack.c.b16 %v2996, %v2992
    %v3369 = vpack.c.b16 %v3001, %v2997
    %v3370 = vpack.c.b16 %v3002, %v2998
    %v3371 = vpack.c.b16 %v3003, %v2999
    %v3372 = vpack.c.b16 %v3004, %v3000
    %v3373 = vpack.c.b16 %v3009, %v3005
    %v3374 = vpack.c.b16 %v3010, %v3006
    %v3375 = vpack.c.b16 %v3011, %v3007
    %v3376 = vpack.c.b16 %v3012, %v3008
    %v3377 = vpack.c.b16 %v3017, %v3013
    %v3378 = vpack.c.b16 %v3018, %v3014
    %v3379 = vpack.c.b16 %v3019, %v3015
    %v3380 = vpack.c.b16 %v3020, %v3016
    %v3381 = vpack.c.b16 %v3025, %v3021
    %v3382 = vpack.c.b16 %v3026, %v3022
    %v3383 = vpack.c.b16 %v3027, %v3023
    %v3384 = vpack.c.b16 %v3028, %v3024
    %v3385 = vpack.c.b16 %v3033, %v3029
    %v3386 = vpack.c.b16 %v3034, %v3030
    %v3387 = vpack.c.b16 %v3035, %v3031
    %v3388 = vpack.c.b16 %v3036, %v3032
    %v3389 = vpack.c.b16 %v3041, %v3037
    %v3390 = vpack.c.b16 %v3042, %v3038
    %v3391 = vpack.c.b16 %v3043, %v3039
    %v3392 = vpack.c.b16 %v3044, %v3040
    %v3393 = vpack.c.b16 %v3049, %v3045
    %v3394 = vpack.c.b16 %v3050, %v3046
    %v3395 = vpack.c.b16 %v3051, %v3047
    %v3396 = vpack.c.b16 %v3052, %v3048
    %v3397 = vpack.c.b16 %v3057, %v3053
    %v3398 = vpack.c.b16 %v3058, %v3054
    %v3399 = vpack.c.b16 %v3059, %v3055
    %v3400 = vpack.c.b16 %v3060, %v3056
    %v3401 = vpack.c.b16 %v3065, %v3061
    %v3402 = vpack.c.b16 %v3066, %v3062
    %v3403 = vpack.c.b16 %v3067, %v3063
    %v3404 = vpack.c.b16 %v3068, %v3064
    %v3405 = vpack.c.b16 %v3073, %v3069
    %v3406 = vpack.c.b16 %v3074, %v3070
    %v3407 = vpack.c.b16 %v3075, %v3071
    %v3408 = vpack.c.b16 %v3076, %v3072
    %v3409 = vpack.c.b16 %v3081, %v3077
    %v3410 = vpack.c.b16 %v3082, %v3078
    %v3411 = vpack.c.b16 %v3083, %v3079
    %v3412 = vpack.c.b16 %v3084, %v3080
    %v3413 = vpack.c.b16 %v3089, %v3085
    %v3414 = vpack.c.b16 %v3090, %v3086
    %v3415 = vpack.c.b16 %v3091, %v3087
    %v3416 = vpack.c.b16 %v3092, %v3088
    %v3417 = vpack.c.b16 %v3097, %v3093
    %v3418 = vpack.c.b16 %v3098, %v3094
    %v3419 = vpack.c.b16 %v3099, %v3095
    %v3420 = vpack.c.b16 %v3100, %v3096
    %v3421 = vpack.c.b16 %v3105, %v3101
    %v3422 = vpack.c.b16 %v3106, %v3102
    %v3423 = vpack.c.b16 %v3107, %v3103
    %v3424 = vpack.c.b16 %v3108, %v3104
    %v3425 = vpack.c.b16 %v3113, %v3109
    %v3426 = vpack.c.b16 %v3114, %v3110
    %v3427 = vpack.c.b16 %v3115, %v3111
    %v3428 = vpack.c.b16 %v3116, %v3112
    %v3429 = vpack.c.b16 %v3121, %v3117
    %v3430 = vpack.c.b16 %v3122, %v3118
    %v3431 = vpack.c.b16 %v3123, %v3119
    %v3432 = vpack.c.b16 %v3124, %v3120
    %v3433 = vpack.c.b16 %v3129, %v3125
    %v3434 = vpack.c.b16 %v3130, %v3126
    %v3435 = vpack.c.b16 %v3131, %v3127
    %v3436 = vpack.c.b16 %v3132, %v3128
    %v3437 = vpack.c.b16 %v3137, %v3133
    %v3438 = vpack.c.b16 %v3138, %v3134
    %v3439 = vpack.c.b16 %v3139, %v3135
    %v3440 = vpack.c.b16 %v3140, %v3136
    %v3441 = vpack.c.b16 %v3145, %v3141
    %v3442 = vpack.c.b16 %v3146, %v3142
    %v3443 = vpack.c.b16 %v3147, %v3143
    %v3444 = vpack.c.b16 %v3148, %v3144
    %v3445 = vpack.c.b16 %v3153, %v3149
    %v3446 = vpack.c.b16 %v3154, %v3150
    %v3447 = vpack.c.b16 %v3155, %v3151
    %v3448 = vpack.c.b16 %v3156, %v3152
    %v3449 = vpack.c.b16 %v3161, %v3157
    %v3450 = vpack.c.b16 %v3162, %v3158
    %v3451 = vpack.c.b16 %v3163, %v3159
    %v3452 = vpack.c.b16 %v3164, %v3160
    %v3453 = vpack.c.b16 %v3169, %v3165
    %v3454 = vpack.c.b16 %v3170, %v3166
    %v3455 = vpack.c.b16 %v3171, %v3167
    %v3456 = vpack.c.b16 %v3172, %v3168
    %v3457 = vpack.c.b16 %v3177, %v3173
    %v3458 = vpack.c.b16 %v3178, %v3174
    %v3459 = vpack.c.b16 %v3179, %v3175
    %v3460 = vpack.c.b16 %v3180, %v3176
    %v3461 = vpack.c.b16 %v3185, %v3181
    %v3462 = vpack.c.b16 %v3186, %v3182
    %v3463 = vpack.c.b16 %v3187, %v3183
    %v3464 = vpack.c.b16 %v3188, %v3184
    %v3465 = vpack.c.b16 %v3193, %v3189
    %v3466 = vpack.c.b16 %v3194, %v3190
    %v3467 = vpack.c.b16 %v3195, %v3191
    %v3468 = vpack.c.b16 %v3196, %v3192
    %v3469 = vpack.c.b16 %v3201, %v3197
    %v3470 = vpack.c.b16 %v3202, %v3198
    %v3471 = vpack.c.b16 %v3203, %v3199
    %v3472 = vpack.c.b16 %v3204, %v3200
    %v3473 = vpack.c.b16 %v3209, %v3205
    %v3474 = vpack.c.b16 %v3210, %v3206
    %v3475 = vpack.c.b16 %v3211, %v3207
    %v3476 = vpack.c.b16 %v3212, %v3208
    %v3477 = vpack.c.b16 %v3217, %v3213
    %v3478 = vpack.c.b16 %v3218, %v3214
    %v3479 = vpack.c.b16 %v3219, %v3215
    %v3480 = vpack.c.b16 %v3220, %v3216
    %v3481 = vpack.c.b16 %v3225, %v3221
    %v3482 = vpack.c.b16 %v3226, %v3222
    %v3483 = vpack.c.b16 %v3227, %v3223
    %v3484 = vpack.c.b16 %v3228, %v3224
    %3741 = vmatpush.bf16.msra.mxu0 %v3257
    %3742 = vmatpush.bf16.msra.mxu0 %v3253
    %3743 = vmatpush.bf16.msra.mxu0 %v3249
    %3744 = vmatpush.bf16.msra.mxu0 %v3245
    %3745 = vmatpush.bf16.msra.mxu0 %v3241
    %3746 = vmatpush.bf16.msra.mxu0 %v3237
    %3747 = vmatpush.bf16.msra.mxu0 %v3233
    %3748 = vmatpush.bf16.msra.mxu0 %v3229
    %3749 = vmatmul.bf16.gmra.mxu0 %v2187
    %v3750 = vpop.f32.mrf.mxu0
    %v3751 = vadd.f32 %v2453, %v3750
    %v3752 = vpop.f32.mrf.mxu0
    %3753 = vdwg.mxu0
    %3754 = vmatpush.bf16.msra.mxu0 %v3289
    %3755 = vmatpush.bf16.msra.mxu0 %v3285
    %3756 = vmatpush.bf16.msra.mxu0 %v3281
    %3757 = vmatpush.bf16.msra.mxu0 %v3277
    %3758 = vmatpush.bf16.msra.mxu0 %v3273
    %3759 = vmatpush.bf16.msra.mxu0 %v3269
    %3760 = vmatpush.bf16.msra.mxu0 %v3265
    %3761 = vmatpush.bf16.msra.mxu0 %v3261
    %3762 = vmatmul.bf16.gmra.mxu0 %v2188
    %v3763 = vpop.f32.mrf.mxu0
    %v3764 = vadd.f32 %v3751, %v3763
    %v3765 = vpop.f32.mrf.mxu0
    %3766 = vdwg.mxu0
    %3767 = vmatpush.bf16.msra.mxu0 %v3321
    %3768 = vmatpush.bf16.msra.mxu0 %v3317
    %3769 = vmatpush.bf16.msra.mxu0 %v3313
    %3770 = vmatpush.bf16.msra.mxu0 %v3309
    %3771 = vmatpush.bf16.msra.mxu0 %v3305
    %3772 = vmatpush.bf16.msra.mxu0 %v3301
    %3773 = vmatpush.bf16.msra.mxu0 %v3297
    %3774 = vmatpush.bf16.msra.mxu0 %v3293
    %3775 = vmatmul.bf16.gmra.mxu0 %v2189
    %v3776 = vpop.f32.mrf.mxu0
    %v3777 = vadd.f32 %v3764, %v3776
    %v3778 = vpop.f32.mrf.mxu0
    %3779 = vdwg.mxu0
    %3780 = vmatpush.bf16.msra.mxu0 %v3353
    %3781 = vmatpush.bf16.msra.mxu0 %v3349
    %3782 = vmatpush.bf16.msra.mxu0 %v3345
    %3783 = vmatpush.bf16.msra.mxu0 %v3341
    %3784 = vmatpush.bf16.msra.mxu0 %v3337
    %3785 = vmatpush.bf16.msra.mxu0 %v3333
    %3786 = vmatpush.bf16.msra.mxu0 %v3329
    %3787 = vmatpush.bf16.msra.mxu0 %v3325
    %3788 = vmatmul.bf16.gmra.mxu0 %v2190
    %v3789 = vpop.f32.mrf.mxu0
    %v3790 = vadd.f32 %v3777, %v3789
    %v3791 = vpop.f32.mrf.mxu0
    %3792 = vdwg.mxu0
    %3793 = vmatpush.bf16.msra.mxu0 %v3385
    %3794 = vmatpush.bf16.msra.mxu0 %v3381
    %3795 = vmatpush.bf16.msra.mxu0 %v3377
    %3796 = vmatpush.bf16.msra.mxu0 %v3373
    %3797 = vmatpush.bf16.msra.mxu0 %v3369
    %3798 = vmatpush.bf16.msra.mxu0 %v3365
    %3799 = vmatpush.bf16.msra.mxu0 %v3361
    %3800 = vmatpush.bf16.msra.mxu0 %v3357
    %3801 = vmatmul.bf16.gmra.mxu0 %v2191
    %v3802 = vpop.f32.mrf.mxu0
    %v3803 = vadd.f32 %v3790, %v3802
    %v3804 = vpop.f32.mrf.mxu0
    %3805 = vdwg.mxu0
    %3806 = vmatpush.bf16.msra.mxu0 %v3417
    %3807 = vmatpush.bf16.msra.mxu0 %v3413
    %3808 = vmatpush.bf16.msra.mxu0 %v3409
    %3809 = vmatpush.bf16.msra.mxu0 %v3405
    %3810 = vmatpush.bf16.msra.mxu0 %v3401
    %3811 = vmatpush.bf16.msra.mxu0 %v3397
    %3812 = vmatpush.bf16.msra.mxu0 %v3393
    %3813 = vmatpush.bf16.msra.mxu0 %v3389
    %3814 = vmatmul.bf16.gmra.mxu0 %v2192
    %v3815 = vpop.f32.mrf.mxu0
    %v3816 = vadd.f32 %v3803, %v3815
    %v3817 = vpop.f32.mrf.mxu0
    %3818 = vdwg.mxu0
    %3819 = vmatpush.bf16.msra.mxu0 %v3449
    %3820 = vmatpush.bf16.msra.mxu0 %v3445
    %3821 = vmatpush.bf16.msra.mxu0 %v3441
    %3822 = vmatpush.bf16.msra.mxu0 %v3437
    %3823 = vmatpush.bf16.msra.mxu0 %v3433
    %3824 = vmatpush.bf16.msra.mxu0 %v3429
    %3825 = vmatpush.bf16.msra.mxu0 %v3425
    %3826 = vmatpush.bf16.msra.mxu0 %v3421
    %3827 = vmatmul.bf16.gmra.mxu0 %v2193
    %v3828 = vpop.f32.mrf.mxu0
    %v3829 = vadd.f32 %v3816, %v3828
    %v3830 = vpop.f32.mrf.mxu0
    %3831 = vdwg.mxu0
    %3832 = vmatpush.bf16.msra.mxu0 %v3481
    %3833 = vmatpush.bf16.msra.mxu0 %v3477
    %3834 = vmatpush.bf16.msra.mxu0 %v3473
    %3835 = vmatpush.bf16.msra.mxu0 %v3469
    %3836 = vmatpush.bf16.msra.mxu0 %v3465
    %3837 = vmatpush.bf16.msra.mxu0 %v3461
    %3838 = vmatpush.bf16.msra.mxu0 %v3457
    %3839 = vmatpush.bf16.msra.mxu0 %v3453
    %3840 = vmatmul.bf16.gmra.mxu0 %v2194
    %v3841 = vpop.f32.mrf.mxu0
    %v3842 = vadd.f32 %v3829, %v3841
    %v3843 = vpop.f32.mrf.mxu0
    %3844 = vdwg.mxu0
    %3845 = vmatpush.bf16.msra.mxu0 %v3258
    %3846 = vmatpush.bf16.msra.mxu0 %v3254
    %3847 = vmatpush.bf16.msra.mxu0 %v3250
    %3848 = vmatpush.bf16.msra.mxu0 %v3246
    %3849 = vmatpush.bf16.msra.mxu0 %v3242
    %3850 = vmatpush.bf16.msra.mxu0 %v3238
    %3851 = vmatpush.bf16.msra.mxu0 %v3234
    %3852 = vmatpush.bf16.msra.mxu0 %v3230
    %3853 = vmatmul.bf16.gmra.mxu0 %v2187
    %v3854 = vpop.f32.mrf.mxu0
    %v3855 = vadd.f32 %v2454, %v3854
    %v3856 = vpop.f32.mrf.mxu0
    %3857 = vdwg.mxu0
    %3858 = vmatpush.bf16.msra.mxu0 %v3290
    %3859 = vmatpush.bf16.msra.mxu0 %v3286
    %3860 = vmatpush.bf16.msra.mxu0 %v3282
    %3861 = vmatpush.bf16.msra.mxu0 %v3278
    %3862 = vmatpush.bf16.msra.mxu0 %v3274
    %3863 = vmatpush.bf16.msra.mxu0 %v3270
    %3864 = vmatpush.bf16.msra.mxu0 %v3266
    %3865 = vmatpush.bf16.msra.mxu0 %v3262
    %3866 = vmatmul.bf16.gmra.mxu0 %v2188
    %v3867 = vpop.f32.mrf.mxu0
    %v3868 = vadd.f32 %v3855, %v3867
    %v3869 = vpop.f32.mrf.mxu0
    %3870 = vdwg.mxu0
    %3871 = vmatpush.bf16.msra.mxu0 %v3322
    %3872 = vmatpush.bf16.msra.mxu0 %v3318
    %3873 = vmatpush.bf16.msra.mxu0 %v3314
    %3874 = vmatpush.bf16.msra.mxu0 %v3310
    %3875 = vmatpush.bf16.msra.mxu0 %v3306
    %3876 = vmatpush.bf16.msra.mxu0 %v3302
    %3877 = vmatpush.bf16.msra.mxu0 %v3298
    %3878 = vmatpush.bf16.msra.mxu0 %v3294
    %3879 = vmatmul.bf16.gmra.mxu0 %v2189
    %v3880 = vpop.f32.mrf.mxu0
    %v3881 = vadd.f32 %v3868, %v3880
    %v3882 = vpop.f32.mrf.mxu0
    %3883 = vdwg.mxu0
    %3884 = vmatpush.bf16.msra.mxu0 %v3354
    %3885 = vmatpush.bf16.msra.mxu0 %v3350
    %3886 = vmatpush.bf16.msra.mxu0 %v3346
    %3887 = vmatpush.bf16.msra.mxu0 %v3342
    %3888 = vmatpush.bf16.msra.mxu0 %v3338
    %3889 = vmatpush.bf16.msra.mxu0 %v3334
    %3890 = vmatpush.bf16.msra.mxu0 %v3330
    %3891 = vmatpush.bf16.msra.mxu0 %v3326
    %3892 = vmatmul.bf16.gmra.mxu0 %v2190
    %v3893 = vpop.f32.mrf.mxu0
    %v3894 = vadd.f32 %v3881, %v3893
    %v3895 = vpop.f32.mrf.mxu0
    %3896 = vdwg.mxu0
    %3897 = vmatpush.bf16.msra.mxu0 %v3386
    %3898 = vmatpush.bf16.msra.mxu0 %v3382
    %3899 = vmatpush.bf16.msra.mxu0 %v3378
    %3900 = vmatpush.bf16.msra.mxu0 %v3374
    %3901 = vmatpush.bf16.msra.mxu0 %v3370
    %3902 = vmatpush.bf16.msra.mxu0 %v3366
    %3903 = vmatpush.bf16.msra.mxu0 %v3362
    %3904 = vmatpush.bf16.msra.mxu0 %v3358
    %3905 = vmatmul.bf16.gmra.mxu0 %v2191
    %v3906 = vpop.f32.mrf.mxu0
    %v3907 = vadd.f32 %v3894, %v3906
    %v3908 = vpop.f32.mrf.mxu0
    %3909 = vdwg.mxu0
    %3910 = vmatpush.bf16.msra.mxu0 %v3418
    %3911 = vmatpush.bf16.msra.mxu0 %v3414
    %3912 = vmatpush.bf16.msra.mxu0 %v3410
    %3913 = vmatpush.bf16.msra.mxu0 %v3406
    %3914 = vmatpush.bf16.msra.mxu0 %v3402
    %3915 = vmatpush.bf16.msra.mxu0 %v3398
    %3916 = vmatpush.bf16.msra.mxu0 %v3394
    %3917 = vmatpush.bf16.msra.mxu0 %v3390
    %3918 = vmatmul.bf16.gmra.mxu0 %v2192
    %v3919 = vpop.f32.mrf.mxu0
    %v3920 = vadd.f32 %v3907, %v3919
    %v3921 = vpop.f32.mrf.mxu0
    %3922 = vdwg.mxu0
    %3923 = vmatpush.bf16.msra.mxu0 %v3450
    %3924 = vmatpush.bf16.msra.mxu0 %v3446
    %3925 = vmatpush.bf16.msra.mxu0 %v3442
    %3926 = vmatpush.bf16.msra.mxu0 %v3438
    %3927 = vmatpush.bf16.msra.mxu0 %v3434
    %3928 = vmatpush.bf16.msra.mxu0 %v3430
    %3929 = vmatpush.bf16.msra.mxu0 %v3426
    %3930 = vmatpush.bf16.msra.mxu0 %v3422
    %3931 = vmatmul.bf16.gmra.mxu0 %v2193
    %v3932 = vpop.f32.mrf.mxu0
    %v3933 = vadd.f32 %v3920, %v3932
    %v3934 = vpop.f32.mrf.mxu0
    %3935 = vdwg.mxu0
    %3936 = vmatpush.bf16.msra.mxu0 %v3482
    %3937 = vmatpush.bf16.msra.mxu0 %v3478
    %3938 = vmatpush.bf16.msra.mxu0 %v3474
    %3939 = vmatpush.bf16.msra.mxu0 %v3470
    %3940 = vmatpush.bf16.msra.mxu0 %v3466
    %3941 = vmatpush.bf16.msra.mxu0 %v3462
    %3942 = vmatpush.bf16.msra.mxu0 %v3458
    %3943 = vmatpush.bf16.msra.mxu0 %v3454
    %3944 = vmatmul.bf16.gmra.mxu0 %v2194
    %v3945 = vpop.f32.mrf.mxu0
    %v3946 = vadd.f32 %v3933, %v3945
    %v3947 = vpop.f32.mrf.mxu0
    %3948 = vdwg.mxu0
    %3949 = vmatpush.bf16.msra.mxu0 %v3259
    %3950 = vmatpush.bf16.msra.mxu0 %v3255
    %3951 = vmatpush.bf16.msra.mxu0 %v3251
    %3952 = vmatpush.bf16.msra.mxu0 %v3247
    %3953 = vmatpush.bf16.msra.mxu0 %v3243
    %3954 = vmatpush.bf16.msra.mxu0 %v3239
    %3955 = vmatpush.bf16.msra.mxu0 %v3235
    %3956 = vmatpush.bf16.msra.mxu0 %v3231
    %3957 = vmatmul.bf16.gmra.mxu0 %v2187
    %v3958 = vpop.f32.mrf.mxu0
    %v3959 = vadd.f32 %v2455, %v3958
    %v3960 = vpop.f32.mrf.mxu0
    %3961 = vdwg.mxu0
    %3962 = vmatpush.bf16.msra.mxu0 %v3291
    %3963 = vmatpush.bf16.msra.mxu0 %v3287
    %3964 = vmatpush.bf16.msra.mxu0 %v3283
    %3965 = vmatpush.bf16.msra.mxu0 %v3279
    %3966 = vmatpush.bf16.msra.mxu0 %v3275
    %3967 = vmatpush.bf16.msra.mxu0 %v3271
    %3968 = vmatpush.bf16.msra.mxu0 %v3267
    %3969 = vmatpush.bf16.msra.mxu0 %v3263
    %3970 = vmatmul.bf16.gmra.mxu0 %v2188
    %v3971 = vpop.f32.mrf.mxu0
    %v3972 = vadd.f32 %v3959, %v3971
    %v3973 = vpop.f32.mrf.mxu0
    %3974 = vdwg.mxu0
    %3975 = vmatpush.bf16.msra.mxu0 %v3323
    %3976 = vmatpush.bf16.msra.mxu0 %v3319
    %3977 = vmatpush.bf16.msra.mxu0 %v3315
    %3978 = vmatpush.bf16.msra.mxu0 %v3311
    %3979 = vmatpush.bf16.msra.mxu0 %v3307
    %3980 = vmatpush.bf16.msra.mxu0 %v3303
    %3981 = vmatpush.bf16.msra.mxu0 %v3299
    %3982 = vmatpush.bf16.msra.mxu0 %v3295
    %3983 = vmatmul.bf16.gmra.mxu0 %v2189
    %v3984 = vpop.f32.mrf.mxu0
    %v3985 = vadd.f32 %v3972, %v3984
    %v3986 = vpop.f32.mrf.mxu0
    %3987 = vdwg.mxu0
    %3988 = vmatpush.bf16.msra.mxu0 %v3355
    %3989 = vmatpush.bf16.msra.mxu0 %v3351
    %3990 = vmatpush.bf16.msra.mxu0 %v3347
    %3991 = vmatpush.bf16.msra.mxu0 %v3343
    %3992 = vmatpush.bf16.msra.mxu0 %v3339
    %3993 = vmatpush.bf16.msra.mxu0 %v3335
    %3994 = vmatpush.bf16.msra.mxu0 %v3331
    %3995 = vmatpush.bf16.msra.mxu0 %v3327
    %3996 = vmatmul.bf16.gmra.mxu0 %v2190
    %v3997 = vpop.f32.mrf.mxu0
    %v3998 = vadd.f32 %v3985, %v3997
    %v3999 = vpop.f32.mrf.mxu0
    %4000 = vdwg.mxu0
    %4001 = vmatpush.bf16.msra.mxu0 %v3387
    %4002 = vmatpush.bf16.msra.mxu0 %v3383
    %4003 = vmatpush.bf16.msra.mxu0 %v3379
    %4004 = vmatpush.bf16.msra.mxu0 %v3375
    %4005 = vmatpush.bf16.msra.mxu0 %v3371
    %4006 = vmatpush.bf16.msra.mxu0 %v3367
    %4007 = vmatpush.bf16.msra.mxu0 %v3363
    %4008 = vmatpush.bf16.msra.mxu0 %v3359
    %4009 = vmatmul.bf16.gmra.mxu0 %v2191
    %v4010 = vpop.f32.mrf.mxu0
    %v4011 = vadd.f32 %v3998, %v4010
    %v4012 = vpop.f32.mrf.mxu0
    %4013 = vdwg.mxu0
    %4014 = vmatpush.bf16.msra.mxu0 %v3419
    %4015 = vmatpush.bf16.msra.mxu0 %v3415
    %4016 = vmatpush.bf16.msra.mxu0 %v3411
    %4017 = vmatpush.bf16.msra.mxu0 %v3407
    %4018 = vmatpush.bf16.msra.mxu0 %v3403
    %4019 = vmatpush.bf16.msra.mxu0 %v3399
    %4020 = vmatpush.bf16.msra.mxu0 %v3395
    %4021 = vmatpush.bf16.msra.mxu0 %v3391
    %4022 = vmatmul.bf16.gmra.mxu0 %v2192
    %v4023 = vpop.f32.mrf.mxu0
    %v4024 = vadd.f32 %v4011, %v4023
    %v4025 = vpop.f32.mrf.mxu0
    %4026 = vdwg.mxu0
    %4027 = vmatpush.bf16.msra.mxu0 %v3451
    %4028 = vmatpush.bf16.msra.mxu0 %v3447
    %4029 = vmatpush.bf16.msra.mxu0 %v3443
    %4030 = vmatpush.bf16.msra.mxu0 %v3439
    %4031 = vmatpush.bf16.msra.mxu0 %v3435
    %4032 = vmatpush.bf16.msra.mxu0 %v3431
    %4033 = vmatpush.bf16.msra.mxu0 %v3427
    %4034 = vmatpush.bf16.msra.mxu0 %v3423
    %4035 = vmatmul.bf16.gmra.mxu0 %v2193
    %v4036 = vpop.f32.mrf.mxu0
    %v4037 = vadd.f32 %v4024, %v4036
    %v4038 = vpop.f32.mrf.mxu0
    %4039 = vdwg.mxu0
    %4040 = vmatpush.bf16.msra.mxu0 %v3483
    %4041 = vmatpush.bf16.msra.mxu0 %v3479
    %4042 = vmatpush.bf16.msra.mxu0 %v3475
    %4043 = vmatpush.bf16.msra.mxu0 %v3471
    %4044 = vmatpush.bf16.msra.mxu0 %v3467
    %4045 = vmatpush.bf16.msra.mxu0 %v3463
    %4046 = vmatpush.bf16.msra.mxu0 %v3459
    %4047 = vmatpush.bf16.msra.mxu0 %v3455
    %4048 = vmatmul.bf16.gmra.mxu0 %v2194
    %v4049 = vpop.f32.mrf.mxu0
    %v4050 = vadd.f32 %v4037, %v4049
    %v4051 = vpop.f32.mrf.mxu0
    %4052 = vdwg.mxu0
    %4053 = vmatpush.bf16.msra.mxu0 %v3260
    %4054 = vmatpush.bf16.msra.mxu0 %v3256
    %4055 = vmatpush.bf16.msra.mxu0 %v3252
    %4056 = vmatpush.bf16.msra.mxu0 %v3248
    %4057 = vmatpush.bf16.msra.mxu0 %v3244
    %4058 = vmatpush.bf16.msra.mxu0 %v3240
    %4059 = vmatpush.bf16.msra.mxu0 %v3236
    %4060 = vmatpush.bf16.msra.mxu0 %v3232
    %4061 = vmatmul.bf16.gmra.mxu0 %v2187
    %v4062 = vpop.f32.mrf.mxu0
    %v4063 = vadd.f32 %v2456, %v4062
    %v4064 = vpop.f32.mrf.mxu0
    %4065 = vdwg.mxu0
    %4066 = vmatpush.bf16.msra.mxu0 %v3292
    %4067 = vmatpush.bf16.msra.mxu0 %v3288
    %4068 = vmatpush.bf16.msra.mxu0 %v3284
    %4069 = vmatpush.bf16.msra.mxu0 %v3280
    %4070 = vmatpush.bf16.msra.mxu0 %v3276
    %4071 = vmatpush.bf16.msra.mxu0 %v3272
    %4072 = vmatpush.bf16.msra.mxu0 %v3268
    %4073 = vmatpush.bf16.msra.mxu0 %v3264
    %4074 = vmatmul.bf16.gmra.mxu0 %v2188
    %v4075 = vpop.f32.mrf.mxu0
    %v4076 = vadd.f32 %v4063, %v4075
    %v4077 = vpop.f32.mrf.mxu0
    %4078 = vdwg.mxu0
    %4079 = vmatpush.bf16.msra.mxu0 %v3324
    %4080 = vmatpush.bf16.msra.mxu0 %v3320
    %4081 = vmatpush.bf16.msra.mxu0 %v3316
    %4082 = vmatpush.bf16.msra.mxu0 %v3312
    %4083 = vmatpush.bf16.msra.mxu0 %v3308
    %4084 = vmatpush.bf16.msra.mxu0 %v3304
    %4085 = vmatpush.bf16.msra.mxu0 %v3300
    %4086 = vmatpush.bf16.msra.mxu0 %v3296
    %4087 = vmatmul.bf16.gmra.mxu0 %v2189
    %v4088 = vpop.f32.mrf.mxu0
    %v4089 = vadd.f32 %v4076, %v4088
    %v4090 = vpop.f32.mrf.mxu0
    %4091 = vdwg.mxu0
    %4092 = vmatpush.bf16.msra.mxu0 %v3356
    %4093 = vmatpush.bf16.msra.mxu0 %v3352
    %4094 = vmatpush.bf16.msra.mxu0 %v3348
    %4095 = vmatpush.bf16.msra.mxu0 %v3344
    %4096 = vmatpush.bf16.msra.mxu0 %v3340
    %4097 = vmatpush.bf16.msra.mxu0 %v3336
    %4098 = vmatpush.bf16.msra.mxu0 %v3332
    %4099 = vmatpush.bf16.msra.mxu0 %v3328
    %4100 = vmatmul.bf16.gmra.mxu0 %v2190
    %v4101 = vpop.f32.mrf.mxu0
    %v4102 = vadd.f32 %v4089, %v4101
    %v4103 = vpop.f32.mrf.mxu0
    %4104 = vdwg.mxu0
    %4105 = vmatpush.bf16.msra.mxu0 %v3388
    %4106 = vmatpush.bf16.msra.mxu0 %v3384
    %4107 = vmatpush.bf16.msra.mxu0 %v3380
    %4108 = vmatpush.bf16.msra.mxu0 %v3376
    %4109 = vmatpush.bf16.msra.mxu0 %v3372
    %4110 = vmatpush.bf16.msra.mxu0 %v3368
    %4111 = vmatpush.bf16.msra.mxu0 %v3364
    %4112 = vmatpush.bf16.msra.mxu0 %v3360
    %4113 = vmatmul.bf16.gmra.mxu0 %v2191
    %v4114 = vpop.f32.mrf.mxu0
    %v4115 = vadd.f32 %v4102, %v4114
    %v4116 = vpop.f32.mrf.mxu0
    %4117 = vdwg.mxu0
    %4118 = vmatpush.bf16.msra.mxu0 %v3420
    %4119 = vmatpush.bf16.msra.mxu0 %v3416
    %4120 = vmatpush.bf16.msra.mxu0 %v3412
    %4121 = vmatpush.bf16.msra.mxu0 %v3408
    %4122 = vmatpush.bf16.msra.mxu0 %v3404
    %4123 = vmatpush.bf16.msra.mxu0 %v3400
    %4124 = vmatpush.bf16.msra.mxu0 %v3396
    %4125 = vmatpush.bf16.msra.mxu0 %v3392
    %4126 = vmatmul.bf16.gmra.mxu0 %v2192
    %v4127 = vpop.f32.mrf.mxu0
    %v4128 = vadd.f32 %v4115, %v4127
    %v4129 = vpop.f32.mrf.mxu0
    %4130 = vdwg.mxu0
    %4131 = vmatpush.bf16.msra.mxu0 %v3452
    %4132 = vmatpush.bf16.msra.mxu0 %v3448
    %4133 = vmatpush.bf16.msra.mxu0 %v3444
    %4134 = vmatpush.bf16.msra.mxu0 %v3440
    %4135 = vmatpush.bf16.msra.mxu0 %v3436
    %4136 = vmatpush.bf16.msra.mxu0 %v3432
    %4137 = vmatpush.bf16.msra.mxu0 %v3428
    %4138 = vmatpush.bf16.msra.mxu0 %v3424
    %4139 = vmatmul.bf16.gmra.mxu0 %v2193
    %v4140 = vpop.f32.mrf.mxu0
    %v4141 = vadd.f32 %v4128, %v4140
    %v4142 = vpop.f32.mrf.mxu0
    %4143 = vdwg.mxu0
    %4144 = vmatpush.bf16.msra.mxu0 %v3484
    %4145 = vmatpush.bf16.msra.mxu0 %v3480
    %4146 = vmatpush.bf16.msra.mxu0 %v3476
    %4147 = vmatpush.bf16.msra.mxu0 %v3472
    %4148 = vmatpush.bf16.msra.mxu0 %v3468
    %4149 = vmatpush.bf16.msra.mxu0 %v3464
    %4150 = vmatpush.bf16.msra.mxu0 %v3460
    %4151 = vmatpush.bf16.msra.mxu0 %v3456
    %4152 = vmatmul.bf16.gmra.mxu0 %v2194
    %v4153 = vpop.f32.mrf.mxu0
    %v4154 = vadd.f32 %v4141, %v4153
    %v4155 = vpop.f32.mrf.mxu0
    %4156 = vdwg.mxu0
    %v4157 = vmul.f32 %v3842, 0.01
    %v4158 = vmul.f32 %v3946, 0.01
    %v4159 = vmul.f32 %v4050, 0.01
    %v4160 = vmul.f32 %v4154, 0.01
    %v4161 = vmax.f32 %v3842, %v4157
    %v4162 = vmax.f32 %v3946, %v4158
    %v4163 = vmax.f32 %v4050, %v4159
    %v4164 = vmax.f32 %v4154, %v4160
    %v4165 = vpack.c.bf16 %v4161, %v4161
    %v4166 = vpack.c.bf16 %v4162, %v4162
    %v4167 = vpack.c.bf16 %v4163, %v4163
    %v4168 = vpack.c.bf16 %v4164, %v4164
    %v4169 = vld [vmem:[#allocation7] sm:$0xff]
    %v4170 = vld [vmem:[#allocation7 + $0x8] sm:$0xff]
    %v4171 = vld [vmem:[#allocation7 + $0x10] sm:$0xff]
    %v4172 = vld [vmem:[#allocation7 + $0x18] sm:$0xff]
    %v4173 = vld [vmem:[#allocation7 + $0x20] sm:$0xff]
    %v4174 = vld [vmem:[#allocation7 + $0x28] sm:$0xff]
    %v4175 = vld [vmem:[#allocation7 + $0x30] sm:$0xff]
    %v4176 = vld [vmem:[#allocation7 + $0x38] sm:$0xff]
    %v4177 = vld [vmem:[#allocation7 + $0x40] sm:$0xff]
    %v4178 = vld [vmem:[#allocation7 + $0x48] sm:$0xff]
    %v4179 = vld [vmem:[#allocation7 + $0x50] sm:$0xff]
    %v4180 = vld [vmem:[#allocation7 + $0x58] sm:$0xff]
    %v4181 = vld [vmem:[#allocation7 + $0x60] sm:$0xff]
    %v4182 = vld [vmem:[#allocation7 + $0x68] sm:$0xff]
    %v4183 = vld [vmem:[#allocation7 + $0x70] sm:$0xff]
    %v4184 = vld [vmem:[#allocation7 + $0x78] sm:$0xff]
    %v4185 = vld [vmem:[#allocation7 + $0x80] sm:$0xff]
    %v4186 = vld [vmem:[#allocation7 + $0x88] sm:$0xff]
    %v4187 = vld [vmem:[#allocation7 + $0x90] sm:$0xff]
    %v4188 = vld [vmem:[#allocation7 + $0x98] sm:$0xff]
    %v4189 = vld [vmem:[#allocation7 + $0xa0] sm:$0xff]
    %v4190 = vld [vmem:[#allocation7 + $0xa8] sm:$0xff]
    %v4191 = vld [vmem:[#allocation7 + $0xb0] sm:$0xff]
    %v4192 = vld [vmem:[#allocation7 + $0xb8] sm:$0xff]
    %v4193 = vld [vmem:[#allocation7 + $0xc0] sm:$0xff]
    %v4194 = vld [vmem:[#allocation7 + $0xc8] sm:$0xff]
    %v4195 = vld [vmem:[#allocation7 + $0xd0] sm:$0xff]
    %v4196 = vld [vmem:[#allocation7 + $0xd8] sm:$0xff]
    %v4197 = vld [vmem:[#allocation7 + $0xe0] sm:$0xff]
    %v4198 = vld [vmem:[#allocation7 + $0xe8] sm:$0xff]
    %v4199 = vld [vmem:[#allocation7 + $0xf0] sm:$0xff]
    %v4200 = vld [vmem:[#allocation7 + $0xf8] sm:$0xff]
    %v4201 = vld [vmem:[#allocation7 + $0x100] sm:$0xff]
    %v4202 = vld [vmem:[#allocation7 + $0x108] sm:$0xff]
    %v4203 = vld [vmem:[#allocation7 + $0x110] sm:$0xff]
    %v4204 = vld [vmem:[#allocation7 + $0x118] sm:$0xff]
    %v4205 = vld [vmem:[#allocation7 + $0x120] sm:$0xff]
    %v4206 = vld [vmem:[#allocation7 + $0x128] sm:$0xff]
    %v4207 = vld [vmem:[#allocation7 + $0x130] sm:$0xff]
    %v4208 = vld [vmem:[#allocation7 + $0x138] sm:$0xff]
    %v4209 = vld [vmem:[#allocation7 + $0x140] sm:$0xff]
    %v4210 = vld [vmem:[#allocation7 + $0x148] sm:$0xff]
    %v4211 = vld [vmem:[#allocation7 + $0x150] sm:$0xff]
    %v4212 = vld [vmem:[#allocation7 + $0x158] sm:$0xff]
    %v4213 = vld [vmem:[#allocation7 + $0x160] sm:$0xff]
    %v4214 = vld [vmem:[#allocation7 + $0x168] sm:$0xff]
    %v4215 = vld [vmem:[#allocation7 + $0x170] sm:$0xff]
    %v4216 = vld [vmem:[#allocation7 + $0x178] sm:$0xff]
    %v4217 = vld [vmem:[#allocation7 + $0x180] sm:$0xff]
    %v4218 = vld [vmem:[#allocation7 + $0x188] sm:$0xff]
    %v4219 = vld [vmem:[#allocation7 + $0x190] sm:$0xff]
    %v4220 = vld [vmem:[#allocation7 + $0x198] sm:$0xff]
    %v4221 = vld [vmem:[#allocation7 + $0x1a0] sm:$0xff]
    %v4222 = vld [vmem:[#allocation7 + $0x1a8] sm:$0xff]
    %v4223 = vld [vmem:[#allocation7 + $0x1b0] sm:$0xff]
    %v4224 = vld [vmem:[#allocation7 + $0x1b8] sm:$0xff]
    %v4225 = vld [vmem:[#allocation7 + $0x1c0] sm:$0xff]
    %v4226 = vld [vmem:[#allocation7 + $0x1c8] sm:$0xff]
    %v4227 = vld [vmem:[#allocation7 + $0x1d0] sm:$0xff]
    %v4228 = vld [vmem:[#allocation7 + $0x1d8] sm:$0xff]
    %v4229 = vld [vmem:[#allocation7 + $0x1e0] sm:$0xff]
    %v4230 = vld [vmem:[#allocation7 + $0x1e8] sm:$0xff]
    %v4231 = vld [vmem:[#allocation7 + $0x1f0] sm:$0xff]
    %v4232 = vld [vmem:[#allocation7 + $0x1f8] sm:$0xff]
    %v4233 = vld [vmem:[%s6] sm:$0x3]
    %v4235 = vperm.slane %v4233, 0
    %v4236 = vperm.slane %v4233, 1
    %v4303 = vunpack.c.l.b16 %v4169
    %v4304 = vunpack.c.h.b16 %v4169
    %v4305 = vunpack.c.l.b16 %v4170
    %v4306 = vunpack.c.h.b16 %v4170
    %v4307 = vunpack.c.l.b16 %v4171
    %v4308 = vunpack.c.h.b16 %v4171
    %v4309 = vunpack.c.l.b16 %v4172
    %v4310 = vunpack.c.h.b16 %v4172
    %v4311 = vunpack.c.l.b16 %v4173
    %v4312 = vunpack.c.h.b16 %v4173
    %v4313 = vunpack.c.l.b16 %v4174
    %v4314 = vunpack.c.h.b16 %v4174
    %v4315 = vunpack.c.l.b16 %v4175
    %v4316 = vunpack.c.h.b16 %v4175
    %v4317 = vunpack.c.l.b16 %v4176
    %v4318 = vunpack.c.h.b16 %v4176
    %v4319 = vunpack.c.l.b16 %v4177
    %v4320 = vunpack.c.h.b16 %v4177
    %v4321 = vunpack.c.l.b16 %v4178
    %v4322 = vunpack.c.h.b16 %v4178
    %v4323 = vunpack.c.l.b16 %v4179
    %v4324 = vunpack.c.h.b16 %v4179
    %v4325 = vunpack.c.l.b16 %v4180
    %v4326 = vunpack.c.h.b16 %v4180
    %v4327 = vunpack.c.l.b16 %v4181
    %v4328 = vunpack.c.h.b16 %v4181
    %v4329 = vunpack.c.l.b16 %v4182
    %v4330 = vunpack.c.h.b16 %v4182
    %v4331 = vunpack.c.l.b16 %v4183
    %v4332 = vunpack.c.h.b16 %v4183
    %v4333 = vunpack.c.l.b16 %v4184
    %v4334 = vunpack.c.h.b16 %v4184
    %v4335 = vunpack.c.l.b16 %v4185
    %v4336 = vunpack.c.h.b16 %v4185
    %v4337 = vunpack.c.l.b16 %v4186
    %v4338 = vunpack.c.h.b16 %v4186
    %v4339 = vunpack.c.l.b16 %v4187
    %v4340 = vunpack.c.h.b16 %v4187
    %v4341 = vunpack.c.l.b16 %v4188
    %v4342 = vunpack.c.h.b16 %v4188
    %v4343 = vunpack.c.l.b16 %v4189
    %v4344 = vunpack.c.h.b16 %v4189
    %v4345 = vunpack.c.l.b16 %v4190
    %v4346 = vunpack.c.h.b16 %v4190
    %v4347 = vunpack.c.l.b16 %v4191
    %v4348 = vunpack.c.h.b16 %v4191
    %v4349 = vunpack.c.l.b16 %v4192
    %v4350 = vunpack.c.h.b16 %v4192
    %v4351 = vunpack.c.l.b16 %v4193
    %v4352 = vunpack.c.h.b16 %v4193
    %v4353 = vunpack.c.l.b16 %v4194
    %v4354 = vunpack.c.h.b16 %v4194
    %v4355 = vunpack.c.l.b16 %v4195
    %v4356 = vunpack.c.h.b16 %v4195
    %v4357 = vunpack.c.l.b16 %v4196
    %v4358 = vunpack.c.h.b16 %v4196
    %v4359 = vunpack.c.l.b16 %v4197
    %v4360 = vunpack.c.h.b16 %v4197
    %v4361 = vunpack.c.l.b16 %v4198
    %v4362 = vunpack.c.h.b16 %v4198
    %v4363 = vunpack.c.l.b16 %v4199
    %v4364 = vunpack.c.h.b16 %v4199
    %v4365 = vunpack.c.l.b16 %v4200
    %v4366 = vunpack.c.h.b16 %v4200
    %v4367 = vunpack.c.l.b16 %v4201
    %v4368 = vunpack.c.h.b16 %v4201
    %v4369 = vunpack.c.l.b16 %v4202
    %v4370 = vunpack.c.h.b16 %v4202
    %v4371 = vunpack.c.l.b16 %v4203
    %v4372 = vunpack.c.h.b16 %v4203
    %v4373 = vunpack.c.l.b16 %v4204
    %v4374 = vunpack.c.h.b16 %v4204
    %v4375 = vunpack.c.l.b16 %v4205
    %v4376 = vunpack.c.h.b16 %v4205
    %v4377 = vunpack.c.l.b16 %v4206
    %v4378 = vunpack.c.h.b16 %v4206
    %v4379 = vunpack.c.l.b16 %v4207
    %v4380 = vunpack.c.h.b16 %v4207
    %v4381 = vunpack.c.l.b16 %v4208
    %v4382 = vunpack.c.h.b16 %v4208
    %v4383 = vunpack.c.l.b16 %v4209
    %v4384 = vunpack.c.h.b16 %v4209
    %v4385 = vunpack.c.l.b16 %v4210
    %v4386 = vunpack.c.h.b16 %v4210
    %v4387 = vunpack.c.l.b16 %v4211
    %v4388 = vunpack.c.h.b16 %v4211
    %v4389 = vunpack.c.l.b16 %v4212
    %v4390 = vunpack.c.h.b16 %v4212
    %v4391 = vunpack.c.l.b16 %v4213
    %v4392 = vunpack.c.h.b16 %v4213
    %v4393 = vunpack.c.l.b16 %v4214
    %v4394 = vunpack.c.h.b16 %v4214
    %v4395 = vunpack.c.l.b16 %v4215
    %v4396 = vunpack.c.h.b16 %v4215
    %v4397 = vunpack.c.l.b16 %v4216
    %v4398 = vunpack.c.h.b16 %v4216
    %v4399 = vunpack.c.l.b16 %v4217
    %v4400 = vunpack.c.h.b16 %v4217
    %v4401 = vunpack.c.l.b16 %v4218
    %v4402 = vunpack.c.h.b16 %v4218
    %v4403 = vunpack.c.l.b16 %v4219
    %v4404 = vunpack.c.h.b16 %v4219
    %v4405 = vunpack.c.l.b16 %v4220
    %v4406 = vunpack.c.h.b16 %v4220
    %v4407 = vunpack.c.l.b16 %v4221
    %v4408 = vunpack.c.h.b16 %v4221
    %v4409 = vunpack.c.l.b16 %v4222
    %v4410 = vunpack.c.h.b16 %v4222
    %v4411 = vunpack.c.l.b16 %v4223
    %v4412 = vunpack.c.h.b16 %v4223
    %v4413 = vunpack.c.l.b16 %v4224
    %v4414 = vunpack.c.h.b16 %v4224
    %v4415 = vunpack.c.l.b16 %v4225
    %v4416 = vunpack.c.h.b16 %v4225
    %v4417 = vunpack.c.l.b16 %v4226
    %v4418 = vunpack.c.h.b16 %v4226
    %v4419 = vunpack.c.l.b16 %v4227
    %v4420 = vunpack.c.h.b16 %v4227
    %v4421 = vunpack.c.l.b16 %v4228
    %v4422 = vunpack.c.h.b16 %v4228
    %v4423 = vunpack.c.l.b16 %v4229
    %v4424 = vunpack.c.h.b16 %v4229
    %v4425 = vunpack.c.l.b16 %v4230
    %v4426 = vunpack.c.h.b16 %v4230
    %v4427 = vunpack.c.l.b16 %v4231
    %v4428 = vunpack.c.h.b16 %v4231
    %v4429 = vunpack.c.l.b16 %v4232
    %v4430 = vunpack.c.h.b16 %v4232
    %v4431 = vpack.c.b16 %v4305, %v4303
    %v4432 = vpack.c.b16 %v4306, %v4304
    %v4433 = vpack.c.b16 %v4309, %v4307
    %v4434 = vpack.c.b16 %v4310, %v4308
    %v4435 = vpack.c.b16 %v4313, %v4311
    %v4436 = vpack.c.b16 %v4314, %v4312
    %v4437 = vpack.c.b16 %v4317, %v4315
    %v4438 = vpack.c.b16 %v4318, %v4316
    %v4439 = vpack.c.b16 %v4321, %v4319
    %v4440 = vpack.c.b16 %v4322, %v4320
    %v4441 = vpack.c.b16 %v4325, %v4323
    %v4442 = vpack.c.b16 %v4326, %v4324
    %v4443 = vpack.c.b16 %v4329, %v4327
    %v4444 = vpack.c.b16 %v4330, %v4328
    %v4445 = vpack.c.b16 %v4333, %v4331
    %v4446 = vpack.c.b16 %v4334, %v4332
    %v4447 = vpack.c.b16 %v4337, %v4335
    %v4448 = vpack.c.b16 %v4338, %v4336
    %v4449 = vpack.c.b16 %v4341, %v4339
    %v4450 = vpack.c.b16 %v4342, %v4340
    %v4451 = vpack.c.b16 %v4345, %v4343
    %v4452 = vpack.c.b16 %v4346, %v4344
    %v4453 = vpack.c.b16 %v4349, %v4347
    %v4454 = vpack.c.b16 %v4350, %v4348
    %v4455 = vpack.c.b16 %v4353, %v4351
    %v4456 = vpack.c.b16 %v4354, %v4352
    %v4457 = vpack.c.b16 %v4357, %v4355
    %v4458 = vpack.c.b16 %v4358, %v4356
    %v4459 = vpack.c.b16 %v4361, %v4359
    %v4460 = vpack.c.b16 %v4362, %v4360
    %v4461 = vpack.c.b16 %v4365, %v4363
    %v4462 = vpack.c.b16 %v4366, %v4364
    %v4463 = vpack.c.b16 %v4369, %v4367
    %v4464 = vpack.c.b16 %v4370, %v4368
    %v4465 = vpack.c.b16 %v4373, %v4371
    %v4466 = vpack.c.b16 %v4374, %v4372
    %v4467 = vpack.c.b16 %v4377, %v4375
    %v4468 = vpack.c.b16 %v4378, %v4376
    %v4469 = vpack.c.b16 %v4381, %v4379
    %v4470 = vpack.c.b16 %v4382, %v4380
    %v4471 = vpack.c.b16 %v4385, %v4383
    %v4472 = vpack.c.b16 %v4386, %v4384
    %v4473 = vpack.c.b16 %v4389, %v4387
    %v4474 = vpack.c.b16 %v4390, %v4388
    %v4475 = vpack.c.b16 %v4393, %v4391
    %v4476 = vpack.c.b16 %v4394, %v4392
    %v4477 = vpack.c.b16 %v4397, %v4395
    %v4478 = vpack.c.b16 %v4398, %v4396
    %v4479 = vpack.c.b16 %v4401, %v4399
    %v4480 = vpack.c.b16 %v4402, %v4400
    %v4481 = vpack.c.b16 %v4405, %v4403
    %v4482 = vpack.c.b16 %v4406, %v4404
    %v4483 = vpack.c.b16 %v4409, %v4407
    %v4484 = vpack.c.b16 %v4410, %v4408
    %v4485 = vpack.c.b16 %v4413, %v4411
    %v4486 = vpack.c.b16 %v4414, %v4412
    %v4487 = vpack.c.b16 %v4417, %v4415
    %v4488 = vpack.c.b16 %v4418, %v4416
    %v4489 = vpack.c.b16 %v4421, %v4419
    %v4490 = vpack.c.b16 %v4422, %v4420
    %v4491 = vpack.c.b16 %v4425, %v4423
    %v4492 = vpack.c.b16 %v4426, %v4424
    %v4493 = vpack.c.b16 %v4429, %v4427
    %v4494 = vpack.c.b16 %v4430, %v4428
    %4559 = vmatpush.bf16.msra.mxu0 %v4445
    %4560 = vmatpush.bf16.msra.mxu0 %v4443
    %4561 = vmatpush.bf16.msra.mxu0 %v4441
    %4562 = vmatpush.bf16.msra.mxu0 %v4439
    %4563 = vmatpush.bf16.msra.mxu0 %v4437
    %4564 = vmatpush.bf16.msra.mxu0 %v4435
    %4565 = vmatpush.bf16.msra.mxu0 %v4433
    %4566 = vmatpush.bf16.msra.mxu0 %v4431
    %4567 = vmatmul.bf16.gmra.mxu0 %v4165
    %v4568 = vpop.f32.mrf.mxu0
    %v4569 = vadd.f32 %v4235, %v4568
    %v4570 = vpop.f32.mrf.mxu0
    %4571 = vdwg.mxu0
    %4572 = vmatpush.bf16.msra.mxu0 %v4461
    %4573 = vmatpush.bf16.msra.mxu0 %v4459
    %4574 = vmatpush.bf16.msra.mxu0 %v4457
    %4575 = vmatpush.bf16.msra.mxu0 %v4455
    %4576 = vmatpush.bf16.msra.mxu0 %v4453
    %4577 = vmatpush.bf16.msra.mxu0 %v4451
    %4578 = vmatpush.bf16.msra.mxu0 %v4449
    %4579 = vmatpush.bf16.msra.mxu0 %v4447
    %4580 = vmatmul.bf16.gmra.mxu0 %v4166
    %v4581 = vpop.f32.mrf.mxu0
    %v4582 = vadd.f32 %v4569, %v4581
    %v4583 = vpop.f32.mrf.mxu0
    %4584 = vdwg.mxu0
    %4585 = vmatpush.bf16.msra.mxu0 %v4477
    %4586 = vmatpush.bf16.msra.mxu0 %v4475
    %4587 = vmatpush.bf16.msra.mxu0 %v4473
    %4588 = vmatpush.bf16.msra.mxu0 %v4471
    %4589 = vmatpush.bf16.msra.mxu0 %v4469
    %4590 = vmatpush.bf16.msra.mxu0 %v4467
    %4591 = vmatpush.bf16.msra.mxu0 %v4465
    %4592 = vmatpush.bf16.msra.mxu0 %v4463
    %4593 = vmatmul.bf16.gmra.mxu0 %v4167
    %v4594 = vpop.f32.mrf.mxu0
    %v4595 = vadd.f32 %v4582, %v4594
    %v4596 = vpop.f32.mrf.mxu0
    %4597 = vdwg.mxu0
    %4598 = vmatpush.bf16.msra.mxu0 %v4493
    %4599 = vmatpush.bf16.msra.mxu0 %v4491
    %4600 = vmatpush.bf16.msra.mxu0 %v4489
    %4601 = vmatpush.bf16.msra.mxu0 %v4487
    %4602 = vmatpush.bf16.msra.mxu0 %v4485
    %4603 = vmatpush.bf16.msra.mxu0 %v4483
    %4604 = vmatpush.bf16.msra.mxu0 %v4481
    %4605 = vmatpush.bf16.msra.mxu0 %v4479
    %4606 = vmatmul.bf16.gmra.mxu0 %v4168
    %v4607 = vpop.f32.mrf.mxu0
    %v4608 = vadd.f32 %v4595, %v4607
    %v4609 = vpop.f32.mrf.mxu0
    %4610 = vdwg.mxu0
    %4611 = vmatpush.bf16.msra.mxu0 %v4446
    %4612 = vmatpush.bf16.msra.mxu0 %v4444
    %4613 = vmatpush.bf16.msra.mxu0 %v4442
    %4614 = vmatpush.bf16.msra.mxu0 %v4440
    %4615 = vmatpush.bf16.msra.mxu0 %v4438
    %4616 = vmatpush.bf16.msra.mxu0 %v4436
    %4617 = vmatpush.bf16.msra.mxu0 %v4434
    %4618 = vmatpush.bf16.msra.mxu0 %v4432
    %4619 = vmatmul.bf16.gmra.mxu0 %v4165
    %v4620 = vpop.f32.mrf.mxu0
    %v4621 = vadd.f32 %v4236, %v4620
    %v4622 = vpop.f32.mrf.mxu0
    %4623 = vdwg.mxu0
    %4624 = vmatpush.bf16.msra.mxu0 %v4462
    %4625 = vmatpush.bf16.msra.mxu0 %v4460
    %4626 = vmatpush.bf16.msra.mxu0 %v4458
    %4627 = vmatpush.bf16.msra.mxu0 %v4456
    %4628 = vmatpush.bf16.msra.mxu0 %v4454
    %4629 = vmatpush.bf16.msra.mxu0 %v4452
    %4630 = vmatpush.bf16.msra.mxu0 %v4450
    %4631 = vmatpush.bf16.msra.mxu0 %v4448
    %4632 = vmatmul.bf16.gmra.mxu0 %v4166
    %v4633 = vpop.f32.mrf.mxu0
    %v4634 = vadd.f32 %v4621, %v4633
    %v4635 = vpop.f32.mrf.mxu0
    %4636 = vdwg.mxu0
    %4637 = vmatpush.bf16.msra.mxu0 %v4478
    %4638 = vmatpush.bf16.msra.mxu0 %v4476
    %4639 = vmatpush.bf16.msra.mxu0 %v4474
    %4640 = vmatpush.bf16.msra.mxu0 %v4472
    %4641 = vmatpush.bf16.msra.mxu0 %v4470
    %4642 = vmatpush.bf16.msra.mxu0 %v4468
    %4643 = vmatpush.bf16.msra.mxu0 %v4466
    %4644 = vmatpush.bf16.msra.mxu0 %v4464
    %4645 = vmatmul.bf16.gmra.mxu0 %v4167
    %v4646 = vpop.f32.mrf.mxu0
    %v4647 = vadd.f32 %v4634, %v4646
    %v4648 = vpop.f32.mrf.mxu0
    %4649 = vdwg.mxu0
    %4650 = vmatpush.bf16.msra.mxu0 %v4494
    %4651 = vmatpush.bf16.msra.mxu0 %v4492
    %4652 = vmatpush.bf16.msra.mxu0 %v4490
    %4653 = vmatpush.bf16.msra.mxu0 %v4488
    %4654 = vmatpush.bf16.msra.mxu0 %v4486
    %4655 = vmatpush.bf16.msra.mxu0 %v4484
    %4656 = vmatpush.bf16.msra.mxu0 %v4482
    %4657 = vmatpush.bf16.msra.mxu0 %v4480
    %4658 = vmatmul.bf16.gmra.mxu0 %v4168
    %v4659 = vpop.f32.mrf.mxu0
    %v4660 = vadd.f32 %v4647, %v4659
    %v4661 = vpop.f32.mrf.mxu0
    %4662 = vdwg.mxu0
    %v4663 = vmul.f32 %v4608, 0.01
    %v4664 = vmul.f32 %v4660, 0.01
    %v4665 = vmax.f32 %v4608, %v4663
    %v4666 = vmax.f32 %v4660, %v4664
    %v4667 = vpack.c.bf16 %v4665, %v4665
    %v4668 = vpack.c.bf16 %v4666, %v4666
    %v4669 = vld [vmem:[#allocation8] sm:$0xff]
    %v4670 = vld [vmem:[#allocation8 + $0x8] sm:$0xff]
    %v4671 = vld [vmem:[#allocation8 + $0x10] sm:$0xff]
    %v4672 = vld [vmem:[#allocation8 + $0x18] sm:$0xff]
    %v4673 = vld [vmem:[#allocation8 + $0x20] sm:$0xff]
    %v4674 = vld [vmem:[#allocation8 + $0x28] sm:$0xff]
    %v4675 = vld [vmem:[#allocation8 + $0x30] sm:$0xff]
    %v4676 = vld [vmem:[#allocation8 + $0x38] sm:$0xff]
    %v4677 = vld [vmem:[#allocation8 + $0x40] sm:$0xff]
    %v4678 = vld [vmem:[#allocation8 + $0x48] sm:$0xff]
    %v4679 = vld [vmem:[#allocation8 + $0x50] sm:$0xff]
    %v4680 = vld [vmem:[#allocation8 + $0x58] sm:$0xff]
    %v4681 = vld [vmem:[#allocation8 + $0x60] sm:$0xff]
    %v4682 = vld [vmem:[#allocation8 + $0x68] sm:$0xff]
    %v4683 = vld [vmem:[#allocation8 + $0x70] sm:$0xff]
    %v4684 = vld [vmem:[#allocation8 + $0x78] sm:$0xff]
    %v4685 = vld [vmem:[#allocation8 + $0x80] sm:$0xff]
    %v4686 = vld [vmem:[#allocation8 + $0x88] sm:$0xff]
    %v4687 = vld [vmem:[#allocation8 + $0x90] sm:$0xff]
    %v4688 = vld [vmem:[#allocation8 + $0x98] sm:$0xff]
    %v4689 = vld [vmem:[#allocation8 + $0xa0] sm:$0xff]
    %v4690 = vld [vmem:[#allocation8 + $0xa8] sm:$0xff]
    %v4691 = vld [vmem:[#allocation8 + $0xb0] sm:$0xff]
    %v4692 = vld [vmem:[#allocation8 + $0xb8] sm:$0xff]
    %v4693 = vld [vmem:[#allocation8 + $0xc0] sm:$0xff]
    %v4694 = vld [vmem:[#allocation8 + $0xc8] sm:$0xff]
    %v4695 = vld [vmem:[#allocation8 + $0xd0] sm:$0xff]
    %v4696 = vld [vmem:[#allocation8 + $0xd8] sm:$0xff]
    %v4697 = vld [vmem:[#allocation8 + $0xe0] sm:$0xff]
    %v4698 = vld [vmem:[#allocation8 + $0xe8] sm:$0xff]
    %v4699 = vld [vmem:[#allocation8 + $0xf0] sm:$0xff]
    %v4700 = vld [vmem:[#allocation8 + $0xf8] sm:$0xff]
    %v4701 = vld [vmem:[%s8] sm:$0x3]
    %v4703 = vperm.slane %v4701, 0
    %v4704 = vperm.slane %v4701, 1
    %v4739 = vunpack.c.l.b16 %v4669
    %v4740 = vunpack.c.h.b16 %v4669
    %v4741 = vunpack.c.l.b16 %v4670
    %v4742 = vunpack.c.h.b16 %v4670
    %v4743 = vunpack.c.l.b16 %v4671
    %v4744 = vunpack.c.h.b16 %v4671
    %v4745 = vunpack.c.l.b16 %v4672
    %v4746 = vunpack.c.h.b16 %v4672
    %v4747 = vunpack.c.l.b16 %v4673
    %v4748 = vunpack.c.h.b16 %v4673
    %v4749 = vunpack.c.l.b16 %v4674
    %v4750 = vunpack.c.h.b16 %v4674
    %v4751 = vunpack.c.l.b16 %v4675
    %v4752 = vunpack.c.h.b16 %v4675
    %v4753 = vunpack.c.l.b16 %v4676
    %v4754 = vunpack.c.h.b16 %v4676
    %v4755 = vunpack.c.l.b16 %v4677
    %v4756 = vunpack.c.h.b16 %v4677
    %v4757 = vunpack.c.l.b16 %v4678
    %v4758 = vunpack.c.h.b16 %v4678
    %v4759 = vunpack.c.l.b16 %v4679
    %v4760 = vunpack.c.h.b16 %v4679
    %v4761 = vunpack.c.l.b16 %v4680
    %v4762 = vunpack.c.h.b16 %v4680
    %v4763 = vunpack.c.l.b16 %v4681
    %v4764 = vunpack.c.h.b16 %v4681
    %v4765 = vunpack.c.l.b16 %v4682
    %v4766 = vunpack.c.h.b16 %v4682
    %v4767 = vunpack.c.l.b16 %v4683
    %v4768 = vunpack.c.h.b16 %v4683
    %v4769 = vunpack.c.l.b16 %v4684
    %v4770 = vunpack.c.h.b16 %v4684
    %v4771 = vunpack.c.l.b16 %v4685
    %v4772 = vunpack.c.h.b16 %v4685
    %v4773 = vunpack.c.l.b16 %v4686
    %v4774 = vunpack.c.h.b16 %v4686
    %v4775 = vunpack.c.l.b16 %v4687
    %v4776 = vunpack.c.h.b16 %v4687
    %v4777 = vunpack.c.l.b16 %v4688
    %v4778 = vunpack.c.h.b16 %v4688
    %v4779 = vunpack.c.l.b16 %v4689
    %v4780 = vunpack.c.h.b16 %v4689
    %v4781 = vunpack.c.l.b16 %v4690
    %v4782 = vunpack.c.h.b16 %v4690
    %v4783 = vunpack.c.l.b16 %v4691
    %v4784 = vunpack.c.h.b16 %v4691
    %v4785 = vunpack.c.l.b16 %v4692
    %v4786 = vunpack.c.h.b16 %v4692
    %v4787 = vunpack.c.l.b16 %v4693
    %v4788 = vunpack.c.h.b16 %v4693
    %v4789 = vunpack.c.l.b16 %v4694
    %v4790 = vunpack.c.h.b16 %v4694
    %v4791 = vunpack.c.l.b16 %v4695
    %v4792 = vunpack.c.h.b16 %v4695
    %v4793 = vunpack.c.l.b16 %v4696
    %v4794 = vunpack.c.h.b16 %v4696
    %v4795 = vunpack.c.l.b16 %v4697
    %v4796 = vunpack.c.h.b16 %v4697
    %v4797 = vunpack.c.l.b16 %v4698
    %v4798 = vunpack.c.h.b16 %v4698
    %v4799 = vunpack.c.l.b16 %v4699
    %v4800 = vunpack.c.h.b16 %v4699
    %v4801 = vunpack.c.l.b16 %v4700
    %v4802 = vunpack.c.h.b16 %v4700
    %v4803 = vpack.c.b16 %v4741, %v4739
    %v4804 = vpack.c.b16 %v4742, %v4740
    %v4805 = vpack.c.b16 %v4745, %v4743
    %v4806 = vpack.c.b16 %v4746, %v4744
    %v4807 = vpack.c.b16 %v4749, %v4747
    %v4808 = vpack.c.b16 %v4750, %v4748
    %v4809 = vpack.c.b16 %v4753, %v4751
    %v4810 = vpack.c.b16 %v4754, %v4752
    %v4811 = vpack.c.b16 %v4757, %v4755
    %v4812 = vpack.c.b16 %v4758, %v4756
    %v4813 = vpack.c.b16 %v4761, %v4759
    %v4814 = vpack.c.b16 %v4762, %v4760
    %v4815 = vpack.c.b16 %v4765, %v4763
    %v4816 = vpack.c.b16 %v4766, %v4764
    %v4817 = vpack.c.b16 %v4769, %v4767
    %v4818 = vpack.c.b16 %v4770, %v4768
    %v4819 = vpack.c.b16 %v4773, %v4771
    %v4820 = vpack.c.b16 %v4774, %v4772
    %v4821 = vpack.c.b16 %v4777, %v4775
    %v4822 = vpack.c.b16 %v4778, %v4776
    %v4823 = vpack.c.b16 %v4781, %v4779
    %v4824 = vpack.c.b16 %v4782, %v4780
    %v4825 = vpack.c.b16 %v4785, %v4783
    %v4826 = vpack.c.b16 %v4786, %v4784
    %v4827 = vpack.c.b16 %v4789, %v4787
    %v4828 = vpack.c.b16 %v4790, %v4788
    %v4829 = vpack.c.b16 %v4793, %v4791
    %v4830 = vpack.c.b16 %v4794, %v4792
    %v4831 = vpack.c.b16 %v4797, %v4795
    %v4832 = vpack.c.b16 %v4798, %v4796
    %v4833 = vpack.c.b16 %v4801, %v4799
    %v4834 = vpack.c.b16 %v4802, %v4800
    %4867 = vmatpush.bf16.msra.mxu0 %v4817
    %4868 = vmatpush.bf16.msra.mxu0 %v4815
    %4869 = vmatpush.bf16.msra.mxu0 %v4813
    %4870 = vmatpush.bf16.msra.mxu0 %v4811
    %4871 = vmatpush.bf16.msra.mxu0 %v4809
    %4872 = vmatpush.bf16.msra.mxu0 %v4807
    %4873 = vmatpush.bf16.msra.mxu0 %v4805
    %4874 = vmatpush.bf16.msra.mxu0 %v4803
    %4875 = vmatmul.bf16.gmra.mxu0 %v4667
    %v4876 = vpop.f32.mrf.mxu0
    %v4877 = vadd.f32 %v4703, %v4876
    %v4878 = vpop.f32.mrf.mxu0
    %4879 = vdwg.mxu0
    %4880 = vmatpush.bf16.msra.mxu0 %v4833
    %4881 = vmatpush.bf16.msra.mxu0 %v4831
    %4882 = vmatpush.bf16.msra.mxu0 %v4829
    %4883 = vmatpush.bf16.msra.mxu0 %v4827
    %4884 = vmatpush.bf16.msra.mxu0 %v4825
    %4885 = vmatpush.bf16.msra.mxu0 %v4823
    %4886 = vmatpush.bf16.msra.mxu0 %v4821
    %4887 = vmatpush.bf16.msra.mxu0 %v4819
    %4888 = vmatmul.bf16.gmra.mxu0 %v4668
    %v4889 = vpop.f32.mrf.mxu0
    %v4890 = vadd.f32 %v4877, %v4889
    %v4891 = vpop.f32.mrf.mxu0
    %4892 = vdwg.mxu0
    %4893 = vmatpush.bf16.msra.mxu0 %v4818
    %4894 = vmatpush.bf16.msra.mxu0 %v4816
    %4895 = vmatpush.bf16.msra.mxu0 %v4814
    %4896 = vmatpush.bf16.msra.mxu0 %v4812
    %4897 = vmatpush.bf16.msra.mxu0 %v4810
    %4898 = vmatpush.bf16.msra.mxu0 %v4808
    %4899 = vmatpush.bf16.msra.mxu0 %v4806
    %4900 = vmatpush.bf16.msra.mxu0 %v4804
    %4901 = vmatmul.bf16.gmra.mxu0 %v4667
    %v4902 = vpop.f32.mrf.mxu0
    %v4903 = vadd.f32 %v4704, %v4902
    %v4904 = vpop.f32.mrf.mxu0
    %4905 = vdwg.mxu0
    %4906 = vmatpush.bf16.msra.mxu0 %v4834
    %4907 = vmatpush.bf16.msra.mxu0 %v4832
    %4908 = vmatpush.bf16.msra.mxu0 %v4830
    %4909 = vmatpush.bf16.msra.mxu0 %v4828
    %4910 = vmatpush.bf16.msra.mxu0 %v4826
    %4911 = vmatpush.bf16.msra.mxu0 %v4824
    %4912 = vmatpush.bf16.msra.mxu0 %v4822
    %4913 = vmatpush.bf16.msra.mxu0 %v4820
    %4914 = vmatmul.bf16.gmra.mxu0 %v4668
    %v4915 = vpop.f32.mrf.mxu0
    %v4916 = vadd.f32 %v4903, %v4915
    %v4917 = vpop.f32.mrf.mxu0
    %4918 = vdwg.mxu0
    %v4919 = vmul.f32 %v4890, 0.01
    %v4920 = vmul.f32 %v4916, 0.01
    %v4921 = vmax.f32 %v4890, %v4919
    %v4922 = vmax.f32 %v4916, %v4920
    %4923 = vst [vmem:[#allocation17] sm:$0xff] %v4921
    %4924 = vst [vmem:[#allocation17 + $0x8] sm:$0xff] %v4922
    %v4925 = vpack.c.bf16 %v4921, %v4921
    %v4926 = vpack.c.bf16 %v4922, %v4922
    %v4927 = vld [vmem:[#allocation10] sm:$0xff]
    %v4928 = vld [vmem:[#allocation10 + $0x8] sm:$0xff]
    %v4929 = vld [vmem:[#allocation10 + $0x10] sm:$0xff]
    %v4930 = vld [vmem:[#allocation10 + $0x18] sm:$0xff]
    %v4931 = vld [vmem:[#allocation10 + $0x20] sm:$0xff]
    %v4932 = vld [vmem:[#allocation10 + $0x28] sm:$0xff]
    %v4933 = vld [vmem:[#allocation10 + $0x30] sm:$0xff]
    %v4934 = vld [vmem:[#allocation10 + $0x38] sm:$0xff]
    %v4935 = vld [vmem:[#allocation10 + $0x40] sm:$0xff]
    %v4936 = vld [vmem:[#allocation10 + $0x48] sm:$0xff]
    %v4937 = vld [vmem:[#allocation10 + $0x50] sm:$0xff]
    %v4938 = vld [vmem:[#allocation10 + $0x58] sm:$0xff]
    %v4939 = vld [vmem:[#allocation10 + $0x60] sm:$0xff]
    %v4940 = vld [vmem:[#allocation10 + $0x68] sm:$0xff]
    %v4941 = vld [vmem:[#allocation10 + $0x70] sm:$0xff]
    %v4942 = vld [vmem:[#allocation10 + $0x78] sm:$0xff]
    %v4943 = vld [vmem:[#allocation10 + $0x80] sm:$0xff]
    %v4944 = vld [vmem:[#allocation10 + $0x88] sm:$0xff]
    %v4945 = vld [vmem:[#allocation10 + $0x90] sm:$0xff]
    %v4946 = vld [vmem:[#allocation10 + $0x98] sm:$0xff]
    %v4947 = vld [vmem:[#allocation10 + $0xa0] sm:$0xff]
    %v4948 = vld [vmem:[#allocation10 + $0xa8] sm:$0xff]
    %v4949 = vld [vmem:[#allocation10 + $0xb0] sm:$0xff]
    %v4950 = vld [vmem:[#allocation10 + $0xb8] sm:$0xff]
    %v4951 = vld [vmem:[#allocation10 + $0xc0] sm:$0xff]
    %v4952 = vld [vmem:[#allocation10 + $0xc8] sm:$0xff]
    %v4953 = vld [vmem:[#allocation10 + $0xd0] sm:$0xff]
    %v4954 = vld [vmem:[#allocation10 + $0xd8] sm:$0xff]
    %v4955 = vld [vmem:[#allocation10 + $0xe0] sm:$0xff]
    %v4956 = vld [vmem:[#allocation10 + $0xe8] sm:$0xff]
    %v4957 = vld [vmem:[#allocation10 + $0xf0] sm:$0xff]
    %v4958 = vld [vmem:[#allocation10 + $0xf8] sm:$0xff]
    %v4959 = vld [vmem:[%s10] sm:$0x3]
    %v4961 = vperm.slane %v4959, 0
    %v4962 = vperm.slane %v4959, 1
    %v4997 = vunpack.c.l.b16 %v4927
    %v4998 = vunpack.c.h.b16 %v4927
    %v4999 = vunpack.c.l.b16 %v4928
    %v5000 = vunpack.c.h.b16 %v4928
    %v5001 = vunpack.c.l.b16 %v4929
    %v5002 = vunpack.c.h.b16 %v4929
    %v5003 = vunpack.c.l.b16 %v4930
    %v5004 = vunpack.c.h.b16 %v4930
    %v5005 = vunpack.c.l.b16 %v4931
    %v5006 = vunpack.c.h.b16 %v4931
    %v5007 = vunpack.c.l.b16 %v4932
    %v5008 = vunpack.c.h.b16 %v4932
    %v5009 = vunpack.c.l.b16 %v4933
    %v5010 = vunpack.c.h.b16 %v4933
    %v5011 = vunpack.c.l.b16 %v4934
    %v5012 = vunpack.c.h.b16 %v4934
    %v5013 = vunpack.c.l.b16 %v4935
    %v5014 = vunpack.c.h.b16 %v4935
    %v5015 = vunpack.c.l.b16 %v4936
    %v5016 = vunpack.c.h.b16 %v4936
    %v5017 = vunpack.c.l.b16 %v4937
    %v5018 = vunpack.c.h.b16 %v4937
    %v5019 = vunpack.c.l.b16 %v4938
    %v5020 = vunpack.c.h.b16 %v4938
    %v5021 = vunpack.c.l.b16 %v4939
    %v5022 = vunpack.c.h.b16 %v4939
    %v5023 = vunpack.c.l.b16 %v4940
    %v5024 = vunpack.c.h.b16 %v4940
    %v5025 = vunpack.c.l.b16 %v4941
    %v5026 = vunpack.c.h.b16 %v4941
    %v5027 = vunpack.c.l.b16 %v4942
    %v5028 = vunpack.c.h.b16 %v4942
    %v5029 = vunpack.c.l.b16 %v4943
    %v5030 = vunpack.c.h.b16 %v4943
    %v5031 = vunpack.c.l.b16 %v4944
    %v5032 = vunpack.c.h.b16 %v4944
    %v5033 = vunpack.c.l.b16 %v4945
    %v5034 = vunpack.c.h.b16 %v4945
    %v5035 = vunpack.c.l.b16 %v4946
    %v5036 = vunpack.c.h.b16 %v4946
    %v5037 = vunpack.c.l.b16 %v4947
    %v5038 = vunpack.c.h.b16 %v4947
    %v5039 = vunpack.c.l.b16 %v4948
    %v5040 = vunpack.c.h.b16 %v4948
    %v5041 = vunpack.c.l.b16 %v4949
    %v5042 = vunpack.c.h.b16 %v4949
    %v5043 = vunpack.c.l.b16 %v4950
    %v5044 = vunpack.c.h.b16 %v4950
    %v5045 = vunpack.c.l.b16 %v4951
    %v5046 = vunpack.c.h.b16 %v4951
    %v5047 = vunpack.c.l.b16 %v4952
    %v5048 = vunpack.c.h.b16 %v4952
    %v5049 = vunpack.c.l.b16 %v4953
    %v5050 = vunpack.c.h.b16 %v4953
    %v5051 = vunpack.c.l.b16 %v4954
    %v5052 = vunpack.c.h.b16 %v4954
    %v5053 = vunpack.c.l.b16 %v4955
    %v5054 = vunpack.c.h.b16 %v4955
    %v5055 = vunpack.c.l.b16 %v4956
    %v5056 = vunpack.c.h.b16 %v4956
    %v5057 = vunpack.c.l.b16 %v4957
    %v5058 = vunpack.c.h.b16 %v4957
    %v5059 = vunpack.c.l.b16 %v4958
    %v5060 = vunpack.c.h.b16 %v4958
    %v5061 = vpack.c.b16 %v4999, %v4997
    %v5062 = vpack.c.b16 %v5000, %v4998
    %v5063 = vpack.c.b16 %v5003, %v5001
    %v5064 = vpack.c.b16 %v5004, %v5002
    %v5065 = vpack.c.b16 %v5007, %v5005
    %v5066 = vpack.c.b16 %v5008, %v5006
    %v5067 = vpack.c.b16 %v5011, %v5009
    %v5068 = vpack.c.b16 %v5012, %v5010
    %v5069 = vpack.c.b16 %v5015, %v5013
    %v5070 = vpack.c.b16 %v5016, %v5014
    %v5071 = vpack.c.b16 %v5019, %v5017
    %v5072 = vpack.c.b16 %v5020, %v5018
    %v5073 = vpack.c.b16 %v5023, %v5021
    %v5074 = vpack.c.b16 %v5024, %v5022
    %v5075 = vpack.c.b16 %v5027, %v5025
    %v5076 = vpack.c.b16 %v5028, %v5026
    %v5077 = vpack.c.b16 %v5031, %v5029
    %v5078 = vpack.c.b16 %v5032, %v5030
    %v5079 = vpack.c.b16 %v5035, %v5033
    %v5080 = vpack.c.b16 %v5036, %v5034
    %v5081 = vpack.c.b16 %v5039, %v5037
    %v5082 = vpack.c.b16 %v5040, %v5038
    %v5083 = vpack.c.b16 %v5043, %v5041
    %v5084 = vpack.c.b16 %v5044, %v5042
    %v5085 = vpack.c.b16 %v5047, %v5045
    %v5086 = vpack.c.b16 %v5048, %v5046
    %v5087 = vpack.c.b16 %v5051, %v5049
    %v5088 = vpack.c.b16 %v5052, %v5050
    %v5089 = vpack.c.b16 %v5055, %v5053
    %v5090 = vpack.c.b16 %v5056, %v5054
    %v5091 = vpack.c.b16 %v5059, %v5057
    %v5092 = vpack.c.b16 %v5060, %v5058
    %5125 = vmatpush.bf16.msra.mxu0 %v5075
    %5126 = vmatpush.bf16.msra.mxu0 %v5073
    %5127 = vmatpush.bf16.msra.mxu0 %v5071
    %5128 = vmatpush.bf16.msra.mxu0 %v5069
    %5129 = vmatpush.bf16.msra.mxu0 %v5067
    %5130 = vmatpush.bf16.msra.mxu0 %v5065
    %5131 = vmatpush.bf16.msra.mxu0 %v5063
    %5132 = vmatpush.bf16.msra.mxu0 %v5061
    %5133 = vmatmul.bf16.gmra.mxu0 %v4925
    %v5134 = vpop.f32.mrf.mxu0
    %v5135 = vadd.f32 %v4961, %v5134
    %v5136 = vpop.f32.mrf.mxu0
    %5137 = vdwg.mxu0
    %5138 = vmatpush.bf16.msra.mxu0 %v5091
    %5139 = vmatpush.bf16.msra.mxu0 %v5089
    %5140 = vmatpush.bf16.msra.mxu0 %v5087
    %5141 = vmatpush.bf16.msra.mxu0 %v5085
    %5142 = vmatpush.bf16.msra.mxu0 %v5083
    %5143 = vmatpush.bf16.msra.mxu0 %v5081
    %5144 = vmatpush.bf16.msra.mxu0 %v5079
    %5145 = vmatpush.bf16.msra.mxu0 %v5077
    %5146 = vmatmul.bf16.gmra.mxu0 %v4926
    %v5147 = vpop.f32.mrf.mxu0
    %v5148 = vadd.f32 %v5135, %v5147
    %v5149 = vpop.f32.mrf.mxu0
    %5150 = vdwg.mxu0
    %5151 = vmatpush.bf16.msra.mxu0 %v5076
    %5152 = vmatpush.bf16.msra.mxu0 %v5074
    %5153 = vmatpush.bf16.msra.mxu0 %v5072
    %5154 = vmatpush.bf16.msra.mxu0 %v5070
    %5155 = vmatpush.bf16.msra.mxu0 %v5068
    %5156 = vmatpush.bf16.msra.mxu0 %v5066
    %5157 = vmatpush.bf16.msra.mxu0 %v5064
    %5158 = vmatpush.bf16.msra.mxu0 %v5062
    %5159 = vmatmul.bf16.gmra.mxu0 %v4925
    %v5160 = vpop.f32.mrf.mxu0
    %v5161 = vadd.f32 %v4962, %v5160
    %v5162 = vpop.f32.mrf.mxu0
    %5163 = vdwg.mxu0
    %5164 = vmatpush.bf16.msra.mxu0 %v5092
    %5165 = vmatpush.bf16.msra.mxu0 %v5090
    %5166 = vmatpush.bf16.msra.mxu0 %v5088
    %5167 = vmatpush.bf16.msra.mxu0 %v5086
    %5168 = vmatpush.bf16.msra.mxu0 %v5084
    %5169 = vmatpush.bf16.msra.mxu0 %v5082
    %5170 = vmatpush.bf16.msra.mxu0 %v5080
    %5171 = vmatpush.bf16.msra.mxu0 %v5078
    %5172 = vmatmul.bf16.gmra.mxu0 %v4926
    %v5173 = vpop.f32.mrf.mxu0
    %v5174 = vadd.f32 %v5161, %v5173
    %v5175 = vpop.f32.mrf.mxu0
    %5176 = vdwg.mxu0
    %v5177 = vmul.f32 %v5148, 0.01
    %v5178 = vmul.f32 %v5174, 0.01
    %v5179 = vmax.f32 %v5148, %v5177
    %v5180 = vmax.f32 %v5174, %v5178
    %v5181 = vpack.c.bf16 %v5179, %v5179
    %v5182 = vpack.c.bf16 %v5180, %v5180
    %v5183 = vld [vmem:[#allocation11] sm:$0xff]
    %v5184 = vld [vmem:[#allocation11 + $0x8] sm:$0xff]
    %v5185 = vld [vmem:[#allocation11 + $0x10] sm:$0xff]
    %v5186 = vld [vmem:[#allocation11 + $0x18] sm:$0xff]
    %v5187 = vld [vmem:[#allocation11 + $0x20] sm:$0xff]
    %v5188 = vld [vmem:[#allocation11 + $0x28] sm:$0xff]
    %v5189 = vld [vmem:[#allocation11 + $0x30] sm:$0xff]
    %v5190 = vld [vmem:[#allocation11 + $0x38] sm:$0xff]
    %v5191 = vld [vmem:[#allocation11 + $0x40] sm:$0xff]
    %v5192 = vld [vmem:[#allocation11 + $0x48] sm:$0xff]
    %v5193 = vld [vmem:[#allocation11 + $0x50] sm:$0xff]
    %v5194 = vld [vmem:[#allocation11 + $0x58] sm:$0xff]
    %v5195 = vld [vmem:[#allocation11 + $0x60] sm:$0xff]
    %v5196 = vld [vmem:[#allocation11 + $0x68] sm:$0xff]
    %v5197 = vld [vmem:[#allocation11 + $0x70] sm:$0xff]
    %v5198 = vld [vmem:[#allocation11 + $0x78] sm:$0xff]
    %v5199 = vld [vmem:[#allocation11 + $0x80] sm:$0xff]
    %v5200 = vld [vmem:[#allocation11 + $0x88] sm:$0xff]
    %v5201 = vld [vmem:[#allocation11 + $0x90] sm:$0xff]
    %v5202 = vld [vmem:[#allocation11 + $0x98] sm:$0xff]
    %v5203 = vld [vmem:[#allocation11 + $0xa0] sm:$0xff]
    %v5204 = vld [vmem:[#allocation11 + $0xa8] sm:$0xff]
    %v5205 = vld [vmem:[#allocation11 + $0xb0] sm:$0xff]
    %v5206 = vld [vmem:[#allocation11 + $0xb8] sm:$0xff]
    %v5207 = vld [vmem:[#allocation11 + $0xc0] sm:$0xff]
    %v5208 = vld [vmem:[#allocation11 + $0xc8] sm:$0xff]
    %v5209 = vld [vmem:[#allocation11 + $0xd0] sm:$0xff]
    %v5210 = vld [vmem:[#allocation11 + $0xd8] sm:$0xff]
    %v5211 = vld [vmem:[#allocation11 + $0xe0] sm:$0xff]
    %v5212 = vld [vmem:[#allocation11 + $0xe8] sm:$0xff]
    %v5213 = vld [vmem:[#allocation11 + $0xf0] sm:$0xff]
    %v5214 = vld [vmem:[#allocation11 + $0xf8] sm:$0xff]
    %v5215 = vld [vmem:[#allocation11 + $0x100] sm:$0xff]
    %v5216 = vld [vmem:[#allocation11 + $0x108] sm:$0xff]
    %v5217 = vld [vmem:[#allocation11 + $0x110] sm:$0xff]
    %v5218 = vld [vmem:[#allocation11 + $0x118] sm:$0xff]
    %v5219 = vld [vmem:[#allocation11 + $0x120] sm:$0xff]
    %v5220 = vld [vmem:[#allocation11 + $0x128] sm:$0xff]
    %v5221 = vld [vmem:[#allocation11 + $0x130] sm:$0xff]
    %v5222 = vld [vmem:[#allocation11 + $0x138] sm:$0xff]
    %v5223 = vld [vmem:[#allocation11 + $0x140] sm:$0xff]
    %v5224 = vld [vmem:[#allocation11 + $0x148] sm:$0xff]
    %v5225 = vld [vmem:[#allocation11 + $0x150] sm:$0xff]
    %v5226 = vld [vmem:[#allocation11 + $0x158] sm:$0xff]
    %v5227 = vld [vmem:[#allocation11 + $0x160] sm:$0xff]
    %v5228 = vld [vmem:[#allocation11 + $0x168] sm:$0xff]
    %v5229 = vld [vmem:[#allocation11 + $0x170] sm:$0xff]
    %v5230 = vld [vmem:[#allocation11 + $0x178] sm:$0xff]
    %v5231 = vld [vmem:[#allocation11 + $0x180] sm:$0xff]
    %v5232 = vld [vmem:[#allocation11 + $0x188] sm:$0xff]
    %v5233 = vld [vmem:[#allocation11 + $0x190] sm:$0xff]
    %v5234 = vld [vmem:[#allocation11 + $0x198] sm:$0xff]
    %v5235 = vld [vmem:[#allocation11 + $0x1a0] sm:$0xff]
    %v5236 = vld [vmem:[#allocation11 + $0x1a8] sm:$0xff]
    %v5237 = vld [vmem:[#allocation11 + $0x1b0] sm:$0xff]
    %v5238 = vld [vmem:[#allocation11 + $0x1b8] sm:$0xff]
    %v5239 = vld [vmem:[#allocation11 + $0x1c0] sm:$0xff]
    %v5240 = vld [vmem:[#allocation11 + $0x1c8] sm:$0xff]
    %v5241 = vld [vmem:[#allocation11 + $0x1d0] sm:$0xff]
    %v5242 = vld [vmem:[#allocation11 + $0x1d8] sm:$0xff]
    %v5243 = vld [vmem:[#allocation11 + $0x1e0] sm:$0xff]
    %v5244 = vld [vmem:[#allocation11 + $0x1e8] sm:$0xff]
    %v5245 = vld [vmem:[#allocation11 + $0x1f0] sm:$0xff]
    %v5246 = vld [vmem:[#allocation11 + $0x1f8] sm:$0xff]
    %v5247 = vld [vmem:[%s12] sm:$0xf]
    %v5249 = vperm.slane %v5247, 0
    %v5250 = vperm.slane %v5247, 1
    %v5251 = vperm.slane %v5247, 2
    %v5252 = vperm.slane %v5247, 3
    %v5321 = vunpack.c.l.b16 %v5183
    %v5322 = vunpack.c.h.b16 %v5183
    %v5323 = vunpack.c.l.b16 %v5184
    %v5324 = vunpack.c.h.b16 %v5184
    %v5325 = vunpack.c.l.b16 %v5185
    %v5326 = vunpack.c.h.b16 %v5185
    %v5327 = vunpack.c.l.b16 %v5186
    %v5328 = vunpack.c.h.b16 %v5186
    %v5329 = vunpack.c.l.b16 %v5187
    %v5330 = vunpack.c.h.b16 %v5187
    %v5331 = vunpack.c.l.b16 %v5188
    %v5332 = vunpack.c.h.b16 %v5188
    %v5333 = vunpack.c.l.b16 %v5189
    %v5334 = vunpack.c.h.b16 %v5189
    %v5335 = vunpack.c.l.b16 %v5190
    %v5336 = vunpack.c.h.b16 %v5190
    %v5337 = vunpack.c.l.b16 %v5191
    %v5338 = vunpack.c.h.b16 %v5191
    %v5339 = vunpack.c.l.b16 %v5192
    %v5340 = vunpack.c.h.b16 %v5192
    %v5341 = vunpack.c.l.b16 %v5193
    %v5342 = vunpack.c.h.b16 %v5193
    %v5343 = vunpack.c.l.b16 %v5194
    %v5344 = vunpack.c.h.b16 %v5194
    %v5345 = vunpack.c.l.b16 %v5195
    %v5346 = vunpack.c.h.b16 %v5195
    %v5347 = vunpack.c.l.b16 %v5196
    %v5348 = vunpack.c.h.b16 %v5196
    %v5349 = vunpack.c.l.b16 %v5197
    %v5350 = vunpack.c.h.b16 %v5197
    %v5351 = vunpack.c.l.b16 %v5198
    %v5352 = vunpack.c.h.b16 %v5198
    %v5353 = vunpack.c.l.b16 %v5199
    %v5354 = vunpack.c.h.b16 %v5199
    %v5355 = vunpack.c.l.b16 %v5200
    %v5356 = vunpack.c.h.b16 %v5200
    %v5357 = vunpack.c.l.b16 %v5201
    %v5358 = vunpack.c.h.b16 %v5201
    %v5359 = vunpack.c.l.b16 %v5202
    %v5360 = vunpack.c.h.b16 %v5202
    %v5361 = vunpack.c.l.b16 %v5203
    %v5362 = vunpack.c.h.b16 %v5203
    %v5363 = vunpack.c.l.b16 %v5204
    %v5364 = vunpack.c.h.b16 %v5204
    %v5365 = vunpack.c.l.b16 %v5205
    %v5366 = vunpack.c.h.b16 %v5205
    %v5367 = vunpack.c.l.b16 %v5206
    %v5368 = vunpack.c.h.b16 %v5206
    %v5369 = vunpack.c.l.b16 %v5207
    %v5370 = vunpack.c.h.b16 %v5207
    %v5371 = vunpack.c.l.b16 %v5208
    %v5372 = vunpack.c.h.b16 %v5208
    %v5373 = vunpack.c.l.b16 %v5209
    %v5374 = vunpack.c.h.b16 %v5209
    %v5375 = vunpack.c.l.b16 %v5210
    %v5376 = vunpack.c.h.b16 %v5210
    %v5377 = vunpack.c.l.b16 %v5211
    %v5378 = vunpack.c.h.b16 %v5211
    %v5379 = vunpack.c.l.b16 %v5212
    %v5380 = vunpack.c.h.b16 %v5212
    %v5381 = vunpack.c.l.b16 %v5213
    %v5382 = vunpack.c.h.b16 %v5213
    %v5383 = vunpack.c.l.b16 %v5214
    %v5384 = vunpack.c.h.b16 %v5214
    %v5385 = vunpack.c.l.b16 %v5215
    %v5386 = vunpack.c.h.b16 %v5215
    %v5387 = vunpack.c.l.b16 %v5216
    %v5388 = vunpack.c.h.b16 %v5216
    %v5389 = vunpack.c.l.b16 %v5217
    %v5390 = vunpack.c.h.b16 %v5217
    %v5391 = vunpack.c.l.b16 %v5218
    %v5392 = vunpack.c.h.b16 %v5218
    %v5393 = vunpack.c.l.b16 %v5219
    %v5394 = vunpack.c.h.b16 %v5219
    %v5395 = vunpack.c.l.b16 %v5220
    %v5396 = vunpack.c.h.b16 %v5220
    %v5397 = vunpack.c.l.b16 %v5221
    %v5398 = vunpack.c.h.b16 %v5221
    %v5399 = vunpack.c.l.b16 %v5222
    %v5400 = vunpack.c.h.b16 %v5222
    %v5401 = vunpack.c.l.b16 %v5223
    %v5402 = vunpack.c.h.b16 %v5223
    %v5403 = vunpack.c.l.b16 %v5224
    %v5404 = vunpack.c.h.b16 %v5224
    %v5405 = vunpack.c.l.b16 %v5225
    %v5406 = vunpack.c.h.b16 %v5225
    %v5407 = vunpack.c.l.b16 %v5226
    %v5408 = vunpack.c.h.b16 %v5226
    %v5409 = vunpack.c.l.b16 %v5227
    %v5410 = vunpack.c.h.b16 %v5227
    %v5411 = vunpack.c.l.b16 %v5228
    %v5412 = vunpack.c.h.b16 %v5228
    %v5413 = vunpack.c.l.b16 %v5229
    %v5414 = vunpack.c.h.b16 %v5229
    %v5415 = vunpack.c.l.b16 %v5230
    %v5416 = vunpack.c.h.b16 %v5230
    %v5417 = vunpack.c.l.b16 %v5231
    %v5418 = vunpack.c.h.b16 %v5231
    %v5419 = vunpack.c.l.b16 %v5232
    %v5420 = vunpack.c.h.b16 %v5232
    %v5421 = vunpack.c.l.b16 %v5233
    %v5422 = vunpack.c.h.b16 %v5233
    %v5423 = vunpack.c.l.b16 %v5234
    %v5424 = vunpack.c.h.b16 %v5234
    %v5425 = vunpack.c.l.b16 %v5235
    %v5426 = vunpack.c.h.b16 %v5235
    %v5427 = vunpack.c.l.b16 %v5236
    %v5428 = vunpack.c.h.b16 %v5236
    %v5429 = vunpack.c.l.b16 %v5237
    %v5430 = vunpack.c.h.b16 %v5237
    %v5431 = vunpack.c.l.b16 %v5238
    %v5432 = vunpack.c.h.b16 %v5238
    %v5433 = vunpack.c.l.b16 %v5239
    %v5434 = vunpack.c.h.b16 %v5239
    %v5435 = vunpack.c.l.b16 %v5240
    %v5436 = vunpack.c.h.b16 %v5240
    %v5437 = vunpack.c.l.b16 %v5241
    %v5438 = vunpack.c.h.b16 %v5241
    %v5439 = vunpack.c.l.b16 %v5242
    %v5440 = vunpack.c.h.b16 %v5242
    %v5441 = vunpack.c.l.b16 %v5243
    %v5442 = vunpack.c.h.b16 %v5243
    %v5443 = vunpack.c.l.b16 %v5244
    %v5444 = vunpack.c.h.b16 %v5244
    %v5445 = vunpack.c.l.b16 %v5245
    %v5446 = vunpack.c.h.b16 %v5245
    %v5447 = vunpack.c.l.b16 %v5246
    %v5448 = vunpack.c.h.b16 %v5246
    %v5449 = vpack.c.b16 %v5325, %v5321
    %v5450 = vpack.c.b16 %v5326, %v5322
    %v5451 = vpack.c.b16 %v5327, %v5323
    %v5452 = vpack.c.b16 %v5328, %v5324
    %v5453 = vpack.c.b16 %v5333, %v5329
    %v5454 = vpack.c.b16 %v5334, %v5330
    %v5455 = vpack.c.b16 %v5335, %v5331
    %v5456 = vpack.c.b16 %v5336, %v5332
    %v5457 = vpack.c.b16 %v5341, %v5337
    %v5458 = vpack.c.b16 %v5342, %v5338
    %v5459 = vpack.c.b16 %v5343, %v5339
    %v5460 = vpack.c.b16 %v5344, %v5340
    %v5461 = vpack.c.b16 %v5349, %v5345
    %v5462 = vpack.c.b16 %v5350, %v5346
    %v5463 = vpack.c.b16 %v5351, %v5347
    %v5464 = vpack.c.b16 %v5352, %v5348
    %v5465 = vpack.c.b16 %v5357, %v5353
    %v5466 = vpack.c.b16 %v5358, %v5354
    %v5467 = vpack.c.b16 %v5359, %v5355
    %v5468 = vpack.c.b16 %v5360, %v5356
    %v5469 = vpack.c.b16 %v5365, %v5361
    %v5470 = vpack.c.b16 %v5366, %v5362
    %v5471 = vpack.c.b16 %v5367, %v5363
    %v5472 = vpack.c.b16 %v5368, %v5364
    %v5473 = vpack.c.b16 %v5373, %v5369
    %v5474 = vpack.c.b16 %v5374, %v5370
    %v5475 = vpack.c.b16 %v5375, %v5371
    %v5476 = vpack.c.b16 %v5376, %v5372
    %v5477 = vpack.c.b16 %v5381, %v5377
    %v5478 = vpack.c.b16 %v5382, %v5378
    %v5479 = vpack.c.b16 %v5383, %v5379
    %v5480 = vpack.c.b16 %v5384, %v5380
    %v5481 = vpack.c.b16 %v5389, %v5385
    %v5482 = vpack.c.b16 %v5390, %v5386
    %v5483 = vpack.c.b16 %v5391, %v5387
    %v5484 = vpack.c.b16 %v5392, %v5388
    %v5485 = vpack.c.b16 %v5397, %v5393
    %v5486 = vpack.c.b16 %v5398, %v5394
    %v5487 = vpack.c.b16 %v5399, %v5395
    %v5488 = vpack.c.b16 %v5400, %v5396
    %v5489 = vpack.c.b16 %v5405, %v5401
    %v5490 = vpack.c.b16 %v5406, %v5402
    %v5491 = vpack.c.b16 %v5407, %v5403
    %v5492 = vpack.c.b16 %v5408, %v5404
    %v5493 = vpack.c.b16 %v5413, %v5409
    %v5494 = vpack.c.b16 %v5414, %v5410
    %v5495 = vpack.c.b16 %v5415, %v5411
    %v5496 = vpack.c.b16 %v5416, %v5412
    %v5497 = vpack.c.b16 %v5421, %v5417
    %v5498 = vpack.c.b16 %v5422, %v5418
    %v5499 = vpack.c.b16 %v5423, %v5419
    %v5500 = vpack.c.b16 %v5424, %v5420
    %v5501 = vpack.c.b16 %v5429, %v5425
    %v5502 = vpack.c.b16 %v5430, %v5426
    %v5503 = vpack.c.b16 %v5431, %v5427
    %v5504 = vpack.c.b16 %v5432, %v5428
    %v5505 = vpack.c.b16 %v5437, %v5433
    %v5506 = vpack.c.b16 %v5438, %v5434
    %v5507 = vpack.c.b16 %v5439, %v5435
    %v5508 = vpack.c.b16 %v5440, %v5436
    %v5509 = vpack.c.b16 %v5445, %v5441
    %v5510 = vpack.c.b16 %v5446, %v5442
    %v5511 = vpack.c.b16 %v5447, %v5443
    %v5512 = vpack.c.b16 %v5448, %v5444
    %5577 = vmatpush.bf16.msra.mxu0 %v5477
    %5578 = vmatpush.bf16.msra.mxu0 %v5473
    %5579 = vmatpush.bf16.msra.mxu0 %v5469
    %5580 = vmatpush.bf16.msra.mxu0 %v5465
    %5581 = vmatpush.bf16.msra.mxu0 %v5461
    %5582 = vmatpush.bf16.msra.mxu0 %v5457
    %5583 = vmatpush.bf16.msra.mxu0 %v5453
    %5584 = vmatpush.bf16.msra.mxu0 %v5449
    %5585 = vmatmul.bf16.gmra.mxu0 %v5181
    %v5586 = vpop.f32.mrf.mxu0
    %v5587 = vadd.f32 %v5249, %v5586
    %v5588 = vpop.f32.mrf.mxu0
    %5589 = vdwg.mxu0
    %5590 = vmatpush.bf16.msra.mxu0 %v5509
    %5591 = vmatpush.bf16.msra.mxu0 %v5505
    %5592 = vmatpush.bf16.msra.mxu0 %v5501
    %5593 = vmatpush.bf16.msra.mxu0 %v5497
    %5594 = vmatpush.bf16.msra.mxu0 %v5493
    %5595 = vmatpush.bf16.msra.mxu0 %v5489
    %5596 = vmatpush.bf16.msra.mxu0 %v5485
    %5597 = vmatpush.bf16.msra.mxu0 %v5481
    %5598 = vmatmul.bf16.gmra.mxu0 %v5182
    %v5599 = vpop.f32.mrf.mxu0
    %v5600 = vadd.f32 %v5587, %v5599
    %v5601 = vpop.f32.mrf.mxu0
    %5602 = vdwg.mxu0
    %5603 = vmatpush.bf16.msra.mxu0 %v5478
    %5604 = vmatpush.bf16.msra.mxu0 %v5474
    %5605 = vmatpush.bf16.msra.mxu0 %v5470
    %5606 = vmatpush.bf16.msra.mxu0 %v5466
    %5607 = vmatpush.bf16.msra.mxu0 %v5462
    %5608 = vmatpush.bf16.msra.mxu0 %v5458
    %5609 = vmatpush.bf16.msra.mxu0 %v5454
    %5610 = vmatpush.bf16.msra.mxu0 %v5450
    %5611 = vmatmul.bf16.gmra.mxu0 %v5181
    %v5612 = vpop.f32.mrf.mxu0
    %v5613 = vadd.f32 %v5250, %v5612
    %v5614 = vpop.f32.mrf.mxu0
    %5615 = vdwg.mxu0
    %5616 = vmatpush.bf16.msra.mxu0 %v5510
    %5617 = vmatpush.bf16.msra.mxu0 %v5506
    %5618 = vmatpush.bf16.msra.mxu0 %v5502
    %5619 = vmatpush.bf16.msra.mxu0 %v5498
    %5620 = vmatpush.bf16.msra.mxu0 %v5494
    %5621 = vmatpush.bf16.msra.mxu0 %v5490
    %5622 = vmatpush.bf16.msra.mxu0 %v5486
    %5623 = vmatpush.bf16.msra.mxu0 %v5482
    %5624 = vmatmul.bf16.gmra.mxu0 %v5182
    %v5625 = vpop.f32.mrf.mxu0
    %v5626 = vadd.f32 %v5613, %v5625
    %v5627 = vpop.f32.mrf.mxu0
    %5628 = vdwg.mxu0
    %5629 = vmatpush.bf16.msra.mxu0 %v5479
    %5630 = vmatpush.bf16.msra.mxu0 %v5475
    %5631 = vmatpush.bf16.msra.mxu0 %v5471
    %5632 = vmatpush.bf16.msra.mxu0 %v5467
    %5633 = vmatpush.bf16.msra.mxu0 %v5463
    %5634 = vmatpush.bf16.msra.mxu0 %v5459
    %5635 = vmatpush.bf16.msra.mxu0 %v5455
    %5636 = vmatpush.bf16.msra.mxu0 %v5451
    %5637 = vmatmul.bf16.gmra.mxu0 %v5181
    %v5638 = vpop.f32.mrf.mxu0
    %v5639 = vadd.f32 %v5251, %v5638
    %v5640 = vpop.f32.mrf.mxu0
    %5641 = vdwg.mxu0
    %5642 = vmatpush.bf16.msra.mxu0 %v5511
    %5643 = vmatpush.bf16.msra.mxu0 %v5507
    %5644 = vmatpush.bf16.msra.mxu0 %v5503
    %5645 = vmatpush.bf16.msra.mxu0 %v5499
    %5646 = vmatpush.bf16.msra.mxu0 %v5495
    %5647 = vmatpush.bf16.msra.mxu0 %v5491
    %5648 = vmatpush.bf16.msra.mxu0 %v5487
    %5649 = vmatpush.bf16.msra.mxu0 %v5483
    %5650 = vmatmul.bf16.gmra.mxu0 %v5182
    %v5651 = vpop.f32.mrf.mxu0
    %v5652 = vadd.f32 %v5639, %v5651
    %v5653 = vpop.f32.mrf.mxu0
    %5654 = vdwg.mxu0
    %5655 = vmatpush.bf16.msra.mxu0 %v5480
    %5656 = vmatpush.bf16.msra.mxu0 %v5476
    %5657 = vmatpush.bf16.msra.mxu0 %v5472
    %5658 = vmatpush.bf16.msra.mxu0 %v5468
    %5659 = vmatpush.bf16.msra.mxu0 %v5464
    %5660 = vmatpush.bf16.msra.mxu0 %v5460
    %5661 = vmatpush.bf16.msra.mxu0 %v5456
    %5662 = vmatpush.bf16.msra.mxu0 %v5452
    %5663 = vmatmul.bf16.gmra.mxu0 %v5181
    %v5664 = vpop.f32.mrf.mxu0
    %v5665 = vadd.f32 %v5252, %v5664
    %v5666 = vpop.f32.mrf.mxu0
    %5667 = vdwg.mxu0
    %5668 = vmatpush.bf16.msra.mxu0 %v5512
    %5669 = vmatpush.bf16.msra.mxu0 %v5508
    %5670 = vmatpush.bf16.msra.mxu0 %v5504
    %5671 = vmatpush.bf16.msra.mxu0 %v5500
    %5672 = vmatpush.bf16.msra.mxu0 %v5496
    %5673 = vmatpush.bf16.msra.mxu0 %v5492
    %5674 = vmatpush.bf16.msra.mxu0 %v5488
    %5675 = vmatpush.bf16.msra.mxu0 %v5484
    %5676 = vmatmul.bf16.gmra.mxu0 %v5182
    %v5677 = vpop.f32.mrf.mxu0
    %v5678 = vadd.f32 %v5665, %v5677
    %v5679 = vpop.f32.mrf.mxu0
    %5680 = vdwg.mxu0
    %v5681 = vmul.f32 %v5600, 0.01
    %v5682 = vmul.f32 %v5626, 0.01
    %v5683 = vmul.f32 %v5652, 0.01
    %v5684 = vmul.f32 %v5678, 0.01
    %v5685 = vmax.f32 %v5600, %v5681
    %v5686 = vmax.f32 %v5626, %v5682
    %v5687 = vmax.f32 %v5652, %v5683
    %v5688 = vmax.f32 %v5678, %v5684
    %v5689 = vpack.c.bf16 %v5685, %v5685
    %v5690 = vpack.c.bf16 %v5686, %v5686
    %v5691 = vpack.c.bf16 %v5687, %v5687
    %v5692 = vpack.c.bf16 %v5688, %v5688
    %v5693 = vld [vmem:[#allocation13] sm:$0xff]
    %v5694 = vld [vmem:[#allocation13 + $0x8] sm:$0xff]
    %v5695 = vld [vmem:[#allocation13 + $0x10] sm:$0xff]
    %v5696 = vld [vmem:[#allocation13 + $0x18] sm:$0xff]
    %v5697 = vld [vmem:[#allocation13 + $0x20] sm:$0xff]
    %v5698 = vld [vmem:[#allocation13 + $0x28] sm:$0xff]
    %v5699 = vld [vmem:[#allocation13 + $0x30] sm:$0xff]
    %v5700 = vld [vmem:[#allocation13 + $0x38] sm:$0xff]
    %v5701 = vld [vmem:[#allocation13 + $0x40] sm:$0xff]
    %v5702 = vld [vmem:[#allocation13 + $0x48] sm:$0xff]
    %v5703 = vld [vmem:[#allocation13 + $0x50] sm:$0xff]
    %v5704 = vld [vmem:[#allocation13 + $0x58] sm:$0xff]
    %v5705 = vld [vmem:[#allocation13 + $0x60] sm:$0xff]
    %v5706 = vld [vmem:[#allocation13 + $0x68] sm:$0xff]
    %v5707 = vld [vmem:[#allocation13 + $0x70] sm:$0xff]
    %v5708 = vld [vmem:[#allocation13 + $0x78] sm:$0xff]
    %v5709 = vld [vmem:[#allocation13 + $0x80] sm:$0xff]
    %v5710 = vld [vmem:[#allocation13 + $0x88] sm:$0xff]
    %v5711 = vld [vmem:[#allocation13 + $0x90] sm:$0xff]
    %v5712 = vld [vmem:[#allocation13 + $0x98] sm:$0xff]
    %v5713 = vld [vmem:[#allocation13 + $0xa0] sm:$0xff]
    %v5714 = vld [vmem:[#allocation13 + $0xa8] sm:$0xff]
    %v5715 = vld [vmem:[#allocation13 + $0xb0] sm:$0xff]
    %v5716 = vld [vmem:[#allocation13 + $0xb8] sm:$0xff]
    %v5717 = vld [vmem:[#allocation13 + $0xc0] sm:$0xff]
    %v5718 = vld [vmem:[#allocation13 + $0xc8] sm:$0xff]
    %v5719 = vld [vmem:[#allocation13 + $0xd0] sm:$0xff]
    %v5720 = vld [vmem:[#allocation13 + $0xd8] sm:$0xff]
    %v5721 = vld [vmem:[#allocation13 + $0xe0] sm:$0xff]
    %v5722 = vld [vmem:[#allocation13 + $0xe8] sm:$0xff]
    %v5723 = vld [vmem:[#allocation13 + $0xf0] sm:$0xff]
    %v5724 = vld [vmem:[#allocation13 + $0xf8] sm:$0xff]
    %v5725 = vld [vmem:[#allocation13 + $0x100] sm:$0xff]
    %v5726 = vld [vmem:[#allocation13 + $0x108] sm:$0xff]
    %v5727 = vld [vmem:[#allocation13 + $0x110] sm:$0xff]
    %v5728 = vld [vmem:[#allocation13 + $0x118] sm:$0xff]
    %v5729 = vld [vmem:[#allocation13 + $0x120] sm:$0xff]
    %v5730 = vld [vmem:[#allocation13 + $0x128] sm:$0xff]
    %v5731 = vld [vmem:[#allocation13 + $0x130] sm:$0xff]
    %v5732 = vld [vmem:[#allocation13 + $0x138] sm:$0xff]
    %v5733 = vld [vmem:[#allocation13 + $0x140] sm:$0xff]
    %v5734 = vld [vmem:[#allocation13 + $0x148] sm:$0xff]
    %v5735 = vld [vmem:[#allocation13 + $0x150] sm:$0xff]
    %v5736 = vld [vmem:[#allocation13 + $0x158] sm:$0xff]
    %v5737 = vld [vmem:[#allocation13 + $0x160] sm:$0xff]
    %v5738 = vld [vmem:[#allocation13 + $0x168] sm:$0xff]
    %v5739 = vld [vmem:[#allocation13 + $0x170] sm:$0xff]
    %v5740 = vld [vmem:[#allocation13 + $0x178] sm:$0xff]
    %v5741 = vld [vmem:[#allocation13 + $0x180] sm:$0xff]
    %v5742 = vld [vmem:[#allocation13 + $0x188] sm:$0xff]
    %v5743 = vld [vmem:[#allocation13 + $0x190] sm:$0xff]
    %v5744 = vld [vmem:[#allocation13 + $0x198] sm:$0xff]
    %v5745 = vld [vmem:[#allocation13 + $0x1a0] sm:$0xff]
    %v5746 = vld [vmem:[#allocation13 + $0x1a8] sm:$0xff]
    %v5747 = vld [vmem:[#allocation13 + $0x1b0] sm:$0xff]
    %v5748 = vld [vmem:[#allocation13 + $0x1b8] sm:$0xff]
    %v5749 = vld [vmem:[#allocation13 + $0x1c0] sm:$0xff]
    %v5750 = vld [vmem:[#allocation13 + $0x1c8] sm:$0xff]
    %v5751 = vld [vmem:[#allocation13 + $0x1d0] sm:$0xff]
    %v5752 = vld [vmem:[#allocation13 + $0x1d8] sm:$0xff]
    %v5753 = vld [vmem:[#allocation13 + $0x1e0] sm:$0xff]
    %v5754 = vld [vmem:[#allocation13 + $0x1e8] sm:$0xff]
    %v5755 = vld [vmem:[#allocation13 + $0x1f0] sm:$0xff]
    %v5756 = vld [vmem:[#allocation13 + $0x1f8] sm:$0xff]
    %v5757 = vld [vmem:[#allocation13 + $0x200] sm:$0xff]
    %v5758 = vld [vmem:[#allocation13 + $0x208] sm:$0xff]
    %v5759 = vld [vmem:[#allocation13 + $0x210] sm:$0xff]
    %v5760 = vld [vmem:[#allocation13 + $0x218] sm:$0xff]
    %v5761 = vld [vmem:[#allocation13 + $0x220] sm:$0xff]
    %v5762 = vld [vmem:[#allocation13 + $0x228] sm:$0xff]
    %v5763 = vld [vmem:[#allocation13 + $0x230] sm:$0xff]
    %v5764 = vld [vmem:[#allocation13 + $0x238] sm:$0xff]
    %v5765 = vld [vmem:[#allocation13 + $0x240] sm:$0xff]
    %v5766 = vld [vmem:[#allocation13 + $0x248] sm:$0xff]
    %v5767 = vld [vmem:[#allocation13 + $0x250] sm:$0xff]
    %v5768 = vld [vmem:[#allocation13 + $0x258] sm:$0xff]
    %v5769 = vld [vmem:[#allocation13 + $0x260] sm:$0xff]
    %v5770 = vld [vmem:[#allocation13 + $0x268] sm:$0xff]
    %v5771 = vld [vmem:[#allocation13 + $0x270] sm:$0xff]
    %v5772 = vld [vmem:[#allocation13 + $0x278] sm:$0xff]
    %v5773 = vld [vmem:[#allocation13 + $0x280] sm:$0xff]
    %v5774 = vld [vmem:[#allocation13 + $0x288] sm:$0xff]
    %v5775 = vld [vmem:[#allocation13 + $0x290] sm:$0xff]
    %v5776 = vld [vmem:[#allocation13 + $0x298] sm:$0xff]
    %v5777 = vld [vmem:[#allocation13 + $0x2a0] sm:$0xff]
    %v5778 = vld [vmem:[#allocation13 + $0x2a8] sm:$0xff]
    %v5779 = vld [vmem:[#allocation13 + $0x2b0] sm:$0xff]
    %v5780 = vld [vmem:[#allocation13 + $0x2b8] sm:$0xff]
    %v5781 = vld [vmem:[#allocation13 + $0x2c0] sm:$0xff]
    %v5782 = vld [vmem:[#allocation13 + $0x2c8] sm:$0xff]
    %v5783 = vld [vmem:[#allocation13 + $0x2d0] sm:$0xff]
    %v5784 = vld [vmem:[#allocation13 + $0x2d8] sm:$0xff]
    %v5785 = vld [vmem:[#allocation13 + $0x2e0] sm:$0xff]
    %v5786 = vld [vmem:[#allocation13 + $0x2e8] sm:$0xff]
    %v5787 = vld [vmem:[#allocation13 + $0x2f0] sm:$0xff]
    %v5788 = vld [vmem:[#allocation13 + $0x2f8] sm:$0xff]
    %v5789 = vld [vmem:[#allocation13 + $0x300] sm:$0xff]
    %v5790 = vld [vmem:[#allocation13 + $0x308] sm:$0xff]
    %v5791 = vld [vmem:[#allocation13 + $0x310] sm:$0xff]
    %v5792 = vld [vmem:[#allocation13 + $0x318] sm:$0xff]
    %v5793 = vld [vmem:[#allocation13 + $0x320] sm:$0xff]
    %v5794 = vld [vmem:[#allocation13 + $0x328] sm:$0xff]
    %v5795 = vld [vmem:[#allocation13 + $0x330] sm:$0xff]
    %v5796 = vld [vmem:[#allocation13 + $0x338] sm:$0xff]
    %v5797 = vld [vmem:[#allocation13 + $0x340] sm:$0xff]
    %v5798 = vld [vmem:[#allocation13 + $0x348] sm:$0xff]
    %v5799 = vld [vmem:[#allocation13 + $0x350] sm:$0xff]
    %v5800 = vld [vmem:[#allocation13 + $0x358] sm:$0xff]
    %v5801 = vld [vmem:[#allocation13 + $0x360] sm:$0xff]
    %v5802 = vld [vmem:[#allocation13 + $0x368] sm:$0xff]
    %v5803 = vld [vmem:[#allocation13 + $0x370] sm:$0xff]
    %v5804 = vld [vmem:[#allocation13 + $0x378] sm:$0xff]
    %v5805 = vld [vmem:[#allocation13 + $0x380] sm:$0xff]
    %v5806 = vld [vmem:[#allocation13 + $0x388] sm:$0xff]
    %v5807 = vld [vmem:[#allocation13 + $0x390] sm:$0xff]
    %v5808 = vld [vmem:[#allocation13 + $0x398] sm:$0xff]
    %v5809 = vld [vmem:[#allocation13 + $0x3a0] sm:$0xff]
    %v5810 = vld [vmem:[#allocation13 + $0x3a8] sm:$0xff]
    %v5811 = vld [vmem:[#allocation13 + $0x3b0] sm:$0xff]
    %v5812 = vld [vmem:[#allocation13 + $0x3b8] sm:$0xff]
    %v5813 = vld [vmem:[#allocation13 + $0x3c0] sm:$0xff]
    %v5814 = vld [vmem:[#allocation13 + $0x3c8] sm:$0xff]
    %v5815 = vld [vmem:[#allocation13 + $0x3d0] sm:$0xff]
    %v5816 = vld [vmem:[#allocation13 + $0x3d8] sm:$0xff]
    %v5817 = vld [vmem:[#allocation13 + $0x3e0] sm:$0xff]
    %v5818 = vld [vmem:[#allocation13 + $0x3e8] sm:$0xff]
    %v5819 = vld [vmem:[#allocation13 + $0x3f0] sm:$0xff]
    %v5820 = vld [vmem:[#allocation13 + $0x3f8] sm:$0xff]
    %v5821 = vld [vmem:[#allocation13 + $0x400] sm:$0xff]
    %v5822 = vld [vmem:[#allocation13 + $0x408] sm:$0xff]
    %v5823 = vld [vmem:[#allocation13 + $0x410] sm:$0xff]
    %v5824 = vld [vmem:[#allocation13 + $0x418] sm:$0xff]
    %v5825 = vld [vmem:[#allocation13 + $0x420] sm:$0xff]
    %v5826 = vld [vmem:[#allocation13 + $0x428] sm:$0xff]
    %v5827 = vld [vmem:[#allocation13 + $0x430] sm:$0xff]
    %v5828 = vld [vmem:[#allocation13 + $0x438] sm:$0xff]
    %v5829 = vld [vmem:[#allocation13 + $0x440] sm:$0xff]
    %v5830 = vld [vmem:[#allocation13 + $0x448] sm:$0xff]
    %v5831 = vld [vmem:[#allocation13 + $0x450] sm:$0xff]
    %v5832 = vld [vmem:[#allocation13 + $0x458] sm:$0xff]
    %v5833 = vld [vmem:[#allocation13 + $0x460] sm:$0xff]
    %v5834 = vld [vmem:[#allocation13 + $0x468] sm:$0xff]
    %v5835 = vld [vmem:[#allocation13 + $0x470] sm:$0xff]
    %v5836 = vld [vmem:[#allocation13 + $0x478] sm:$0xff]
    %v5837 = vld [vmem:[#allocation13 + $0x480] sm:$0xff]
    %v5838 = vld [vmem:[#allocation13 + $0x488] sm:$0xff]
    %v5839 = vld [vmem:[#allocation13 + $0x490] sm:$0xff]
    %v5840 = vld [vmem:[#allocation13 + $0x498] sm:$0xff]
    %v5841 = vld [vmem:[#allocation13 + $0x4a0] sm:$0xff]
    %v5842 = vld [vmem:[#allocation13 + $0x4a8] sm:$0xff]
    %v5843 = vld [vmem:[#allocation13 + $0x4b0] sm:$0xff]
    %v5844 = vld [vmem:[#allocation13 + $0x4b8] sm:$0xff]
    %v5845 = vld [vmem:[#allocation13 + $0x4c0] sm:$0xff]
    %v5846 = vld [vmem:[#allocation13 + $0x4c8] sm:$0xff]
    %v5847 = vld [vmem:[#allocation13 + $0x4d0] sm:$0xff]
    %v5848 = vld [vmem:[#allocation13 + $0x4d8] sm:$0xff]
    %v5849 = vld [vmem:[#allocation13 + $0x4e0] sm:$0xff]
    %v5850 = vld [vmem:[#allocation13 + $0x4e8] sm:$0xff]
    %v5851 = vld [vmem:[#allocation13 + $0x4f0] sm:$0xff]
    %v5852 = vld [vmem:[#allocation13 + $0x4f8] sm:$0xff]
    %v5853 = vld [vmem:[#allocation13 + $0x500] sm:$0xff]
    %v5854 = vld [vmem:[#allocation13 + $0x508] sm:$0xff]
    %v5855 = vld [vmem:[#allocation13 + $0x510] sm:$0xff]
    %v5856 = vld [vmem:[#allocation13 + $0x518] sm:$0xff]
    %v5857 = vld [vmem:[#allocation13 + $0x520] sm:$0xff]
    %v5858 = vld [vmem:[#allocation13 + $0x528] sm:$0xff]
    %v5859 = vld [vmem:[#allocation13 + $0x530] sm:$0xff]
    %v5860 = vld [vmem:[#allocation13 + $0x538] sm:$0xff]
    %v5861 = vld [vmem:[#allocation13 + $0x540] sm:$0xff]
    %v5862 = vld [vmem:[#allocation13 + $0x548] sm:$0xff]
    %v5863 = vld [vmem:[#allocation13 + $0x550] sm:$0xff]
    %v5864 = vld [vmem:[#allocation13 + $0x558] sm:$0xff]
    %v5865 = vld [vmem:[#allocation13 + $0x560] sm:$0xff]
    %v5866 = vld [vmem:[#allocation13 + $0x568] sm:$0xff]
    %v5867 = vld [vmem:[#allocation13 + $0x570] sm:$0xff]
    %v5868 = vld [vmem:[#allocation13 + $0x578] sm:$0xff]
    %v5869 = vld [vmem:[#allocation13 + $0x580] sm:$0xff]
    %v5870 = vld [vmem:[#allocation13 + $0x588] sm:$0xff]
    %v5871 = vld [vmem:[#allocation13 + $0x590] sm:$0xff]
    %v5872 = vld [vmem:[#allocation13 + $0x598] sm:$0xff]
    %v5873 = vld [vmem:[#allocation13 + $0x5a0] sm:$0xff]
    %v5874 = vld [vmem:[#allocation13 + $0x5a8] sm:$0xff]
    %v5875 = vld [vmem:[#allocation13 + $0x5b0] sm:$0xff]
    %v5876 = vld [vmem:[#allocation13 + $0x5b8] sm:$0xff]
    %v5877 = vld [vmem:[#allocation13 + $0x5c0] sm:$0xff]
    %v5878 = vld [vmem:[#allocation13 + $0x5c8] sm:$0xff]
    %v5879 = vld [vmem:[#allocation13 + $0x5d0] sm:$0xff]
    %v5880 = vld [vmem:[#allocation13 + $0x5d8] sm:$0xff]
    %v5881 = vld [vmem:[#allocation13 + $0x5e0] sm:$0xff]
    %v5882 = vld [vmem:[#allocation13 + $0x5e8] sm:$0xff]
    %v5883 = vld [vmem:[#allocation13 + $0x5f0] sm:$0xff]
    %v5884 = vld [vmem:[#allocation13 + $0x5f8] sm:$0xff]
    %v5885 = vld [vmem:[#allocation13 + $0x600] sm:$0xff]
    %v5886 = vld [vmem:[#allocation13 + $0x608] sm:$0xff]
    %v5887 = vld [vmem:[#allocation13 + $0x610] sm:$0xff]
    %v5888 = vld [vmem:[#allocation13 + $0x618] sm:$0xff]
    %v5889 = vld [vmem:[#allocation13 + $0x620] sm:$0xff]
    %v5890 = vld [vmem:[#allocation13 + $0x628] sm:$0xff]
    %v5891 = vld [vmem:[#allocation13 + $0x630] sm:$0xff]
    %v5892 = vld [vmem:[#allocation13 + $0x638] sm:$0xff]
    %v5893 = vld [vmem:[#allocation13 + $0x640] sm:$0xff]
    %v5894 = vld [vmem:[#allocation13 + $0x648] sm:$0xff]
    %v5895 = vld [vmem:[#allocation13 + $0x650] sm:$0xff]
    %v5896 = vld [vmem:[#allocation13 + $0x658] sm:$0xff]
    %v5897 = vld [vmem:[#allocation13 + $0x660] sm:$0xff]
    %v5898 = vld [vmem:[#allocation13 + $0x668] sm:$0xff]
    %v5899 = vld [vmem:[#allocation13 + $0x670] sm:$0xff]
    %v5900 = vld [vmem:[#allocation13 + $0x678] sm:$0xff]
    %v5901 = vld [vmem:[#allocation13 + $0x680] sm:$0xff]
    %v5902 = vld [vmem:[#allocation13 + $0x688] sm:$0xff]
    %v5903 = vld [vmem:[#allocation13 + $0x690] sm:$0xff]
    %v5904 = vld [vmem:[#allocation13 + $0x698] sm:$0xff]
    %v5905 = vld [vmem:[#allocation13 + $0x6a0] sm:$0xff]
    %v5906 = vld [vmem:[#allocation13 + $0x6a8] sm:$0xff]
    %v5907 = vld [vmem:[#allocation13 + $0x6b0] sm:$0xff]
    %v5908 = vld [vmem:[#allocation13 + $0x6b8] sm:$0xff]
    %v5909 = vld [vmem:[#allocation13 + $0x6c0] sm:$0xff]
    %v5910 = vld [vmem:[#allocation13 + $0x6c8] sm:$0xff]
    %v5911 = vld [vmem:[#allocation13 + $0x6d0] sm:$0xff]
    %v5912 = vld [vmem:[#allocation13 + $0x6d8] sm:$0xff]
    %v5913 = vld [vmem:[#allocation13 + $0x6e0] sm:$0xff]
    %v5914 = vld [vmem:[#allocation13 + $0x6e8] sm:$0xff]
    %v5915 = vld [vmem:[#allocation13 + $0x6f0] sm:$0xff]
    %v5916 = vld [vmem:[#allocation13 + $0x6f8] sm:$0xff]
    %v5917 = vld [vmem:[#allocation13 + $0x700] sm:$0xff]
    %v5918 = vld [vmem:[#allocation13 + $0x708] sm:$0xff]
    %v5919 = vld [vmem:[#allocation13 + $0x710] sm:$0xff]
    %v5920 = vld [vmem:[#allocation13 + $0x718] sm:$0xff]
    %v5921 = vld [vmem:[#allocation13 + $0x720] sm:$0xff]
    %v5922 = vld [vmem:[#allocation13 + $0x728] sm:$0xff]
    %v5923 = vld [vmem:[#allocation13 + $0x730] sm:$0xff]
    %v5924 = vld [vmem:[#allocation13 + $0x738] sm:$0xff]
    %v5925 = vld [vmem:[#allocation13 + $0x740] sm:$0xff]
    %v5926 = vld [vmem:[#allocation13 + $0x748] sm:$0xff]
    %v5927 = vld [vmem:[#allocation13 + $0x750] sm:$0xff]
    %v5928 = vld [vmem:[#allocation13 + $0x758] sm:$0xff]
    %v5929 = vld [vmem:[#allocation13 + $0x760] sm:$0xff]
    %v5930 = vld [vmem:[#allocation13 + $0x768] sm:$0xff]
    %v5931 = vld [vmem:[#allocation13 + $0x770] sm:$0xff]
    %v5932 = vld [vmem:[#allocation13 + $0x778] sm:$0xff]
    %v5933 = vld [vmem:[#allocation13 + $0x780] sm:$0xff]
    %v5934 = vld [vmem:[#allocation13 + $0x788] sm:$0xff]
    %v5935 = vld [vmem:[#allocation13 + $0x790] sm:$0xff]
    %v5936 = vld [vmem:[#allocation13 + $0x798] sm:$0xff]
    %v5937 = vld [vmem:[#allocation13 + $0x7a0] sm:$0xff]
    %v5938 = vld [vmem:[#allocation13 + $0x7a8] sm:$0xff]
    %v5939 = vld [vmem:[#allocation13 + $0x7b0] sm:$0xff]
    %v5940 = vld [vmem:[#allocation13 + $0x7b8] sm:$0xff]
    %v5941 = vld [vmem:[#allocation13 + $0x7c0] sm:$0xff]
    %v5942 = vld [vmem:[#allocation13 + $0x7c8] sm:$0xff]
    %v5943 = vld [vmem:[#allocation13 + $0x7d0] sm:$0xff]
    %v5944 = vld [vmem:[#allocation13 + $0x7d8] sm:$0xff]
    %v5945 = vld [vmem:[#allocation13 + $0x7e0] sm:$0xff]
    %v5946 = vld [vmem:[#allocation13 + $0x7e8] sm:$0xff]
    %v5947 = vld [vmem:[#allocation13 + $0x7f0] sm:$0xff]
    %v5948 = vld [vmem:[#allocation13 + $0x7f8] sm:$0xff]
    %v5949 = vld [vmem:[%s14] sm:$0xff]
    %v5951 = vperm.slane %v5949, 0
    %v5952 = vperm.slane %v5949, 1
    %v5953 = vperm.slane %v5949, 2
    %v5954 = vperm.slane %v5949, 3
    %v5955 = vperm.slane %v5949, 4
    %v5956 = vperm.slane %v5949, 5
    %v5957 = vperm.slane %v5949, 6
    %v5958 = vperm.slane %v5949, 7
    %v6223 = vunpack.c.l.b16 %v5693
    %v6224 = vunpack.c.h.b16 %v5693
    %v6225 = vunpack.c.l.b16 %v5694
    %v6226 = vunpack.c.h.b16 %v5694
    %v6227 = vunpack.c.l.b16 %v5695
    %v6228 = vunpack.c.h.b16 %v5695
    %v6229 = vunpack.c.l.b16 %v5696
    %v6230 = vunpack.c.h.b16 %v5696
    %v6231 = vunpack.c.l.b16 %v5697
    %v6232 = vunpack.c.h.b16 %v5697
    %v6233 = vunpack.c.l.b16 %v5698
    %v6234 = vunpack.c.h.b16 %v5698
    %v6235 = vunpack.c.l.b16 %v5699
    %v6236 = vunpack.c.h.b16 %v5699
    %v6237 = vunpack.c.l.b16 %v5700
    %v6238 = vunpack.c.h.b16 %v5700
    %v6239 = vunpack.c.l.b16 %v5701
    %v6240 = vunpack.c.h.b16 %v5701
    %v6241 = vunpack.c.l.b16 %v5702
    %v6242 = vunpack.c.h.b16 %v5702
    %v6243 = vunpack.c.l.b16 %v5703
    %v6244 = vunpack.c.h.b16 %v5703
    %v6245 = vunpack.c.l.b16 %v5704
    %v6246 = vunpack.c.h.b16 %v5704
    %v6247 = vunpack.c.l.b16 %v5705
    %v6248 = vunpack.c.h.b16 %v5705
    %v6249 = vunpack.c.l.b16 %v5706
    %v6250 = vunpack.c.h.b16 %v5706
    %v6251 = vunpack.c.l.b16 %v5707
    %v6252 = vunpack.c.h.b16 %v5707
    %v6253 = vunpack.c.l.b16 %v5708
    %v6254 = vunpack.c.h.b16 %v5708
    %v6255 = vunpack.c.l.b16 %v5709
    %v6256 = vunpack.c.h.b16 %v5709
    %v6257 = vunpack.c.l.b16 %v5710
    %v6258 = vunpack.c.h.b16 %v5710
    %v6259 = vunpack.c.l.b16 %v5711
    %v6260 = vunpack.c.h.b16 %v5711
    %v6261 = vunpack.c.l.b16 %v5712
    %v6262 = vunpack.c.h.b16 %v5712
    %v6263 = vunpack.c.l.b16 %v5713
    %v6264 = vunpack.c.h.b16 %v5713
    %v6265 = vunpack.c.l.b16 %v5714
    %v6266 = vunpack.c.h.b16 %v5714
    %v6267 = vunpack.c.l.b16 %v5715
    %v6268 = vunpack.c.h.b16 %v5715
    %v6269 = vunpack.c.l.b16 %v5716
    %v6270 = vunpack.c.h.b16 %v5716
    %v6271 = vunpack.c.l.b16 %v5717
    %v6272 = vunpack.c.h.b16 %v5717
    %v6273 = vunpack.c.l.b16 %v5718
    %v6274 = vunpack.c.h.b16 %v5718
    %v6275 = vunpack.c.l.b16 %v5719
    %v6276 = vunpack.c.h.b16 %v5719
    %v6277 = vunpack.c.l.b16 %v5720
    %v6278 = vunpack.c.h.b16 %v5720
    %v6279 = vunpack.c.l.b16 %v5721
    %v6280 = vunpack.c.h.b16 %v5721
    %v6281 = vunpack.c.l.b16 %v5722
    %v6282 = vunpack.c.h.b16 %v5722
    %v6283 = vunpack.c.l.b16 %v5723
    %v6284 = vunpack.c.h.b16 %v5723
    %v6285 = vunpack.c.l.b16 %v5724
    %v6286 = vunpack.c.h.b16 %v5724
    %v6287 = vunpack.c.l.b16 %v5725
    %v6288 = vunpack.c.h.b16 %v5725
    %v6289 = vunpack.c.l.b16 %v5726
    %v6290 = vunpack.c.h.b16 %v5726
    %v6291 = vunpack.c.l.b16 %v5727
    %v6292 = vunpack.c.h.b16 %v5727
    %v6293 = vunpack.c.l.b16 %v5728
    %v6294 = vunpack.c.h.b16 %v5728
    %v6295 = vunpack.c.l.b16 %v5729
    %v6296 = vunpack.c.h.b16 %v5729
    %v6297 = vunpack.c.l.b16 %v5730
    %v6298 = vunpack.c.h.b16 %v5730
    %v6299 = vunpack.c.l.b16 %v5731
    %v6300 = vunpack.c.h.b16 %v5731
    %v6301 = vunpack.c.l.b16 %v5732
    %v6302 = vunpack.c.h.b16 %v5732
    %v6303 = vunpack.c.l.b16 %v5733
    %v6304 = vunpack.c.h.b16 %v5733
    %v6305 = vunpack.c.l.b16 %v5734
    %v6306 = vunpack.c.h.b16 %v5734
    %v6307 = vunpack.c.l.b16 %v5735
    %v6308 = vunpack.c.h.b16 %v5735
    %v6309 = vunpack.c.l.b16 %v5736
    %v6310 = vunpack.c.h.b16 %v5736
    %v6311 = vunpack.c.l.b16 %v5737
    %v6312 = vunpack.c.h.b16 %v5737
    %v6313 = vunpack.c.l.b16 %v5738
    %v6314 = vunpack.c.h.b16 %v5738
    %v6315 = vunpack.c.l.b16 %v5739
    %v6316 = vunpack.c.h.b16 %v5739
    %v6317 = vunpack.c.l.b16 %v5740
    %v6318 = vunpack.c.h.b16 %v5740
    %v6319 = vunpack.c.l.b16 %v5741
    %v6320 = vunpack.c.h.b16 %v5741
    %v6321 = vunpack.c.l.b16 %v5742
    %v6322 = vunpack.c.h.b16 %v5742
    %v6323 = vunpack.c.l.b16 %v5743
    %v6324 = vunpack.c.h.b16 %v5743
    %v6325 = vunpack.c.l.b16 %v5744
    %v6326 = vunpack.c.h.b16 %v5744
    %v6327 = vunpack.c.l.b16 %v5745
    %v6328 = vunpack.c.h.b16 %v5745
    %v6329 = vunpack.c.l.b16 %v5746
    %v6330 = vunpack.c.h.b16 %v5746
    %v6331 = vunpack.c.l.b16 %v5747
    %v6332 = vunpack.c.h.b16 %v5747
    %v6333 = vunpack.c.l.b16 %v5748
    %v6334 = vunpack.c.h.b16 %v5748
    %v6335 = vunpack.c.l.b16 %v5749
    %v6336 = vunpack.c.h.b16 %v5749
    %v6337 = vunpack.c.l.b16 %v5750
    %v6338 = vunpack.c.h.b16 %v5750
    %v6339 = vunpack.c.l.b16 %v5751
    %v6340 = vunpack.c.h.b16 %v5751
    %v6341 = vunpack.c.l.b16 %v5752
    %v6342 = vunpack.c.h.b16 %v5752
    %v6343 = vunpack.c.l.b16 %v5753
    %v6344 = vunpack.c.h.b16 %v5753
    %v6345 = vunpack.c.l.b16 %v5754
    %v6346 = vunpack.c.h.b16 %v5754
    %v6347 = vunpack.c.l.b16 %v5755
    %v6348 = vunpack.c.h.b16 %v5755
    %v6349 = vunpack.c.l.b16 %v5756
    %v6350 = vunpack.c.h.b16 %v5756
    %v6351 = vunpack.c.l.b16 %v5757
    %v6352 = vunpack.c.h.b16 %v5757
    %v6353 = vunpack.c.l.b16 %v5758
    %v6354 = vunpack.c.h.b16 %v5758
    %v6355 = vunpack.c.l.b16 %v5759
    %v6356 = vunpack.c.h.b16 %v5759
    %v6357 = vunpack.c.l.b16 %v5760
    %v6358 = vunpack.c.h.b16 %v5760
    %v6359 = vunpack.c.l.b16 %v5761
    %v6360 = vunpack.c.h.b16 %v5761
    %v6361 = vunpack.c.l.b16 %v5762
    %v6362 = vunpack.c.h.b16 %v5762
    %v6363 = vunpack.c.l.b16 %v5763
    %v6364 = vunpack.c.h.b16 %v5763
    %v6365 = vunpack.c.l.b16 %v5764
    %v6366 = vunpack.c.h.b16 %v5764
    %v6367 = vunpack.c.l.b16 %v5765
    %v6368 = vunpack.c.h.b16 %v5765
    %v6369 = vunpack.c.l.b16 %v5766
    %v6370 = vunpack.c.h.b16 %v5766
    %v6371 = vunpack.c.l.b16 %v5767
    %v6372 = vunpack.c.h.b16 %v5767
    %v6373 = vunpack.c.l.b16 %v5768
    %v6374 = vunpack.c.h.b16 %v5768
    %v6375 = vunpack.c.l.b16 %v5769
    %v6376 = vunpack.c.h.b16 %v5769
    %v6377 = vunpack.c.l.b16 %v5770
    %v6378 = vunpack.c.h.b16 %v5770
    %v6379 = vunpack.c.l.b16 %v5771
    %v6380 = vunpack.c.h.b16 %v5771
    %v6381 = vunpack.c.l.b16 %v5772
    %v6382 = vunpack.c.h.b16 %v5772
    %v6383 = vunpack.c.l.b16 %v5773
    %v6384 = vunpack.c.h.b16 %v5773
    %v6385 = vunpack.c.l.b16 %v5774
    %v6386 = vunpack.c.h.b16 %v5774
    %v6387 = vunpack.c.l.b16 %v5775
    %v6388 = vunpack.c.h.b16 %v5775
    %v6389 = vunpack.c.l.b16 %v5776
    %v6390 = vunpack.c.h.b16 %v5776
    %v6391 = vunpack.c.l.b16 %v5777
    %v6392 = vunpack.c.h.b16 %v5777
    %v6393 = vunpack.c.l.b16 %v5778
    %v6394 = vunpack.c.h.b16 %v5778
    %v6395 = vunpack.c.l.b16 %v5779
    %v6396 = vunpack.c.h.b16 %v5779
    %v6397 = vunpack.c.l.b16 %v5780
    %v6398 = vunpack.c.h.b16 %v5780
    %v6399 = vunpack.c.l.b16 %v5781
    %v6400 = vunpack.c.h.b16 %v5781
    %v6401 = vunpack.c.l.b16 %v5782
    %v6402 = vunpack.c.h.b16 %v5782
    %v6403 = vunpack.c.l.b16 %v5783
    %v6404 = vunpack.c.h.b16 %v5783
    %v6405 = vunpack.c.l.b16 %v5784
    %v6406 = vunpack.c.h.b16 %v5784
    %v6407 = vunpack.c.l.b16 %v5785
    %v6408 = vunpack.c.h.b16 %v5785
    %v6409 = vunpack.c.l.b16 %v5786
    %v6410 = vunpack.c.h.b16 %v5786
    %v6411 = vunpack.c.l.b16 %v5787
    %v6412 = vunpack.c.h.b16 %v5787
    %v6413 = vunpack.c.l.b16 %v5788
    %v6414 = vunpack.c.h.b16 %v5788
    %v6415 = vunpack.c.l.b16 %v5789
    %v6416 = vunpack.c.h.b16 %v5789
    %v6417 = vunpack.c.l.b16 %v5790
    %v6418 = vunpack.c.h.b16 %v5790
    %v6419 = vunpack.c.l.b16 %v5791
    %v6420 = vunpack.c.h.b16 %v5791
    %v6421 = vunpack.c.l.b16 %v5792
    %v6422 = vunpack.c.h.b16 %v5792
    %v6423 = vunpack.c.l.b16 %v5793
    %v6424 = vunpack.c.h.b16 %v5793
    %v6425 = vunpack.c.l.b16 %v5794
    %v6426 = vunpack.c.h.b16 %v5794
    %v6427 = vunpack.c.l.b16 %v5795
    %v6428 = vunpack.c.h.b16 %v5795
    %v6429 = vunpack.c.l.b16 %v5796
    %v6430 = vunpack.c.h.b16 %v5796
    %v6431 = vunpack.c.l.b16 %v5797
    %v6432 = vunpack.c.h.b16 %v5797
    %v6433 = vunpack.c.l.b16 %v5798
    %v6434 = vunpack.c.h.b16 %v5798
    %v6435 = vunpack.c.l.b16 %v5799
    %v6436 = vunpack.c.h.b16 %v5799
    %v6437 = vunpack.c.l.b16 %v5800
    %v6438 = vunpack.c.h.b16 %v5800
    %v6439 = vunpack.c.l.b16 %v5801
    %v6440 = vunpack.c.h.b16 %v5801
    %v6441 = vunpack.c.l.b16 %v5802
    %v6442 = vunpack.c.h.b16 %v5802
    %v6443 = vunpack.c.l.b16 %v5803
    %v6444 = vunpack.c.h.b16 %v5803
    %v6445 = vunpack.c.l.b16 %v5804
    %v6446 = vunpack.c.h.b16 %v5804
    %v6447 = vunpack.c.l.b16 %v5805
    %v6448 = vunpack.c.h.b16 %v5805
    %v6449 = vunpack.c.l.b16 %v5806
    %v6450 = vunpack.c.h.b16 %v5806
    %v6451 = vunpack.c.l.b16 %v5807
    %v6452 = vunpack.c.h.b16 %v5807
    %v6453 = vunpack.c.l.b16 %v5808
    %v6454 = vunpack.c.h.b16 %v5808
    %v6455 = vunpack.c.l.b16 %v5809
    %v6456 = vunpack.c.h.b16 %v5809
    %v6457 = vunpack.c.l.b16 %v5810
    %v6458 = vunpack.c.h.b16 %v5810
    %v6459 = vunpack.c.l.b16 %v5811
    %v6460 = vunpack.c.h.b16 %v5811
    %v6461 = vunpack.c.l.b16 %v5812
    %v6462 = vunpack.c.h.b16 %v5812
    %v6463 = vunpack.c.l.b16 %v5813
    %v6464 = vunpack.c.h.b16 %v5813
    %v6465 = vunpack.c.l.b16 %v5814
    %v6466 = vunpack.c.h.b16 %v5814
    %v6467 = vunpack.c.l.b16 %v5815
    %v6468 = vunpack.c.h.b16 %v5815
    %v6469 = vunpack.c.l.b16 %v5816
    %v6470 = vunpack.c.h.b16 %v5816
    %v6471 = vunpack.c.l.b16 %v5817
    %v6472 = vunpack.c.h.b16 %v5817
    %v6473 = vunpack.c.l.b16 %v5818
    %v6474 = vunpack.c.h.b16 %v5818
    %v6475 = vunpack.c.l.b16 %v5819
    %v6476 = vunpack.c.h.b16 %v5819
    %v6477 = vunpack.c.l.b16 %v5820
    %v6478 = vunpack.c.h.b16 %v5820
    %v6479 = vunpack.c.l.b16 %v5821
    %v6480 = vunpack.c.h.b16 %v5821
    %v6481 = vunpack.c.l.b16 %v5822
    %v6482 = vunpack.c.h.b16 %v5822
    %v6483 = vunpack.c.l.b16 %v5823
    %v6484 = vunpack.c.h.b16 %v5823
    %v6485 = vunpack.c.l.b16 %v5824
    %v6486 = vunpack.c.h.b16 %v5824
    %v6487 = vunpack.c.l.b16 %v5825
    %v6488 = vunpack.c.h.b16 %v5825
    %v6489 = vunpack.c.l.b16 %v5826
    %v6490 = vunpack.c.h.b16 %v5826
    %v6491 = vunpack.c.l.b16 %v5827
    %v6492 = vunpack.c.h.b16 %v5827
    %v6493 = vunpack.c.l.b16 %v5828
    %v6494 = vunpack.c.h.b16 %v5828
    %v6495 = vunpack.c.l.b16 %v5829
    %v6496 = vunpack.c.h.b16 %v5829
    %v6497 = vunpack.c.l.b16 %v5830
    %v6498 = vunpack.c.h.b16 %v5830
    %v6499 = vunpack.c.l.b16 %v5831
    %v6500 = vunpack.c.h.b16 %v5831
    %v6501 = vunpack.c.l.b16 %v5832
    %v6502 = vunpack.c.h.b16 %v5832
    %v6503 = vunpack.c.l.b16 %v5833
    %v6504 = vunpack.c.h.b16 %v5833
    %v6505 = vunpack.c.l.b16 %v5834
    %v6506 = vunpack.c.h.b16 %v5834
    %v6507 = vunpack.c.l.b16 %v5835
    %v6508 = vunpack.c.h.b16 %v5835
    %v6509 = vunpack.c.l.b16 %v5836
    %v6510 = vunpack.c.h.b16 %v5836
    %v6511 = vunpack.c.l.b16 %v5837
    %v6512 = vunpack.c.h.b16 %v5837
    %v6513 = vunpack.c.l.b16 %v5838
    %v6514 = vunpack.c.h.b16 %v5838
    %v6515 = vunpack.c.l.b16 %v5839
    %v6516 = vunpack.c.h.b16 %v5839
    %v6517 = vunpack.c.l.b16 %v5840
    %v6518 = vunpack.c.h.b16 %v5840
    %v6519 = vunpack.c.l.b16 %v5841
    %v6520 = vunpack.c.h.b16 %v5841
    %v6521 = vunpack.c.l.b16 %v5842
    %v6522 = vunpack.c.h.b16 %v5842
    %v6523 = vunpack.c.l.b16 %v5843
    %v6524 = vunpack.c.h.b16 %v5843
    %v6525 = vunpack.c.l.b16 %v5844
    %v6526 = vunpack.c.h.b16 %v5844
    %v6527 = vunpack.c.l.b16 %v5845
    %v6528 = vunpack.c.h.b16 %v5845
    %v6529 = vunpack.c.l.b16 %v5846
    %v6530 = vunpack.c.h.b16 %v5846
    %v6531 = vunpack.c.l.b16 %v5847
    %v6532 = vunpack.c.h.b16 %v5847
    %v6533 = vunpack.c.l.b16 %v5848
    %v6534 = vunpack.c.h.b16 %v5848
    %v6535 = vunpack.c.l.b16 %v5849
    %v6536 = vunpack.c.h.b16 %v5849
    %v6537 = vunpack.c.l.b16 %v5850
    %v6538 = vunpack.c.h.b16 %v5850
    %v6539 = vunpack.c.l.b16 %v5851
    %v6540 = vunpack.c.h.b16 %v5851
    %v6541 = vunpack.c.l.b16 %v5852
    %v6542 = vunpack.c.h.b16 %v5852
    %v6543 = vunpack.c.l.b16 %v5853
    %v6544 = vunpack.c.h.b16 %v5853
    %v6545 = vunpack.c.l.b16 %v5854
    %v6546 = vunpack.c.h.b16 %v5854
    %v6547 = vunpack.c.l.b16 %v5855
    %v6548 = vunpack.c.h.b16 %v5855
    %v6549 = vunpack.c.l.b16 %v5856
    %v6550 = vunpack.c.h.b16 %v5856
    %v6551 = vunpack.c.l.b16 %v5857
    %v6552 = vunpack.c.h.b16 %v5857
    %v6553 = vunpack.c.l.b16 %v5858
    %v6554 = vunpack.c.h.b16 %v5858
    %v6555 = vunpack.c.l.b16 %v5859
    %v6556 = vunpack.c.h.b16 %v5859
    %v6557 = vunpack.c.l.b16 %v5860
    %v6558 = vunpack.c.h.b16 %v5860
    %v6559 = vunpack.c.l.b16 %v5861
    %v6560 = vunpack.c.h.b16 %v5861
    %v6561 = vunpack.c.l.b16 %v5862
    %v6562 = vunpack.c.h.b16 %v5862
    %v6563 = vunpack.c.l.b16 %v5863
    %v6564 = vunpack.c.h.b16 %v5863
    %v6565 = vunpack.c.l.b16 %v5864
    %v6566 = vunpack.c.h.b16 %v5864
    %v6567 = vunpack.c.l.b16 %v5865
    %v6568 = vunpack.c.h.b16 %v5865
    %v6569 = vunpack.c.l.b16 %v5866
    %v6570 = vunpack.c.h.b16 %v5866
    %v6571 = vunpack.c.l.b16 %v5867
    %v6572 = vunpack.c.h.b16 %v5867
    %v6573 = vunpack.c.l.b16 %v5868
    %v6574 = vunpack.c.h.b16 %v5868
    %v6575 = vunpack.c.l.b16 %v5869
    %v6576 = vunpack.c.h.b16 %v5869
    %v6577 = vunpack.c.l.b16 %v5870
    %v6578 = vunpack.c.h.b16 %v5870
    %v6579 = vunpack.c.l.b16 %v5871
    %v6580 = vunpack.c.h.b16 %v5871
    %v6581 = vunpack.c.l.b16 %v5872
    %v6582 = vunpack.c.h.b16 %v5872
    %v6583 = vunpack.c.l.b16 %v5873
    %v6584 = vunpack.c.h.b16 %v5873
    %v6585 = vunpack.c.l.b16 %v5874
    %v6586 = vunpack.c.h.b16 %v5874
    %v6587 = vunpack.c.l.b16 %v5875
    %v6588 = vunpack.c.h.b16 %v5875
    %v6589 = vunpack.c.l.b16 %v5876
    %v6590 = vunpack.c.h.b16 %v5876
    %v6591 = vunpack.c.l.b16 %v5877
    %v6592 = vunpack.c.h.b16 %v5877
    %v6593 = vunpack.c.l.b16 %v5878
    %v6594 = vunpack.c.h.b16 %v5878
    %v6595 = vunpack.c.l.b16 %v5879
    %v6596 = vunpack.c.h.b16 %v5879
    %v6597 = vunpack.c.l.b16 %v5880
    %v6598 = vunpack.c.h.b16 %v5880
    %v6599 = vunpack.c.l.b16 %v5881
    %v6600 = vunpack.c.h.b16 %v5881
    %v6601 = vunpack.c.l.b16 %v5882
    %v6602 = vunpack.c.h.b16 %v5882
    %v6603 = vunpack.c.l.b16 %v5883
    %v6604 = vunpack.c.h.b16 %v5883
    %v6605 = vunpack.c.l.b16 %v5884
    %v6606 = vunpack.c.h.b16 %v5884
    %v6607 = vunpack.c.l.b16 %v5885
    %v6608 = vunpack.c.h.b16 %v5885
    %v6609 = vunpack.c.l.b16 %v5886
    %v6610 = vunpack.c.h.b16 %v5886
    %v6611 = vunpack.c.l.b16 %v5887
    %v6612 = vunpack.c.h.b16 %v5887
    %v6613 = vunpack.c.l.b16 %v5888
    %v6614 = vunpack.c.h.b16 %v5888
    %v6615 = vunpack.c.l.b16 %v5889
    %v6616 = vunpack.c.h.b16 %v5889
    %v6617 = vunpack.c.l.b16 %v5890
    %v6618 = vunpack.c.h.b16 %v5890
    %v6619 = vunpack.c.l.b16 %v5891
    %v6620 = vunpack.c.h.b16 %v5891
    %v6621 = vunpack.c.l.b16 %v5892
    %v6622 = vunpack.c.h.b16 %v5892
    %v6623 = vunpack.c.l.b16 %v5893
    %v6624 = vunpack.c.h.b16 %v5893
    %v6625 = vunpack.c.l.b16 %v5894
    %v6626 = vunpack.c.h.b16 %v5894
    %v6627 = vunpack.c.l.b16 %v5895
    %v6628 = vunpack.c.h.b16 %v5895
    %v6629 = vunpack.c.l.b16 %v5896
    %v6630 = vunpack.c.h.b16 %v5896
    %v6631 = vunpack.c.l.b16 %v5897
    %v6632 = vunpack.c.h.b16 %v5897
    %v6633 = vunpack.c.l.b16 %v5898
    %v6634 = vunpack.c.h.b16 %v5898
    %v6635 = vunpack.c.l.b16 %v5899
    %v6636 = vunpack.c.h.b16 %v5899
    %v6637 = vunpack.c.l.b16 %v5900
    %v6638 = vunpack.c.h.b16 %v5900
    %v6639 = vunpack.c.l.b16 %v5901
    %v6640 = vunpack.c.h.b16 %v5901
    %v6641 = vunpack.c.l.b16 %v5902
    %v6642 = vunpack.c.h.b16 %v5902
    %v6643 = vunpack.c.l.b16 %v5903
    %v6644 = vunpack.c.h.b16 %v5903
    %v6645 = vunpack.c.l.b16 %v5904
    %v6646 = vunpack.c.h.b16 %v5904
    %v6647 = vunpack.c.l.b16 %v5905
    %v6648 = vunpack.c.h.b16 %v5905
    %v6649 = vunpack.c.l.b16 %v5906
    %v6650 = vunpack.c.h.b16 %v5906
    %v6651 = vunpack.c.l.b16 %v5907
    %v6652 = vunpack.c.h.b16 %v5907
    %v6653 = vunpack.c.l.b16 %v5908
    %v6654 = vunpack.c.h.b16 %v5908
    %v6655 = vunpack.c.l.b16 %v5909
    %v6656 = vunpack.c.h.b16 %v5909
    %v6657 = vunpack.c.l.b16 %v5910
    %v6658 = vunpack.c.h.b16 %v5910
    %v6659 = vunpack.c.l.b16 %v5911
    %v6660 = vunpack.c.h.b16 %v5911
    %v6661 = vunpack.c.l.b16 %v5912
    %v6662 = vunpack.c.h.b16 %v5912
    %v6663 = vunpack.c.l.b16 %v5913
    %v6664 = vunpack.c.h.b16 %v5913
    %v6665 = vunpack.c.l.b16 %v5914
    %v6666 = vunpack.c.h.b16 %v5914
    %v6667 = vunpack.c.l.b16 %v5915
    %v6668 = vunpack.c.h.b16 %v5915
    %v6669 = vunpack.c.l.b16 %v5916
    %v6670 = vunpack.c.h.b16 %v5916
    %v6671 = vunpack.c.l.b16 %v5917
    %v6672 = vunpack.c.h.b16 %v5917
    %v6673 = vunpack.c.l.b16 %v5918
    %v6674 = vunpack.c.h.b16 %v5918
    %v6675 = vunpack.c.l.b16 %v5919
    %v6676 = vunpack.c.h.b16 %v5919
    %v6677 = vunpack.c.l.b16 %v5920
    %v6678 = vunpack.c.h.b16 %v5920
    %v6679 = vunpack.c.l.b16 %v5921
    %v6680 = vunpack.c.h.b16 %v5921
    %v6681 = vunpack.c.l.b16 %v5922
    %v6682 = vunpack.c.h.b16 %v5922
    %v6683 = vunpack.c.l.b16 %v5923
    %v6684 = vunpack.c.h.b16 %v5923
    %v6685 = vunpack.c.l.b16 %v5924
    %v6686 = vunpack.c.h.b16 %v5924
    %v6687 = vunpack.c.l.b16 %v5925
    %v6688 = vunpack.c.h.b16 %v5925
    %v6689 = vunpack.c.l.b16 %v5926
    %v6690 = vunpack.c.h.b16 %v5926
    %v6691 = vunpack.c.l.b16 %v5927
    %v6692 = vunpack.c.h.b16 %v5927
    %v6693 = vunpack.c.l.b16 %v5928
    %v6694 = vunpack.c.h.b16 %v5928
    %v6695 = vunpack.c.l.b16 %v5929
    %v6696 = vunpack.c.h.b16 %v5929
    %v6697 = vunpack.c.l.b16 %v5930
    %v6698 = vunpack.c.h.b16 %v5930
    %v6699 = vunpack.c.l.b16 %v5931
    %v6700 = vunpack.c.h.b16 %v5931
    %v6701 = vunpack.c.l.b16 %v5932
    %v6702 = vunpack.c.h.b16 %v5932
    %v6703 = vunpack.c.l.b16 %v5933
    %v6704 = vunpack.c.h.b16 %v5933
    %v6705 = vunpack.c.l.b16 %v5934
    %v6706 = vunpack.c.h.b16 %v5934
    %v6707 = vunpack.c.l.b16 %v5935
    %v6708 = vunpack.c.h.b16 %v5935
    %v6709 = vunpack.c.l.b16 %v5936
    %v6710 = vunpack.c.h.b16 %v5936
    %v6711 = vunpack.c.l.b16 %v5937
    %v6712 = vunpack.c.h.b16 %v5937
    %v6713 = vunpack.c.l.b16 %v5938
    %v6714 = vunpack.c.h.b16 %v5938
    %v6715 = vunpack.c.l.b16 %v5939
    %v6716 = vunpack.c.h.b16 %v5939
    %v6717 = vunpack.c.l.b16 %v5940
    %v6718 = vunpack.c.h.b16 %v5940
    %v6719 = vunpack.c.l.b16 %v5941
    %v6720 = vunpack.c.h.b16 %v5941
    %v6721 = vunpack.c.l.b16 %v5942
    %v6722 = vunpack.c.h.b16 %v5942
    %v6723 = vunpack.c.l.b16 %v5943
    %v6724 = vunpack.c.h.b16 %v5943
    %v6725 = vunpack.c.l.b16 %v5944
    %v6726 = vunpack.c.h.b16 %v5944
    %v6727 = vunpack.c.l.b16 %v5945
    %v6728 = vunpack.c.h.b16 %v5945
    %v6729 = vunpack.c.l.b16 %v5946
    %v6730 = vunpack.c.h.b16 %v5946
    %v6731 = vunpack.c.l.b16 %v5947
    %v6732 = vunpack.c.h.b16 %v5947
    %v6733 = vunpack.c.l.b16 %v5948
    %v6734 = vunpack.c.h.b16 %v5948
    %v6735 = vpack.c.b16 %v6231, %v6223
    %v6736 = vpack.c.b16 %v6232, %v6224
    %v6737 = vpack.c.b16 %v6233, %v6225
    %v6738 = vpack.c.b16 %v6234, %v6226
    %v6739 = vpack.c.b16 %v6235, %v6227
    %v6740 = vpack.c.b16 %v6236, %v6228
    %v6741 = vpack.c.b16 %v6237, %v6229
    %v6742 = vpack.c.b16 %v6238, %v6230
    %v6743 = vpack.c.b16 %v6247, %v6239
    %v6744 = vpack.c.b16 %v6248, %v6240
    %v6745 = vpack.c.b16 %v6249, %v6241
    %v6746 = vpack.c.b16 %v6250, %v6242
    %v6747 = vpack.c.b16 %v6251, %v6243
    %v6748 = vpack.c.b16 %v6252, %v6244
    %v6749 = vpack.c.b16 %v6253, %v6245
    %v6750 = vpack.c.b16 %v6254, %v6246
    %v6751 = vpack.c.b16 %v6263, %v6255
    %v6752 = vpack.c.b16 %v6264, %v6256
    %v6753 = vpack.c.b16 %v6265, %v6257
    %v6754 = vpack.c.b16 %v6266, %v6258
    %v6755 = vpack.c.b16 %v6267, %v6259
    %v6756 = vpack.c.b16 %v6268, %v6260
    %v6757 = vpack.c.b16 %v6269, %v6261
    %v6758 = vpack.c.b16 %v6270, %v6262
    %v6759 = vpack.c.b16 %v6279, %v6271
    %v6760 = vpack.c.b16 %v6280, %v6272
    %v6761 = vpack.c.b16 %v6281, %v6273
    %v6762 = vpack.c.b16 %v6282, %v6274
    %v6763 = vpack.c.b16 %v6283, %v6275
    %v6764 = vpack.c.b16 %v6284, %v6276
    %v6765 = vpack.c.b16 %v6285, %v6277
    %v6766 = vpack.c.b16 %v6286, %v6278
    %v6767 = vpack.c.b16 %v6295, %v6287
    %v6768 = vpack.c.b16 %v6296, %v6288
    %v6769 = vpack.c.b16 %v6297, %v6289
    %v6770 = vpack.c.b16 %v6298, %v6290
    %v6771 = vpack.c.b16 %v6299, %v6291
    %v6772 = vpack.c.b16 %v6300, %v6292
    %v6773 = vpack.c.b16 %v6301, %v6293
    %v6774 = vpack.c.b16 %v6302, %v6294
    %v6775 = vpack.c.b16 %v6311, %v6303
    %v6776 = vpack.c.b16 %v6312, %v6304
    %v6777 = vpack.c.b16 %v6313, %v6305
    %v6778 = vpack.c.b16 %v6314, %v6306
    %v6779 = vpack.c.b16 %v6315, %v6307
    %v6780 = vpack.c.b16 %v6316, %v6308
    %v6781 = vpack.c.b16 %v6317, %v6309
    %v6782 = vpack.c.b16 %v6318, %v6310
    %v6783 = vpack.c.b16 %v6327, %v6319
    %v6784 = vpack.c.b16 %v6328, %v6320
    %v6785 = vpack.c.b16 %v6329, %v6321
    %v6786 = vpack.c.b16 %v6330, %v6322
    %v6787 = vpack.c.b16 %v6331, %v6323
    %v6788 = vpack.c.b16 %v6332, %v6324
    %v6789 = vpack.c.b16 %v6333, %v6325
    %v6790 = vpack.c.b16 %v6334, %v6326
    %v6791 = vpack.c.b16 %v6343, %v6335
    %v6792 = vpack.c.b16 %v6344, %v6336
    %v6793 = vpack.c.b16 %v6345, %v6337
    %v6794 = vpack.c.b16 %v6346, %v6338
    %v6795 = vpack.c.b16 %v6347, %v6339
    %v6796 = vpack.c.b16 %v6348, %v6340
    %v6797 = vpack.c.b16 %v6349, %v6341
    %v6798 = vpack.c.b16 %v6350, %v6342
    %v6799 = vpack.c.b16 %v6359, %v6351
    %v6800 = vpack.c.b16 %v6360, %v6352
    %v6801 = vpack.c.b16 %v6361, %v6353
    %v6802 = vpack.c.b16 %v6362, %v6354
    %v6803 = vpack.c.b16 %v6363, %v6355
    %v6804 = vpack.c.b16 %v6364, %v6356
    %v6805 = vpack.c.b16 %v6365, %v6357
    %v6806 = vpack.c.b16 %v6366, %v6358
    %v6807 = vpack.c.b16 %v6375, %v6367
    %v6808 = vpack.c.b16 %v6376, %v6368
    %v6809 = vpack.c.b16 %v6377, %v6369
    %v6810 = vpack.c.b16 %v6378, %v6370
    %v6811 = vpack.c.b16 %v6379, %v6371
    %v6812 = vpack.c.b16 %v6380, %v6372
    %v6813 = vpack.c.b16 %v6381, %v6373
    %v6814 = vpack.c.b16 %v6382, %v6374
    %v6815 = vpack.c.b16 %v6391, %v6383
    %v6816 = vpack.c.b16 %v6392, %v6384
    %v6817 = vpack.c.b16 %v6393, %v6385
    %v6818 = vpack.c.b16 %v6394, %v6386
    %v6819 = vpack.c.b16 %v6395, %v6387
    %v6820 = vpack.c.b16 %v6396, %v6388
    %v6821 = vpack.c.b16 %v6397, %v6389
    %v6822 = vpack.c.b16 %v6398, %v6390
    %v6823 = vpack.c.b16 %v6407, %v6399
    %v6824 = vpack.c.b16 %v6408, %v6400
    %v6825 = vpack.c.b16 %v6409, %v6401
    %v6826 = vpack.c.b16 %v6410, %v6402
    %v6827 = vpack.c.b16 %v6411, %v6403
    %v6828 = vpack.c.b16 %v6412, %v6404
    %v6829 = vpack.c.b16 %v6413, %v6405
    %v6830 = vpack.c.b16 %v6414, %v6406
    %v6831 = vpack.c.b16 %v6423, %v6415
    %v6832 = vpack.c.b16 %v6424, %v6416
    %v6833 = vpack.c.b16 %v6425, %v6417
    %v6834 = vpack.c.b16 %v6426, %v6418
    %v6835 = vpack.c.b16 %v6427, %v6419
    %v6836 = vpack.c.b16 %v6428, %v6420
    %v6837 = vpack.c.b16 %v6429, %v6421
    %v6838 = vpack.c.b16 %v6430, %v6422
    %v6839 = vpack.c.b16 %v6439, %v6431
    %v6840 = vpack.c.b16 %v6440, %v6432
    %v6841 = vpack.c.b16 %v6441, %v6433
    %v6842 = vpack.c.b16 %v6442, %v6434
    %v6843 = vpack.c.b16 %v6443, %v6435
    %v6844 = vpack.c.b16 %v6444, %v6436
    %v6845 = vpack.c.b16 %v6445, %v6437
    %v6846 = vpack.c.b16 %v6446, %v6438
    %v6847 = vpack.c.b16 %v6455, %v6447
    %v6848 = vpack.c.b16 %v6456, %v6448
    %v6849 = vpack.c.b16 %v6457, %v6449
    %v6850 = vpack.c.b16 %v6458, %v6450
    %v6851 = vpack.c.b16 %v6459, %v6451
    %v6852 = vpack.c.b16 %v6460, %v6452
    %v6853 = vpack.c.b16 %v6461, %v6453
    %v6854 = vpack.c.b16 %v6462, %v6454
    %v6855 = vpack.c.b16 %v6471, %v6463
    %v6856 = vpack.c.b16 %v6472, %v6464
    %v6857 = vpack.c.b16 %v6473, %v6465
    %v6858 = vpack.c.b16 %v6474, %v6466
    %v6859 = vpack.c.b16 %v6475, %v6467
    %v6860 = vpack.c.b16 %v6476, %v6468
    %v6861 = vpack.c.b16 %v6477, %v6469
    %v6862 = vpack.c.b16 %v6478, %v6470
    %v6863 = vpack.c.b16 %v6487, %v6479
    %v6864 = vpack.c.b16 %v6488, %v6480
    %v6865 = vpack.c.b16 %v6489, %v6481
    %v6866 = vpack.c.b16 %v6490, %v6482
    %v6867 = vpack.c.b16 %v6491, %v6483
    %v6868 = vpack.c.b16 %v6492, %v6484
    %v6869 = vpack.c.b16 %v6493, %v6485
    %v6870 = vpack.c.b16 %v6494, %v6486
    %v6871 = vpack.c.b16 %v6503, %v6495
    %v6872 = vpack.c.b16 %v6504, %v6496
    %v6873 = vpack.c.b16 %v6505, %v6497
    %v6874 = vpack.c.b16 %v6506, %v6498
    %v6875 = vpack.c.b16 %v6507, %v6499
    %v6876 = vpack.c.b16 %v6508, %v6500
    %v6877 = vpack.c.b16 %v6509, %v6501
    %v6878 = vpack.c.b16 %v6510, %v6502
    %v6879 = vpack.c.b16 %v6519, %v6511
    %v6880 = vpack.c.b16 %v6520, %v6512
    %v6881 = vpack.c.b16 %v6521, %v6513
    %v6882 = vpack.c.b16 %v6522, %v6514
    %v6883 = vpack.c.b16 %v6523, %v6515
    %v6884 = vpack.c.b16 %v6524, %v6516
    %v6885 = vpack.c.b16 %v6525, %v6517
    %v6886 = vpack.c.b16 %v6526, %v6518
    %v6887 = vpack.c.b16 %v6535, %v6527
    %v6888 = vpack.c.b16 %v6536, %v6528
    %v6889 = vpack.c.b16 %v6537, %v6529
    %v6890 = vpack.c.b16 %v6538, %v6530
    %v6891 = vpack.c.b16 %v6539, %v6531
    %v6892 = vpack.c.b16 %v6540, %v6532
    %v6893 = vpack.c.b16 %v6541, %v6533
    %v6894 = vpack.c.b16 %v6542, %v6534
    %v6895 = vpack.c.b16 %v6551, %v6543
    %v6896 = vpack.c.b16 %v6552, %v6544
    %v6897 = vpack.c.b16 %v6553, %v6545
    %v6898 = vpack.c.b16 %v6554, %v6546
    %v6899 = vpack.c.b16 %v6555, %v6547
    %v6900 = vpack.c.b16 %v6556, %v6548
    %v6901 = vpack.c.b16 %v6557, %v6549
    %v6902 = vpack.c.b16 %v6558, %v6550
    %v6903 = vpack.c.b16 %v6567, %v6559
    %v6904 = vpack.c.b16 %v6568, %v6560
    %v6905 = vpack.c.b16 %v6569, %v6561
    %v6906 = vpack.c.b16 %v6570, %v6562
    %v6907 = vpack.c.b16 %v6571, %v6563
    %v6908 = vpack.c.b16 %v6572, %v6564
    %v6909 = vpack.c.b16 %v6573, %v6565
    %v6910 = vpack.c.b16 %v6574, %v6566
    %v6911 = vpack.c.b16 %v6583, %v6575
    %v6912 = vpack.c.b16 %v6584, %v6576
    %v6913 = vpack.c.b16 %v6585, %v6577
    %v6914 = vpack.c.b16 %v6586, %v6578
    %v6915 = vpack.c.b16 %v6587, %v6579
    %v6916 = vpack.c.b16 %v6588, %v6580
    %v6917 = vpack.c.b16 %v6589, %v6581
    %v6918 = vpack.c.b16 %v6590, %v6582
    %v6919 = vpack.c.b16 %v6599, %v6591
    %v6920 = vpack.c.b16 %v6600, %v6592
    %v6921 = vpack.c.b16 %v6601, %v6593
    %v6922 = vpack.c.b16 %v6602, %v6594
    %v6923 = vpack.c.b16 %v6603, %v6595
    %v6924 = vpack.c.b16 %v6604, %v6596
    %v6925 = vpack.c.b16 %v6605, %v6597
    %v6926 = vpack.c.b16 %v6606, %v6598
    %v6927 = vpack.c.b16 %v6615, %v6607
    %v6928 = vpack.c.b16 %v6616, %v6608
    %v6929 = vpack.c.b16 %v6617, %v6609
    %v6930 = vpack.c.b16 %v6618, %v6610
    %v6931 = vpack.c.b16 %v6619, %v6611
    %v6932 = vpack.c.b16 %v6620, %v6612
    %v6933 = vpack.c.b16 %v6621, %v6613
    %v6934 = vpack.c.b16 %v6622, %v6614
    %v6935 = vpack.c.b16 %v6631, %v6623
    %v6936 = vpack.c.b16 %v6632, %v6624
    %v6937 = vpack.c.b16 %v6633, %v6625
    %v6938 = vpack.c.b16 %v6634, %v6626
    %v6939 = vpack.c.b16 %v6635, %v6627
    %v6940 = vpack.c.b16 %v6636, %v6628
    %v6941 = vpack.c.b16 %v6637, %v6629
    %v6942 = vpack.c.b16 %v6638, %v6630
    %v6943 = vpack.c.b16 %v6647, %v6639
    %v6944 = vpack.c.b16 %v6648, %v6640
    %v6945 = vpack.c.b16 %v6649, %v6641
    %v6946 = vpack.c.b16 %v6650, %v6642
    %v6947 = vpack.c.b16 %v6651, %v6643
    %v6948 = vpack.c.b16 %v6652, %v6644
    %v6949 = vpack.c.b16 %v6653, %v6645
    %v6950 = vpack.c.b16 %v6654, %v6646
    %v6951 = vpack.c.b16 %v6663, %v6655
    %v6952 = vpack.c.b16 %v6664, %v6656
    %v6953 = vpack.c.b16 %v6665, %v6657
    %v6954 = vpack.c.b16 %v6666, %v6658
    %v6955 = vpack.c.b16 %v6667, %v6659
    %v6956 = vpack.c.b16 %v6668, %v6660
    %v6957 = vpack.c.b16 %v6669, %v6661
    %v6958 = vpack.c.b16 %v6670, %v6662
    %v6959 = vpack.c.b16 %v6679, %v6671
    %v6960 = vpack.c.b16 %v6680, %v6672
    %v6961 = vpack.c.b16 %v6681, %v6673
    %v6962 = vpack.c.b16 %v6682, %v6674
    %v6963 = vpack.c.b16 %v6683, %v6675
    %v6964 = vpack.c.b16 %v6684, %v6676
    %v6965 = vpack.c.b16 %v6685, %v6677
    %v6966 = vpack.c.b16 %v6686, %v6678
    %v6967 = vpack.c.b16 %v6695, %v6687
    %v6968 = vpack.c.b16 %v6696, %v6688
    %v6969 = vpack.c.b16 %v6697, %v6689
    %v6970 = vpack.c.b16 %v6698, %v6690
    %v6971 = vpack.c.b16 %v6699, %v6691
    %v6972 = vpack.c.b16 %v6700, %v6692
    %v6973 = vpack.c.b16 %v6701, %v6693
    %v6974 = vpack.c.b16 %v6702, %v6694
    %v6975 = vpack.c.b16 %v6711, %v6703
    %v6976 = vpack.c.b16 %v6712, %v6704
    %v6977 = vpack.c.b16 %v6713, %v6705
    %v6978 = vpack.c.b16 %v6714, %v6706
    %v6979 = vpack.c.b16 %v6715, %v6707
    %v6980 = vpack.c.b16 %v6716, %v6708
    %v6981 = vpack.c.b16 %v6717, %v6709
    %v6982 = vpack.c.b16 %v6718, %v6710
    %v6983 = vpack.c.b16 %v6727, %v6719
    %v6984 = vpack.c.b16 %v6728, %v6720
    %v6985 = vpack.c.b16 %v6729, %v6721
    %v6986 = vpack.c.b16 %v6730, %v6722
    %v6987 = vpack.c.b16 %v6731, %v6723
    %v6988 = vpack.c.b16 %v6732, %v6724
    %v6989 = vpack.c.b16 %v6733, %v6725
    %v6990 = vpack.c.b16 %v6734, %v6726
    %7247 = vmatpush.bf16.msra.mxu0 %v6791
    %7248 = vmatpush.bf16.msra.mxu0 %v6783
    %7249 = vmatpush.bf16.msra.mxu0 %v6775
    %7250 = vmatpush.bf16.msra.mxu0 %v6767
    %7251 = vmatpush.bf16.msra.mxu0 %v6759
    %7252 = vmatpush.bf16.msra.mxu0 %v6751
    %7253 = vmatpush.bf16.msra.mxu0 %v6743
    %7254 = vmatpush.bf16.msra.mxu0 %v6735
    %7255 = vmatmul.bf16.gmra.mxu0 %v5689
    %v7256 = vpop.f32.mrf.mxu0
    %v7257 = vadd.f32 %v5951, %v7256
    %v7258 = vpop.f32.mrf.mxu0
    %7259 = vdwg.mxu0
    %7260 = vmatpush.bf16.msra.mxu0 %v6855
    %7261 = vmatpush.bf16.msra.mxu0 %v6847
    %7262 = vmatpush.bf16.msra.mxu0 %v6839
    %7263 = vmatpush.bf16.msra.mxu0 %v6831
    %7264 = vmatpush.bf16.msra.mxu0 %v6823
    %7265 = vmatpush.bf16.msra.mxu0 %v6815
    %7266 = vmatpush.bf16.msra.mxu0 %v6807
    %7267 = vmatpush.bf16.msra.mxu0 %v6799
    %7268 = vmatmul.bf16.gmra.mxu0 %v5690
    %v7269 = vpop.f32.mrf.mxu0
    %v7270 = vadd.f32 %v7257, %v7269
    %v7271 = vpop.f32.mrf.mxu0
    %7272 = vdwg.mxu0
    %7273 = vmatpush.bf16.msra.mxu0 %v6919
    %7274 = vmatpush.bf16.msra.mxu0 %v6911
    %7275 = vmatpush.bf16.msra.mxu0 %v6903
    %7276 = vmatpush.bf16.msra.mxu0 %v6895
    %7277 = vmatpush.bf16.msra.mxu0 %v6887
    %7278 = vmatpush.bf16.msra.mxu0 %v6879
    %7279 = vmatpush.bf16.msra.mxu0 %v6871
    %7280 = vmatpush.bf16.msra.mxu0 %v6863
    %7281 = vmatmul.bf16.gmra.mxu0 %v5691
    %v7282 = vpop.f32.mrf.mxu0
    %v7283 = vadd.f32 %v7270, %v7282
    %v7284 = vpop.f32.mrf.mxu0
    %7285 = vdwg.mxu0
    %7286 = vmatpush.bf16.msra.mxu0 %v6983
    %7287 = vmatpush.bf16.msra.mxu0 %v6975
    %7288 = vmatpush.bf16.msra.mxu0 %v6967
    %7289 = vmatpush.bf16.msra.mxu0 %v6959
    %7290 = vmatpush.bf16.msra.mxu0 %v6951
    %7291 = vmatpush.bf16.msra.mxu0 %v6943
    %7292 = vmatpush.bf16.msra.mxu0 %v6935
    %7293 = vmatpush.bf16.msra.mxu0 %v6927
    %7294 = vmatmul.bf16.gmra.mxu0 %v5692
    %v7295 = vpop.f32.mrf.mxu0
    %v7296 = vadd.f32 %v7283, %v7295
    %v7297 = vpop.f32.mrf.mxu0
    %7298 = vdwg.mxu0
    %7299 = vmatpush.bf16.msra.mxu0 %v6792
    %7300 = vmatpush.bf16.msra.mxu0 %v6784
    %7301 = vmatpush.bf16.msra.mxu0 %v6776
    %7302 = vmatpush.bf16.msra.mxu0 %v6768
    %7303 = vmatpush.bf16.msra.mxu0 %v6760
    %7304 = vmatpush.bf16.msra.mxu0 %v6752
    %7305 = vmatpush.bf16.msra.mxu0 %v6744
    %7306 = vmatpush.bf16.msra.mxu0 %v6736
    %7307 = vmatmul.bf16.gmra.mxu0 %v5689
    %v7308 = vpop.f32.mrf.mxu0
    %v7309 = vadd.f32 %v5952, %v7308
    %v7310 = vpop.f32.mrf.mxu0
    %7311 = vdwg.mxu0
    %7312 = vmatpush.bf16.msra.mxu0 %v6856
    %7313 = vmatpush.bf16.msra.mxu0 %v6848
    %7314 = vmatpush.bf16.msra.mxu0 %v6840
    %7315 = vmatpush.bf16.msra.mxu0 %v6832
    %7316 = vmatpush.bf16.msra.mxu0 %v6824
    %7317 = vmatpush.bf16.msra.mxu0 %v6816
    %7318 = vmatpush.bf16.msra.mxu0 %v6808
    %7319 = vmatpush.bf16.msra.mxu0 %v6800
    %7320 = vmatmul.bf16.gmra.mxu0 %v5690
    %v7321 = vpop.f32.mrf.mxu0
    %v7322 = vadd.f32 %v7309, %v7321
    %v7323 = vpop.f32.mrf.mxu0
    %7324 = vdwg.mxu0
    %7325 = vmatpush.bf16.msra.mxu0 %v6920
    %7326 = vmatpush.bf16.msra.mxu0 %v6912
    %7327 = vmatpush.bf16.msra.mxu0 %v6904
    %7328 = vmatpush.bf16.msra.mxu0 %v6896
    %7329 = vmatpush.bf16.msra.mxu0 %v6888
    %7330 = vmatpush.bf16.msra.mxu0 %v6880
    %7331 = vmatpush.bf16.msra.mxu0 %v6872
    %7332 = vmatpush.bf16.msra.mxu0 %v6864
    %7333 = vmatmul.bf16.gmra.mxu0 %v5691
    %v7334 = vpop.f32.mrf.mxu0
    %v7335 = vadd.f32 %v7322, %v7334
    %v7336 = vpop.f32.mrf.mxu0
    %7337 = vdwg.mxu0
    %7338 = vmatpush.bf16.msra.mxu0 %v6984
    %7339 = vmatpush.bf16.msra.mxu0 %v6976
    %7340 = vmatpush.bf16.msra.mxu0 %v6968
    %7341 = vmatpush.bf16.msra.mxu0 %v6960
    %7342 = vmatpush.bf16.msra.mxu0 %v6952
    %7343 = vmatpush.bf16.msra.mxu0 %v6944
    %7344 = vmatpush.bf16.msra.mxu0 %v6936
    %7345 = vmatpush.bf16.msra.mxu0 %v6928
    %7346 = vmatmul.bf16.gmra.mxu0 %v5692
    %v7347 = vpop.f32.mrf.mxu0
    %v7348 = vadd.f32 %v7335, %v7347
    %v7349 = vpop.f32.mrf.mxu0
    %7350 = vdwg.mxu0
    %7351 = vmatpush.bf16.msra.mxu0 %v6793
    %7352 = vmatpush.bf16.msra.mxu0 %v6785
    %7353 = vmatpush.bf16.msra.mxu0 %v6777
    %7354 = vmatpush.bf16.msra.mxu0 %v6769
    %7355 = vmatpush.bf16.msra.mxu0 %v6761
    %7356 = vmatpush.bf16.msra.mxu0 %v6753
    %7357 = vmatpush.bf16.msra.mxu0 %v6745
    %7358 = vmatpush.bf16.msra.mxu0 %v6737
    %7359 = vmatmul.bf16.gmra.mxu0 %v5689
    %v7360 = vpop.f32.mrf.mxu0
    %v7361 = vadd.f32 %v5953, %v7360
    %v7362 = vpop.f32.mrf.mxu0
    %7363 = vdwg.mxu0
    %7364 = vmatpush.bf16.msra.mxu0 %v6857
    %7365 = vmatpush.bf16.msra.mxu0 %v6849
    %7366 = vmatpush.bf16.msra.mxu0 %v6841
    %7367 = vmatpush.bf16.msra.mxu0 %v6833
    %7368 = vmatpush.bf16.msra.mxu0 %v6825
    %7369 = vmatpush.bf16.msra.mxu0 %v6817
    %7370 = vmatpush.bf16.msra.mxu0 %v6809
    %7371 = vmatpush.bf16.msra.mxu0 %v6801
    %7372 = vmatmul.bf16.gmra.mxu0 %v5690
    %v7373 = vpop.f32.mrf.mxu0
    %v7374 = vadd.f32 %v7361, %v7373
    %v7375 = vpop.f32.mrf.mxu0
    %7376 = vdwg.mxu0
    %7377 = vmatpush.bf16.msra.mxu0 %v6921
    %7378 = vmatpush.bf16.msra.mxu0 %v6913
    %7379 = vmatpush.bf16.msra.mxu0 %v6905
    %7380 = vmatpush.bf16.msra.mxu0 %v6897
    %7381 = vmatpush.bf16.msra.mxu0 %v6889
    %7382 = vmatpush.bf16.msra.mxu0 %v6881
    %7383 = vmatpush.bf16.msra.mxu0 %v6873
    %7384 = vmatpush.bf16.msra.mxu0 %v6865
    %7385 = vmatmul.bf16.gmra.mxu0 %v5691
    %v7386 = vpop.f32.mrf.mxu0
    %v7387 = vadd.f32 %v7374, %v7386
    %v7388 = vpop.f32.mrf.mxu0
    %7389 = vdwg.mxu0
    %7390 = vmatpush.bf16.msra.mxu0 %v6985
    %7391 = vmatpush.bf16.msra.mxu0 %v6977
    %7392 = vmatpush.bf16.msra.mxu0 %v6969
    %7393 = vmatpush.bf16.msra.mxu0 %v6961
    %7394 = vmatpush.bf16.msra.mxu0 %v6953
    %7395 = vmatpush.bf16.msra.mxu0 %v6945
    %7396 = vmatpush.bf16.msra.mxu0 %v6937
    %7397 = vmatpush.bf16.msra.mxu0 %v6929
    %7398 = vmatmul.bf16.gmra.mxu0 %v5692
    %v7399 = vpop.f32.mrf.mxu0
    %v7400 = vadd.f32 %v7387, %v7399
    %v7401 = vpop.f32.mrf.mxu0
    %7402 = vdwg.mxu0
    %7403 = vmatpush.bf16.msra.mxu0 %v6794
    %7404 = vmatpush.bf16.msra.mxu0 %v6786
    %7405 = vmatpush.bf16.msra.mxu0 %v6778
    %7406 = vmatpush.bf16.msra.mxu0 %v6770
    %7407 = vmatpush.bf16.msra.mxu0 %v6762
    %7408 = vmatpush.bf16.msra.mxu0 %v6754
    %7409 = vmatpush.bf16.msra.mxu0 %v6746
    %7410 = vmatpush.bf16.msra.mxu0 %v6738
    %7411 = vmatmul.bf16.gmra.mxu0 %v5689
    %v7412 = vpop.f32.mrf.mxu0
    %v7413 = vadd.f32 %v5954, %v7412
    %v7414 = vpop.f32.mrf.mxu0
    %7415 = vdwg.mxu0
    %7416 = vmatpush.bf16.msra.mxu0 %v6858
    %7417 = vmatpush.bf16.msra.mxu0 %v6850
    %7418 = vmatpush.bf16.msra.mxu0 %v6842
    %7419 = vmatpush.bf16.msra.mxu0 %v6834
    %7420 = vmatpush.bf16.msra.mxu0 %v6826
    %7421 = vmatpush.bf16.msra.mxu0 %v6818
    %7422 = vmatpush.bf16.msra.mxu0 %v6810
    %7423 = vmatpush.bf16.msra.mxu0 %v6802
    %7424 = vmatmul.bf16.gmra.mxu0 %v5690
    %v7425 = vpop.f32.mrf.mxu0
    %v7426 = vadd.f32 %v7413, %v7425
    %v7427 = vpop.f32.mrf.mxu0
    %7428 = vdwg.mxu0
    %7429 = vmatpush.bf16.msra.mxu0 %v6922
    %7430 = vmatpush.bf16.msra.mxu0 %v6914
    %7431 = vmatpush.bf16.msra.mxu0 %v6906
    %7432 = vmatpush.bf16.msra.mxu0 %v6898
    %7433 = vmatpush.bf16.msra.mxu0 %v6890
    %7434 = vmatpush.bf16.msra.mxu0 %v6882
    %7435 = vmatpush.bf16.msra.mxu0 %v6874
    %7436 = vmatpush.bf16.msra.mxu0 %v6866
    %7437 = vmatmul.bf16.gmra.mxu0 %v5691
    %v7438 = vpop.f32.mrf.mxu0
    %v7439 = vadd.f32 %v7426, %v7438
    %v7440 = vpop.f32.mrf.mxu0
    %7441 = vdwg.mxu0
    %7442 = vmatpush.bf16.msra.mxu0 %v6986
    %7443 = vmatpush.bf16.msra.mxu0 %v6978
    %7444 = vmatpush.bf16.msra.mxu0 %v6970
    %7445 = vmatpush.bf16.msra.mxu0 %v6962
    %7446 = vmatpush.bf16.msra.mxu0 %v6954
    %7447 = vmatpush.bf16.msra.mxu0 %v6946
    %7448 = vmatpush.bf16.msra.mxu0 %v6938
    %7449 = vmatpush.bf16.msra.mxu0 %v6930
    %7450 = vmatmul.bf16.gmra.mxu0 %v5692
    %v7451 = vpop.f32.mrf.mxu0
    %v7452 = vadd.f32 %v7439, %v7451
    %v7453 = vpop.f32.mrf.mxu0
    %7454 = vdwg.mxu0
    %7455 = vmatpush.bf16.msra.mxu0 %v6795
    %7456 = vmatpush.bf16.msra.mxu0 %v6787
    %7457 = vmatpush.bf16.msra.mxu0 %v6779
    %7458 = vmatpush.bf16.msra.mxu0 %v6771
    %7459 = vmatpush.bf16.msra.mxu0 %v6763
    %7460 = vmatpush.bf16.msra.mxu0 %v6755
    %7461 = vmatpush.bf16.msra.mxu0 %v6747
    %7462 = vmatpush.bf16.msra.mxu0 %v6739
    %7463 = vmatmul.bf16.gmra.mxu0 %v5689
    %v7464 = vpop.f32.mrf.mxu0
    %v7465 = vadd.f32 %v5955, %v7464
    %v7466 = vpop.f32.mrf.mxu0
    %7467 = vdwg.mxu0
    %7468 = vmatpush.bf16.msra.mxu0 %v6859
    %7469 = vmatpush.bf16.msra.mxu0 %v6851
    %7470 = vmatpush.bf16.msra.mxu0 %v6843
    %7471 = vmatpush.bf16.msra.mxu0 %v6835
    %7472 = vmatpush.bf16.msra.mxu0 %v6827
    %7473 = vmatpush.bf16.msra.mxu0 %v6819
    %7474 = vmatpush.bf16.msra.mxu0 %v6811
    %7475 = vmatpush.bf16.msra.mxu0 %v6803
    %7476 = vmatmul.bf16.gmra.mxu0 %v5690
    %v7477 = vpop.f32.mrf.mxu0
    %v7478 = vadd.f32 %v7465, %v7477
    %v7479 = vpop.f32.mrf.mxu0
    %7480 = vdwg.mxu0
    %7481 = vmatpush.bf16.msra.mxu0 %v6923
    %7482 = vmatpush.bf16.msra.mxu0 %v6915
    %7483 = vmatpush.bf16.msra.mxu0 %v6907
    %7484 = vmatpush.bf16.msra.mxu0 %v6899
    %7485 = vmatpush.bf16.msra.mxu0 %v6891
    %7486 = vmatpush.bf16.msra.mxu0 %v6883
    %7487 = vmatpush.bf16.msra.mxu0 %v6875
    %7488 = vmatpush.bf16.msra.mxu0 %v6867
    %7489 = vmatmul.bf16.gmra.mxu0 %v5691
    %v7490 = vpop.f32.mrf.mxu0
    %v7491 = vadd.f32 %v7478, %v7490
    %v7492 = vpop.f32.mrf.mxu0
    %7493 = vdwg.mxu0
    %7494 = vmatpush.bf16.msra.mxu0 %v6987
    %7495 = vmatpush.bf16.msra.mxu0 %v6979
    %7496 = vmatpush.bf16.msra.mxu0 %v6971
    %7497 = vmatpush.bf16.msra.mxu0 %v6963
    %7498 = vmatpush.bf16.msra.mxu0 %v6955
    %7499 = vmatpush.bf16.msra.mxu0 %v6947
    %7500 = vmatpush.bf16.msra.mxu0 %v6939
    %7501 = vmatpush.bf16.msra.mxu0 %v6931
    %7502 = vmatmul.bf16.gmra.mxu0 %v5692
    %v7503 = vpop.f32.mrf.mxu0
    %v7504 = vadd.f32 %v7491, %v7503
    %v7505 = vpop.f32.mrf.mxu0
    %7506 = vdwg.mxu0
    %7507 = vmatpush.bf16.msra.mxu0 %v6796
    %7508 = vmatpush.bf16.msra.mxu0 %v6788
    %7509 = vmatpush.bf16.msra.mxu0 %v6780
    %7510 = vmatpush.bf16.msra.mxu0 %v6772
    %7511 = vmatpush.bf16.msra.mxu0 %v6764
    %7512 = vmatpush.bf16.msra.mxu0 %v6756
    %7513 = vmatpush.bf16.msra.mxu0 %v6748
    %7514 = vmatpush.bf16.msra.mxu0 %v6740
    %7515 = vmatmul.bf16.gmra.mxu0 %v5689
    %v7516 = vpop.f32.mrf.mxu0
    %v7517 = vadd.f32 %v5956, %v7516
    %v7518 = vpop.f32.mrf.mxu0
    %7519 = vdwg.mxu0
    %7520 = vmatpush.bf16.msra.mxu0 %v6860
    %7521 = vmatpush.bf16.msra.mxu0 %v6852
    %7522 = vmatpush.bf16.msra.mxu0 %v6844
    %7523 = vmatpush.bf16.msra.mxu0 %v6836
    %7524 = vmatpush.bf16.msra.mxu0 %v6828
    %7525 = vmatpush.bf16.msra.mxu0 %v6820
    %7526 = vmatpush.bf16.msra.mxu0 %v6812
    %7527 = vmatpush.bf16.msra.mxu0 %v6804
    %7528 = vmatmul.bf16.gmra.mxu0 %v5690
    %v7529 = vpop.f32.mrf.mxu0
    %v7530 = vadd.f32 %v7517, %v7529
    %v7531 = vpop.f32.mrf.mxu0
    %7532 = vdwg.mxu0
    %7533 = vmatpush.bf16.msra.mxu0 %v6924
    %7534 = vmatpush.bf16.msra.mxu0 %v6916
    %7535 = vmatpush.bf16.msra.mxu0 %v6908
    %7536 = vmatpush.bf16.msra.mxu0 %v6900
    %7537 = vmatpush.bf16.msra.mxu0 %v6892
    %7538 = vmatpush.bf16.msra.mxu0 %v6884
    %7539 = vmatpush.bf16.msra.mxu0 %v6876
    %7540 = vmatpush.bf16.msra.mxu0 %v6868
    %7541 = vmatmul.bf16.gmra.mxu0 %v5691
    %v7542 = vpop.f32.mrf.mxu0
    %v7543 = vadd.f32 %v7530, %v7542
    %v7544 = vpop.f32.mrf.mxu0
    %7545 = vdwg.mxu0
    %7546 = vmatpush.bf16.msra.mxu0 %v6988
    %7547 = vmatpush.bf16.msra.mxu0 %v6980
    %7548 = vmatpush.bf16.msra.mxu0 %v6972
    %7549 = vmatpush.bf16.msra.mxu0 %v6964
    %7550 = vmatpush.bf16.msra.mxu0 %v6956
    %7551 = vmatpush.bf16.msra.mxu0 %v6948
    %7552 = vmatpush.bf16.msra.mxu0 %v6940
    %7553 = vmatpush.bf16.msra.mxu0 %v6932
    %7554 = vmatmul.bf16.gmra.mxu0 %v5692
    %v7555 = vpop.f32.mrf.mxu0
    %v7556 = vadd.f32 %v7543, %v7555
    %v7557 = vpop.f32.mrf.mxu0
    %7558 = vdwg.mxu0
    %7559 = vmatpush.bf16.msra.mxu0 %v6797
    %7560 = vmatpush.bf16.msra.mxu0 %v6789
    %7561 = vmatpush.bf16.msra.mxu0 %v6781
    %7562 = vmatpush.bf16.msra.mxu0 %v6773
    %7563 = vmatpush.bf16.msra.mxu0 %v6765
    %7564 = vmatpush.bf16.msra.mxu0 %v6757
    %7565 = vmatpush.bf16.msra.mxu0 %v6749
    %7566 = vmatpush.bf16.msra.mxu0 %v6741
    %7567 = vmatmul.bf16.gmra.mxu0 %v5689
    %v7568 = vpop.f32.mrf.mxu0
    %v7569 = vadd.f32 %v5957, %v7568
    %v7570 = vpop.f32.mrf.mxu0
    %7571 = vdwg.mxu0
    %7572 = vmatpush.bf16.msra.mxu0 %v6861
    %7573 = vmatpush.bf16.msra.mxu0 %v6853
    %7574 = vmatpush.bf16.msra.mxu0 %v6845
    %7575 = vmatpush.bf16.msra.mxu0 %v6837
    %7576 = vmatpush.bf16.msra.mxu0 %v6829
    %7577 = vmatpush.bf16.msra.mxu0 %v6821
    %7578 = vmatpush.bf16.msra.mxu0 %v6813
    %7579 = vmatpush.bf16.msra.mxu0 %v6805
    %7580 = vmatmul.bf16.gmra.mxu0 %v5690
    %v7581 = vpop.f32.mrf.mxu0
    %v7582 = vadd.f32 %v7569, %v7581
    %v7583 = vpop.f32.mrf.mxu0
    %7584 = vdwg.mxu0
    %7585 = vmatpush.bf16.msra.mxu0 %v6925
    %7586 = vmatpush.bf16.msra.mxu0 %v6917
    %7587 = vmatpush.bf16.msra.mxu0 %v6909
    %7588 = vmatpush.bf16.msra.mxu0 %v6901
    %7589 = vmatpush.bf16.msra.mxu0 %v6893
    %7590 = vmatpush.bf16.msra.mxu0 %v6885
    %7591 = vmatpush.bf16.msra.mxu0 %v6877
    %7592 = vmatpush.bf16.msra.mxu0 %v6869
    %7593 = vmatmul.bf16.gmra.mxu0 %v5691
    %v7594 = vpop.f32.mrf.mxu0
    %v7595 = vadd.f32 %v7582, %v7594
    %v7596 = vpop.f32.mrf.mxu0
    %7597 = vdwg.mxu0
    %7598 = vmatpush.bf16.msra.mxu0 %v6989
    %7599 = vmatpush.bf16.msra.mxu0 %v6981
    %7600 = vmatpush.bf16.msra.mxu0 %v6973
    %7601 = vmatpush.bf16.msra.mxu0 %v6965
    %7602 = vmatpush.bf16.msra.mxu0 %v6957
    %7603 = vmatpush.bf16.msra.mxu0 %v6949
    %7604 = vmatpush.bf16.msra.mxu0 %v6941
    %7605 = vmatpush.bf16.msra.mxu0 %v6933
    %7606 = vmatmul.bf16.gmra.mxu0 %v5692
    %v7607 = vpop.f32.mrf.mxu0
    %v7608 = vadd.f32 %v7595, %v7607
    %v7609 = vpop.f32.mrf.mxu0
    %7610 = vdwg.mxu0
    %7611 = vmatpush.bf16.msra.mxu0 %v6798
    %7612 = vmatpush.bf16.msra.mxu0 %v6790
    %7613 = vmatpush.bf16.msra.mxu0 %v6782
    %7614 = vmatpush.bf16.msra.mxu0 %v6774
    %7615 = vmatpush.bf16.msra.mxu0 %v6766
    %7616 = vmatpush.bf16.msra.mxu0 %v6758
    %7617 = vmatpush.bf16.msra.mxu0 %v6750
    %7618 = vmatpush.bf16.msra.mxu0 %v6742
    %7619 = vmatmul.bf16.gmra.mxu0 %v5689
    %v7620 = vpop.f32.mrf.mxu0
    %v7621 = vadd.f32 %v5958, %v7620
    %v7622 = vpop.f32.mrf.mxu0
    %7623 = vdwg.mxu0
    %7624 = vmatpush.bf16.msra.mxu0 %v6862
    %7625 = vmatpush.bf16.msra.mxu0 %v6854
    %7626 = vmatpush.bf16.msra.mxu0 %v6846
    %7627 = vmatpush.bf16.msra.mxu0 %v6838
    %7628 = vmatpush.bf16.msra.mxu0 %v6830
    %7629 = vmatpush.bf16.msra.mxu0 %v6822
    %7630 = vmatpush.bf16.msra.mxu0 %v6814
    %7631 = vmatpush.bf16.msra.mxu0 %v6806
    %7632 = vmatmul.bf16.gmra.mxu0 %v5690
    %v7633 = vpop.f32.mrf.mxu0
    %v7634 = vadd.f32 %v7621, %v7633
    %v7635 = vpop.f32.mrf.mxu0
    %7636 = vdwg.mxu0
    %7637 = vmatpush.bf16.msra.mxu0 %v6926
    %7638 = vmatpush.bf16.msra.mxu0 %v6918
    %7639 = vmatpush.bf16.msra.mxu0 %v6910
    %7640 = vmatpush.bf16.msra.mxu0 %v6902
    %7641 = vmatpush.bf16.msra.mxu0 %v6894
    %7642 = vmatpush.bf16.msra.mxu0 %v6886
    %7643 = vmatpush.bf16.msra.mxu0 %v6878
    %7644 = vmatpush.bf16.msra.mxu0 %v6870
    %7645 = vmatmul.bf16.gmra.mxu0 %v5691
    %v7646 = vpop.f32.mrf.mxu0
    %v7647 = vadd.f32 %v7634, %v7646
    %v7648 = vpop.f32.mrf.mxu0
    %7649 = vdwg.mxu0
    %7650 = vmatpush.bf16.msra.mxu0 %v6990
    %7651 = vmatpush.bf16.msra.mxu0 %v6982
    %7652 = vmatpush.bf16.msra.mxu0 %v6974
    %7653 = vmatpush.bf16.msra.mxu0 %v6966
    %7654 = vmatpush.bf16.msra.mxu0 %v6958
    %7655 = vmatpush.bf16.msra.mxu0 %v6950
    %7656 = vmatpush.bf16.msra.mxu0 %v6942
    %7657 = vmatpush.bf16.msra.mxu0 %v6934
    %7658 = vmatmul.bf16.gmra.mxu0 %v5692
    %v7659 = vpop.f32.mrf.mxu0
    %v7660 = vadd.f32 %v7647, %v7659
    %v7661 = vpop.f32.mrf.mxu0
    %7662 = vdwg.mxu0
    %v7663 = vmul.f32 %v7296, 0.01
    %v7664 = vmul.f32 %v7348, 0.01
    %v7665 = vmul.f32 %v7400, 0.01
    %v7666 = vmul.f32 %v7452, 0.01
    %v7667 = vmul.f32 %v7504, 0.01
    %v7668 = vmul.f32 %v7556, 0.01
    %v7669 = vmul.f32 %v7608, 0.01
    %v7670 = vmul.f32 %v7660, 0.01
    %v7671 = vmax.f32 %v7296, %v7663
    %v7672 = vmax.f32 %v7348, %v7664
    %v7673 = vmax.f32 %v7400, %v7665
    %v7674 = vmax.f32 %v7452, %v7666
    %v7675 = vmax.f32 %v7504, %v7667
    %v7676 = vmax.f32 %v7556, %v7668
    %v7677 = vmax.f32 %v7608, %v7669
    %v7678 = vmax.f32 %v7660, %v7670
    %v7679 = vpack.c.bf16 %v7671, %v7671
    %v7680 = vpack.c.bf16 %v7672, %v7672
    %v7681 = vpack.c.bf16 %v7673, %v7673
    %v7682 = vpack.c.bf16 %v7674, %v7674
    %v7683 = vpack.c.bf16 %v7675, %v7675
    %v7684 = vpack.c.bf16 %v7676, %v7676
    %v7685 = vpack.c.bf16 %v7677, %v7677
    %v7686 = vpack.c.bf16 %v7678, %v7678
    %v7687 = vld [vmem:[#allocation14] sm:$0xff]
    %v7688 = vld [vmem:[#allocation14 + $0x8] sm:$0xff]
    %v7689 = vld [vmem:[#allocation14 + $0x10] sm:$0xff]
    %v7690 = vld [vmem:[#allocation14 + $0x18] sm:$0xff]
    %v7691 = vld [vmem:[#allocation14 + $0x20] sm:$0xff]
    %v7692 = vld [vmem:[#allocation14 + $0x28] sm:$0xff]
    %v7693 = vld [vmem:[#allocation14 + $0x30] sm:$0xff]
    %v7694 = vld [vmem:[#allocation14 + $0x38] sm:$0xff]
    %v7695 = vld [vmem:[#allocation14 + $0x40] sm:$0xff]
    %v7696 = vld [vmem:[#allocation14 + $0x48] sm:$0xff]
    %v7697 = vld [vmem:[#allocation14 + $0x50] sm:$0xff]
    %v7698 = vld [vmem:[#allocation14 + $0x58] sm:$0xff]
    %v7699 = vld [vmem:[#allocation14 + $0x60] sm:$0xff]
    %v7700 = vld [vmem:[#allocation14 + $0x68] sm:$0xff]
    %v7701 = vld [vmem:[#allocation14 + $0x70] sm:$0xff]
    %v7702 = vld [vmem:[#allocation14 + $0x78] sm:$0xff]
    %v7703 = vld [vmem:[#allocation14 + $0x80] sm:$0xff]
    %v7704 = vld [vmem:[#allocation14 + $0x88] sm:$0xff]
    %v7705 = vld [vmem:[#allocation14 + $0x90] sm:$0xff]
    %v7706 = vld [vmem:[#allocation14 + $0x98] sm:$0xff]
    %v7707 = vld [vmem:[#allocation14 + $0xa0] sm:$0xff]
    %v7708 = vld [vmem:[#allocation14 + $0xa8] sm:$0xff]
    %v7709 = vld [vmem:[#allocation14 + $0xb0] sm:$0xff]
    %v7710 = vld [vmem:[#allocation14 + $0xb8] sm:$0xff]
    %v7711 = vld [vmem:[#allocation14 + $0xc0] sm:$0xff]
    %v7712 = vld [vmem:[#allocation14 + $0xc8] sm:$0xff]
    %v7713 = vld [vmem:[#allocation14 + $0xd0] sm:$0xff]
    %v7714 = vld [vmem:[#allocation14 + $0xd8] sm:$0xff]
    %v7715 = vld [vmem:[#allocation14 + $0xe0] sm:$0xff]
    %v7716 = vld [vmem:[#allocation14 + $0xe8] sm:$0xff]
    %v7717 = vld [vmem:[#allocation14 + $0xf0] sm:$0xff]
    %v7718 = vld [vmem:[#allocation14 + $0xf8] sm:$0xff]
    %v7719 = vld [vmem:[#allocation14 + $0x100] sm:$0xff]
    %v7720 = vld [vmem:[#allocation14 + $0x108] sm:$0xff]
    %v7721 = vld [vmem:[#allocation14 + $0x110] sm:$0xff]
    %v7722 = vld [vmem:[#allocation14 + $0x118] sm:$0xff]
    %v7723 = vld [vmem:[#allocation14 + $0x120] sm:$0xff]
    %v7724 = vld [vmem:[#allocation14 + $0x128] sm:$0xff]
    %v7725 = vld [vmem:[#allocation14 + $0x130] sm:$0xff]
    %v7726 = vld [vmem:[#allocation14 + $0x138] sm:$0xff]
    %v7727 = vld [vmem:[#allocation14 + $0x140] sm:$0xff]
    %v7728 = vld [vmem:[#allocation14 + $0x148] sm:$0xff]
    %v7729 = vld [vmem:[#allocation14 + $0x150] sm:$0xff]
    %v7730 = vld [vmem:[#allocation14 + $0x158] sm:$0xff]
    %v7731 = vld [vmem:[#allocation14 + $0x160] sm:$0xff]
    %v7732 = vld [vmem:[#allocation14 + $0x168] sm:$0xff]
    %v7733 = vld [vmem:[#allocation14 + $0x170] sm:$0xff]
    %v7734 = vld [vmem:[#allocation14 + $0x178] sm:$0xff]
    %v7735 = vld [vmem:[#allocation14 + $0x180] sm:$0xff]
    %v7736 = vld [vmem:[#allocation14 + $0x188] sm:$0xff]
    %v7737 = vld [vmem:[#allocation14 + $0x190] sm:$0xff]
    %v7738 = vld [vmem:[#allocation14 + $0x198] sm:$0xff]
    %v7739 = vld [vmem:[#allocation14 + $0x1a0] sm:$0xff]
    %v7740 = vld [vmem:[#allocation14 + $0x1a8] sm:$0xff]
    %v7741 = vld [vmem:[#allocation14 + $0x1b0] sm:$0xff]
    %v7742 = vld [vmem:[#allocation14 + $0x1b8] sm:$0xff]
    %v7743 = vld [vmem:[#allocation14 + $0x1c0] sm:$0xff]
    %v7744 = vld [vmem:[#allocation14 + $0x1c8] sm:$0xff]
    %v7745 = vld [vmem:[#allocation14 + $0x1d0] sm:$0xff]
    %v7746 = vld [vmem:[#allocation14 + $0x1d8] sm:$0xff]
    %v7747 = vld [vmem:[#allocation14 + $0x1e0] sm:$0xff]
    %v7748 = vld [vmem:[#allocation14 + $0x1e8] sm:$0xff]
    %v7749 = vld [vmem:[#allocation14 + $0x1f0] sm:$0xff]
    %v7750 = vld [vmem:[#allocation14 + $0x1f8] sm:$0xff]
    %v7751 = vld [vmem:[#allocation14 + $0x200] sm:$0xff]
    %v7752 = vld [vmem:[#allocation14 + $0x208] sm:$0xff]
    %v7753 = vld [vmem:[#allocation14 + $0x210] sm:$0xff]
    %v7754 = vld [vmem:[#allocation14 + $0x218] sm:$0xff]
    %v7755 = vld [vmem:[#allocation14 + $0x220] sm:$0xff]
    %v7756 = vld [vmem:[#allocation14 + $0x228] sm:$0xff]
    %v7757 = vld [vmem:[#allocation14 + $0x230] sm:$0xff]
    %v7758 = vld [vmem:[#allocation14 + $0x238] sm:$0xff]
    %v7759 = vld [vmem:[#allocation14 + $0x240] sm:$0xff]
    %v7760 = vld [vmem:[#allocation14 + $0x248] sm:$0xff]
    %v7761 = vld [vmem:[#allocation14 + $0x250] sm:$0xff]
    %v7762 = vld [vmem:[#allocation14 + $0x258] sm:$0xff]
    %v7763 = vld [vmem:[#allocation14 + $0x260] sm:$0xff]
    %v7764 = vld [vmem:[#allocation14 + $0x268] sm:$0xff]
    %v7765 = vld [vmem:[#allocation14 + $0x270] sm:$0xff]
    %v7766 = vld [vmem:[#allocation14 + $0x278] sm:$0xff]
    %v7767 = vld [vmem:[#allocation14 + $0x280] sm:$0xff]
    %v7768 = vld [vmem:[#allocation14 + $0x288] sm:$0xff]
    %v7769 = vld [vmem:[#allocation14 + $0x290] sm:$0xff]
    %v7770 = vld [vmem:[#allocation14 + $0x298] sm:$0xff]
    %v7771 = vld [vmem:[#allocation14 + $0x2a0] sm:$0xff]
    %v7772 = vld [vmem:[#allocation14 + $0x2a8] sm:$0xff]
    %v7773 = vld [vmem:[#allocation14 + $0x2b0] sm:$0xff]
    %v7774 = vld [vmem:[#allocation14 + $0x2b8] sm:$0xff]
    %v7775 = vld [vmem:[#allocation14 + $0x2c0] sm:$0xff]
    %v7776 = vld [vmem:[#allocation14 + $0x2c8] sm:$0xff]
    %v7777 = vld [vmem:[#allocation14 + $0x2d0] sm:$0xff]
    %v7778 = vld [vmem:[#allocation14 + $0x2d8] sm:$0xff]
    %v7779 = vld [vmem:[#allocation14 + $0x2e0] sm:$0xff]
    %v7780 = vld [vmem:[#allocation14 + $0x2e8] sm:$0xff]
    %v7781 = vld [vmem:[#allocation14 + $0x2f0] sm:$0xff]
    %v7782 = vld [vmem:[#allocation14 + $0x2f8] sm:$0xff]
    %v7783 = vld [vmem:[#allocation14 + $0x300] sm:$0xff]
    %v7784 = vld [vmem:[#allocation14 + $0x308] sm:$0xff]
    %v7785 = vld [vmem:[#allocation14 + $0x310] sm:$0xff]
    %v7786 = vld [vmem:[#allocation14 + $0x318] sm:$0xff]
    %v7787 = vld [vmem:[#allocation14 + $0x320] sm:$0xff]
    %v7788 = vld [vmem:[#allocation14 + $0x328] sm:$0xff]
    %v7789 = vld [vmem:[#allocation14 + $0x330] sm:$0xff]
    %v7790 = vld [vmem:[#allocation14 + $0x338] sm:$0xff]
    %v7791 = vld [vmem:[#allocation14 + $0x340] sm:$0xff]
    %v7792 = vld [vmem:[#allocation14 + $0x348] sm:$0xff]
    %v7793 = vld [vmem:[#allocation14 + $0x350] sm:$0xff]
    %v7794 = vld [vmem:[#allocation14 + $0x358] sm:$0xff]
    %v7795 = vld [vmem:[#allocation14 + $0x360] sm:$0xff]
    %v7796 = vld [vmem:[#allocation14 + $0x368] sm:$0xff]
    %v7797 = vld [vmem:[#allocation14 + $0x370] sm:$0xff]
    %v7798 = vld [vmem:[#allocation14 + $0x378] sm:$0xff]
    %v7799 = vld [vmem:[#allocation14 + $0x380] sm:$0xff]
    %v7800 = vld [vmem:[#allocation14 + $0x388] sm:$0xff]
    %v7801 = vld [vmem:[#allocation14 + $0x390] sm:$0xff]
    %v7802 = vld [vmem:[#allocation14 + $0x398] sm:$0xff]
    %v7803 = vld [vmem:[#allocation14 + $0x3a0] sm:$0xff]
    %v7804 = vld [vmem:[#allocation14 + $0x3a8] sm:$0xff]
    %v7805 = vld [vmem:[#allocation14 + $0x3b0] sm:$0xff]
    %v7806 = vld [vmem:[#allocation14 + $0x3b8] sm:$0xff]
    %v7807 = vld [vmem:[#allocation14 + $0x3c0] sm:$0xff]
    %v7808 = vld [vmem:[#allocation14 + $0x3c8] sm:$0xff]
    %v7809 = vld [vmem:[#allocation14 + $0x3d0] sm:$0xff]
    %v7810 = vld [vmem:[#allocation14 + $0x3d8] sm:$0xff]
    %v7811 = vld [vmem:[#allocation14 + $0x3e0] sm:$0xff]
    %v7812 = vld [vmem:[#allocation14 + $0x3e8] sm:$0xff]
    %v7813 = vld [vmem:[#allocation14 + $0x3f0] sm:$0xff]
    %v7814 = vld [vmem:[#allocation14 + $0x3f8] sm:$0xff]
    %v7815 = vld [vmem:[#allocation14 + $0x400] sm:$0xff]
    %v7816 = vld [vmem:[#allocation14 + $0x408] sm:$0xff]
    %v7817 = vld [vmem:[#allocation14 + $0x410] sm:$0xff]
    %v7818 = vld [vmem:[#allocation14 + $0x418] sm:$0xff]
    %v7819 = vld [vmem:[#allocation14 + $0x420] sm:$0xff]
    %v7820 = vld [vmem:[#allocation14 + $0x428] sm:$0xff]
    %v7821 = vld [vmem:[#allocation14 + $0x430] sm:$0xff]
    %v7822 = vld [vmem:[#allocation14 + $0x438] sm:$0xff]
    %v7823 = vld [vmem:[#allocation14 + $0x440] sm:$0xff]
    %v7824 = vld [vmem:[#allocation14 + $0x448] sm:$0xff]
    %v7825 = vld [vmem:[#allocation14 + $0x450] sm:$0xff]
    %v7826 = vld [vmem:[#allocation14 + $0x458] sm:$0xff]
    %v7827 = vld [vmem:[#allocation14 + $0x460] sm:$0xff]
    %v7828 = vld [vmem:[#allocation14 + $0x468] sm:$0xff]
    %v7829 = vld [vmem:[#allocation14 + $0x470] sm:$0xff]
    %v7830 = vld [vmem:[#allocation14 + $0x478] sm:$0xff]
    %v7831 = vld [vmem:[#allocation14 + $0x480] sm:$0xff]
    %v7832 = vld [vmem:[#allocation14 + $0x488] sm:$0xff]
    %v7833 = vld [vmem:[#allocation14 + $0x490] sm:$0xff]
    %v7834 = vld [vmem:[#allocation14 + $0x498] sm:$0xff]
    %v7835 = vld [vmem:[#allocation14 + $0x4a0] sm:$0xff]
    %v7836 = vld [vmem:[#allocation14 + $0x4a8] sm:$0xff]
    %v7837 = vld [vmem:[#allocation14 + $0x4b0] sm:$0xff]
    %v7838 = vld [vmem:[#allocation14 + $0x4b8] sm:$0xff]
    %v7839 = vld [vmem:[#allocation14 + $0x4c0] sm:$0xff]
    %v7840 = vld [vmem:[#allocation14 + $0x4c8] sm:$0xff]
    %v7841 = vld [vmem:[#allocation14 + $0x4d0] sm:$0xff]
    %v7842 = vld [vmem:[#allocation14 + $0x4d8] sm:$0xff]
    %v7843 = vld [vmem:[#allocation14 + $0x4e0] sm:$0xff]
    %v7844 = vld [vmem:[#allocation14 + $0x4e8] sm:$0xff]
    %v7845 = vld [vmem:[#allocation14 + $0x4f0] sm:$0xff]
    %v7846 = vld [vmem:[#allocation14 + $0x4f8] sm:$0xff]
    %v7847 = vld [vmem:[#allocation14 + $0x500] sm:$0xff]
    %v7848 = vld [vmem:[#allocation14 + $0x508] sm:$0xff]
    %v7849 = vld [vmem:[#allocation14 + $0x510] sm:$0xff]
    %v7850 = vld [vmem:[#allocation14 + $0x518] sm:$0xff]
    %v7851 = vld [vmem:[#allocation14 + $0x520] sm:$0xff]
    %v7852 = vld [vmem:[#allocation14 + $0x528] sm:$0xff]
    %v7853 = vld [vmem:[#allocation14 + $0x530] sm:$0xff]
    %v7854 = vld [vmem:[#allocation14 + $0x538] sm:$0xff]
    %v7855 = vld [vmem:[#allocation14 + $0x540] sm:$0xff]
    %v7856 = vld [vmem:[#allocation14 + $0x548] sm:$0xff]
    %v7857 = vld [vmem:[#allocation14 + $0x550] sm:$0xff]
    %v7858 = vld [vmem:[#allocation14 + $0x558] sm:$0xff]
    %v7859 = vld [vmem:[#allocation14 + $0x560] sm:$0xff]
    %v7860 = vld [vmem:[#allocation14 + $0x568] sm:$0xff]
    %v7861 = vld [vmem:[#allocation14 + $0x570] sm:$0xff]
    %v7862 = vld [vmem:[#allocation14 + $0x578] sm:$0xff]
    %v7863 = vld [vmem:[#allocation14 + $0x580] sm:$0xff]
    %v7864 = vld [vmem:[#allocation14 + $0x588] sm:$0xff]
    %v7865 = vld [vmem:[#allocation14 + $0x590] sm:$0xff]
    %v7866 = vld [vmem:[#allocation14 + $0x598] sm:$0xff]
    %v7867 = vld [vmem:[#allocation14 + $0x5a0] sm:$0xff]
    %v7868 = vld [vmem:[#allocation14 + $0x5a8] sm:$0xff]
    %v7869 = vld [vmem:[#allocation14 + $0x5b0] sm:$0xff]
    %v7870 = vld [vmem:[#allocation14 + $0x5b8] sm:$0xff]
    %v7871 = vld [vmem:[#allocation14 + $0x5c0] sm:$0xff]
    %v7872 = vld [vmem:[#allocation14 + $0x5c8] sm:$0xff]
    %v7873 = vld [vmem:[#allocation14 + $0x5d0] sm:$0xff]
    %v7874 = vld [vmem:[#allocation14 + $0x5d8] sm:$0xff]
    %v7875 = vld [vmem:[#allocation14 + $0x5e0] sm:$0xff]
    %v7876 = vld [vmem:[#allocation14 + $0x5e8] sm:$0xff]
    %v7877 = vld [vmem:[#allocation14 + $0x5f0] sm:$0xff]
    %v7878 = vld [vmem:[#allocation14 + $0x5f8] sm:$0xff]
    %v7879 = vld [vmem:[#allocation14 + $0x600] sm:$0xff]
    %v7880 = vld [vmem:[#allocation14 + $0x608] sm:$0xff]
    %v7881 = vld [vmem:[#allocation14 + $0x610] sm:$0xff]
    %v7882 = vld [vmem:[#allocation14 + $0x618] sm:$0xff]
    %v7883 = vld [vmem:[#allocation14 + $0x620] sm:$0xff]
    %v7884 = vld [vmem:[#allocation14 + $0x628] sm:$0xff]
    %v7885 = vld [vmem:[#allocation14 + $0x630] sm:$0xff]
    %v7886 = vld [vmem:[#allocation14 + $0x638] sm:$0xff]
    %v7887 = vld [vmem:[#allocation14 + $0x640] sm:$0xff]
    %v7888 = vld [vmem:[#allocation14 + $0x648] sm:$0xff]
    %v7889 = vld [vmem:[#allocation14 + $0x650] sm:$0xff]
    %v7890 = vld [vmem:[#allocation14 + $0x658] sm:$0xff]
    %v7891 = vld [vmem:[#allocation14 + $0x660] sm:$0xff]
    %v7892 = vld [vmem:[#allocation14 + $0x668] sm:$0xff]
    %v7893 = vld [vmem:[#allocation14 + $0x670] sm:$0xff]
    %v7894 = vld [vmem:[#allocation14 + $0x678] sm:$0xff]
    %v7895 = vld [vmem:[#allocation14 + $0x680] sm:$0xff]
    %v7896 = vld [vmem:[#allocation14 + $0x688] sm:$0xff]
    %v7897 = vld [vmem:[#allocation14 + $0x690] sm:$0xff]
    %v7898 = vld [vmem:[#allocation14 + $0x698] sm:$0xff]
    %v7899 = vld [vmem:[#allocation14 + $0x6a0] sm:$0xff]
    %v7900 = vld [vmem:[#allocation14 + $0x6a8] sm:$0xff]
    %v7901 = vld [vmem:[#allocation14 + $0x6b0] sm:$0xff]
    %v7902 = vld [vmem:[#allocation14 + $0x6b8] sm:$0xff]
    %v7903 = vld [vmem:[#allocation14 + $0x6c0] sm:$0xff]
    %v7904 = vld [vmem:[#allocation14 + $0x6c8] sm:$0xff]
    %v7905 = vld [vmem:[#allocation14 + $0x6d0] sm:$0xff]
    %v7906 = vld [vmem:[#allocation14 + $0x6d8] sm:$0xff]
    %v7907 = vld [vmem:[#allocation14 + $0x6e0] sm:$0xff]
    %v7908 = vld [vmem:[#allocation14 + $0x6e8] sm:$0xff]
    %v7909 = vld [vmem:[#allocation14 + $0x6f0] sm:$0xff]
    %v7910 = vld [vmem:[#allocation14 + $0x6f8] sm:$0xff]
    %v7911 = vld [vmem:[#allocation14 + $0x700] sm:$0xff]
    %v7912 = vld [vmem:[#allocation14 + $0x708] sm:$0xff]
    %v7913 = vld [vmem:[#allocation14 + $0x710] sm:$0xff]
    %v7914 = vld [vmem:[#allocation14 + $0x718] sm:$0xff]
    %v7915 = vld [vmem:[#allocation14 + $0x720] sm:$0xff]
    %v7916 = vld [vmem:[#allocation14 + $0x728] sm:$0xff]
    %v7917 = vld [vmem:[#allocation14 + $0x730] sm:$0xff]
    %v7918 = vld [vmem:[#allocation14 + $0x738] sm:$0xff]
    %v7919 = vld [vmem:[#allocation14 + $0x740] sm:$0xff]
    %v7920 = vld [vmem:[#allocation14 + $0x748] sm:$0xff]
    %v7921 = vld [vmem:[#allocation14 + $0x750] sm:$0xff]
    %v7922 = vld [vmem:[#allocation14 + $0x758] sm:$0xff]
    %v7923 = vld [vmem:[#allocation14 + $0x760] sm:$0xff]
    %v7924 = vld [vmem:[#allocation14 + $0x768] sm:$0xff]
    %v7925 = vld [vmem:[#allocation14 + $0x770] sm:$0xff]
    %v7926 = vld [vmem:[#allocation14 + $0x778] sm:$0xff]
    %v7927 = vld [vmem:[#allocation14 + $0x780] sm:$0xff]
    %v7928 = vld [vmem:[#allocation14 + $0x788] sm:$0xff]
    %v7929 = vld [vmem:[#allocation14 + $0x790] sm:$0xff]
    %v7930 = vld [vmem:[#allocation14 + $0x798] sm:$0xff]
    %v7931 = vld [vmem:[#allocation14 + $0x7a0] sm:$0xff]
    %v7932 = vld [vmem:[#allocation14 + $0x7a8] sm:$0xff]
    %v7933 = vld [vmem:[#allocation14 + $0x7b0] sm:$0xff]
    %v7934 = vld [vmem:[#allocation14 + $0x7b8] sm:$0xff]
    %v7935 = vld [vmem:[#allocation14 + $0x7c0] sm:$0xff]
    %v7936 = vld [vmem:[#allocation14 + $0x7c8] sm:$0xff]
    %v7937 = vld [vmem:[#allocation14 + $0x7d0] sm:$0xff]
    %v7938 = vld [vmem:[#allocation14 + $0x7d8] sm:$0xff]
    %v7939 = vld [vmem:[#allocation14 + $0x7e0] sm:$0xff]
    %v7940 = vld [vmem:[#allocation14 + $0x7e8] sm:$0xff]
    %v7941 = vld [vmem:[#allocation14 + $0x7f0] sm:$0xff]
    %v7942 = vld [vmem:[#allocation14 + $0x7f8] sm:$0xff]
    %v7943 = vld [vmem:[%s16] sm:$0xf]
    %v7945 = vperm.slane %v7943, 0
    %v7946 = vperm.slane %v7943, 1
    %v7947 = vperm.slane %v7943, 2
    %v7948 = vperm.slane %v7943, 3
    %v8209 = vunpack.c.l.b16 %v7687
    %v8210 = vunpack.c.h.b16 %v7687
    %v8211 = vunpack.c.l.b16 %v7688
    %v8212 = vunpack.c.h.b16 %v7688
    %v8213 = vunpack.c.l.b16 %v7689
    %v8214 = vunpack.c.h.b16 %v7689
    %v8215 = vunpack.c.l.b16 %v7690
    %v8216 = vunpack.c.h.b16 %v7690
    %v8217 = vunpack.c.l.b16 %v7691
    %v8218 = vunpack.c.h.b16 %v7691
    %v8219 = vunpack.c.l.b16 %v7692
    %v8220 = vunpack.c.h.b16 %v7692
    %v8221 = vunpack.c.l.b16 %v7693
    %v8222 = vunpack.c.h.b16 %v7693
    %v8223 = vunpack.c.l.b16 %v7694
    %v8224 = vunpack.c.h.b16 %v7694
    %v8225 = vunpack.c.l.b16 %v7695
    %v8226 = vunpack.c.h.b16 %v7695
    %v8227 = vunpack.c.l.b16 %v7696
    %v8228 = vunpack.c.h.b16 %v7696
    %v8229 = vunpack.c.l.b16 %v7697
    %v8230 = vunpack.c.h.b16 %v7697
    %v8231 = vunpack.c.l.b16 %v7698
    %v8232 = vunpack.c.h.b16 %v7698
    %v8233 = vunpack.c.l.b16 %v7699
    %v8234 = vunpack.c.h.b16 %v7699
    %v8235 = vunpack.c.l.b16 %v7700
    %v8236 = vunpack.c.h.b16 %v7700
    %v8237 = vunpack.c.l.b16 %v7701
    %v8238 = vunpack.c.h.b16 %v7701
    %v8239 = vunpack.c.l.b16 %v7702
    %v8240 = vunpack.c.h.b16 %v7702
    %v8241 = vunpack.c.l.b16 %v7703
    %v8242 = vunpack.c.h.b16 %v7703
    %v8243 = vunpack.c.l.b16 %v7704
    %v8244 = vunpack.c.h.b16 %v7704
    %v8245 = vunpack.c.l.b16 %v7705
    %v8246 = vunpack.c.h.b16 %v7705
    %v8247 = vunpack.c.l.b16 %v7706
    %v8248 = vunpack.c.h.b16 %v7706
    %v8249 = vunpack.c.l.b16 %v7707
    %v8250 = vunpack.c.h.b16 %v7707
    %v8251 = vunpack.c.l.b16 %v7708
    %v8252 = vunpack.c.h.b16 %v7708
    %v8253 = vunpack.c.l.b16 %v7709
    %v8254 = vunpack.c.h.b16 %v7709
    %v8255 = vunpack.c.l.b16 %v7710
    %v8256 = vunpack.c.h.b16 %v7710
    %v8257 = vunpack.c.l.b16 %v7711
    %v8258 = vunpack.c.h.b16 %v7711
    %v8259 = vunpack.c.l.b16 %v7712
    %v8260 = vunpack.c.h.b16 %v7712
    %v8261 = vunpack.c.l.b16 %v7713
    %v8262 = vunpack.c.h.b16 %v7713
    %v8263 = vunpack.c.l.b16 %v7714
    %v8264 = vunpack.c.h.b16 %v7714
    %v8265 = vunpack.c.l.b16 %v7715
    %v8266 = vunpack.c.h.b16 %v7715
    %v8267 = vunpack.c.l.b16 %v7716
    %v8268 = vunpack.c.h.b16 %v7716
    %v8269 = vunpack.c.l.b16 %v7717
    %v8270 = vunpack.c.h.b16 %v7717
    %v8271 = vunpack.c.l.b16 %v7718
    %v8272 = vunpack.c.h.b16 %v7718
    %v8273 = vunpack.c.l.b16 %v7719
    %v8274 = vunpack.c.h.b16 %v7719
    %v8275 = vunpack.c.l.b16 %v7720
    %v8276 = vunpack.c.h.b16 %v7720
    %v8277 = vunpack.c.l.b16 %v7721
    %v8278 = vunpack.c.h.b16 %v7721
    %v8279 = vunpack.c.l.b16 %v7722
    %v8280 = vunpack.c.h.b16 %v7722
    %v8281 = vunpack.c.l.b16 %v7723
    %v8282 = vunpack.c.h.b16 %v7723
    %v8283 = vunpack.c.l.b16 %v7724
    %v8284 = vunpack.c.h.b16 %v7724
    %v8285 = vunpack.c.l.b16 %v7725
    %v8286 = vunpack.c.h.b16 %v7725
    %v8287 = vunpack.c.l.b16 %v7726
    %v8288 = vunpack.c.h.b16 %v7726
    %v8289 = vunpack.c.l.b16 %v7727
    %v8290 = vunpack.c.h.b16 %v7727
    %v8291 = vunpack.c.l.b16 %v7728
    %v8292 = vunpack.c.h.b16 %v7728
    %v8293 = vunpack.c.l.b16 %v7729
    %v8294 = vunpack.c.h.b16 %v7729
    %v8295 = vunpack.c.l.b16 %v7730
    %v8296 = vunpack.c.h.b16 %v7730
    %v8297 = vunpack.c.l.b16 %v7731
    %v8298 = vunpack.c.h.b16 %v7731
    %v8299 = vunpack.c.l.b16 %v7732
    %v8300 = vunpack.c.h.b16 %v7732
    %v8301 = vunpack.c.l.b16 %v7733
    %v8302 = vunpack.c.h.b16 %v7733
    %v8303 = vunpack.c.l.b16 %v7734
    %v8304 = vunpack.c.h.b16 %v7734
    %v8305 = vunpack.c.l.b16 %v7735
    %v8306 = vunpack.c.h.b16 %v7735
    %v8307 = vunpack.c.l.b16 %v7736
    %v8308 = vunpack.c.h.b16 %v7736
    %v8309 = vunpack.c.l.b16 %v7737
    %v8310 = vunpack.c.h.b16 %v7737
    %v8311 = vunpack.c.l.b16 %v7738
    %v8312 = vunpack.c.h.b16 %v7738
    %v8313 = vunpack.c.l.b16 %v7739
    %v8314 = vunpack.c.h.b16 %v7739
    %v8315 = vunpack.c.l.b16 %v7740
    %v8316 = vunpack.c.h.b16 %v7740
    %v8317 = vunpack.c.l.b16 %v7741
    %v8318 = vunpack.c.h.b16 %v7741
    %v8319 = vunpack.c.l.b16 %v7742
    %v8320 = vunpack.c.h.b16 %v7742
    %v8321 = vunpack.c.l.b16 %v7743
    %v8322 = vunpack.c.h.b16 %v7743
    %v8323 = vunpack.c.l.b16 %v7744
    %v8324 = vunpack.c.h.b16 %v7744
    %v8325 = vunpack.c.l.b16 %v7745
    %v8326 = vunpack.c.h.b16 %v7745
    %v8327 = vunpack.c.l.b16 %v7746
    %v8328 = vunpack.c.h.b16 %v7746
    %v8329 = vunpack.c.l.b16 %v7747
    %v8330 = vunpack.c.h.b16 %v7747
    %v8331 = vunpack.c.l.b16 %v7748
    %v8332 = vunpack.c.h.b16 %v7748
    %v8333 = vunpack.c.l.b16 %v7749
    %v8334 = vunpack.c.h.b16 %v7749
    %v8335 = vunpack.c.l.b16 %v7750
    %v8336 = vunpack.c.h.b16 %v7750
    %v8337 = vunpack.c.l.b16 %v7751
    %v8338 = vunpack.c.h.b16 %v7751
    %v8339 = vunpack.c.l.b16 %v7752
    %v8340 = vunpack.c.h.b16 %v7752
    %v8341 = vunpack.c.l.b16 %v7753
    %v8342 = vunpack.c.h.b16 %v7753
    %v8343 = vunpack.c.l.b16 %v7754
    %v8344 = vunpack.c.h.b16 %v7754
    %v8345 = vunpack.c.l.b16 %v7755
    %v8346 = vunpack.c.h.b16 %v7755
    %v8347 = vunpack.c.l.b16 %v7756
    %v8348 = vunpack.c.h.b16 %v7756
    %v8349 = vunpack.c.l.b16 %v7757
    %v8350 = vunpack.c.h.b16 %v7757
    %v8351 = vunpack.c.l.b16 %v7758
    %v8352 = vunpack.c.h.b16 %v7758
    %v8353 = vunpack.c.l.b16 %v7759
    %v8354 = vunpack.c.h.b16 %v7759
    %v8355 = vunpack.c.l.b16 %v7760
    %v8356 = vunpack.c.h.b16 %v7760
    %v8357 = vunpack.c.l.b16 %v7761
    %v8358 = vunpack.c.h.b16 %v7761
    %v8359 = vunpack.c.l.b16 %v7762
    %v8360 = vunpack.c.h.b16 %v7762
    %v8361 = vunpack.c.l.b16 %v7763
    %v8362 = vunpack.c.h.b16 %v7763
    %v8363 = vunpack.c.l.b16 %v7764
    %v8364 = vunpack.c.h.b16 %v7764
    %v8365 = vunpack.c.l.b16 %v7765
    %v8366 = vunpack.c.h.b16 %v7765
    %v8367 = vunpack.c.l.b16 %v7766
    %v8368 = vunpack.c.h.b16 %v7766
    %v8369 = vunpack.c.l.b16 %v7767
    %v8370 = vunpack.c.h.b16 %v7767
    %v8371 = vunpack.c.l.b16 %v7768
    %v8372 = vunpack.c.h.b16 %v7768
    %v8373 = vunpack.c.l.b16 %v7769
    %v8374 = vunpack.c.h.b16 %v7769
    %v8375 = vunpack.c.l.b16 %v7770
    %v8376 = vunpack.c.h.b16 %v7770
    %v8377 = vunpack.c.l.b16 %v7771
    %v8378 = vunpack.c.h.b16 %v7771
    %v8379 = vunpack.c.l.b16 %v7772
    %v8380 = vunpack.c.h.b16 %v7772
    %v8381 = vunpack.c.l.b16 %v7773
    %v8382 = vunpack.c.h.b16 %v7773
    %v8383 = vunpack.c.l.b16 %v7774
    %v8384 = vunpack.c.h.b16 %v7774
    %v8385 = vunpack.c.l.b16 %v7775
    %v8386 = vunpack.c.h.b16 %v7775
    %v8387 = vunpack.c.l.b16 %v7776
    %v8388 = vunpack.c.h.b16 %v7776
    %v8389 = vunpack.c.l.b16 %v7777
    %v8390 = vunpack.c.h.b16 %v7777
    %v8391 = vunpack.c.l.b16 %v7778
    %v8392 = vunpack.c.h.b16 %v7778
    %v8393 = vunpack.c.l.b16 %v7779
    %v8394 = vunpack.c.h.b16 %v7779
    %v8395 = vunpack.c.l.b16 %v7780
    %v8396 = vunpack.c.h.b16 %v7780
    %v8397 = vunpack.c.l.b16 %v7781
    %v8398 = vunpack.c.h.b16 %v7781
    %v8399 = vunpack.c.l.b16 %v7782
    %v8400 = vunpack.c.h.b16 %v7782
    %v8401 = vunpack.c.l.b16 %v7783
    %v8402 = vunpack.c.h.b16 %v7783
    %v8403 = vunpack.c.l.b16 %v7784
    %v8404 = vunpack.c.h.b16 %v7784
    %v8405 = vunpack.c.l.b16 %v7785
    %v8406 = vunpack.c.h.b16 %v7785
    %v8407 = vunpack.c.l.b16 %v7786
    %v8408 = vunpack.c.h.b16 %v7786
    %v8409 = vunpack.c.l.b16 %v7787
    %v8410 = vunpack.c.h.b16 %v7787
    %v8411 = vunpack.c.l.b16 %v7788
    %v8412 = vunpack.c.h.b16 %v7788
    %v8413 = vunpack.c.l.b16 %v7789
    %v8414 = vunpack.c.h.b16 %v7789
    %v8415 = vunpack.c.l.b16 %v7790
    %v8416 = vunpack.c.h.b16 %v7790
    %v8417 = vunpack.c.l.b16 %v7791
    %v8418 = vunpack.c.h.b16 %v7791
    %v8419 = vunpack.c.l.b16 %v7792
    %v8420 = vunpack.c.h.b16 %v7792
    %v8421 = vunpack.c.l.b16 %v7793
    %v8422 = vunpack.c.h.b16 %v7793
    %v8423 = vunpack.c.l.b16 %v7794
    %v8424 = vunpack.c.h.b16 %v7794
    %v8425 = vunpack.c.l.b16 %v7795
    %v8426 = vunpack.c.h.b16 %v7795
    %v8427 = vunpack.c.l.b16 %v7796
    %v8428 = vunpack.c.h.b16 %v7796
    %v8429 = vunpack.c.l.b16 %v7797
    %v8430 = vunpack.c.h.b16 %v7797
    %v8431 = vunpack.c.l.b16 %v7798
    %v8432 = vunpack.c.h.b16 %v7798
    %v8433 = vunpack.c.l.b16 %v7799
    %v8434 = vunpack.c.h.b16 %v7799
    %v8435 = vunpack.c.l.b16 %v7800
    %v8436 = vunpack.c.h.b16 %v7800
    %v8437 = vunpack.c.l.b16 %v7801
    %v8438 = vunpack.c.h.b16 %v7801
    %v8439 = vunpack.c.l.b16 %v7802
    %v8440 = vunpack.c.h.b16 %v7802
    %v8441 = vunpack.c.l.b16 %v7803
    %v8442 = vunpack.c.h.b16 %v7803
    %v8443 = vunpack.c.l.b16 %v7804
    %v8444 = vunpack.c.h.b16 %v7804
    %v8445 = vunpack.c.l.b16 %v7805
    %v8446 = vunpack.c.h.b16 %v7805
    %v8447 = vunpack.c.l.b16 %v7806
    %v8448 = vunpack.c.h.b16 %v7806
    %v8449 = vunpack.c.l.b16 %v7807
    %v8450 = vunpack.c.h.b16 %v7807
    %v8451 = vunpack.c.l.b16 %v7808
    %v8452 = vunpack.c.h.b16 %v7808
    %v8453 = vunpack.c.l.b16 %v7809
    %v8454 = vunpack.c.h.b16 %v7809
    %v8455 = vunpack.c.l.b16 %v7810
    %v8456 = vunpack.c.h.b16 %v7810
    %v8457 = vunpack.c.l.b16 %v7811
    %v8458 = vunpack.c.h.b16 %v7811
    %v8459 = vunpack.c.l.b16 %v7812
    %v8460 = vunpack.c.h.b16 %v7812
    %v8461 = vunpack.c.l.b16 %v7813
    %v8462 = vunpack.c.h.b16 %v7813
    %v8463 = vunpack.c.l.b16 %v7814
    %v8464 = vunpack.c.h.b16 %v7814
    %v8465 = vunpack.c.l.b16 %v7815
    %v8466 = vunpack.c.h.b16 %v7815
    %v8467 = vunpack.c.l.b16 %v7816
    %v8468 = vunpack.c.h.b16 %v7816
    %v8469 = vunpack.c.l.b16 %v7817
    %v8470 = vunpack.c.h.b16 %v7817
    %v8471 = vunpack.c.l.b16 %v7818
    %v8472 = vunpack.c.h.b16 %v7818
    %v8473 = vunpack.c.l.b16 %v7819
    %v8474 = vunpack.c.h.b16 %v7819
    %v8475 = vunpack.c.l.b16 %v7820
    %v8476 = vunpack.c.h.b16 %v7820
    %v8477 = vunpack.c.l.b16 %v7821
    %v8478 = vunpack.c.h.b16 %v7821
    %v8479 = vunpack.c.l.b16 %v7822
    %v8480 = vunpack.c.h.b16 %v7822
    %v8481 = vunpack.c.l.b16 %v7823
    %v8482 = vunpack.c.h.b16 %v7823
    %v8483 = vunpack.c.l.b16 %v7824
    %v8484 = vunpack.c.h.b16 %v7824
    %v8485 = vunpack.c.l.b16 %v7825
    %v8486 = vunpack.c.h.b16 %v7825
    %v8487 = vunpack.c.l.b16 %v7826
    %v8488 = vunpack.c.h.b16 %v7826
    %v8489 = vunpack.c.l.b16 %v7827
    %v8490 = vunpack.c.h.b16 %v7827
    %v8491 = vunpack.c.l.b16 %v7828
    %v8492 = vunpack.c.h.b16 %v7828
    %v8493 = vunpack.c.l.b16 %v7829
    %v8494 = vunpack.c.h.b16 %v7829
    %v8495 = vunpack.c.l.b16 %v7830
    %v8496 = vunpack.c.h.b16 %v7830
    %v8497 = vunpack.c.l.b16 %v7831
    %v8498 = vunpack.c.h.b16 %v7831
    %v8499 = vunpack.c.l.b16 %v7832
    %v8500 = vunpack.c.h.b16 %v7832
    %v8501 = vunpack.c.l.b16 %v7833
    %v8502 = vunpack.c.h.b16 %v7833
    %v8503 = vunpack.c.l.b16 %v7834
    %v8504 = vunpack.c.h.b16 %v7834
    %v8505 = vunpack.c.l.b16 %v7835
    %v8506 = vunpack.c.h.b16 %v7835
    %v8507 = vunpack.c.l.b16 %v7836
    %v8508 = vunpack.c.h.b16 %v7836
    %v8509 = vunpack.c.l.b16 %v7837
    %v8510 = vunpack.c.h.b16 %v7837
    %v8511 = vunpack.c.l.b16 %v7838
    %v8512 = vunpack.c.h.b16 %v7838
    %v8513 = vunpack.c.l.b16 %v7839
    %v8514 = vunpack.c.h.b16 %v7839
    %v8515 = vunpack.c.l.b16 %v7840
    %v8516 = vunpack.c.h.b16 %v7840
    %v8517 = vunpack.c.l.b16 %v7841
    %v8518 = vunpack.c.h.b16 %v7841
    %v8519 = vunpack.c.l.b16 %v7842
    %v8520 = vunpack.c.h.b16 %v7842
    %v8521 = vunpack.c.l.b16 %v7843
    %v8522 = vunpack.c.h.b16 %v7843
    %v8523 = vunpack.c.l.b16 %v7844
    %v8524 = vunpack.c.h.b16 %v7844
    %v8525 = vunpack.c.l.b16 %v7845
    %v8526 = vunpack.c.h.b16 %v7845
    %v8527 = vunpack.c.l.b16 %v7846
    %v8528 = vunpack.c.h.b16 %v7846
    %v8529 = vunpack.c.l.b16 %v7847
    %v8530 = vunpack.c.h.b16 %v7847
    %v8531 = vunpack.c.l.b16 %v7848
    %v8532 = vunpack.c.h.b16 %v7848
    %v8533 = vunpack.c.l.b16 %v7849
    %v8534 = vunpack.c.h.b16 %v7849
    %v8535 = vunpack.c.l.b16 %v7850
    %v8536 = vunpack.c.h.b16 %v7850
    %v8537 = vunpack.c.l.b16 %v7851
    %v8538 = vunpack.c.h.b16 %v7851
    %v8539 = vunpack.c.l.b16 %v7852
    %v8540 = vunpack.c.h.b16 %v7852
    %v8541 = vunpack.c.l.b16 %v7853
    %v8542 = vunpack.c.h.b16 %v7853
    %v8543 = vunpack.c.l.b16 %v7854
    %v8544 = vunpack.c.h.b16 %v7854
    %v8545 = vunpack.c.l.b16 %v7855
    %v8546 = vunpack.c.h.b16 %v7855
    %v8547 = vunpack.c.l.b16 %v7856
    %v8548 = vunpack.c.h.b16 %v7856
    %v8549 = vunpack.c.l.b16 %v7857
    %v8550 = vunpack.c.h.b16 %v7857
    %v8551 = vunpack.c.l.b16 %v7858
    %v8552 = vunpack.c.h.b16 %v7858
    %v8553 = vunpack.c.l.b16 %v7859
    %v8554 = vunpack.c.h.b16 %v7859
    %v8555 = vunpack.c.l.b16 %v7860
    %v8556 = vunpack.c.h.b16 %v7860
    %v8557 = vunpack.c.l.b16 %v7861
    %v8558 = vunpack.c.h.b16 %v7861
    %v8559 = vunpack.c.l.b16 %v7862
    %v8560 = vunpack.c.h.b16 %v7862
    %v8561 = vunpack.c.l.b16 %v7863
    %v8562 = vunpack.c.h.b16 %v7863
    %v8563 = vunpack.c.l.b16 %v7864
    %v8564 = vunpack.c.h.b16 %v7864
    %v8565 = vunpack.c.l.b16 %v7865
    %v8566 = vunpack.c.h.b16 %v7865
    %v8567 = vunpack.c.l.b16 %v7866
    %v8568 = vunpack.c.h.b16 %v7866
    %v8569 = vunpack.c.l.b16 %v7867
    %v8570 = vunpack.c.h.b16 %v7867
    %v8571 = vunpack.c.l.b16 %v7868
    %v8572 = vunpack.c.h.b16 %v7868
    %v8573 = vunpack.c.l.b16 %v7869
    %v8574 = vunpack.c.h.b16 %v7869
    %v8575 = vunpack.c.l.b16 %v7870
    %v8576 = vunpack.c.h.b16 %v7870
    %v8577 = vunpack.c.l.b16 %v7871
    %v8578 = vunpack.c.h.b16 %v7871
    %v8579 = vunpack.c.l.b16 %v7872
    %v8580 = vunpack.c.h.b16 %v7872
    %v8581 = vunpack.c.l.b16 %v7873
    %v8582 = vunpack.c.h.b16 %v7873
    %v8583 = vunpack.c.l.b16 %v7874
    %v8584 = vunpack.c.h.b16 %v7874
    %v8585 = vunpack.c.l.b16 %v7875
    %v8586 = vunpack.c.h.b16 %v7875
    %v8587 = vunpack.c.l.b16 %v7876
    %v8588 = vunpack.c.h.b16 %v7876
    %v8589 = vunpack.c.l.b16 %v7877
    %v8590 = vunpack.c.h.b16 %v7877
    %v8591 = vunpack.c.l.b16 %v7878
    %v8592 = vunpack.c.h.b16 %v7878
    %v8593 = vunpack.c.l.b16 %v7879
    %v8594 = vunpack.c.h.b16 %v7879
    %v8595 = vunpack.c.l.b16 %v7880
    %v8596 = vunpack.c.h.b16 %v7880
    %v8597 = vunpack.c.l.b16 %v7881
    %v8598 = vunpack.c.h.b16 %v7881
    %v8599 = vunpack.c.l.b16 %v7882
    %v8600 = vunpack.c.h.b16 %v7882
    %v8601 = vunpack.c.l.b16 %v7883
    %v8602 = vunpack.c.h.b16 %v7883
    %v8603 = vunpack.c.l.b16 %v7884
    %v8604 = vunpack.c.h.b16 %v7884
    %v8605 = vunpack.c.l.b16 %v7885
    %v8606 = vunpack.c.h.b16 %v7885
    %v8607 = vunpack.c.l.b16 %v7886
    %v8608 = vunpack.c.h.b16 %v7886
    %v8609 = vunpack.c.l.b16 %v7887
    %v8610 = vunpack.c.h.b16 %v7887
    %v8611 = vunpack.c.l.b16 %v7888
    %v8612 = vunpack.c.h.b16 %v7888
    %v8613 = vunpack.c.l.b16 %v7889
    %v8614 = vunpack.c.h.b16 %v7889
    %v8615 = vunpack.c.l.b16 %v7890
    %v8616 = vunpack.c.h.b16 %v7890
    %v8617 = vunpack.c.l.b16 %v7891
    %v8618 = vunpack.c.h.b16 %v7891
    %v8619 = vunpack.c.l.b16 %v7892
    %v8620 = vunpack.c.h.b16 %v7892
    %v8621 = vunpack.c.l.b16 %v7893
    %v8622 = vunpack.c.h.b16 %v7893
    %v8623 = vunpack.c.l.b16 %v7894
    %v8624 = vunpack.c.h.b16 %v7894
    %v8625 = vunpack.c.l.b16 %v7895
    %v8626 = vunpack.c.h.b16 %v7895
    %v8627 = vunpack.c.l.b16 %v7896
    %v8628 = vunpack.c.h.b16 %v7896
    %v8629 = vunpack.c.l.b16 %v7897
    %v8630 = vunpack.c.h.b16 %v7897
    %v8631 = vunpack.c.l.b16 %v7898
    %v8632 = vunpack.c.h.b16 %v7898
    %v8633 = vunpack.c.l.b16 %v7899
    %v8634 = vunpack.c.h.b16 %v7899
    %v8635 = vunpack.c.l.b16 %v7900
    %v8636 = vunpack.c.h.b16 %v7900
    %v8637 = vunpack.c.l.b16 %v7901
    %v8638 = vunpack.c.h.b16 %v7901
    %v8639 = vunpack.c.l.b16 %v7902
    %v8640 = vunpack.c.h.b16 %v7902
    %v8641 = vunpack.c.l.b16 %v7903
    %v8642 = vunpack.c.h.b16 %v7903
    %v8643 = vunpack.c.l.b16 %v7904
    %v8644 = vunpack.c.h.b16 %v7904
    %v8645 = vunpack.c.l.b16 %v7905
    %v8646 = vunpack.c.h.b16 %v7905
    %v8647 = vunpack.c.l.b16 %v7906
    %v8648 = vunpack.c.h.b16 %v7906
    %v8649 = vunpack.c.l.b16 %v7907
    %v8650 = vunpack.c.h.b16 %v7907
    %v8651 = vunpack.c.l.b16 %v7908
    %v8652 = vunpack.c.h.b16 %v7908
    %v8653 = vunpack.c.l.b16 %v7909
    %v8654 = vunpack.c.h.b16 %v7909
    %v8655 = vunpack.c.l.b16 %v7910
    %v8656 = vunpack.c.h.b16 %v7910
    %v8657 = vunpack.c.l.b16 %v7911
    %v8658 = vunpack.c.h.b16 %v7911
    %v8659 = vunpack.c.l.b16 %v7912
    %v8660 = vunpack.c.h.b16 %v7912
    %v8661 = vunpack.c.l.b16 %v7913
    %v8662 = vunpack.c.h.b16 %v7913
    %v8663 = vunpack.c.l.b16 %v7914
    %v8664 = vunpack.c.h.b16 %v7914
    %v8665 = vunpack.c.l.b16 %v7915
    %v8666 = vunpack.c.h.b16 %v7915
    %v8667 = vunpack.c.l.b16 %v7916
    %v8668 = vunpack.c.h.b16 %v7916
    %v8669 = vunpack.c.l.b16 %v7917
    %v8670 = vunpack.c.h.b16 %v7917
    %v8671 = vunpack.c.l.b16 %v7918
    %v8672 = vunpack.c.h.b16 %v7918
    %v8673 = vunpack.c.l.b16 %v7919
    %v8674 = vunpack.c.h.b16 %v7919
    %v8675 = vunpack.c.l.b16 %v7920
    %v8676 = vunpack.c.h.b16 %v7920
    %v8677 = vunpack.c.l.b16 %v7921
    %v8678 = vunpack.c.h.b16 %v7921
    %v8679 = vunpack.c.l.b16 %v7922
    %v8680 = vunpack.c.h.b16 %v7922
    %v8681 = vunpack.c.l.b16 %v7923
    %v8682 = vunpack.c.h.b16 %v7923
    %v8683 = vunpack.c.l.b16 %v7924
    %v8684 = vunpack.c.h.b16 %v7924
    %v8685 = vunpack.c.l.b16 %v7925
    %v8686 = vunpack.c.h.b16 %v7925
    %v8687 = vunpack.c.l.b16 %v7926
    %v8688 = vunpack.c.h.b16 %v7926
    %v8689 = vunpack.c.l.b16 %v7927
    %v8690 = vunpack.c.h.b16 %v7927
    %v8691 = vunpack.c.l.b16 %v7928
    %v8692 = vunpack.c.h.b16 %v7928
    %v8693 = vunpack.c.l.b16 %v7929
    %v8694 = vunpack.c.h.b16 %v7929
    %v8695 = vunpack.c.l.b16 %v7930
    %v8696 = vunpack.c.h.b16 %v7930
    %v8697 = vunpack.c.l.b16 %v7931
    %v8698 = vunpack.c.h.b16 %v7931
    %v8699 = vunpack.c.l.b16 %v7932
    %v8700 = vunpack.c.h.b16 %v7932
    %v8701 = vunpack.c.l.b16 %v7933
    %v8702 = vunpack.c.h.b16 %v7933
    %v8703 = vunpack.c.l.b16 %v7934
    %v8704 = vunpack.c.h.b16 %v7934
    %v8705 = vunpack.c.l.b16 %v7935
    %v8706 = vunpack.c.h.b16 %v7935
    %v8707 = vunpack.c.l.b16 %v7936
    %v8708 = vunpack.c.h.b16 %v7936
    %v8709 = vunpack.c.l.b16 %v7937
    %v8710 = vunpack.c.h.b16 %v7937
    %v8711 = vunpack.c.l.b16 %v7938
    %v8712 = vunpack.c.h.b16 %v7938
    %v8713 = vunpack.c.l.b16 %v7939
    %v8714 = vunpack.c.h.b16 %v7939
    %v8715 = vunpack.c.l.b16 %v7940
    %v8716 = vunpack.c.h.b16 %v7940
    %v8717 = vunpack.c.l.b16 %v7941
    %v8718 = vunpack.c.h.b16 %v7941
    %v8719 = vunpack.c.l.b16 %v7942
    %v8720 = vunpack.c.h.b16 %v7942
    %v8721 = vpack.c.b16 %v8213, %v8209
    %v8722 = vpack.c.b16 %v8214, %v8210
    %v8723 = vpack.c.b16 %v8215, %v8211
    %v8724 = vpack.c.b16 %v8216, %v8212
    %v8725 = vpack.c.b16 %v8221, %v8217
    %v8726 = vpack.c.b16 %v8222, %v8218
    %v8727 = vpack.c.b16 %v8223, %v8219
    %v8728 = vpack.c.b16 %v8224, %v8220
    %v8729 = vpack.c.b16 %v8229, %v8225
    %v8730 = vpack.c.b16 %v8230, %v8226
    %v8731 = vpack.c.b16 %v8231, %v8227
    %v8732 = vpack.c.b16 %v8232, %v8228
    %v8733 = vpack.c.b16 %v8237, %v8233
    %v8734 = vpack.c.b16 %v8238, %v8234
    %v8735 = vpack.c.b16 %v8239, %v8235
    %v8736 = vpack.c.b16 %v8240, %v8236
    %v8737 = vpack.c.b16 %v8245, %v8241
    %v8738 = vpack.c.b16 %v8246, %v8242
    %v8739 = vpack.c.b16 %v8247, %v8243
    %v8740 = vpack.c.b16 %v8248, %v8244
    %v8741 = vpack.c.b16 %v8253, %v8249
    %v8742 = vpack.c.b16 %v8254, %v8250
    %v8743 = vpack.c.b16 %v8255, %v8251
    %v8744 = vpack.c.b16 %v8256, %v8252
    %v8745 = vpack.c.b16 %v8261, %v8257
    %v8746 = vpack.c.b16 %v8262, %v8258
    %v8747 = vpack.c.b16 %v8263, %v8259
    %v8748 = vpack.c.b16 %v8264, %v8260
    %v8749 = vpack.c.b16 %v8269, %v8265
    %v8750 = vpack.c.b16 %v8270, %v8266
    %v8751 = vpack.c.b16 %v8271, %v8267
    %v8752 = vpack.c.b16 %v8272, %v8268
    %v8753 = vpack.c.b16 %v8277, %v8273
    %v8754 = vpack.c.b16 %v8278, %v8274
    %v8755 = vpack.c.b16 %v8279, %v8275
    %v8756 = vpack.c.b16 %v8280, %v8276
    %v8757 = vpack.c.b16 %v8285, %v8281
    %v8758 = vpack.c.b16 %v8286, %v8282
    %v8759 = vpack.c.b16 %v8287, %v8283
    %v8760 = vpack.c.b16 %v8288, %v8284
    %v8761 = vpack.c.b16 %v8293, %v8289
    %v8762 = vpack.c.b16 %v8294, %v8290
    %v8763 = vpack.c.b16 %v8295, %v8291
    %v8764 = vpack.c.b16 %v8296, %v8292
    %v8765 = vpack.c.b16 %v8301, %v8297
    %v8766 = vpack.c.b16 %v8302, %v8298
    %v8767 = vpack.c.b16 %v8303, %v8299
    %v8768 = vpack.c.b16 %v8304, %v8300
    %v8769 = vpack.c.b16 %v8309, %v8305
    %v8770 = vpack.c.b16 %v8310, %v8306
    %v8771 = vpack.c.b16 %v8311, %v8307
    %v8772 = vpack.c.b16 %v8312, %v8308
    %v8773 = vpack.c.b16 %v8317, %v8313
    %v8774 = vpack.c.b16 %v8318, %v8314
    %v8775 = vpack.c.b16 %v8319, %v8315
    %v8776 = vpack.c.b16 %v8320, %v8316
    %v8777 = vpack.c.b16 %v8325, %v8321
    %v8778 = vpack.c.b16 %v8326, %v8322
    %v8779 = vpack.c.b16 %v8327, %v8323
    %v8780 = vpack.c.b16 %v8328, %v8324
    %v8781 = vpack.c.b16 %v8333, %v8329
    %v8782 = vpack.c.b16 %v8334, %v8330
    %v8783 = vpack.c.b16 %v8335, %v8331
    %v8784 = vpack.c.b16 %v8336, %v8332
    %v8785 = vpack.c.b16 %v8341, %v8337
    %v8786 = vpack.c.b16 %v8342, %v8338
    %v8787 = vpack.c.b16 %v8343, %v8339
    %v8788 = vpack.c.b16 %v8344, %v8340
    %v8789 = vpack.c.b16 %v8349, %v8345
    %v8790 = vpack.c.b16 %v8350, %v8346
    %v8791 = vpack.c.b16 %v8351, %v8347
    %v8792 = vpack.c.b16 %v8352, %v8348
    %v8793 = vpack.c.b16 %v8357, %v8353
    %v8794 = vpack.c.b16 %v8358, %v8354
    %v8795 = vpack.c.b16 %v8359, %v8355
    %v8796 = vpack.c.b16 %v8360, %v8356
    %v8797 = vpack.c.b16 %v8365, %v8361
    %v8798 = vpack.c.b16 %v8366, %v8362
    %v8799 = vpack.c.b16 %v8367, %v8363
    %v8800 = vpack.c.b16 %v8368, %v8364
    %v8801 = vpack.c.b16 %v8373, %v8369
    %v8802 = vpack.c.b16 %v8374, %v8370
    %v8803 = vpack.c.b16 %v8375, %v8371
    %v8804 = vpack.c.b16 %v8376, %v8372
    %v8805 = vpack.c.b16 %v8381, %v8377
    %v8806 = vpack.c.b16 %v8382, %v8378
    %v8807 = vpack.c.b16 %v8383, %v8379
    %v8808 = vpack.c.b16 %v8384, %v8380
    %v8809 = vpack.c.b16 %v8389, %v8385
    %v8810 = vpack.c.b16 %v8390, %v8386
    %v8811 = vpack.c.b16 %v8391, %v8387
    %v8812 = vpack.c.b16 %v8392, %v8388
    %v8813 = vpack.c.b16 %v8397, %v8393
    %v8814 = vpack.c.b16 %v8398, %v8394
    %v8815 = vpack.c.b16 %v8399, %v8395
    %v8816 = vpack.c.b16 %v8400, %v8396
    %v8817 = vpack.c.b16 %v8405, %v8401
    %v8818 = vpack.c.b16 %v8406, %v8402
    %v8819 = vpack.c.b16 %v8407, %v8403
    %v8820 = vpack.c.b16 %v8408, %v8404
    %v8821 = vpack.c.b16 %v8413, %v8409
    %v8822 = vpack.c.b16 %v8414, %v8410
    %v8823 = vpack.c.b16 %v8415, %v8411
    %v8824 = vpack.c.b16 %v8416, %v8412
    %v8825 = vpack.c.b16 %v8421, %v8417
    %v8826 = vpack.c.b16 %v8422, %v8418
    %v8827 = vpack.c.b16 %v8423, %v8419
    %v8828 = vpack.c.b16 %v8424, %v8420
    %v8829 = vpack.c.b16 %v8429, %v8425
    %v8830 = vpack.c.b16 %v8430, %v8426
    %v8831 = vpack.c.b16 %v8431, %v8427
    %v8832 = vpack.c.b16 %v8432, %v8428
    %v8833 = vpack.c.b16 %v8437, %v8433
    %v8834 = vpack.c.b16 %v8438, %v8434
    %v8835 = vpack.c.b16 %v8439, %v8435
    %v8836 = vpack.c.b16 %v8440, %v8436
    %v8837 = vpack.c.b16 %v8445, %v8441
    %v8838 = vpack.c.b16 %v8446, %v8442
    %v8839 = vpack.c.b16 %v8447, %v8443
    %v8840 = vpack.c.b16 %v8448, %v8444
    %v8841 = vpack.c.b16 %v8453, %v8449
    %v8842 = vpack.c.b16 %v8454, %v8450
    %v8843 = vpack.c.b16 %v8455, %v8451
    %v8844 = vpack.c.b16 %v8456, %v8452
    %v8845 = vpack.c.b16 %v8461, %v8457
    %v8846 = vpack.c.b16 %v8462, %v8458
    %v8847 = vpack.c.b16 %v8463, %v8459
    %v8848 = vpack.c.b16 %v8464, %v8460
    %v8849 = vpack.c.b16 %v8469, %v8465
    %v8850 = vpack.c.b16 %v8470, %v8466
    %v8851 = vpack.c.b16 %v8471, %v8467
    %v8852 = vpack.c.b16 %v8472, %v8468
    %v8853 = vpack.c.b16 %v8477, %v8473
    %v8854 = vpack.c.b16 %v8478, %v8474
    %v8855 = vpack.c.b16 %v8479, %v8475
    %v8856 = vpack.c.b16 %v8480, %v8476
    %v8857 = vpack.c.b16 %v8485, %v8481
    %v8858 = vpack.c.b16 %v8486, %v8482
    %v8859 = vpack.c.b16 %v8487, %v8483
    %v8860 = vpack.c.b16 %v8488, %v8484
    %v8861 = vpack.c.b16 %v8493, %v8489
    %v8862 = vpack.c.b16 %v8494, %v8490
    %v8863 = vpack.c.b16 %v8495, %v8491
    %v8864 = vpack.c.b16 %v8496, %v8492
    %v8865 = vpack.c.b16 %v8501, %v8497
    %v8866 = vpack.c.b16 %v8502, %v8498
    %v8867 = vpack.c.b16 %v8503, %v8499
    %v8868 = vpack.c.b16 %v8504, %v8500
    %v8869 = vpack.c.b16 %v8509, %v8505
    %v8870 = vpack.c.b16 %v8510, %v8506
    %v8871 = vpack.c.b16 %v8511, %v8507
    %v8872 = vpack.c.b16 %v8512, %v8508
    %v8873 = vpack.c.b16 %v8517, %v8513
    %v8874 = vpack.c.b16 %v8518, %v8514
    %v8875 = vpack.c.b16 %v8519, %v8515
    %v8876 = vpack.c.b16 %v8520, %v8516
    %v8877 = vpack.c.b16 %v8525, %v8521
    %v8878 = vpack.c.b16 %v8526, %v8522
    %v8879 = vpack.c.b16 %v8527, %v8523
    %v8880 = vpack.c.b16 %v8528, %v8524
    %v8881 = vpack.c.b16 %v8533, %v8529
    %v8882 = vpack.c.b16 %v8534, %v8530
    %v8883 = vpack.c.b16 %v8535, %v8531
    %v8884 = vpack.c.b16 %v8536, %v8532
    %v8885 = vpack.c.b16 %v8541, %v8537
    %v8886 = vpack.c.b16 %v8542, %v8538
    %v8887 = vpack.c.b16 %v8543, %v8539
    %v8888 = vpack.c.b16 %v8544, %v8540
    %v8889 = vpack.c.b16 %v8549, %v8545
    %v8890 = vpack.c.b16 %v8550, %v8546
    %v8891 = vpack.c.b16 %v8551, %v8547
    %v8892 = vpack.c.b16 %v8552, %v8548
    %v8893 = vpack.c.b16 %v8557, %v8553
    %v8894 = vpack.c.b16 %v8558, %v8554
    %v8895 = vpack.c.b16 %v8559, %v8555
    %v8896 = vpack.c.b16 %v8560, %v8556
    %v8897 = vpack.c.b16 %v8565, %v8561
    %v8898 = vpack.c.b16 %v8566, %v8562
    %v8899 = vpack.c.b16 %v8567, %v8563
    %v8900 = vpack.c.b16 %v8568, %v8564
    %v8901 = vpack.c.b16 %v8573, %v8569
    %v8902 = vpack.c.b16 %v8574, %v8570
    %v8903 = vpack.c.b16 %v8575, %v8571
    %v8904 = vpack.c.b16 %v8576, %v8572
    %v8905 = vpack.c.b16 %v8581, %v8577
    %v8906 = vpack.c.b16 %v8582, %v8578
    %v8907 = vpack.c.b16 %v8583, %v8579
    %v8908 = vpack.c.b16 %v8584, %v8580
    %v8909 = vpack.c.b16 %v8589, %v8585
    %v8910 = vpack.c.b16 %v8590, %v8586
    %v8911 = vpack.c.b16 %v8591, %v8587
    %v8912 = vpack.c.b16 %v8592, %v8588
    %v8913 = vpack.c.b16 %v8597, %v8593
    %v8914 = vpack.c.b16 %v8598, %v8594
    %v8915 = vpack.c.b16 %v8599, %v8595
    %v8916 = vpack.c.b16 %v8600, %v8596
    %v8917 = vpack.c.b16 %v8605, %v8601
    %v8918 = vpack.c.b16 %v8606, %v8602
    %v8919 = vpack.c.b16 %v8607, %v8603
    %v8920 = vpack.c.b16 %v8608, %v8604
    %v8921 = vpack.c.b16 %v8613, %v8609
    %v8922 = vpack.c.b16 %v8614, %v8610
    %v8923 = vpack.c.b16 %v8615, %v8611
    %v8924 = vpack.c.b16 %v8616, %v8612
    %v8925 = vpack.c.b16 %v8621, %v8617
    %v8926 = vpack.c.b16 %v8622, %v8618
    %v8927 = vpack.c.b16 %v8623, %v8619
    %v8928 = vpack.c.b16 %v8624, %v8620
    %v8929 = vpack.c.b16 %v8629, %v8625
    %v8930 = vpack.c.b16 %v8630, %v8626
    %v8931 = vpack.c.b16 %v8631, %v8627
    %v8932 = vpack.c.b16 %v8632, %v8628
    %v8933 = vpack.c.b16 %v8637, %v8633
    %v8934 = vpack.c.b16 %v8638, %v8634
    %v8935 = vpack.c.b16 %v8639, %v8635
    %v8936 = vpack.c.b16 %v8640, %v8636
    %v8937 = vpack.c.b16 %v8645, %v8641
    %v8938 = vpack.c.b16 %v8646, %v8642
    %v8939 = vpack.c.b16 %v8647, %v8643
    %v8940 = vpack.c.b16 %v8648, %v8644
    %v8941 = vpack.c.b16 %v8653, %v8649
    %v8942 = vpack.c.b16 %v8654, %v8650
    %v8943 = vpack.c.b16 %v8655, %v8651
    %v8944 = vpack.c.b16 %v8656, %v8652
    %v8945 = vpack.c.b16 %v8661, %v8657
    %v8946 = vpack.c.b16 %v8662, %v8658
    %v8947 = vpack.c.b16 %v8663, %v8659
    %v8948 = vpack.c.b16 %v8664, %v8660
    %v8949 = vpack.c.b16 %v8669, %v8665
    %v8950 = vpack.c.b16 %v8670, %v8666
    %v8951 = vpack.c.b16 %v8671, %v8667
    %v8952 = vpack.c.b16 %v8672, %v8668
    %v8953 = vpack.c.b16 %v8677, %v8673
    %v8954 = vpack.c.b16 %v8678, %v8674
    %v8955 = vpack.c.b16 %v8679, %v8675
    %v8956 = vpack.c.b16 %v8680, %v8676
    %v8957 = vpack.c.b16 %v8685, %v8681
    %v8958 = vpack.c.b16 %v8686, %v8682
    %v8959 = vpack.c.b16 %v8687, %v8683
    %v8960 = vpack.c.b16 %v8688, %v8684
    %v8961 = vpack.c.b16 %v8693, %v8689
    %v8962 = vpack.c.b16 %v8694, %v8690
    %v8963 = vpack.c.b16 %v8695, %v8691
    %v8964 = vpack.c.b16 %v8696, %v8692
    %v8965 = vpack.c.b16 %v8701, %v8697
    %v8966 = vpack.c.b16 %v8702, %v8698
    %v8967 = vpack.c.b16 %v8703, %v8699
    %v8968 = vpack.c.b16 %v8704, %v8700
    %v8969 = vpack.c.b16 %v8709, %v8705
    %v8970 = vpack.c.b16 %v8710, %v8706
    %v8971 = vpack.c.b16 %v8711, %v8707
    %v8972 = vpack.c.b16 %v8712, %v8708
    %v8973 = vpack.c.b16 %v8717, %v8713
    %v8974 = vpack.c.b16 %v8718, %v8714
    %v8975 = vpack.c.b16 %v8719, %v8715
    %v8976 = vpack.c.b16 %v8720, %v8716
    %9233 = vmatpush.bf16.msra.mxu0 %v8749
    %9234 = vmatpush.bf16.msra.mxu0 %v8745
    %9235 = vmatpush.bf16.msra.mxu0 %v8741
    %9236 = vmatpush.bf16.msra.mxu0 %v8737
    %9237 = vmatpush.bf16.msra.mxu0 %v8733
    %9238 = vmatpush.bf16.msra.mxu0 %v8729
    %9239 = vmatpush.bf16.msra.mxu0 %v8725
    %9240 = vmatpush.bf16.msra.mxu0 %v8721
    %9241 = vmatmul.bf16.gmra.mxu0 %v7679
    %v9242 = vpop.f32.mrf.mxu0
    %v9243 = vadd.f32 %v7945, %v9242
    %v9244 = vpop.f32.mrf.mxu0
    %9245 = vdwg.mxu0
    %9246 = vmatpush.bf16.msra.mxu0 %v8781
    %9247 = vmatpush.bf16.msra.mxu0 %v8777
    %9248 = vmatpush.bf16.msra.mxu0 %v8773
    %9249 = vmatpush.bf16.msra.mxu0 %v8769
    %9250 = vmatpush.bf16.msra.mxu0 %v8765
    %9251 = vmatpush.bf16.msra.mxu0 %v8761
    %9252 = vmatpush.bf16.msra.mxu0 %v8757
    %9253 = vmatpush.bf16.msra.mxu0 %v8753
    %9254 = vmatmul.bf16.gmra.mxu0 %v7680
    %v9255 = vpop.f32.mrf.mxu0
    %v9256 = vadd.f32 %v9243, %v9255
    %v9257 = vpop.f32.mrf.mxu0
    %9258 = vdwg.mxu0
    %9259 = vmatpush.bf16.msra.mxu0 %v8813
    %9260 = vmatpush.bf16.msra.mxu0 %v8809
    %9261 = vmatpush.bf16.msra.mxu0 %v8805
    %9262 = vmatpush.bf16.msra.mxu0 %v8801
    %9263 = vmatpush.bf16.msra.mxu0 %v8797
    %9264 = vmatpush.bf16.msra.mxu0 %v8793
    %9265 = vmatpush.bf16.msra.mxu0 %v8789
    %9266 = vmatpush.bf16.msra.mxu0 %v8785
    %9267 = vmatmul.bf16.gmra.mxu0 %v7681
    %v9268 = vpop.f32.mrf.mxu0
    %v9269 = vadd.f32 %v9256, %v9268
    %v9270 = vpop.f32.mrf.mxu0
    %9271 = vdwg.mxu0
    %9272 = vmatpush.bf16.msra.mxu0 %v8845
    %9273 = vmatpush.bf16.msra.mxu0 %v8841
    %9274 = vmatpush.bf16.msra.mxu0 %v8837
    %9275 = vmatpush.bf16.msra.mxu0 %v8833
    %9276 = vmatpush.bf16.msra.mxu0 %v8829
    %9277 = vmatpush.bf16.msra.mxu0 %v8825
    %9278 = vmatpush.bf16.msra.mxu0 %v8821
    %9279 = vmatpush.bf16.msra.mxu0 %v8817
    %9280 = vmatmul.bf16.gmra.mxu0 %v7682
    %v9281 = vpop.f32.mrf.mxu0
    %v9282 = vadd.f32 %v9269, %v9281
    %v9283 = vpop.f32.mrf.mxu0
    %9284 = vdwg.mxu0
    %9285 = vmatpush.bf16.msra.mxu0 %v8877
    %9286 = vmatpush.bf16.msra.mxu0 %v8873
    %9287 = vmatpush.bf16.msra.mxu0 %v8869
    %9288 = vmatpush.bf16.msra.mxu0 %v8865
    %9289 = vmatpush.bf16.msra.mxu0 %v8861
    %9290 = vmatpush.bf16.msra.mxu0 %v8857
    %9291 = vmatpush.bf16.msra.mxu0 %v8853
    %9292 = vmatpush.bf16.msra.mxu0 %v8849
    %9293 = vmatmul.bf16.gmra.mxu0 %v7683
    %v9294 = vpop.f32.mrf.mxu0
    %v9295 = vadd.f32 %v9282, %v9294
    %v9296 = vpop.f32.mrf.mxu0
    %9297 = vdwg.mxu0
    %9298 = vmatpush.bf16.msra.mxu0 %v8909
    %9299 = vmatpush.bf16.msra.mxu0 %v8905
    %9300 = vmatpush.bf16.msra.mxu0 %v8901
    %9301 = vmatpush.bf16.msra.mxu0 %v8897
    %9302 = vmatpush.bf16.msra.mxu0 %v8893
    %9303 = vmatpush.bf16.msra.mxu0 %v8889
    %9304 = vmatpush.bf16.msra.mxu0 %v8885
    %9305 = vmatpush.bf16.msra.mxu0 %v8881
    %9306 = vmatmul.bf16.gmra.mxu0 %v7684
    %v9307 = vpop.f32.mrf.mxu0
    %v9308 = vadd.f32 %v9295, %v9307
    %v9309 = vpop.f32.mrf.mxu0
    %9310 = vdwg.mxu0
    %9311 = vmatpush.bf16.msra.mxu0 %v8941
    %9312 = vmatpush.bf16.msra.mxu0 %v8937
    %9313 = vmatpush.bf16.msra.mxu0 %v8933
    %9314 = vmatpush.bf16.msra.mxu0 %v8929
    %9315 = vmatpush.bf16.msra.mxu0 %v8925
    %9316 = vmatpush.bf16.msra.mxu0 %v8921
    %9317 = vmatpush.bf16.msra.mxu0 %v8917
    %9318 = vmatpush.bf16.msra.mxu0 %v8913
    %9319 = vmatmul.bf16.gmra.mxu0 %v7685
    %v9320 = vpop.f32.mrf.mxu0
    %v9321 = vadd.f32 %v9308, %v9320
    %v9322 = vpop.f32.mrf.mxu0
    %9323 = vdwg.mxu0
    %9324 = vmatpush.bf16.msra.mxu0 %v8973
    %9325 = vmatpush.bf16.msra.mxu0 %v8969
    %9326 = vmatpush.bf16.msra.mxu0 %v8965
    %9327 = vmatpush.bf16.msra.mxu0 %v8961
    %9328 = vmatpush.bf16.msra.mxu0 %v8957
    %9329 = vmatpush.bf16.msra.mxu0 %v8953
    %9330 = vmatpush.bf16.msra.mxu0 %v8949
    %9331 = vmatpush.bf16.msra.mxu0 %v8945
    %9332 = vmatmul.bf16.gmra.mxu0 %v7686
    %v9333 = vpop.f32.mrf.mxu0
    %v9334 = vadd.f32 %v9321, %v9333
    %v9335 = vpop.f32.mrf.mxu0
    %9336 = vdwg.mxu0
    %9337 = vmatpush.bf16.msra.mxu0 %v8750
    %9338 = vmatpush.bf16.msra.mxu0 %v8746
    %9339 = vmatpush.bf16.msra.mxu0 %v8742
    %9340 = vmatpush.bf16.msra.mxu0 %v8738
    %9341 = vmatpush.bf16.msra.mxu0 %v8734
    %9342 = vmatpush.bf16.msra.mxu0 %v8730
    %9343 = vmatpush.bf16.msra.mxu0 %v8726
    %9344 = vmatpush.bf16.msra.mxu0 %v8722
    %9345 = vmatmul.bf16.gmra.mxu0 %v7679
    %v9346 = vpop.f32.mrf.mxu0
    %v9347 = vadd.f32 %v7946, %v9346
    %v9348 = vpop.f32.mrf.mxu0
    %9349 = vdwg.mxu0
    %9350 = vmatpush.bf16.msra.mxu0 %v8782
    %9351 = vmatpush.bf16.msra.mxu0 %v8778
    %9352 = vmatpush.bf16.msra.mxu0 %v8774
    %9353 = vmatpush.bf16.msra.mxu0 %v8770
    %9354 = vmatpush.bf16.msra.mxu0 %v8766
    %9355 = vmatpush.bf16.msra.mxu0 %v8762
    %9356 = vmatpush.bf16.msra.mxu0 %v8758
    %9357 = vmatpush.bf16.msra.mxu0 %v8754
    %9358 = vmatmul.bf16.gmra.mxu0 %v7680
    %v9359 = vpop.f32.mrf.mxu0
    %v9360 = vadd.f32 %v9347, %v9359
    %v9361 = vpop.f32.mrf.mxu0
    %9362 = vdwg.mxu0
    %9363 = vmatpush.bf16.msra.mxu0 %v8814
    %9364 = vmatpush.bf16.msra.mxu0 %v8810
    %9365 = vmatpush.bf16.msra.mxu0 %v8806
    %9366 = vmatpush.bf16.msra.mxu0 %v8802
    %9367 = vmatpush.bf16.msra.mxu0 %v8798
    %9368 = vmatpush.bf16.msra.mxu0 %v8794
    %9369 = vmatpush.bf16.msra.mxu0 %v8790
    %9370 = vmatpush.bf16.msra.mxu0 %v8786
    %9371 = vmatmul.bf16.gmra.mxu0 %v7681
    %v9372 = vpop.f32.mrf.mxu0
    %v9373 = vadd.f32 %v9360, %v9372
    %v9374 = vpop.f32.mrf.mxu0
    %9375 = vdwg.mxu0
    %9376 = vmatpush.bf16.msra.mxu0 %v8846
    %9377 = vmatpush.bf16.msra.mxu0 %v8842
    %9378 = vmatpush.bf16.msra.mxu0 %v8838
    %9379 = vmatpush.bf16.msra.mxu0 %v8834
    %9380 = vmatpush.bf16.msra.mxu0 %v8830
    %9381 = vmatpush.bf16.msra.mxu0 %v8826
    %9382 = vmatpush.bf16.msra.mxu0 %v8822
    %9383 = vmatpush.bf16.msra.mxu0 %v8818
    %9384 = vmatmul.bf16.gmra.mxu0 %v7682
    %v9385 = vpop.f32.mrf.mxu0
    %v9386 = vadd.f32 %v9373, %v9385
    %v9387 = vpop.f32.mrf.mxu0
    %9388 = vdwg.mxu0
    %9389 = vmatpush.bf16.msra.mxu0 %v8878
    %9390 = vmatpush.bf16.msra.mxu0 %v8874
    %9391 = vmatpush.bf16.msra.mxu0 %v8870
    %9392 = vmatpush.bf16.msra.mxu0 %v8866
    %9393 = vmatpush.bf16.msra.mxu0 %v8862
    %9394 = vmatpush.bf16.msra.mxu0 %v8858
    %9395 = vmatpush.bf16.msra.mxu0 %v8854
    %9396 = vmatpush.bf16.msra.mxu0 %v8850
    %9397 = vmatmul.bf16.gmra.mxu0 %v7683
    %v9398 = vpop.f32.mrf.mxu0
    %v9399 = vadd.f32 %v9386, %v9398
    %v9400 = vpop.f32.mrf.mxu0
    %9401 = vdwg.mxu0
    %9402 = vmatpush.bf16.msra.mxu0 %v8910
    %9403 = vmatpush.bf16.msra.mxu0 %v8906
    %9404 = vmatpush.bf16.msra.mxu0 %v8902
    %9405 = vmatpush.bf16.msra.mxu0 %v8898
    %9406 = vmatpush.bf16.msra.mxu0 %v8894
    %9407 = vmatpush.bf16.msra.mxu0 %v8890
    %9408 = vmatpush.bf16.msra.mxu0 %v8886
    %9409 = vmatpush.bf16.msra.mxu0 %v8882
    %9410 = vmatmul.bf16.gmra.mxu0 %v7684
    %v9411 = vpop.f32.mrf.mxu0
    %v9412 = vadd.f32 %v9399, %v9411
    %v9413 = vpop.f32.mrf.mxu0
    %9414 = vdwg.mxu0
    %9415 = vmatpush.bf16.msra.mxu0 %v8942
    %9416 = vmatpush.bf16.msra.mxu0 %v8938
    %9417 = vmatpush.bf16.msra.mxu0 %v8934
    %9418 = vmatpush.bf16.msra.mxu0 %v8930
    %9419 = vmatpush.bf16.msra.mxu0 %v8926
    %9420 = vmatpush.bf16.msra.mxu0 %v8922
    %9421 = vmatpush.bf16.msra.mxu0 %v8918
    %9422 = vmatpush.bf16.msra.mxu0 %v8914
    %9423 = vmatmul.bf16.gmra.mxu0 %v7685
    %v9424 = vpop.f32.mrf.mxu0
    %v9425 = vadd.f32 %v9412, %v9424
    %v9426 = vpop.f32.mrf.mxu0
    %9427 = vdwg.mxu0
    %9428 = vmatpush.bf16.msra.mxu0 %v8974
    %9429 = vmatpush.bf16.msra.mxu0 %v8970
    %9430 = vmatpush.bf16.msra.mxu0 %v8966
    %9431 = vmatpush.bf16.msra.mxu0 %v8962
    %9432 = vmatpush.bf16.msra.mxu0 %v8958
    %9433 = vmatpush.bf16.msra.mxu0 %v8954
    %9434 = vmatpush.bf16.msra.mxu0 %v8950
    %9435 = vmatpush.bf16.msra.mxu0 %v8946
    %9436 = vmatmul.bf16.gmra.mxu0 %v7686
    %v9437 = vpop.f32.mrf.mxu0
    %v9438 = vadd.f32 %v9425, %v9437
    %v9439 = vpop.f32.mrf.mxu0
    %9440 = vdwg.mxu0
    %9441 = vmatpush.bf16.msra.mxu0 %v8751
    %9442 = vmatpush.bf16.msra.mxu0 %v8747
    %9443 = vmatpush.bf16.msra.mxu0 %v8743
    %9444 = vmatpush.bf16.msra.mxu0 %v8739
    %9445 = vmatpush.bf16.msra.mxu0 %v8735
    %9446 = vmatpush.bf16.msra.mxu0 %v8731
    %9447 = vmatpush.bf16.msra.mxu0 %v8727
    %9448 = vmatpush.bf16.msra.mxu0 %v8723
    %9449 = vmatmul.bf16.gmra.mxu0 %v7679
    %v9450 = vpop.f32.mrf.mxu0
    %v9451 = vadd.f32 %v7947, %v9450
    %v9452 = vpop.f32.mrf.mxu0
    %9453 = vdwg.mxu0
    %9454 = vmatpush.bf16.msra.mxu0 %v8783
    %9455 = vmatpush.bf16.msra.mxu0 %v8779
    %9456 = vmatpush.bf16.msra.mxu0 %v8775
    %9457 = vmatpush.bf16.msra.mxu0 %v8771
    %9458 = vmatpush.bf16.msra.mxu0 %v8767
    %9459 = vmatpush.bf16.msra.mxu0 %v8763
    %9460 = vmatpush.bf16.msra.mxu0 %v8759
    %9461 = vmatpush.bf16.msra.mxu0 %v8755
    %9462 = vmatmul.bf16.gmra.mxu0 %v7680
    %v9463 = vpop.f32.mrf.mxu0
    %v9464 = vadd.f32 %v9451, %v9463
    %v9465 = vpop.f32.mrf.mxu0
    %9466 = vdwg.mxu0
    %9467 = vmatpush.bf16.msra.mxu0 %v8815
    %9468 = vmatpush.bf16.msra.mxu0 %v8811
    %9469 = vmatpush.bf16.msra.mxu0 %v8807
    %9470 = vmatpush.bf16.msra.mxu0 %v8803
    %9471 = vmatpush.bf16.msra.mxu0 %v8799
    %9472 = vmatpush.bf16.msra.mxu0 %v8795
    %9473 = vmatpush.bf16.msra.mxu0 %v8791
    %9474 = vmatpush.bf16.msra.mxu0 %v8787
    %9475 = vmatmul.bf16.gmra.mxu0 %v7681
    %v9476 = vpop.f32.mrf.mxu0
    %v9477 = vadd.f32 %v9464, %v9476
    %v9478 = vpop.f32.mrf.mxu0
    %9479 = vdwg.mxu0
    %9480 = vmatpush.bf16.msra.mxu0 %v8847
    %9481 = vmatpush.bf16.msra.mxu0 %v8843
    %9482 = vmatpush.bf16.msra.mxu0 %v8839
    %9483 = vmatpush.bf16.msra.mxu0 %v8835
    %9484 = vmatpush.bf16.msra.mxu0 %v8831
    %9485 = vmatpush.bf16.msra.mxu0 %v8827
    %9486 = vmatpush.bf16.msra.mxu0 %v8823
    %9487 = vmatpush.bf16.msra.mxu0 %v8819
    %9488 = vmatmul.bf16.gmra.mxu0 %v7682
    %v9489 = vpop.f32.mrf.mxu0
    %v9490 = vadd.f32 %v9477, %v9489
    %v9491 = vpop.f32.mrf.mxu0
    %9492 = vdwg.mxu0
    %9493 = vmatpush.bf16.msra.mxu0 %v8879
    %9494 = vmatpush.bf16.msra.mxu0 %v8875
    %9495 = vmatpush.bf16.msra.mxu0 %v8871
    %9496 = vmatpush.bf16.msra.mxu0 %v8867
    %9497 = vmatpush.bf16.msra.mxu0 %v8863
    %9498 = vmatpush.bf16.msra.mxu0 %v8859
    %9499 = vmatpush.bf16.msra.mxu0 %v8855
    %9500 = vmatpush.bf16.msra.mxu0 %v8851
    %9501 = vmatmul.bf16.gmra.mxu0 %v7683
    %v9502 = vpop.f32.mrf.mxu0
    %v9503 = vadd.f32 %v9490, %v9502
    %v9504 = vpop.f32.mrf.mxu0
    %9505 = vdwg.mxu0
    %9506 = vmatpush.bf16.msra.mxu0 %v8911
    %9507 = vmatpush.bf16.msra.mxu0 %v8907
    %9508 = vmatpush.bf16.msra.mxu0 %v8903
    %9509 = vmatpush.bf16.msra.mxu0 %v8899
    %9510 = vmatpush.bf16.msra.mxu0 %v8895
    %9511 = vmatpush.bf16.msra.mxu0 %v8891
    %9512 = vmatpush.bf16.msra.mxu0 %v8887
    %9513 = vmatpush.bf16.msra.mxu0 %v8883
    %9514 = vmatmul.bf16.gmra.mxu0 %v7684
    %v9515 = vpop.f32.mrf.mxu0
    %v9516 = vadd.f32 %v9503, %v9515
    %v9517 = vpop.f32.mrf.mxu0
    %9518 = vdwg.mxu0
    %9519 = vmatpush.bf16.msra.mxu0 %v8943
    %9520 = vmatpush.bf16.msra.mxu0 %v8939
    %9521 = vmatpush.bf16.msra.mxu0 %v8935
    %9522 = vmatpush.bf16.msra.mxu0 %v8931
    %9523 = vmatpush.bf16.msra.mxu0 %v8927
    %9524 = vmatpush.bf16.msra.mxu0 %v8923
    %9525 = vmatpush.bf16.msra.mxu0 %v8919
    %9526 = vmatpush.bf16.msra.mxu0 %v8915
    %9527 = vmatmul.bf16.gmra.mxu0 %v7685
    %v9528 = vpop.f32.mrf.mxu0
    %v9529 = vadd.f32 %v9516, %v9528
    %v9530 = vpop.f32.mrf.mxu0
    %9531 = vdwg.mxu0
    %9532 = vmatpush.bf16.msra.mxu0 %v8975
    %9533 = vmatpush.bf16.msra.mxu0 %v8971
    %9534 = vmatpush.bf16.msra.mxu0 %v8967
    %9535 = vmatpush.bf16.msra.mxu0 %v8963
    %9536 = vmatpush.bf16.msra.mxu0 %v8959
    %9537 = vmatpush.bf16.msra.mxu0 %v8955
    %9538 = vmatpush.bf16.msra.mxu0 %v8951
    %9539 = vmatpush.bf16.msra.mxu0 %v8947
    %9540 = vmatmul.bf16.gmra.mxu0 %v7686
    %v9541 = vpop.f32.mrf.mxu0
    %v9542 = vadd.f32 %v9529, %v9541
    %v9543 = vpop.f32.mrf.mxu0
    %9544 = vdwg.mxu0
    %9545 = vmatpush.bf16.msra.mxu0 %v8752
    %9546 = vmatpush.bf16.msra.mxu0 %v8748
    %9547 = vmatpush.bf16.msra.mxu0 %v8744
    %9548 = vmatpush.bf16.msra.mxu0 %v8740
    %9549 = vmatpush.bf16.msra.mxu0 %v8736
    %9550 = vmatpush.bf16.msra.mxu0 %v8732
    %9551 = vmatpush.bf16.msra.mxu0 %v8728
    %9552 = vmatpush.bf16.msra.mxu0 %v8724
    %9553 = vmatmul.bf16.gmra.mxu0 %v7679
    %v9554 = vpop.f32.mrf.mxu0
    %v9555 = vadd.f32 %v7948, %v9554
    %v9556 = vpop.f32.mrf.mxu0
    %9557 = vdwg.mxu0
    %9558 = vmatpush.bf16.msra.mxu0 %v8784
    %9559 = vmatpush.bf16.msra.mxu0 %v8780
    %9560 = vmatpush.bf16.msra.mxu0 %v8776
    %9561 = vmatpush.bf16.msra.mxu0 %v8772
    %9562 = vmatpush.bf16.msra.mxu0 %v8768
    %9563 = vmatpush.bf16.msra.mxu0 %v8764
    %9564 = vmatpush.bf16.msra.mxu0 %v8760
    %9565 = vmatpush.bf16.msra.mxu0 %v8756
    %9566 = vmatmul.bf16.gmra.mxu0 %v7680
    %v9567 = vpop.f32.mrf.mxu0
    %v9568 = vadd.f32 %v9555, %v9567
    %v9569 = vpop.f32.mrf.mxu0
    %9570 = vdwg.mxu0
    %9571 = vmatpush.bf16.msra.mxu0 %v8816
    %9572 = vmatpush.bf16.msra.mxu0 %v8812
    %9573 = vmatpush.bf16.msra.mxu0 %v8808
    %9574 = vmatpush.bf16.msra.mxu0 %v8804
    %9575 = vmatpush.bf16.msra.mxu0 %v8800
    %9576 = vmatpush.bf16.msra.mxu0 %v8796
    %9577 = vmatpush.bf16.msra.mxu0 %v8792
    %9578 = vmatpush.bf16.msra.mxu0 %v8788
    %9579 = vmatmul.bf16.gmra.mxu0 %v7681
    %v9580 = vpop.f32.mrf.mxu0
    %v9581 = vadd.f32 %v9568, %v9580
    %v9582 = vpop.f32.mrf.mxu0
    %9583 = vdwg.mxu0
    %9584 = vmatpush.bf16.msra.mxu0 %v8848
    %9585 = vmatpush.bf16.msra.mxu0 %v8844
    %9586 = vmatpush.bf16.msra.mxu0 %v8840
    %9587 = vmatpush.bf16.msra.mxu0 %v8836
    %9588 = vmatpush.bf16.msra.mxu0 %v8832
    %9589 = vmatpush.bf16.msra.mxu0 %v8828
    %9590 = vmatpush.bf16.msra.mxu0 %v8824
    %9591 = vmatpush.bf16.msra.mxu0 %v8820
    %9592 = vmatmul.bf16.gmra.mxu0 %v7682
    %v9593 = vpop.f32.mrf.mxu0
    %v9594 = vadd.f32 %v9581, %v9593
    %v9595 = vpop.f32.mrf.mxu0
    %9596 = vdwg.mxu0
    %9597 = vmatpush.bf16.msra.mxu0 %v8880
    %9598 = vmatpush.bf16.msra.mxu0 %v8876
    %9599 = vmatpush.bf16.msra.mxu0 %v8872
    %9600 = vmatpush.bf16.msra.mxu0 %v8868
    %9601 = vmatpush.bf16.msra.mxu0 %v8864
    %9602 = vmatpush.bf16.msra.mxu0 %v8860
    %9603 = vmatpush.bf16.msra.mxu0 %v8856
    %9604 = vmatpush.bf16.msra.mxu0 %v8852
    %9605 = vmatmul.bf16.gmra.mxu0 %v7683
    %v9606 = vpop.f32.mrf.mxu0
    %v9607 = vadd.f32 %v9594, %v9606
    %v9608 = vpop.f32.mrf.mxu0
    %9609 = vdwg.mxu0
    %9610 = vmatpush.bf16.msra.mxu0 %v8912
    %9611 = vmatpush.bf16.msra.mxu0 %v8908
    %9612 = vmatpush.bf16.msra.mxu0 %v8904
    %9613 = vmatpush.bf16.msra.mxu0 %v8900
    %9614 = vmatpush.bf16.msra.mxu0 %v8896
    %9615 = vmatpush.bf16.msra.mxu0 %v8892
    %9616 = vmatpush.bf16.msra.mxu0 %v8888
    %9617 = vmatpush.bf16.msra.mxu0 %v8884
    %9618 = vmatmul.bf16.gmra.mxu0 %v7684
    %v9619 = vpop.f32.mrf.mxu0
    %v9620 = vadd.f32 %v9607, %v9619
    %v9621 = vpop.f32.mrf.mxu0
    %9622 = vdwg.mxu0
    %9623 = vmatpush.bf16.msra.mxu0 %v8944
    %9624 = vmatpush.bf16.msra.mxu0 %v8940
    %9625 = vmatpush.bf16.msra.mxu0 %v8936
    %9626 = vmatpush.bf16.msra.mxu0 %v8932
    %9627 = vmatpush.bf16.msra.mxu0 %v8928
    %9628 = vmatpush.bf16.msra.mxu0 %v8924
    %9629 = vmatpush.bf16.msra.mxu0 %v8920
    %9630 = vmatpush.bf16.msra.mxu0 %v8916
    %9631 = vmatmul.bf16.gmra.mxu0 %v7685
    %v9632 = vpop.f32.mrf.mxu0
    %v9633 = vadd.f32 %v9620, %v9632
    %v9634 = vpop.f32.mrf.mxu0
    %9635 = vdwg.mxu0
    %9636 = vmatpush.bf16.msra.mxu0 %v8976
    %9637 = vmatpush.bf16.msra.mxu0 %v8972
    %9638 = vmatpush.bf16.msra.mxu0 %v8968
    %9639 = vmatpush.bf16.msra.mxu0 %v8964
    %9640 = vmatpush.bf16.msra.mxu0 %v8960
    %9641 = vmatpush.bf16.msra.mxu0 %v8956
    %9642 = vmatpush.bf16.msra.mxu0 %v8952
    %9643 = vmatpush.bf16.msra.mxu0 %v8948
    %9644 = vmatmul.bf16.gmra.mxu0 %v7686
    %v9645 = vpop.f32.mrf.mxu0
    %v9646 = vadd.f32 %v9633, %v9645
    %v9647 = vpop.f32.mrf.mxu0
    %9648 = vdwg.mxu0
    %v9649 = vmul.f32 %v9334, 0.01
    %v9650 = vmul.f32 %v9438, 0.01
    %v9651 = vmul.f32 %v9542, 0.01
    %v9652 = vmul.f32 %v9646, 0.01
    %v9653 = vmax.f32 %v9334, %v9649
    %v9654 = vmax.f32 %v9438, %v9650
    %v9655 = vmax.f32 %v9542, %v9651
    %v9656 = vmax.f32 %v9646, %v9652
    %9657 = vst [vmem:[#allocation16] sm:$0xff] %v9653
    %9658 = vst [vmem:[#allocation16 + $0x8] sm:$0xff] %v9654
    %9659 = vst [vmem:[#allocation16 + $0x10] sm:$0xff] %v9655
    %9660 = vst [vmem:[#allocation16 + $0x18] sm:$0xff] %v9656
    // Predicated region
    $region102: #{ae_cifar_forward.1} parent=1 // pred_check
      _
    $region103: #{ae_cifar_forward.1} parent=1 // pred_check_branch
      %9662 = sbr.rel (0) target = $region105
    $region104: #{ae_cifar_forward.1} parent=1 // pred_region
      %9664 = vsyncadd [#allocation4], 0
      %s9666 = sshll.u32 [#allocation16], 4
      %s9667 = int_to_ptr.vmem [resolvable:$true] %s9666
      %s9668 = sshll.u32 %s17, 4
      %s9669 = int_to_ptr.hbm [resolvable:$true] %s9668
      %9671 = dma.vmem_to_hbm [thread:$0]  %s9667, 512, %s9669, [#allocation4]
    $region105: #{ae_cifar_forward.1} parent=1 // pred_fallthru
      _
    // Predicated region
    $region106: #{ae_cifar_forward.1} parent=1 // pred_check
      _
    $region107: #{ae_cifar_forward.1} parent=1 // pred_check_branch
      %9673 = sbr.rel (0) target = $region109
    $region108: #{ae_cifar_forward.1} parent=1 // pred_region
      %9675 = vsyncadd [#allocation18], 0
      %s9677 = sshll.u32 [#allocation17], 4
      %s9678 = int_to_ptr.vmem [resolvable:$true] %s9677
      %s9679 = sshll.u32 %s18, 4
      %s9680 = int_to_ptr.hbm [resolvable:$true] %s9679
      %9682 = dma.vmem_to_hbm [thread:$0]  %s9678, 256, %s9680, [#allocation18]
    $region109: #{ae_cifar_forward.1} parent=1 // pred_fallthru
      _
    // Predicated region
    $region110: #{ae_cifar_forward.1} parent=1 // pred_check
      _
    $region111: #{ae_cifar_forward.1} parent=1 // pred_check_branch
      %9684 = sbr.rel (0) target = $region113
    $region112: #{ae_cifar_forward.1} parent=1 // pred_region
      %9686 = dma.done [#allocation4], 512
    $region113: #{ae_cifar_forward.1} parent=1 // pred_fallthru
      _
    // Predicated region
    $region114: #{ae_cifar_forward.1} parent=1 // pred_check
      _
    $region115: #{ae_cifar_forward.1} parent=1 // pred_check_branch
      %9688 = sbr.rel (0) target = $region117
    $region116: #{ae_cifar_forward.1} parent=1 // pred_region
      %9690 = dma.done [#allocation18], 256
    $region117: #{ae_cifar_forward.1} parent=1 // pred_fallthru
      _
    %9691 = vsyncpa [#allocation3], 1
    %9692 = vsyncpa [#allocation6], 1
    %9693 = vsyncpa [#allocation9], 1
    %9694 = vsyncpa [#allocation12], 1
    %9695 = vsyncpa [#allocation15], 1
    %9696 = vsyncpa [#allocation4], 1
    %9697 = vsyncpa [#allocation18], 1

</llo_original>
